<compile_context>
chip_gen: v7x
topology: tpu7x:2x2x1
jax: 0.10.0
libtpu: 0.0.40
codegen_flags: <defaults>
</compile_context>

<pallas_src>
import jax
import jax.numpy as jnp
from jax.experimental import pallas as pl

# ---------------- synthetic config (small shapes) ----------------
VOCAB = 100
SEP_TOKEN_ID = 3
EMBED = 768          # config.embed == BERT hidden size (fc_cls hardcodes 768)
HIDDEN = 32          # config.hidden_size
NUM_CLASSES = 2      # config.num_classes
SEQ = 8
BATCH = 2
# TODO(synk): config.num_layers fixed to 1 (single bidirectional GRU layer);
#             all nn.Dropout layers are identity (inference mode).


# ---------------- in-kernel math helpers ----------------
def _erf(x):
    # Abramowitz–Stegun 7.1.26 rational approximation (|err| < 1.5e-7); keeps
    # us numerically close to torch's exact (erf-based) GELU.
    p = 0.3275911
    a1, a2, a3, a4, a5 = 0.254829592, -0.284496736, 1.421413741, -1.453152027, 1.061405429
    s = jnp.where(x < 0.0, -1.0, 1.0)
    ax = jnp.abs(x)
    t = 1.0 / (1.0 + p * ax)
    poly = t * (a1 + t * (a2 + t * (a3 + t * (a4 + t * a5))))
    return s * (1.0 - poly * jnp.exp(-(ax * ax)))


def _gelu(x):
    return 0.5 * x * (1.0 + _erf(x * 0.7071067811865476))


def _layernorm(x, gamma, beta, eps=1e-5):
    mu = jnp.mean(x, axis=-1, keepdims=True)
    var = jnp.mean((x - mu) ** 2, axis=-1, keepdims=True)
    return (x - mu) * jax.lax.rsqrt(var + eps) * gamma + beta


def _softmax_last(x):
    m = jnp.max(x, axis=-1, keepdims=True)
    e = jnp.exp(x - m)
    return e * pl.reciprocal(jnp.sum(e, axis=-1, keepdims=True), approx=True)


# ---------------- the single fused kernel (whole forward in one invocation) ----------------
def _fused_kernel(x_ref, gum_ref, wbig_ref, gwh_ref, wsen_ref, wso_ref,
                  watt1_ref, wfc_ref, wfc3_ref, bias_ref,
                  out_ref, sen_ref):
    H, DH = HIDDEN, 2 * HIDDEN
    B, L = BATCH, SEQ
    NB = 2 * B               # sequences through "bert"
    M = NB * L               # flattened token rows

    # ---- unpack the packed bias / small-vector slab (8, 192) ----
    bias = bias_ref[...]
    bqkv = bias[0:1, :]                       # q|k|v biases            (1, 192)
    gbi = bias[1:2, :]                        # GRU input biases fwd|bwd (1, 192)
    gbh = bias[2:3, :]                        # GRU hidden biases fwd|bwd(1, 192)
    aln_g = bias[3:4, 0:DH]
    aln_b = bias[3:4, DH:2 * DH]
    watt = bias[3:4, 2 * DH:3 * DH]           # self.w                  (1, 64)
    bsen = bias[4:5, 0:DH]                    # fc_sen bias             (1, 64)
    bcls = bias[4:5, DH:DH + H]               # fc_cls bias             (1, 32)
    bse = bias[4:5, DH + H:DH + 2 * H]        # sen_embedding bias      (1, 32)
    lng = bias[4:5, DH + 2 * H:DH + 3 * H]    # layer_norm gamma        (1, 32)
    lnb = bias[4:5, DH + 3 * H:DH + 4 * H]    # layer_norm beta         (1, 32)
    bso = bias[5:6, 0:128]                    # fc_sen_out bias (padded)(1, 128)
    batt1 = bias[5:6, 128:128 + H]            # fc_att1 bias            (1, 32)
    bfc = bias[6:7, 0:128]                    # fc bias                 (1, 128)
    wse0 = bias[6:7, 128:128 + H]             # sen_embedding weight row0
    wse1 = bias[6:7, 128 + H:128 + 2 * H]     # sen_embedding weight row1
    bfc3 = bias[7:8, 0:128]                   # fc3 bias (padded)       (1, 128)

    # ---- ONE wide bf16 K=768 matmul: [Q|K|V | GRU fwd|bwd gates | fc_cls] ----
    x = x_ref[...]                                                     # (M+B, 768) bf16
    big = jnp.dot(x, wbig_ref[...], preferred_element_type=jnp.float32)  # (M+B, 416) f32
    qkv = big[0:M, 0:3 * DH] + bqkv                                    # (M, 192)
    gx = big[0:M, 3 * DH:3 * DH + 6 * H] + gbi                         # (M, 192)
    sem = _gelu(big[M:M + B, 3 * DH + 6 * H:3 * DH + 6 * H + H] + bcls)  # (B, 32)

    # ---- single-head self-attention over all NB sequences (batched einsum) ----
    qkv3 = qkv.reshape(NB, L, 3 * DH)
    q = qkv3[:, :, 0:DH]
    k = qkv3[:, :, DH:2 * DH]
    v = qkv3[:, :, 2 * DH:3 * DH]
    # Module divides by hidden_size**0.5 (= sqrt(32)) even though Q/K width is 2H.
    s = jnp.einsum('bqd,bkd->bqk', q, k, preferred_element_type=jnp.float32) * (1.0 / (H ** 0.5))
    p = _softmax_last(s)
    o = jnp.einsum('bqk,bkd->bqd', p, v, preferred_element_type=jnp.float32)
    h_att = _layernorm(o, aln_g.reshape(1, 1, DH), aln_b.reshape(1, 1, DH))  # (NB, L, 2H)

    # ---- bidirectional GRU: all 4 sequences x both directions, one unrolled chain ----
    gx3 = gx.reshape(NB, L, 6 * H)          # cols 0:3H fwd gates, 3H:6H bwd gates
    gwh = gwh_ref[...]                      # (2H, 6H) block-diagonal hidden weight
    h_cat = jnp.zeros((NB, DH), jnp.float32)
    hf_out = [None] * L
    hb_out = [None] * L
    for t in range(L):                      # L=8, statically unrolled
        gh = jnp.dot(h_cat, gwh, preferred_element_type=jnp.float32) + gbh   # (NB, 6H)
        gxf = gx3[:, t, 0:3 * H]
        gxb = gx3[:, L - 1 - t, 3 * H:6 * H]
        ghf = gh[:, 0:3 * H]
        ghb = gh[:, 3 * H:6 * H]
        hf = h_cat[:, 0:H]
        hb = h_cat[:, H:DH]

        rf = jax.nn.sigmoid(gxf[:, 0:H] + ghf[:, 0:H])
        zf = jax.nn.sigmoid(gxf[:, H:2 * H] + ghf[:, H:2 * H])
        nf = jnp.tanh(gxf[:, 2 * H:3 * H] + rf * ghf[:, 2 * H:3 * H])
        hf = (1.0 - zf) * nf + zf * hf

        rb = jax.nn.sigmoid(gxb[:, 0:H] + ghb[:, 0:H])
        zb = jax.nn.sigmoid(gxb[:, H:2 * H] + ghb[:, H:2 * H])
        nb = jnp.tanh(gxb[:, 2 * H:3 * H] + rb * ghb[:, 2 * H:3 * H])
        hb = (1.0 - zb) * nb + zb * hb

        hf_out[t] = hf                       # kept in vregs (no VMEM scratch)
        hb_out[L - 1 - t] = hb
        h_cat = jnp.concatenate([hf, hb], axis=-1)
    H_sen = jnp.concatenate([jnp.stack(hf_out, axis=1),
                             jnp.stack(hb_out, axis=1)], axis=-1)      # (NB, L, 2H)

    # ---- sentiment head: seq-softmax weighting + fc_sen + fc_sen_out + max-pool ----
    scores = jnp.sum(H_sen * watt.reshape(1, 1, DH), axis=-1, keepdims=True)  # (NB, L, 1)
    m = jnp.max(scores, axis=1, keepdims=True)
    ex = jnp.exp(scores - m)
    alpha = ex * pl.reciprocal(jnp.sum(ex, axis=1, keepdims=True), approx=True)
    H_senw = H_sen * alpha                                              # (NB, L, 2H)
    hw_flat = H_senw.reshape(M, DH)
    mid = _gelu(jnp.dot(hw_flat, wsen_ref[...], preferred_element_type=jnp.float32) + bsen)
    so = jnp.dot(mid, wso_ref[...], preferred_element_type=jnp.float32) + bso   # (M, 128) padded
    sen_pool = jnp.max(so.reshape(NB, L, 128), axis=1)                  # (NB, 128) AdaptiveMaxPool1d
    sen_ref[...] = sen_pool                                             # lane-dense final store

    # ---- gumbel-softmax (hard, tau=1) + sentiment embedding + LayerNorm ----
    y = sen_pool[:, 0:2] + gum_ref[...]                                 # (NB, 2)
    take0 = (y[:, 0:1] >= y[:, 1:2]).astype(jnp.float32)                # one-hot of argmax
    emb = take0 * wse0 + (1.0 - take0) * wse1 + bse                     # (NB, H)
    sen_gs = _layernorm(emb, lng, lnb)

    # ---- fc_att1 on cat([self-attn, weighted GRU]) — split-weight, flat M rows ----
    w1 = watt1_ref[...]                                                 # (4H, H)
    att_flat = h_att.reshape(M, DH)
    ro_all = (jnp.dot(att_flat, w1[0:DH, :], preferred_element_type=jnp.float32)
              + jnp.dot(hw_flat, w1[DH:2 * DH, :], preferred_element_type=jnp.float32)
              + batt1)                                                  # (M, H)
    ro3 = ro_all.reshape(NB, L, H)
    ro_x = ro3[0:B]                                                     # sentences from x
    ro_x1 = ro3[B:NB]                                                   # sentences from x_1

    # ---- symmetric cross attention: only the last query row of each direction ----
    g0 = _gelu(ro_x)
    g1 = _gelu(ro_x1)
    s0 = jnp.einsum('bqh,bkh->bqk', g0[:, L - 1:L, :], g1,
                    preferred_element_type=jnp.float32)                 # (B, 1, L)
    att0 = jnp.einsum('bqk,bkh->bqh', _softmax_last(s0), ro_x1,
                      preferred_element_type=jnp.float32)[:, 0, :]      # (B, H)
    s1 = jnp.einsum('bqh,bkh->bqk', g1[:, L - 1:L, :], g0,
                    preferred_element_type=jnp.float32)
    att1 = jnp.einsum('bqk,bkh->bqh', _softmax_last(s1), ro_x,
                      preferred_element_type=jnp.float32)[:, 0, :]      # (B, H)

    # ---- final MLP head (lane-dense 128-col outputs) ----
    raw = jnp.concatenate([att0, sen_gs[0:B], att1, sen_gs[B:NB], sem], axis=-1)  # (B, 5H)
    h1 = jnp.dot(_gelu(raw), wfc_ref[...], preferred_element_type=jnp.float32) + bfc     # (B, 128)
    logits = jnp.dot(_gelu(h1), wfc3_ref[...], preferred_element_type=jnp.float32) + bfc3  # (B, 128)
    out_ref[...] = logits


def _fused_forward(x_slab, gum, fw):
    out_pad, sen_pad = pl.pallas_call(
        _fused_kernel,
        out_shape=(jax.ShapeDtypeStruct((BATCH, 128), jnp.float32),
                   jax.ShapeDtypeStruct((2 * BATCH, 128), jnp.float32)),
    )(x_slab, gum, fw["w_big"], fw["gwh"], fw["wsen"], fw["wso"],
      fw["watt1"], fw["wfc"], fw["wfc3"], fw["bias"])
    return out_pad, sen_pad


# ---------------- weight packing for the fused kernel ----------------
def _fuse_weights(p):
    H, DH = HIDDEN, 2 * HIDDEN
    # one wide bf16 slab over K=768: [Q|K|V (192) | GRU fwd|bwd input gates (192) | fc_cls (32)]
    wqkv = jnp.concatenate([p["q_w"], p["k_w"], p["v_w"]], axis=1)
    gwi = jnp.concatenate([p["gru_wif"], p["gru_wib"]], axis=1)
    w_big = jnp.concatenate([wqkv, gwi, p["fc_cls_w"]], axis=1).astype(jnp.bfloat16)  # (768, 416)

    # block-diagonal hidden->gates weight: forward block top-left, backward bottom-right
    gwh = jnp.zeros((DH, 6 * H), jnp.float32)
    gwh = gwh.at[0:H, 0:3 * H].set(p["gru_whf"]).at[H:DH, 3 * H:6 * H].set(p["gru_whb"])

    # pad tiny output projections to 128 lanes so final stores are dense
    wso = jnp.zeros((64, 128), jnp.float32).at[:, 0:2].set(p["fc_sen_out_w"])
    wfc3 = jnp.zeros((128, 128), jnp.float32).at[:, 0:NUM_CLASSES].set(p["fc3_w"])

    # pack all tiny bias / vector params into one (8, 192) slab
    bias = jnp.zeros((8, 192), jnp.float32)
    bias = bias.at[0, :].set(jnp.concatenate([p["q_b"], p["k_b"], p["v_b"]], axis=1)[0])
    bias = bias.at[1, :].set(jnp.concatenate([p["gru_bif"], p["gru_bib"]], axis=1)[0])
    bias = bias.at[2, :].set(jnp.concatenate([p["gru_bhf"], p["gru_bhb"]], axis=1)[0])
    bias = (bias.at[3, 0:DH].set(p["attn_ln_g"][0])
                .at[3, DH:2 * DH].set(p["attn_ln_b"][0])
                .at[3, 2 * DH:3 * DH].set(p["w_att"][0]))
    bias = (bias.at[4, 0:DH].set(p["fc_sen_b"][0])
                .at[4, DH:DH + H].set(p["fc_cls_b"][0])
                .at[4, DH + H:DH + 2 * H].set(p["sen_emb_b"][0])
                .at[4, DH + 2 * H:DH + 3 * H].set(p["ln_g"][0])
                .at[4, DH + 3 * H:DH + 4 * H].set(p["ln_b"][0]))
    bias = (bias.at[5, 0:2].set(p["fc_sen_out_b"][0])
                .at[5, 128:128 + H].set(p["fc_att1_b"][0]))
    bias = (bias.at[6, 0:128].set(p["fc_b"][0])
                .at[6, 128:128 + H].set(p["sen_emb_w"][0])
                .at[6, 128 + H:128 + 2 * H].set(p["sen_emb_w"][1]))
    bias = bias.at[7, 0:NUM_CLASSES].set(p["fc3_b"][0])

    return dict(w_big=w_big, gwh=gwh, wsen=p["fc_sen_w"], wso=wso,
                watt1=p["fc_att1_w"], wfc=p["fc_w"], wfc3=wfc3, bias=bias)


# ---------------- glue: BERT stubs + wrapper ----------------
def bert_stub(token_ids, mask, emb_table):
    # TODO(synk): frozen pretrained BERT/SBERT encoders have no clean Pallas
    # equivalent (checkpoint-loaded transformers); replaced by a deterministic
    # embedding-lookup stub producing the same (B, L, 768) shaped features.
    e = jnp.take(emb_table, token_ids, axis=0)
    return e * mask[..., None].astype(e.dtype)


def model_forward(params, x, x_1, a, b, gumbel_key):
    B, L = x.shape

    # joint batch through "bert"
    input_data = jnp.concatenate([x, x_1], axis=0)                 # (2B, L)
    mask = jnp.concatenate([a, b], axis=0)
    encoder_out = bert_stub(input_data, mask, params["emb_bert"])  # (2B, L, E)

    # sentence_embed: [sent1, SEP, sent2[:, 1:]] through "sbert"
    sep = jnp.full((B, 1), SEP_TOKEN_ID, dtype=x.dtype)
    sep_mask = jnp.ones((B, 1), dtype=a.dtype)
    input_data1 = jnp.concatenate([x, sep, x_1[:, 1:]], axis=1)
    mask1 = jnp.concatenate([a, sep_mask, b[:, 1:]], axis=1)
    encoder_out1 = bert_stub(input_data1, mask1, params["emb_sbert"])
    cls_embeddings = encoder_out1[:, 0, :]                          # (B, E)

    # gumbel noise drawn outside (jax.random); hard one-hot taken in-kernel
    gum = jax.random.gumbel(gumbel_key, (2 * B, 2), dtype=jnp.float32)

    # one bf16 input slab: all bert token rows + the sbert CLS rows (no transposes)
    x_slab = jnp.concatenate([encoder_out.reshape(2 * B * L, EMBED),
                              cls_embeddings], axis=0).astype(jnp.bfloat16)   # (2BL+B, 768)

    fw = _fuse_weights(params)
    out_pad, sen_pad = _fused_forward(x_slab, gum, fw)

    out = out_pad[:, :NUM_CLASSES]                                  # (B, C)
    sen_sum_out = sen_pad[:, :2]                                    # (2B, 2)
    return out, sen_sum_out


# ---------------- deterministic parameter init ----------------
def init_params(key):
    keys = iter(jax.random.split(key, 40))

    def nrm(shape, scale=0.05):
        return (scale * jax.random.normal(next(keys), shape)).astype(jnp.float32)

    H, E = HIDDEN, EMBED
    return {
        "emb_bert": nrm((VOCAB, E), 1.0),
        "emb_sbert": nrm((VOCAB, 768), 1.0),
        "fc_cls_w": nrm((768, H)), "fc_cls_b": nrm((1, H)),
        "q_w": nrm((E, 2 * H)), "q_b": nrm((1, 2 * H)),
        "k_w": nrm((E, 2 * H)), "k_b": nrm((1, 2 * H)),
        "v_w": nrm((E, 2 * H)), "v_b": nrm((1, 2 * H)),
        "attn_ln_g": jnp.ones((1, 2 * H), jnp.float32),
        "attn_ln_b": jnp.zeros((1, 2 * H), jnp.float32),
        "gru_wif": nrm((E, 3 * H)), "gru_whf": nrm((H, 3 * H)),
        "gru_bif": nrm((1, 3 * H)), "gru_bhf": nrm((1, 3 * H)),
        "gru_wib": nrm((E, 3 * H)), "gru_whb": nrm((H, 3 * H)),
        "gru_bib": nrm((1, 3 * H)), "gru_bhb": nrm((1, 3 * H)),
        # matches nn.Parameter(torch.zeros(hidden_size * 2)) in the module
        "w_att": jnp.zeros((1, 2 * H), jnp.float32),
        "fc_sen_w": nrm((2 * H, 64)), "fc_sen_b": nrm((1, 64)),
        "fc_sen_out_w": nrm((64, 2)), "fc_sen_out_b": nrm((1, 2)),
        "sen_emb_w": nrm((2, H)), "sen_emb_b": nrm((1, H)),
        "ln_g": jnp.ones((1, H), jnp.float32),
        "ln_b": jnp.zeros((1, H), jnp.float32),
        "fc_att1_w": nrm((4 * H, H)), "fc_att1_b": nrm((1, H)),
        "fc_w": nrm((5 * H, 128)), "fc_b": nrm((1, 128)),
        "fc3_w": nrm((128, NUM_CLASSES)), "fc3_b": nrm((1, NUM_CLASSES)),
    }


if __name__ == "__main__":
    key = jax.random.PRNGKey(0)
    kx, kx1, kg = jax.random.split(key, 3)
    x = jax.random.randint(kx, (BATCH, SEQ), 0, VOCAB, dtype=jnp.int32)
    x_1 = jax.random.randint(kx1, (BATCH, SEQ), 0, VOCAB, dtype=jnp.int32)
    a = jnp.ones((BATCH, SEQ), dtype=jnp.int32)
    b = jnp.ones((BATCH, SEQ), dtype=jnp.int32)
    params = init_params(jax.random.PRNGKey(42))

    out, sen_sum_out = jax.jit(model_forward)(params, x, x_1, a, b, kg)
    jax.block_until_ready((out, sen_sum_out))
    assert out.shape == (BATCH, NUM_CLASSES)
    assert sen_sum_out.shape == (2 * BATCH, 2)
    assert bool(jnp.all(jnp.isfinite(out))) and bool(jnp.all(jnp.isfinite(sen_sum_out)))
    print("KERNEL_OK")
</pallas_src>

<mosaic_0001>
module attributes {stable_mosaic.version = 11 : i64} {
  func.func @_fused_kernel(%arg0: memref<34x768xbf16, #tpu.memory_space<vmem>>, %arg1: memref<4x2xf32, #tpu.memory_space<vmem>>, %arg2: memref<768x416xbf16, #tpu.memory_space<vmem>>, %arg3: memref<64x192xf32, #tpu.memory_space<vmem>>, %arg4: memref<64x64xf32, #tpu.memory_space<vmem>>, %arg5: memref<64x128xf32, #tpu.memory_space<vmem>>, %arg6: memref<128x32xf32, #tpu.memory_space<vmem>>, %arg7: memref<160x128xf32, #tpu.memory_space<vmem>>, %arg8: memref<128x128xf32, #tpu.memory_space<vmem>>, %arg9: memref<8x192xf32, #tpu.memory_space<vmem>>, %arg10: memref<2x128xf32, #tpu.memory_space<vmem>>, %arg11: memref<4x128xf32, #tpu.memory_space<vmem>>) attributes {dimension_semantics = [], scalar_prefetch = 0 : i64, scratch_operands = 0 : i64, tpu.core_type = #tpu.core_type<tc>} {
    %c0 = arith.constant 0 : index
    %c0_0 = arith.constant 0 : index
    %0 = vector.load %arg9[%c0, %c0_0] : memref<8x192xf32, #tpu.memory_space<vmem>>, vector<8x192xf32>
    %1 = vector.extract_strided_slice %0 {offsets = [0, 0], sizes = [1, 192], strides = [1, 1]} : vector<8x192xf32> to vector<1x192xf32>
    %2 = vector.extract_strided_slice %0 {offsets = [1, 0], sizes = [1, 192], strides = [1, 1]} : vector<8x192xf32> to vector<1x192xf32>
    %3 = vector.extract_strided_slice %0 {offsets = [2, 0], sizes = [1, 192], strides = [1, 1]} : vector<8x192xf32> to vector<1x192xf32>
    %4 = vector.extract_strided_slice %0 {offsets = [3, 0], sizes = [1, 64], strides = [1, 1]} : vector<8x192xf32> to vector<1x64xf32>
    %5 = vector.extract_strided_slice %0 {offsets = [3, 64], sizes = [1, 64], strides = [1, 1]} : vector<8x192xf32> to vector<1x64xf32>
    %6 = vector.extract_strided_slice %0 {offsets = [3, 128], sizes = [1, 64], strides = [1, 1]} : vector<8x192xf32> to vector<1x64xf32>
    %7 = vector.extract_strided_slice %0 {offsets = [4, 0], sizes = [1, 64], strides = [1, 1]} : vector<8x192xf32> to vector<1x64xf32>
    %8 = vector.extract_strided_slice %0 {offsets = [4, 64], sizes = [1, 32], strides = [1, 1]} : vector<8x192xf32> to vector<1x32xf32>
    %9 = vector.extract_strided_slice %0 {offsets = [4, 96], sizes = [1, 32], strides = [1, 1]} : vector<8x192xf32> to vector<1x32xf32>
    %10 = vector.extract_strided_slice %0 {offsets = [4, 128], sizes = [1, 32], strides = [1, 1]} : vector<8x192xf32> to vector<1x32xf32>
    %11 = vector.extract_strided_slice %0 {offsets = [4, 160], sizes = [1, 32], strides = [1, 1]} : vector<8x192xf32> to vector<1x32xf32>
    %12 = vector.extract_strided_slice %0 {offsets = [5, 0], sizes = [1, 128], strides = [1, 1]} : vector<8x192xf32> to vector<1x128xf32>
    %13 = vector.extract_strided_slice %0 {offsets = [5, 128], sizes = [1, 32], strides = [1, 1]} : vector<8x192xf32> to vector<1x32xf32>
    %14 = vector.extract_strided_slice %0 {offsets = [6, 0], sizes = [1, 128], strides = [1, 1]} : vector<8x192xf32> to vector<1x128xf32>
    %15 = vector.extract_strided_slice %0 {offsets = [6, 128], sizes = [1, 32], strides = [1, 1]} : vector<8x192xf32> to vector<1x32xf32>
    %16 = vector.extract_strided_slice %0 {offsets = [6, 160], sizes = [1, 32], strides = [1, 1]} : vector<8x192xf32> to vector<1x32xf32>
    %17 = vector.extract_strided_slice %0 {offsets = [7, 0], sizes = [1, 128], strides = [1, 1]} : vector<8x192xf32> to vector<1x128xf32>
    %c0_1 = arith.constant 0 : index
    %c0_2 = arith.constant 0 : index
    %18 = vector.load %arg0[%c0_1, %c0_2] : memref<34x768xbf16, #tpu.memory_space<vmem>>, vector<34x768xbf16>
    %c0_3 = arith.constant 0 : index
    %c0_4 = arith.constant 0 : index
    %19 = vector.load %arg2[%c0_3, %c0_4] : memref<768x416xbf16, #tpu.memory_space<vmem>>, vector<768x416xbf16>
    %cst = arith.constant dense<0.000000e+00> : vector<34x416xf32>
    %20 = tpu.matmul %18, %19, %cst {dimension_numbers = #tpu.dot_dimension_numbers<[1], [0], [0], [1], [0, 0, 1, 1], [], []>} : vector<34x768xbf16>, vector<768x416xbf16>, vector<34x416xf32> -> vector<34x416xf32>
    %21 = vector.extract_strided_slice %20 {offsets = [0, 0], sizes = [32, 192], strides = [1, 1]} : vector<34x416xf32> to vector<32x192xf32>
    %22 = vector.broadcast %1 : vector<1x192xf32> to vector<32x192xf32>
    %23 = arith.addf %21, %22 : vector<32x192xf32>
    %24 = vector.extract_strided_slice %20 {offsets = [0, 192], sizes = [32, 192], strides = [1, 1]} : vector<34x416xf32> to vector<32x192xf32>
    %25 = vector.broadcast %2 : vector<1x192xf32> to vector<32x192xf32>
    %26 = arith.addf %24, %25 : vector<32x192xf32>
    %27 = vector.extract_strided_slice %20 {offsets = [32, 384], sizes = [2, 32], strides = [1, 1]} : vector<34x416xf32> to vector<2x32xf32>
    %28 = vector.broadcast %8 : vector<1x32xf32> to vector<2x32xf32>
    %29 = arith.addf %27, %28 : vector<2x32xf32>
    %cst_5 = arith.constant 5.000000e-01 : f32
    %30 = vector.broadcast %cst_5 : f32 to vector<2x32xf32>
    %31 = arith.mulf %30, %29 : vector<2x32xf32>
    %cst_6 = arith.constant 0.707106769 : f32
    %32 = vector.broadcast %cst_6 : f32 to vector<2x32xf32>
    %33 = arith.mulf %29, %32 : vector<2x32xf32>
    %cst_7 = arith.constant 0.000000e+00 : f32
    %34 = vector.broadcast %cst_7 : f32 to vector<2x32xf32>
    %35 = arith.cmpf olt, %33, %34 : vector<2x32xf32>
    %cst_8 = arith.constant -1.000000e+00 : f32
    %cst_9 = arith.constant 1.000000e+00 : f32
    %36 = vector.broadcast %cst_8 : f32 to vector<2x32xf32>
    %37 = vector.broadcast %cst_9 : f32 to vector<2x32xf32>
    %38 = arith.select %35, %36, %37 : vector<2x32xi1>, vector<2x32xf32>
    %39 = math.absf %33 : vector<2x32xf32>
    %cst_10 = arith.constant 0.327591091 : f32
    %40 = vector.broadcast %cst_10 : f32 to vector<2x32xf32>
    %41 = arith.mulf %40, %39 : vector<2x32xf32>
    %cst_11 = arith.constant 1.000000e+00 : f32
    %42 = vector.broadcast %cst_11 : f32 to vector<2x32xf32>
    %43 = arith.addf %42, %41 : vector<2x32xf32>
    %cst_12 = arith.constant 1.000000e+00 : f32
    %44 = vector.broadcast %cst_12 : f32 to vector<2x32xf32>
    %45 = arith.divf %44, %43 : vector<2x32xf32>
    %cst_13 = arith.constant 1.06140542 : f32
    %46 = vector.broadcast %cst_13 : f32 to vector<2x32xf32>
    %47 = arith.mulf %45, %46 : vector<2x32xf32>
    %cst_14 = arith.constant -1.45315206 : f32
    %48 = vector.broadcast %cst_14 : f32 to vector<2x32xf32>
    %49 = arith.addf %48, %47 : vector<2x32xf32>
    %50 = arith.mulf %45, %49 : vector<2x32xf32>
    %cst_15 = arith.constant 1.42141378 : f32
    %51 = vector.broadcast %cst_15 : f32 to vector<2x32xf32>
    %52 = arith.addf %51, %50 : vector<2x32xf32>
    %53 = arith.mulf %45, %52 : vector<2x32xf32>
    %cst_16 = arith.constant -0.284496725 : f32
    %54 = vector.broadcast %cst_16 : f32 to vector<2x32xf32>
    %55 = arith.addf %54, %53 : vector<2x32xf32>
    %56 = arith.mulf %45, %55 : vector<2x32xf32>
    %cst_17 = arith.constant 0.254829586 : f32
    %57 = vector.broadcast %cst_17 : f32 to vector<2x32xf32>
    %58 = arith.addf %57, %56 : vector<2x32xf32>
    %59 = arith.mulf %45, %58 : vector<2x32xf32>
    %60 = arith.mulf %39, %39 : vector<2x32xf32>
    %cst_18 = arith.constant 0.000000e+00 : f32
    %61 = vector.broadcast %cst_18 : f32 to vector<2x32xf32>
    %62 = arith.subf %61, %60 : vector<2x32xf32>
    %63 = math.exp %62 : vector<2x32xf32>
    %64 = arith.mulf %59, %63 : vector<2x32xf32>
    %cst_19 = arith.constant 1.000000e+00 : f32
    %65 = vector.broadcast %cst_19 : f32 to vector<2x32xf32>
    %66 = arith.subf %65, %64 : vector<2x32xf32>
    %67 = arith.mulf %38, %66 : vector<2x32xf32>
    %cst_20 = arith.constant 1.000000e+00 : f32
    %68 = vector.broadcast %cst_20 : f32 to vector<2x32xf32>
    %69 = arith.addf %68, %67 : vector<2x32xf32>
    %70 = arith.mulf %31, %69 : vector<2x32xf32>
    %71 = vector.shape_cast %23 : vector<32x192xf32> to vector<4x8x192xf32>
    %72 = vector.extract_strided_slice %71 {offsets = [0, 0, 0], sizes = [4, 8, 64], strides = [1, 1, 1]} : vector<4x8x192xf32> to vector<4x8x64xf32>
    %73 = vector.extract_strided_slice %71 {offsets = [0, 0, 64], sizes = [4, 8, 64], strides = [1, 1, 1]} : vector<4x8x192xf32> to vector<4x8x64xf32>
    %74 = vector.extract_strided_slice %71 {offsets = [0, 0, 128], sizes = [4, 8, 64], strides = [1, 1, 1]} : vector<4x8x192xf32> to vector<4x8x64xf32>
    "tpu.trace_start"() <{level = 10 : i32, message = "bqd,bkd->bqk"}> : () -> ()
    %cst_21 = arith.constant dense<0.000000e+00> : vector<4x8x8xf32>
    %75 = tpu.matmul %72, %73, %cst_21 {dimension_numbers = #tpu.dot_dimension_numbers<[2], [2], [1], [1], [0, 0, 0, 1, 1, 1], [0], [0]>} : vector<4x8x64xf32>, vector<4x8x64xf32>, vector<4x8x8xf32> -> vector<4x8x8xf32>
    "tpu.trace_stop"() : () -> ()
    %cst_22 = arith.constant 0.176776692 : f32
    %76 = vector.broadcast %cst_22 : f32 to vector<4x8x8xf32>
    %77 = arith.mulf %75, %76 : vector<4x8x8xf32>
    %cst_23 = arith.constant dense<0xFF800000> : vector<4x8xf32>
    %78 = vector.multi_reduction <maximumf>, %77, %cst_23 [2] : vector<4x8x8xf32> to vector<4x8xf32>
    %79 = vector.shape_cast %78 : vector<4x8xf32> to vector<4x8x1xf32>
    %80 = vector.broadcast %79 : vector<4x8x1xf32> to vector<4x8x8xf32>
    %81 = arith.subf %77, %80 : vector<4x8x8xf32>
    %82 = math.exp %81 : vector<4x8x8xf32>
    %cst_24 = arith.constant dense<0.000000e+00> : vector<4x8xf32>
    %83 = vector.multi_reduction <add>, %82, %cst_24 [2] : vector<4x8x8xf32> to vector<4x8xf32>
    %84 = vector.shape_cast %83 : vector<4x8xf32> to vector<4x8x1xf32>
    %85 = tpu.reciprocal %84 {approx = true} : vector<4x8x1xf32> -> vector<4x8x1xf32>
    %86 = vector.broadcast %85 : vector<4x8x1xf32> to vector<4x8x8xf32>
    %87 = arith.mulf %82, %86 : vector<4x8x8xf32>
    "tpu.trace_start"() <{level = 10 : i32, message = "bqk,bkd->bqd"}> : () -> ()
    %cst_25 = arith.constant dense<0.000000e+00> : vector<4x8x64xf32>
    %88 = tpu.matmul %87, %74, %cst_25 {dimension_numbers = #tpu.dot_dimension_numbers<[2], [1], [1], [2], [0, 0, 0, 1, 1, 2], [0], [0]>} : vector<4x8x8xf32>, vector<4x8x64xf32>, vector<4x8x64xf32> -> vector<4x8x64xf32>
    "tpu.trace_stop"() : () -> ()
    %89 = vector.shape_cast %4 : vector<1x64xf32> to vector<1x1x64xf32>
    %90 = vector.shape_cast %5 : vector<1x64xf32> to vector<1x1x64xf32>
    %cst_26 = arith.constant dense<0.000000e+00> : vector<4x8xf32>
    %91 = vector.multi_reduction <add>, %88, %cst_26 [2] : vector<4x8x64xf32> to vector<4x8xf32>
    %92 = vector.shape_cast %91 : vector<4x8xf32> to vector<4x8x1xf32>
    %cst_27 = arith.constant 6.400000e+01 : f32
    %93 = vector.broadcast %cst_27 : f32 to vector<4x8x1xf32>
    %94 = arith.divf %92, %93 : vector<4x8x1xf32>
    %95 = vector.broadcast %94 : vector<4x8x1xf32> to vector<4x8x64xf32>
    %96 = arith.subf %88, %95 : vector<4x8x64xf32>
    %97 = arith.mulf %96, %96 : vector<4x8x64xf32>
    %cst_28 = arith.constant dense<0.000000e+00> : vector<4x8xf32>
    %98 = vector.multi_reduction <add>, %97, %cst_28 [2] : vector<4x8x64xf32> to vector<4x8xf32>
    %99 = vector.shape_cast %98 : vector<4x8xf32> to vector<4x8x1xf32>
    %cst_29 = arith.constant 6.400000e+01 : f32
    %100 = vector.broadcast %cst_29 : f32 to vector<4x8x1xf32>
    %101 = arith.divf %99, %100 : vector<4x8x1xf32>
    %102 = vector.broadcast %94 : vector<4x8x1xf32> to vector<4x8x64xf32>
    %103 = arith.subf %88, %102 : vector<4x8x64xf32>
    %cst_30 = arith.constant 9.99999974E-6 : f32
    %104 = vector.broadcast %cst_30 : f32 to vector<4x8x1xf32>
    %105 = arith.addf %101, %104 : vector<4x8x1xf32>
    %106 = math.rsqrt %105 : vector<4x8x1xf32>
    %107 = vector.broadcast %106 : vector<4x8x1xf32> to vector<4x8x64xf32>
    %108 = arith.mulf %103, %107 : vector<4x8x64xf32>
    %109 = vector.broadcast %89 : vector<1x1x64xf32> to vector<4x8x64xf32>
    %110 = arith.mulf %108, %109 : vector<4x8x64xf32>
    %111 = vector.broadcast %90 : vector<1x1x64xf32> to vector<4x8x64xf32>
    %112 = arith.addf %110, %111 : vector<4x8x64xf32>
    %113 = vector.shape_cast %26 : vector<32x192xf32> to vector<4x8x192xf32>
    %c0_31 = arith.constant 0 : index
    %c0_32 = arith.constant 0 : index
    %114 = vector.load %arg3[%c0_31, %c0_32] : memref<64x192xf32, #tpu.memory_space<vmem>>, vector<64x192xf32>
    %cst_33 = arith.constant 0.000000e+00 : f32
    %115 = vector.broadcast %cst_33 : f32 to vector<4x64xf32>
    %cst_34 = arith.constant dense<0.000000e+00> : vector<4x192xf32>
    %116 = tpu.matmul %115, %114, %cst_34 {dimension_numbers = #tpu.dot_dimension_numbers<[1], [0], [0], [1], [0, 0, 1, 1], [], []>} : vector<4x64xf32>, vector<64x192xf32>, vector<4x192xf32> -> vector<4x192xf32>
    %117 = vector.broadcast %3 : vector<1x192xf32> to vector<4x192xf32>
    %118 = arith.addf %116, %117 : vector<4x192xf32>
    %119 = vector.extract_strided_slice %113 {offsets = [0, 0, 0], sizes = [4, 1, 96], strides = [1, 1, 1]} : vector<4x8x192xf32> to vector<4x1x96xf32>
    %120 = vector.shape_cast %119 : vector<4x1x96xf32> to vector<4x96xf32>
    %121 = vector.extract_strided_slice %113 {offsets = [0, 7, 96], sizes = [4, 1, 96], strides = [1, 1, 1]} : vector<4x8x192xf32> to vector<4x1x96xf32>
    %122 = vector.shape_cast %121 : vector<4x1x96xf32> to vector<4x96xf32>
    %123 = vector.extract_strided_slice %118 {offsets = [0, 0], sizes = [4, 96], strides = [1, 1]} : vector<4x192xf32> to vector<4x96xf32>
    %124 = vector.extract_strided_slice %118 {offsets = [0, 96], sizes = [4, 96], strides = [1, 1]} : vector<4x192xf32> to vector<4x96xf32>
    %125 = vector.extract_strided_slice %115 {offsets = [0, 0], sizes = [4, 32], strides = [1, 1]} : vector<4x64xf32> to vector<4x32xf32>
    %126 = vector.extract_strided_slice %115 {offsets = [0, 32], sizes = [4, 32], strides = [1, 1]} : vector<4x64xf32> to vector<4x32xf32>
    %127 = vector.extract_strided_slice %120 {offsets = [0, 0], sizes = [4, 32], strides = [1, 1]} : vector<4x96xf32> to vector<4x32xf32>
    %128 = vector.extract_strided_slice %123 {offsets = [0, 0], sizes = [4, 32], strides = [1, 1]} : vector<4x96xf32> to vector<4x32xf32>
    %129 = arith.addf %127, %128 : vector<4x32xf32>
    %130 = arith.negf %129 : vector<4x32xf32>
    %131 = math.exp %130 : vector<4x32xf32>
    %cst_35 = arith.constant 1.000000e+00 : f32
    %132 = vector.broadcast %cst_35 : f32 to vector<4x32xf32>
    %133 = arith.addf %132, %131 : vector<4x32xf32>
    %134 = arith.divf %132, %133 : vector<4x32xf32>
    %135 = vector.extract_strided_slice %120 {offsets = [0, 32], sizes = [4, 32], strides = [1, 1]} : vector<4x96xf32> to vector<4x32xf32>
    %136 = vector.extract_strided_slice %123 {offsets = [0, 32], sizes = [4, 32], strides = [1, 1]} : vector<4x96xf32> to vector<4x32xf32>
    %137 = arith.addf %135, %136 : vector<4x32xf32>
    %138 = arith.negf %137 : vector<4x32xf32>
    %139 = math.exp %138 : vector<4x32xf32>
    %cst_36 = arith.constant 1.000000e+00 : f32
    %140 = vector.broadcast %cst_36 : f32 to vector<4x32xf32>
    %141 = arith.addf %140, %139 : vector<4x32xf32>
    %142 = arith.divf %140, %141 : vector<4x32xf32>
    %143 = vector.extract_strided_slice %120 {offsets = [0, 64], sizes = [4, 32], strides = [1, 1]} : vector<4x96xf32> to vector<4x32xf32>
    %144 = vector.extract_strided_slice %123 {offsets = [0, 64], sizes = [4, 32], strides = [1, 1]} : vector<4x96xf32> to vector<4x32xf32>
    %145 = arith.mulf %134, %144 : vector<4x32xf32>
    %146 = arith.addf %143, %145 : vector<4x32xf32>
    %147 = math.tanh %146 : vector<4x32xf32>
    %cst_37 = arith.constant 1.000000e+00 : f32
    %148 = vector.broadcast %cst_37 : f32 to vector<4x32xf32>
    %149 = arith.subf %148, %142 : vector<4x32xf32>
    %150 = arith.mulf %149, %147 : vector<4x32xf32>
    %151 = arith.mulf %142, %125 : vector<4x32xf32>
    %152 = arith.addf %150, %151 : vector<4x32xf32>
    %153 = vector.extract_strided_slice %122 {offsets = [0, 0], sizes = [4, 32], strides = [1, 1]} : vector<4x96xf32> to vector<4x32xf32>
    %154 = vector.extract_strided_slice %124 {offsets = [0, 0], sizes = [4, 32], strides = [1, 1]} : vector<4x96xf32> to vector<4x32xf32>
    %155 = arith.addf %153, %154 : vector<4x32xf32>
    %156 = arith.negf %155 : vector<4x32xf32>
    %157 = math.exp %156 : vector<4x32xf32>
    %cst_38 = arith.constant 1.000000e+00 : f32
    %158 = vector.broadcast %cst_38 : f32 to vector<4x32xf32>
    %159 = arith.addf %158, %157 : vector<4x32xf32>
    %160 = arith.divf %158, %159 : vector<4x32xf32>
    %161 = vector.extract_strided_slice %122 {offsets = [0, 32], sizes = [4, 32], strides = [1, 1]} : vector<4x96xf32> to vector<4x32xf32>
    %162 = vector.extract_strided_slice %124 {offsets = [0, 32], sizes = [4, 32], strides = [1, 1]} : vector<4x96xf32> to vector<4x32xf32>
    %163 = arith.addf %161, %162 : vector<4x32xf32>
    %164 = arith.negf %163 : vector<4x32xf32>
    %165 = math.exp %164 : vector<4x32xf32>
    %cst_39 = arith.constant 1.000000e+00 : f32
    %166 = vector.broadcast %cst_39 : f32 to vector<4x32xf32>
    %167 = arith.addf %166, %165 : vector<4x32xf32>
    %168 = arith.divf %166, %167 : vector<4x32xf32>
    %169 = vector.extract_strided_slice %122 {offsets = [0, 64], sizes = [4, 32], strides = [1, 1]} : vector<4x96xf32> to vector<4x32xf32>
    %170 = vector.extract_strided_slice %124 {offsets = [0, 64], sizes = [4, 32], strides = [1, 1]} : vector<4x96xf32> to vector<4x32xf32>
    %171 = arith.mulf %160, %170 : vector<4x32xf32>
    %172 = arith.addf %169, %171 : vector<4x32xf32>
    %173 = math.tanh %172 : vector<4x32xf32>
    %cst_40 = arith.constant 1.000000e+00 : f32
    %174 = vector.broadcast %cst_40 : f32 to vector<4x32xf32>
    %175 = arith.subf %174, %168 : vector<4x32xf32>
    %176 = arith.mulf %175, %173 : vector<4x32xf32>
    %177 = arith.mulf %168, %126 : vector<4x32xf32>
    %178 = arith.addf %176, %177 : vector<4x32xf32>
    %179 = tpu.concatenate %152, %178 in 1 : vector<4x32xf32>, vector<4x32xf32> -> vector<4x64xf32>
    %cst_41 = arith.constant dense<0.000000e+00> : vector<4x192xf32>
    %180 = tpu.matmul %179, %114, %cst_41 {dimension_numbers = #tpu.dot_dimension_numbers<[1], [0], [0], [1], [0, 0, 1, 1], [], []>} : vector<4x64xf32>, vector<64x192xf32>, vector<4x192xf32> -> vector<4x192xf32>
    %181 = vector.broadcast %3 : vector<1x192xf32> to vector<4x192xf32>
    %182 = arith.addf %180, %181 : vector<4x192xf32>
    %183 = vector.extract_strided_slice %113 {offsets = [0, 1, 0], sizes = [4, 1, 96], strides = [1, 1, 1]} : vector<4x8x192xf32> to vector<4x1x96xf32>
    %184 = vector.shape_cast %183 : vector<4x1x96xf32> to vector<4x96xf32>
    %185 = vector.extract_strided_slice %113 {offsets = [0, 6, 96], sizes = [4, 1, 96], strides = [1, 1, 1]} : vector<4x8x192xf32> to vector<4x1x96xf32>
    %186 = vector.shape_cast %185 : vector<4x1x96xf32> to vector<4x96xf32>
    %187 = vector.extract_strided_slice %182 {offsets = [0, 0], sizes = [4, 96], strides = [1, 1]} : vector<4x192xf32> to vector<4x96xf32>
    %188 = vector.extract_strided_slice %182 {offsets = [0, 96], sizes = [4, 96], strides = [1, 1]} : vector<4x192xf32> to vector<4x96xf32>
    %189 = vector.extract_strided_slice %179 {offsets = [0, 0], sizes = [4, 32], strides = [1, 1]} : vector<4x64xf32> to vector<4x32xf32>
    %190 = vector.extract_strided_slice %179 {offsets = [0, 32], sizes = [4, 32], strides = [1, 1]} : vector<4x64xf32> to vector<4x32xf32>
    %191 = vector.extract_strided_slice %184 {offsets = [0, 0], sizes = [4, 32], strides = [1, 1]} : vector<4x96xf32> to vector<4x32xf32>
    %192 = vector.extract_strided_slice %187 {offsets = [0, 0], sizes = [4, 32], strides = [1, 1]} : vector<4x96xf32> to vector<4x32xf32>
    %193 = arith.addf %191, %192 : vector<4x32xf32>
    %194 = arith.negf %193 : vector<4x32xf32>
    %195 = math.exp %194 : vector<4x32xf32>
    %cst_42 = arith.constant 1.000000e+00 : f32
    %196 = vector.broadcast %cst_42 : f32 to vector<4x32xf32>
    %197 = arith.addf %196, %195 : vector<4x32xf32>
    %198 = arith.divf %196, %197 : vector<4x32xf32>
    %199 = vector.extract_strided_slice %184 {offsets = [0, 32], sizes = [4, 32], strides = [1, 1]} : vector<4x96xf32> to vector<4x32xf32>
    %200 = vector.extract_strided_slice %187 {offsets = [0, 32], sizes = [4, 32], strides = [1, 1]} : vector<4x96xf32> to vector<4x32xf32>
    %201 = arith.addf %199, %200 : vector<4x32xf32>
    %202 = arith.negf %201 : vector<4x32xf32>
    %203 = math.exp %202 : vector<4x32xf32>
    %cst_43 = arith.constant 1.000000e+00 : f32
    %204 = vector.broadcast %cst_43 : f32 to vector<4x32xf32>
    %205 = arith.addf %204, %203 : vector<4x32xf32>
    %206 = arith.divf %204, %205 : vector<4x32xf32>
    %207 = vector.extract_strided_slice %184 {offsets = [0, 64], sizes = [4, 32], strides = [1, 1]} : vector<4x96xf32> to vector<4x32xf32>
    %208 = vector.extract_strided_slice %187 {offsets = [0, 64], sizes = [4, 32], strides = [1, 1]} : vector<4x96xf32> to vector<4x32xf32>
    %209 = arith.mulf %198, %208 : vector<4x32xf32>
    %210 = arith.addf %207, %209 : vector<4x32xf32>
    %211 = math.tanh %210 : vector<4x32xf32>
    %cst_44 = arith.constant 1.000000e+00 : f32
    %212 = vector.broadcast %cst_44 : f32 to vector<4x32xf32>
    %213 = arith.subf %212, %206 : vector<4x32xf32>
    %214 = arith.mulf %213, %211 : vector<4x32xf32>
    %215 = arith.mulf %206, %189 : vector<4x32xf32>
    %216 = arith.addf %214, %215 : vector<4x32xf32>
    %217 = vector.extract_strided_slice %186 {offsets = [0, 0], sizes = [4, 32], strides = [1, 1]} : vector<4x96xf32> to vector<4x32xf32>
    %218 = vector.extract_strided_slice %188 {offsets = [0, 0], sizes = [4, 32], strides = [1, 1]} : vector<4x96xf32> to vector<4x32xf32>
    %219 = arith.addf %217, %218 : vector<4x32xf32>
    %220 = arith.negf %219 : vector<4x32xf32>
    %221 = math.exp %220 : vector<4x32xf32>
    %cst_45 = arith.constant 1.000000e+00 : f32
    %222 = vector.broadcast %cst_45 : f32 to vector<4x32xf32>
    %223 = arith.addf %222, %221 : vector<4x32xf32>
    %224 = arith.divf %222, %223 : vector<4x32xf32>
    %225 = vector.extract_strided_slice %186 {offsets = [0, 32], sizes = [4, 32], strides = [1, 1]} : vector<4x96xf32> to vector<4x32xf32>
    %226 = vector.extract_strided_slice %188 {offsets = [0, 32], sizes = [4, 32], strides = [1, 1]} : vector<4x96xf32> to vector<4x32xf32>
    %227 = arith.addf %225, %226 : vector<4x32xf32>
    %228 = arith.negf %227 : vector<4x32xf32>
    %229 = math.exp %228 : vector<4x32xf32>
    %cst_46 = arith.constant 1.000000e+00 : f32
    %230 = vector.broadcast %cst_46 : f32 to vector<4x32xf32>
    %231 = arith.addf %230, %229 : vector<4x32xf32>
    %232 = arith.divf %230, %231 : vector<4x32xf32>
    %233 = vector.extract_strided_slice %186 {offsets = [0, 64], sizes = [4, 32], strides = [1, 1]} : vector<4x96xf32> to vector<4x32xf32>
    %234 = vector.extract_strided_slice %188 {offsets = [0, 64], sizes = [4, 32], strides = [1, 1]} : vector<4x96xf32> to vector<4x32xf32>
    %235 = arith.mulf %224, %234 : vector<4x32xf32>
    %236 = arith.addf %233, %235 : vector<4x32xf32>
    %237 = math.tanh %236 : vector<4x32xf32>
    %cst_47 = arith.constant 1.000000e+00 : f32
    %238 = vector.broadcast %cst_47 : f32 to vector<4x32xf32>
    %239 = arith.subf %238, %232 : vector<4x32xf32>
    %240 = arith.mulf %239, %237 : vector<4x32xf32>
    %241 = arith.mulf %232, %190 : vector<4x32xf32>
    %242 = arith.addf %240, %241 : vector<4x32xf32>
    %243 = tpu.concatenate %216, %242 in 1 : vector<4x32xf32>, vector<4x32xf32> -> vector<4x64xf32>
    %cst_48 = arith.constant dense<0.000000e+00> : vector<4x192xf32>
    %244 = tpu.matmul %243, %114, %cst_48 {dimension_numbers = #tpu.dot_dimension_numbers<[1], [0], [0], [1], [0, 0, 1, 1], [], []>} : vector<4x64xf32>, vector<64x192xf32>, vector<4x192xf32> -> vector<4x192xf32>
    %245 = vector.broadcast %3 : vector<1x192xf32> to vector<4x192xf32>
    %246 = arith.addf %244, %245 : vector<4x192xf32>
    %247 = vector.extract_strided_slice %113 {offsets = [0, 2, 0], sizes = [4, 1, 96], strides = [1, 1, 1]} : vector<4x8x192xf32> to vector<4x1x96xf32>
    %248 = vector.shape_cast %247 : vector<4x1x96xf32> to vector<4x96xf32>
    %249 = vector.extract_strided_slice %113 {offsets = [0, 5, 96], sizes = [4, 1, 96], strides = [1, 1, 1]} : vector<4x8x192xf32> to vector<4x1x96xf32>
    %250 = vector.shape_cast %249 : vector<4x1x96xf32> to vector<4x96xf32>
    %251 = vector.extract_strided_slice %246 {offsets = [0, 0], sizes = [4, 96], strides = [1, 1]} : vector<4x192xf32> to vector<4x96xf32>
    %252 = vector.extract_strided_slice %246 {offsets = [0, 96], sizes = [4, 96], strides = [1, 1]} : vector<4x192xf32> to vector<4x96xf32>
    %253 = vector.extract_strided_slice %243 {offsets = [0, 0], sizes = [4, 32], strides = [1, 1]} : vector<4x64xf32> to vector<4x32xf32>
    %254 = vector.extract_strided_slice %243 {offsets = [0, 32], sizes = [4, 32], strides = [1, 1]} : vector<4x64xf32> to vector<4x32xf32>
    %255 = vector.extract_strided_slice %248 {offsets = [0, 0], sizes = [4, 32], strides = [1, 1]} : vector<4x96xf32> to vector<4x32xf32>
    %256 = vector.extract_strided_slice %251 {offsets = [0, 0], sizes = [4, 32], strides = [1, 1]} : vector<4x96xf32> to vector<4x32xf32>
    %257 = arith.addf %255, %256 : vector<4x32xf32>
    %258 = arith.negf %257 : vector<4x32xf32>
    %259 = math.exp %258 : vector<4x32xf32>
    %cst_49 = arith.constant 1.000000e+00 : f32
    %260 = vector.broadcast %cst_49 : f32 to vector<4x32xf32>
    %261 = arith.addf %260, %259 : vector<4x32xf32>
    %262 = arith.divf %260, %261 : vector<4x32xf32>
    %263 = vector.extract_strided_slice %248 {offsets = [0, 32], sizes = [4, 32], strides = [1, 1]} : vector<4x96xf32> to vector<4x32xf32>
    %264 = vector.extract_strided_slice %251 {offsets = [0, 32], sizes = [4, 32], strides = [1, 1]} : vector<4x96xf32> to vector<4x32xf32>
    %265 = arith.addf %263, %264 : vector<4x32xf32>
    %266 = arith.negf %265 : vector<4x32xf32>
    %267 = math.exp %266 : vector<4x32xf32>
    %cst_50 = arith.constant 1.000000e+00 : f32
    %268 = vector.broadcast %cst_50 : f32 to vector<4x32xf32>
    %269 = arith.addf %268, %267 : vector<4x32xf32>
    %270 = arith.divf %268, %269 : vector<4x32xf32>
    %271 = vector.extract_strided_slice %248 {offsets = [0, 64], sizes = [4, 32], strides = [1, 1]} : vector<4x96xf32> to vector<4x32xf32>
    %272 = vector.extract_strided_slice %251 {offsets = [0, 64], sizes = [4, 32], strides = [1, 1]} : vector<4x96xf32> to vector<4x32xf32>
    %273 = arith.mulf %262, %272 : vector<4x32xf32>
    %274 = arith.addf %271, %273 : vector<4x32xf32>
    %275 = math.tanh %274 : vector<4x32xf32>
    %cst_51 = arith.constant 1.000000e+00 : f32
    %276 = vector.broadcast %cst_51 : f32 to vector<4x32xf32>
    %277 = arith.subf %276, %270 : vector<4x32xf32>
    %278 = arith.mulf %277, %275 : vector<4x32xf32>
    %279 = arith.mulf %270, %253 : vector<4x32xf32>
    %280 = arith.addf %278, %279 : vector<4x32xf32>
    %281 = vector.extract_strided_slice %250 {offsets = [0, 0], sizes = [4, 32], strides = [1, 1]} : vector<4x96xf32> to vector<4x32xf32>
    %282 = vector.extract_strided_slice %252 {offsets = [0, 0], sizes = [4, 32], strides = [1, 1]} : vector<4x96xf32> to vector<4x32xf32>
    %283 = arith.addf %281, %282 : vector<4x32xf32>
    %284 = arith.negf %283 : vector<4x32xf32>
    %285 = math.exp %284 : vector<4x32xf32>
    %cst_52 = arith.constant 1.000000e+00 : f32
    %286 = vector.broadcast %cst_52 : f32 to vector<4x32xf32>
    %287 = arith.addf %286, %285 : vector<4x32xf32>
    %288 = arith.divf %286, %287 : vector<4x32xf32>
    %289 = vector.extract_strided_slice %250 {offsets = [0, 32], sizes = [4, 32], strides = [1, 1]} : vector<4x96xf32> to vector<4x32xf32>
    %290 = vector.extract_strided_slice %252 {offsets = [0, 32], sizes = [4, 32], strides = [1, 1]} : vector<4x96xf32> to vector<4x32xf32>
    %291 = arith.addf %289, %290 : vector<4x32xf32>
    %292 = arith.negf %291 : vector<4x32xf32>
    %293 = math.exp %292 : vector<4x32xf32>
    %cst_53 = arith.constant 1.000000e+00 : f32
    %294 = vector.broadcast %cst_53 : f32 to vector<4x32xf32>
    %295 = arith.addf %294, %293 : vector<4x32xf32>
    %296 = arith.divf %294, %295 : vector<4x32xf32>
    %297 = vector.extract_strided_slice %250 {offsets = [0, 64], sizes = [4, 32], strides = [1, 1]} : vector<4x96xf32> to vector<4x32xf32>
    %298 = vector.extract_strided_slice %252 {offsets = [0, 64], sizes = [4, 32], strides = [1, 1]} : vector<4x96xf32> to vector<4x32xf32>
    %299 = arith.mulf %288, %298 : vector<4x32xf32>
    %300 = arith.addf %297, %299 : vector<4x32xf32>
    %301 = math.tanh %300 : vector<4x32xf32>
    %cst_54 = arith.constant 1.000000e+00 : f32
    %302 = vector.broadcast %cst_54 : f32 to vector<4x32xf32>
    %303 = arith.subf %302, %296 : vector<4x32xf32>
    %304 = arith.mulf %303, %301 : vector<4x32xf32>
    %305 = arith.mulf %296, %254 : vector<4x32xf32>
    %306 = arith.addf %304, %305 : vector<4x32xf32>
    %307 = tpu.concatenate %280, %306 in 1 : vector<4x32xf32>, vector<4x32xf32> -> vector<4x64xf32>
    %cst_55 = arith.constant dense<0.000000e+00> : vector<4x192xf32>
    %308 = tpu.matmul %307, %114, %cst_55 {dimension_numbers = #tpu.dot_dimension_numbers<[1], [0], [0], [1], [0, 0, 1, 1], [], []>} : vector<4x64xf32>, vector<64x192xf32>, vector<4x192xf32> -> vector<4x192xf32>
    %309 = vector.broadcast %3 : vector<1x192xf32> to vector<4x192xf32>
    %310 = arith.addf %308, %309 : vector<4x192xf32>
    %311 = vector.extract_strided_slice %113 {offsets = [0, 3, 0], sizes = [4, 1, 96], strides = [1, 1, 1]} : vector<4x8x192xf32> to vector<4x1x96xf32>
    %312 = vector.shape_cast %311 : vector<4x1x96xf32> to vector<4x96xf32>
    %313 = vector.extract_strided_slice %113 {offsets = [0, 4, 96], sizes = [4, 1, 96], strides = [1, 1, 1]} : vector<4x8x192xf32> to vector<4x1x96xf32>
    %314 = vector.shape_cast %313 : vector<4x1x96xf32> to vector<4x96xf32>
    %315 = vector.extract_strided_slice %310 {offsets = [0, 0], sizes = [4, 96], strides = [1, 1]} : vector<4x192xf32> to vector<4x96xf32>
    %316 = vector.extract_strided_slice %310 {offsets = [0, 96], sizes = [4, 96], strides = [1, 1]} : vector<4x192xf32> to vector<4x96xf32>
    %317 = vector.extract_strided_slice %307 {offsets = [0, 0], sizes = [4, 32], strides = [1, 1]} : vector<4x64xf32> to vector<4x32xf32>
    %318 = vector.extract_strided_slice %307 {offsets = [0, 32], sizes = [4, 32], strides = [1, 1]} : vector<4x64xf32> to vector<4x32xf32>
    %319 = vector.extract_strided_slice %312 {offsets = [0, 0], sizes = [4, 32], strides = [1, 1]} : vector<4x96xf32> to vector<4x32xf32>
    %320 = vector.extract_strided_slice %315 {offsets = [0, 0], sizes = [4, 32], strides = [1, 1]} : vector<4x96xf32> to vector<4x32xf32>
    %321 = arith.addf %319, %320 : vector<4x32xf32>
    %322 = arith.negf %321 : vector<4x32xf32>
    %323 = math.exp %322 : vector<4x32xf32>
    %cst_56 = arith.constant 1.000000e+00 : f32
    %324 = vector.broadcast %cst_56 : f32 to vector<4x32xf32>
    %325 = arith.addf %324, %323 : vector<4x32xf32>
    %326 = arith.divf %324, %325 : vector<4x32xf32>
    %327 = vector.extract_strided_slice %312 {offsets = [0, 32], sizes = [4, 32], strides = [1, 1]} : vector<4x96xf32> to vector<4x32xf32>
    %328 = vector.extract_strided_slice %315 {offsets = [0, 32], sizes = [4, 32], strides = [1, 1]} : vector<4x96xf32> to vector<4x32xf32>
    %329 = arith.addf %327, %328 : vector<4x32xf32>
    %330 = arith.negf %329 : vector<4x32xf32>
    %331 = math.exp %330 : vector<4x32xf32>
    %cst_57 = arith.constant 1.000000e+00 : f32
    %332 = vector.broadcast %cst_57 : f32 to vector<4x32xf32>
    %333 = arith.addf %332, %331 : vector<4x32xf32>
    %334 = arith.divf %332, %333 : vector<4x32xf32>
    %335 = vector.extract_strided_slice %312 {offsets = [0, 64], sizes = [4, 32], strides = [1, 1]} : vector<4x96xf32> to vector<4x32xf32>
    %336 = vector.extract_strided_slice %315 {offsets = [0, 64], sizes = [4, 32], strides = [1, 1]} : vector<4x96xf32> to vector<4x32xf32>
    %337 = arith.mulf %326, %336 : vector<4x32xf32>
    %338 = arith.addf %335, %337 : vector<4x32xf32>
    %339 = math.tanh %338 : vector<4x32xf32>
    %cst_58 = arith.constant 1.000000e+00 : f32
    %340 = vector.broadcast %cst_58 : f32 to vector<4x32xf32>
    %341 = arith.subf %340, %334 : vector<4x32xf32>
    %342 = arith.mulf %341, %339 : vector<4x32xf32>
    %343 = arith.mulf %334, %317 : vector<4x32xf32>
    %344 = arith.addf %342, %343 : vector<4x32xf32>
    %345 = vector.extract_strided_slice %314 {offsets = [0, 0], sizes = [4, 32], strides = [1, 1]} : vector<4x96xf32> to vector<4x32xf32>
    %346 = vector.extract_strided_slice %316 {offsets = [0, 0], sizes = [4, 32], strides = [1, 1]} : vector<4x96xf32> to vector<4x32xf32>
    %347 = arith.addf %345, %346 : vector<4x32xf32>
    %348 = arith.negf %347 : vector<4x32xf32>
    %349 = math.exp %348 : vector<4x32xf32>
    %cst_59 = arith.constant 1.000000e+00 : f32
    %350 = vector.broadcast %cst_59 : f32 to vector<4x32xf32>
    %351 = arith.addf %350, %349 : vector<4x32xf32>
    %352 = arith.divf %350, %351 : vector<4x32xf32>
    %353 = vector.extract_strided_slice %314 {offsets = [0, 32], sizes = [4, 32], strides = [1, 1]} : vector<4x96xf32> to vector<4x32xf32>
    %354 = vector.extract_strided_slice %316 {offsets = [0, 32], sizes = [4, 32], strides = [1, 1]} : vector<4x96xf32> to vector<4x32xf32>
    %355 = arith.addf %353, %354 : vector<4x32xf32>
    %356 = arith.negf %355 : vector<4x32xf32>
    %357 = math.exp %356 : vector<4x32xf32>
    %cst_60 = arith.constant 1.000000e+00 : f32
    %358 = vector.broadcast %cst_60 : f32 to vector<4x32xf32>
    %359 = arith.addf %358, %357 : vector<4x32xf32>
    %360 = arith.divf %358, %359 : vector<4x32xf32>
    %361 = vector.extract_strided_slice %314 {offsets = [0, 64], sizes = [4, 32], strides = [1, 1]} : vector<4x96xf32> to vector<4x32xf32>
    %362 = vector.extract_strided_slice %316 {offsets = [0, 64], sizes = [4, 32], strides = [1, 1]} : vector<4x96xf32> to vector<4x32xf32>
    %363 = arith.mulf %352, %362 : vector<4x32xf32>
    %364 = arith.addf %361, %363 : vector<4x32xf32>
    %365 = math.tanh %364 : vector<4x32xf32>
    %cst_61 = arith.constant 1.000000e+00 : f32
    %366 = vector.broadcast %cst_61 : f32 to vector<4x32xf32>
    %367 = arith.subf %366, %360 : vector<4x32xf32>
    %368 = arith.mulf %367, %365 : vector<4x32xf32>
    %369 = arith.mulf %360, %318 : vector<4x32xf32>
    %370 = arith.addf %368, %369 : vector<4x32xf32>
    %371 = tpu.concatenate %344, %370 in 1 : vector<4x32xf32>, vector<4x32xf32> -> vector<4x64xf32>
    %cst_62 = arith.constant dense<0.000000e+00> : vector<4x192xf32>
    %372 = tpu.matmul %371, %114, %cst_62 {dimension_numbers = #tpu.dot_dimension_numbers<[1], [0], [0], [1], [0, 0, 1, 1], [], []>} : vector<4x64xf32>, vector<64x192xf32>, vector<4x192xf32> -> vector<4x192xf32>
    %373 = vector.broadcast %3 : vector<1x192xf32> to vector<4x192xf32>
    %374 = arith.addf %372, %373 : vector<4x192xf32>
    %375 = vector.extract_strided_slice %113 {offsets = [0, 4, 0], sizes = [4, 1, 96], strides = [1, 1, 1]} : vector<4x8x192xf32> to vector<4x1x96xf32>
    %376 = vector.shape_cast %375 : vector<4x1x96xf32> to vector<4x96xf32>
    %377 = vector.extract_strided_slice %113 {offsets = [0, 3, 96], sizes = [4, 1, 96], strides = [1, 1, 1]} : vector<4x8x192xf32> to vector<4x1x96xf32>
    %378 = vector.shape_cast %377 : vector<4x1x96xf32> to vector<4x96xf32>
    %379 = vector.extract_strided_slice %374 {offsets = [0, 0], sizes = [4, 96], strides = [1, 1]} : vector<4x192xf32> to vector<4x96xf32>
    %380 = vector.extract_strided_slice %374 {offsets = [0, 96], sizes = [4, 96], strides = [1, 1]} : vector<4x192xf32> to vector<4x96xf32>
    %381 = vector.extract_strided_slice %371 {offsets = [0, 0], sizes = [4, 32], strides = [1, 1]} : vector<4x64xf32> to vector<4x32xf32>
    %382 = vector.extract_strided_slice %371 {offsets = [0, 32], sizes = [4, 32], strides = [1, 1]} : vector<4x64xf32> to vector<4x32xf32>
    %383 = vector.extract_strided_slice %376 {offsets = [0, 0], sizes = [4, 32], strides = [1, 1]} : vector<4x96xf32> to vector<4x32xf32>
    %384 = vector.extract_strided_slice %379 {offsets = [0, 0], sizes = [4, 32], strides = [1, 1]} : vector<4x96xf32> to vector<4x32xf32>
    %385 = arith.addf %383, %384 : vector<4x32xf32>
    %386 = arith.negf %385 : vector<4x32xf32>
    %387 = math.exp %386 : vector<4x32xf32>
    %cst_63 = arith.constant 1.000000e+00 : f32
    %388 = vector.broadcast %cst_63 : f32 to vector<4x32xf32>
    %389 = arith.addf %388, %387 : vector<4x32xf32>
    %390 = arith.divf %388, %389 : vector<4x32xf32>
    %391 = vector.extract_strided_slice %376 {offsets = [0, 32], sizes = [4, 32], strides = [1, 1]} : vector<4x96xf32> to vector<4x32xf32>
    %392 = vector.extract_strided_slice %379 {offsets = [0, 32], sizes = [4, 32], strides = [1, 1]} : vector<4x96xf32> to vector<4x32xf32>
    %393 = arith.addf %391, %392 : vector<4x32xf32>
    %394 = arith.negf %393 : vector<4x32xf32>
    %395 = math.exp %394 : vector<4x32xf32>
    %cst_64 = arith.constant 1.000000e+00 : f32
    %396 = vector.broadcast %cst_64 : f32 to vector<4x32xf32>
    %397 = arith.addf %396, %395 : vector<4x32xf32>
    %398 = arith.divf %396, %397 : vector<4x32xf32>
    %399 = vector.extract_strided_slice %376 {offsets = [0, 64], sizes = [4, 32], strides = [1, 1]} : vector<4x96xf32> to vector<4x32xf32>
    %400 = vector.extract_strided_slice %379 {offsets = [0, 64], sizes = [4, 32], strides = [1, 1]} : vector<4x96xf32> to vector<4x32xf32>
    %401 = arith.mulf %390, %400 : vector<4x32xf32>
    %402 = arith.addf %399, %401 : vector<4x32xf32>
    %403 = math.tanh %402 : vector<4x32xf32>
    %cst_65 = arith.constant 1.000000e+00 : f32
    %404 = vector.broadcast %cst_65 : f32 to vector<4x32xf32>
    %405 = arith.subf %404, %398 : vector<4x32xf32>
    %406 = arith.mulf %405, %403 : vector<4x32xf32>
    %407 = arith.mulf %398, %381 : vector<4x32xf32>
    %408 = arith.addf %406, %407 : vector<4x32xf32>
    %409 = vector.extract_strided_slice %378 {offsets = [0, 0], sizes = [4, 32], strides = [1, 1]} : vector<4x96xf32> to vector<4x32xf32>
    %410 = vector.extract_strided_slice %380 {offsets = [0, 0], sizes = [4, 32], strides = [1, 1]} : vector<4x96xf32> to vector<4x32xf32>
    %411 = arith.addf %409, %410 : vector<4x32xf32>
    %412 = arith.negf %411 : vector<4x32xf32>
    %413 = math.exp %412 : vector<4x32xf32>
    %cst_66 = arith.constant 1.000000e+00 : f32
    %414 = vector.broadcast %cst_66 : f32 to vector<4x32xf32>
    %415 = arith.addf %414, %413 : vector<4x32xf32>
    %416 = arith.divf %414, %415 : vector<4x32xf32>
    %417 = vector.extract_strided_slice %378 {offsets = [0, 32], sizes = [4, 32], strides = [1, 1]} : vector<4x96xf32> to vector<4x32xf32>
    %418 = vector.extract_strided_slice %380 {offsets = [0, 32], sizes = [4, 32], strides = [1, 1]} : vector<4x96xf32> to vector<4x32xf32>
    %419 = arith.addf %417, %418 : vector<4x32xf32>
    %420 = arith.negf %419 : vector<4x32xf32>
    %421 = math.exp %420 : vector<4x32xf32>
    %cst_67 = arith.constant 1.000000e+00 : f32
    %422 = vector.broadcast %cst_67 : f32 to vector<4x32xf32>
    %423 = arith.addf %422, %421 : vector<4x32xf32>
    %424 = arith.divf %422, %423 : vector<4x32xf32>
    %425 = vector.extract_strided_slice %378 {offsets = [0, 64], sizes = [4, 32], strides = [1, 1]} : vector<4x96xf32> to vector<4x32xf32>
    %426 = vector.extract_strided_slice %380 {offsets = [0, 64], sizes = [4, 32], strides = [1, 1]} : vector<4x96xf32> to vector<4x32xf32>
    %427 = arith.mulf %416, %426 : vector<4x32xf32>
    %428 = arith.addf %425, %427 : vector<4x32xf32>
    %429 = math.tanh %428 : vector<4x32xf32>
    %cst_68 = arith.constant 1.000000e+00 : f32
    %430 = vector.broadcast %cst_68 : f32 to vector<4x32xf32>
    %431 = arith.subf %430, %424 : vector<4x32xf32>
    %432 = arith.mulf %431, %429 : vector<4x32xf32>
    %433 = arith.mulf %424, %382 : vector<4x32xf32>
    %434 = arith.addf %432, %433 : vector<4x32xf32>
    %435 = tpu.concatenate %408, %434 in 1 : vector<4x32xf32>, vector<4x32xf32> -> vector<4x64xf32>
    %cst_69 = arith.constant dense<0.000000e+00> : vector<4x192xf32>
    %436 = tpu.matmul %435, %114, %cst_69 {dimension_numbers = #tpu.dot_dimension_numbers<[1], [0], [0], [1], [0, 0, 1, 1], [], []>} : vector<4x64xf32>, vector<64x192xf32>, vector<4x192xf32> -> vector<4x192xf32>
    %437 = vector.broadcast %3 : vector<1x192xf32> to vector<4x192xf32>
    %438 = arith.addf %436, %437 : vector<4x192xf32>
    %439 = vector.extract_strided_slice %113 {offsets = [0, 5, 0], sizes = [4, 1, 96], strides = [1, 1, 1]} : vector<4x8x192xf32> to vector<4x1x96xf32>
    %440 = vector.shape_cast %439 : vector<4x1x96xf32> to vector<4x96xf32>
    %441 = vector.extract_strided_slice %113 {offsets = [0, 2, 96], sizes = [4, 1, 96], strides = [1, 1, 1]} : vector<4x8x192xf32> to vector<4x1x96xf32>
    %442 = vector.shape_cast %441 : vector<4x1x96xf32> to vector<4x96xf32>
    %443 = vector.extract_strided_slice %438 {offsets = [0, 0], sizes = [4, 96], strides = [1, 1]} : vector<4x192xf32> to vector<4x96xf32>
    %444 = vector.extract_strided_slice %438 {offsets = [0, 96], sizes = [4, 96], strides = [1, 1]} : vector<4x192xf32> to vector<4x96xf32>
    %445 = vector.extract_strided_slice %435 {offsets = [0, 0], sizes = [4, 32], strides = [1, 1]} : vector<4x64xf32> to vector<4x32xf32>
    %446 = vector.extract_strided_slice %435 {offsets = [0, 32], sizes = [4, 32], strides = [1, 1]} : vector<4x64xf32> to vector<4x32xf32>
    %447 = vector.extract_strided_slice %440 {offsets = [0, 0], sizes = [4, 32], strides = [1, 1]} : vector<4x96xf32> to vector<4x32xf32>
    %448 = vector.extract_strided_slice %443 {offsets = [0, 0], sizes = [4, 32], strides = [1, 1]} : vector<4x96xf32> to vector<4x32xf32>
    %449 = arith.addf %447, %448 : vector<4x32xf32>
    %450 = arith.negf %449 : vector<4x32xf32>
    %451 = math.exp %450 : vector<4x32xf32>
    %cst_70 = arith.constant 1.000000e+00 : f32
    %452 = vector.broadcast %cst_70 : f32 to vector<4x32xf32>
    %453 = arith.addf %452, %451 : vector<4x32xf32>
    %454 = arith.divf %452, %453 : vector<4x32xf32>
    %455 = vector.extract_strided_slice %440 {offsets = [0, 32], sizes = [4, 32], strides = [1, 1]} : vector<4x96xf32> to vector<4x32xf32>
    %456 = vector.extract_strided_slice %443 {offsets = [0, 32], sizes = [4, 32], strides = [1, 1]} : vector<4x96xf32> to vector<4x32xf32>
    %457 = arith.addf %455, %456 : vector<4x32xf32>
    %458 = arith.negf %457 : vector<4x32xf32>
    %459 = math.exp %458 : vector<4x32xf32>
    %cst_71 = arith.constant 1.000000e+00 : f32
    %460 = vector.broadcast %cst_71 : f32 to vector<4x32xf32>
    %461 = arith.addf %460, %459 : vector<4x32xf32>
    %462 = arith.divf %460, %461 : vector<4x32xf32>
    %463 = vector.extract_strided_slice %440 {offsets = [0, 64], sizes = [4, 32], strides = [1, 1]} : vector<4x96xf32> to vector<4x32xf32>
    %464 = vector.extract_strided_slice %443 {offsets = [0, 64], sizes = [4, 32], strides = [1, 1]} : vector<4x96xf32> to vector<4x32xf32>
    %465 = arith.mulf %454, %464 : vector<4x32xf32>
    %466 = arith.addf %463, %465 : vector<4x32xf32>
    %467 = math.tanh %466 : vector<4x32xf32>
    %cst_72 = arith.constant 1.000000e+00 : f32
    %468 = vector.broadcast %cst_72 : f32 to vector<4x32xf32>
    %469 = arith.subf %468, %462 : vector<4x32xf32>
    %470 = arith.mulf %469, %467 : vector<4x32xf32>
    %471 = arith.mulf %462, %445 : vector<4x32xf32>
    %472 = arith.addf %470, %471 : vector<4x32xf32>
    %473 = vector.extract_strided_slice %442 {offsets = [0, 0], sizes = [4, 32], strides = [1, 1]} : vector<4x96xf32> to vector<4x32xf32>
    %474 = vector.extract_strided_slice %444 {offsets = [0, 0], sizes = [4, 32], strides = [1, 1]} : vector<4x96xf32> to vector<4x32xf32>
    %475 = arith.addf %473, %474 : vector<4x32xf32>
    %476 = arith.negf %475 : vector<4x32xf32>
    %477 = math.exp %476 : vector<4x32xf32>
    %cst_73 = arith.constant 1.000000e+00 : f32
    %478 = vector.broadcast %cst_73 : f32 to vector<4x32xf32>
    %479 = arith.addf %478, %477 : vector<4x32xf32>
    %480 = arith.divf %478, %479 : vector<4x32xf32>
    %481 = vector.extract_strided_slice %442 {offsets = [0, 32], sizes = [4, 32], strides = [1, 1]} : vector<4x96xf32> to vector<4x32xf32>
    %482 = vector.extract_strided_slice %444 {offsets = [0, 32], sizes = [4, 32], strides = [1, 1]} : vector<4x96xf32> to vector<4x32xf32>
    %483 = arith.addf %481, %482 : vector<4x32xf32>
    %484 = arith.negf %483 : vector<4x32xf32>
    %485 = math.exp %484 : vector<4x32xf32>
    %cst_74 = arith.constant 1.000000e+00 : f32
    %486 = vector.broadcast %cst_74 : f32 to vector<4x32xf32>
    %487 = arith.addf %486, %485 : vector<4x32xf32>
    %488 = arith.divf %486, %487 : vector<4x32xf32>
    %489 = vector.extract_strided_slice %442 {offsets = [0, 64], sizes = [4, 32], strides = [1, 1]} : vector<4x96xf32> to vector<4x32xf32>
    %490 = vector.extract_strided_slice %444 {offsets = [0, 64], sizes = [4, 32], strides = [1, 1]} : vector<4x96xf32> to vector<4x32xf32>
    %491 = arith.mulf %480, %490 : vector<4x32xf32>
    %492 = arith.addf %489, %491 : vector<4x32xf32>
    %493 = math.tanh %492 : vector<4x32xf32>
    %cst_75 = arith.constant 1.000000e+00 : f32
    %494 = vector.broadcast %cst_75 : f32 to vector<4x32xf32>
    %495 = arith.subf %494, %488 : vector<4x32xf32>
    %496 = arith.mulf %495, %493 : vector<4x32xf32>
    %497 = arith.mulf %488, %446 : vector<4x32xf32>
    %498 = arith.addf %496, %497 : vector<4x32xf32>
    %499 = tpu.concatenate %472, %498 in 1 : vector<4x32xf32>, vector<4x32xf32> -> vector<4x64xf32>
    %cst_76 = arith.constant dense<0.000000e+00> : vector<4x192xf32>
    %500 = tpu.matmul %499, %114, %cst_76 {dimension_numbers = #tpu.dot_dimension_numbers<[1], [0], [0], [1], [0, 0, 1, 1], [], []>} : vector<4x64xf32>, vector<64x192xf32>, vector<4x192xf32> -> vector<4x192xf32>
    %501 = vector.broadcast %3 : vector<1x192xf32> to vector<4x192xf32>
    %502 = arith.addf %500, %501 : vector<4x192xf32>
    %503 = vector.extract_strided_slice %113 {offsets = [0, 6, 0], sizes = [4, 1, 96], strides = [1, 1, 1]} : vector<4x8x192xf32> to vector<4x1x96xf32>
    %504 = vector.shape_cast %503 : vector<4x1x96xf32> to vector<4x96xf32>
    %505 = vector.extract_strided_slice %113 {offsets = [0, 1, 96], sizes = [4, 1, 96], strides = [1, 1, 1]} : vector<4x8x192xf32> to vector<4x1x96xf32>
    %506 = vector.shape_cast %505 : vector<4x1x96xf32> to vector<4x96xf32>
    %507 = vector.extract_strided_slice %502 {offsets = [0, 0], sizes = [4, 96], strides = [1, 1]} : vector<4x192xf32> to vector<4x96xf32>
    %508 = vector.extract_strided_slice %502 {offsets = [0, 96], sizes = [4, 96], strides = [1, 1]} : vector<4x192xf32> to vector<4x96xf32>
    %509 = vector.extract_strided_slice %499 {offsets = [0, 0], sizes = [4, 32], strides = [1, 1]} : vector<4x64xf32> to vector<4x32xf32>
    %510 = vector.extract_strided_slice %499 {offsets = [0, 32], sizes = [4, 32], strides = [1, 1]} : vector<4x64xf32> to vector<4x32xf32>
    %511 = vector.extract_strided_slice %504 {offsets = [0, 0], sizes = [4, 32], strides = [1, 1]} : vector<4x96xf32> to vector<4x32xf32>
    %512 = vector.extract_strided_slice %507 {offsets = [0, 0], sizes = [4, 32], strides = [1, 1]} : vector<4x96xf32> to vector<4x32xf32>
    %513 = arith.addf %511, %512 : vector<4x32xf32>
    %514 = arith.negf %513 : vector<4x32xf32>
    %515 = math.exp %514 : vector<4x32xf32>
    %cst_77 = arith.constant 1.000000e+00 : f32
    %516 = vector.broadcast %cst_77 : f32 to vector<4x32xf32>
    %517 = arith.addf %516, %515 : vector<4x32xf32>
    %518 = arith.divf %516, %517 : vector<4x32xf32>
    %519 = vector.extract_strided_slice %504 {offsets = [0, 32], sizes = [4, 32], strides = [1, 1]} : vector<4x96xf32> to vector<4x32xf32>
    %520 = vector.extract_strided_slice %507 {offsets = [0, 32], sizes = [4, 32], strides = [1, 1]} : vector<4x96xf32> to vector<4x32xf32>
    %521 = arith.addf %519, %520 : vector<4x32xf32>
    %522 = arith.negf %521 : vector<4x32xf32>
    %523 = math.exp %522 : vector<4x32xf32>
    %cst_78 = arith.constant 1.000000e+00 : f32
    %524 = vector.broadcast %cst_78 : f32 to vector<4x32xf32>
    %525 = arith.addf %524, %523 : vector<4x32xf32>
    %526 = arith.divf %524, %525 : vector<4x32xf32>
    %527 = vector.extract_strided_slice %504 {offsets = [0, 64], sizes = [4, 32], strides = [1, 1]} : vector<4x96xf32> to vector<4x32xf32>
    %528 = vector.extract_strided_slice %507 {offsets = [0, 64], sizes = [4, 32], strides = [1, 1]} : vector<4x96xf32> to vector<4x32xf32>
    %529 = arith.mulf %518, %528 : vector<4x32xf32>
    %530 = arith.addf %527, %529 : vector<4x32xf32>
    %531 = math.tanh %530 : vector<4x32xf32>
    %cst_79 = arith.constant 1.000000e+00 : f32
    %532 = vector.broadcast %cst_79 : f32 to vector<4x32xf32>
    %533 = arith.subf %532, %526 : vector<4x32xf32>
    %534 = arith.mulf %533, %531 : vector<4x32xf32>
    %535 = arith.mulf %526, %509 : vector<4x32xf32>
    %536 = arith.addf %534, %535 : vector<4x32xf32>
    %537 = vector.extract_strided_slice %506 {offsets = [0, 0], sizes = [4, 32], strides = [1, 1]} : vector<4x96xf32> to vector<4x32xf32>
    %538 = vector.extract_strided_slice %508 {offsets = [0, 0], sizes = [4, 32], strides = [1, 1]} : vector<4x96xf32> to vector<4x32xf32>
    %539 = arith.addf %537, %538 : vector<4x32xf32>
    %540 = arith.negf %539 : vector<4x32xf32>
    %541 = math.exp %540 : vector<4x32xf32>
    %cst_80 = arith.constant 1.000000e+00 : f32
    %542 = vector.broadcast %cst_80 : f32 to vector<4x32xf32>
    %543 = arith.addf %542, %541 : vector<4x32xf32>
    %544 = arith.divf %542, %543 : vector<4x32xf32>
    %545 = vector.extract_strided_slice %506 {offsets = [0, 32], sizes = [4, 32], strides = [1, 1]} : vector<4x96xf32> to vector<4x32xf32>
    %546 = vector.extract_strided_slice %508 {offsets = [0, 32], sizes = [4, 32], strides = [1, 1]} : vector<4x96xf32> to vector<4x32xf32>
    %547 = arith.addf %545, %546 : vector<4x32xf32>
    %548 = arith.negf %547 : vector<4x32xf32>
    %549 = math.exp %548 : vector<4x32xf32>
    %cst_81 = arith.constant 1.000000e+00 : f32
    %550 = vector.broadcast %cst_81 : f32 to vector<4x32xf32>
    %551 = arith.addf %550, %549 : vector<4x32xf32>
    %552 = arith.divf %550, %551 : vector<4x32xf32>
    %553 = vector.extract_strided_slice %506 {offsets = [0, 64], sizes = [4, 32], strides = [1, 1]} : vector<4x96xf32> to vector<4x32xf32>
    %554 = vector.extract_strided_slice %508 {offsets = [0, 64], sizes = [4, 32], strides = [1, 1]} : vector<4x96xf32> to vector<4x32xf32>
    %555 = arith.mulf %544, %554 : vector<4x32xf32>
    %556 = arith.addf %553, %555 : vector<4x32xf32>
    %557 = math.tanh %556 : vector<4x32xf32>
    %cst_82 = arith.constant 1.000000e+00 : f32
    %558 = vector.broadcast %cst_82 : f32 to vector<4x32xf32>
    %559 = arith.subf %558, %552 : vector<4x32xf32>
    %560 = arith.mulf %559, %557 : vector<4x32xf32>
    %561 = arith.mulf %552, %510 : vector<4x32xf32>
    %562 = arith.addf %560, %561 : vector<4x32xf32>
    %563 = tpu.concatenate %536, %562 in 1 : vector<4x32xf32>, vector<4x32xf32> -> vector<4x64xf32>
    %cst_83 = arith.constant dense<0.000000e+00> : vector<4x192xf32>
    %564 = tpu.matmul %563, %114, %cst_83 {dimension_numbers = #tpu.dot_dimension_numbers<[1], [0], [0], [1], [0, 0, 1, 1], [], []>} : vector<4x64xf32>, vector<64x192xf32>, vector<4x192xf32> -> vector<4x192xf32>
    %565 = vector.broadcast %3 : vector<1x192xf32> to vector<4x192xf32>
    %566 = arith.addf %564, %565 : vector<4x192xf32>
    %567 = vector.extract_strided_slice %113 {offsets = [0, 7, 0], sizes = [4, 1, 96], strides = [1, 1, 1]} : vector<4x8x192xf32> to vector<4x1x96xf32>
    %568 = vector.shape_cast %567 : vector<4x1x96xf32> to vector<4x96xf32>
    %569 = vector.extract_strided_slice %113 {offsets = [0, 0, 96], sizes = [4, 1, 96], strides = [1, 1, 1]} : vector<4x8x192xf32> to vector<4x1x96xf32>
    %570 = vector.shape_cast %569 : vector<4x1x96xf32> to vector<4x96xf32>
    %571 = vector.extract_strided_slice %566 {offsets = [0, 0], sizes = [4, 96], strides = [1, 1]} : vector<4x192xf32> to vector<4x96xf32>
    %572 = vector.extract_strided_slice %566 {offsets = [0, 96], sizes = [4, 96], strides = [1, 1]} : vector<4x192xf32> to vector<4x96xf32>
    %573 = vector.extract_strided_slice %563 {offsets = [0, 0], sizes = [4, 32], strides = [1, 1]} : vector<4x64xf32> to vector<4x32xf32>
    %574 = vector.extract_strided_slice %563 {offsets = [0, 32], sizes = [4, 32], strides = [1, 1]} : vector<4x64xf32> to vector<4x32xf32>
    %575 = vector.extract_strided_slice %568 {offsets = [0, 0], sizes = [4, 32], strides = [1, 1]} : vector<4x96xf32> to vector<4x32xf32>
    %576 = vector.extract_strided_slice %571 {offsets = [0, 0], sizes = [4, 32], strides = [1, 1]} : vector<4x96xf32> to vector<4x32xf32>
    %577 = arith.addf %575, %576 : vector<4x32xf32>
    %578 = arith.negf %577 : vector<4x32xf32>
    %579 = math.exp %578 : vector<4x32xf32>
    %cst_84 = arith.constant 1.000000e+00 : f32
    %580 = vector.broadcast %cst_84 : f32 to vector<4x32xf32>
    %581 = arith.addf %580, %579 : vector<4x32xf32>
    %582 = arith.divf %580, %581 : vector<4x32xf32>
    %583 = vector.extract_strided_slice %568 {offsets = [0, 32], sizes = [4, 32], strides = [1, 1]} : vector<4x96xf32> to vector<4x32xf32>
    %584 = vector.extract_strided_slice %571 {offsets = [0, 32], sizes = [4, 32], strides = [1, 1]} : vector<4x96xf32> to vector<4x32xf32>
    %585 = arith.addf %583, %584 : vector<4x32xf32>
    %586 = arith.negf %585 : vector<4x32xf32>
    %587 = math.exp %586 : vector<4x32xf32>
    %cst_85 = arith.constant 1.000000e+00 : f32
    %588 = vector.broadcast %cst_85 : f32 to vector<4x32xf32>
    %589 = arith.addf %588, %587 : vector<4x32xf32>
    %590 = arith.divf %588, %589 : vector<4x32xf32>
    %591 = vector.extract_strided_slice %568 {offsets = [0, 64], sizes = [4, 32], strides = [1, 1]} : vector<4x96xf32> to vector<4x32xf32>
    %592 = vector.extract_strided_slice %571 {offsets = [0, 64], sizes = [4, 32], strides = [1, 1]} : vector<4x96xf32> to vector<4x32xf32>
    %593 = arith.mulf %582, %592 : vector<4x32xf32>
    %594 = arith.addf %591, %593 : vector<4x32xf32>
    %595 = math.tanh %594 : vector<4x32xf32>
    %cst_86 = arith.constant 1.000000e+00 : f32
    %596 = vector.broadcast %cst_86 : f32 to vector<4x32xf32>
    %597 = arith.subf %596, %590 : vector<4x32xf32>
    %598 = arith.mulf %597, %595 : vector<4x32xf32>
    %599 = arith.mulf %590, %573 : vector<4x32xf32>
    %600 = arith.addf %598, %599 : vector<4x32xf32>
    %601 = vector.extract_strided_slice %570 {offsets = [0, 0], sizes = [4, 32], strides = [1, 1]} : vector<4x96xf32> to vector<4x32xf32>
    %602 = vector.extract_strided_slice %572 {offsets = [0, 0], sizes = [4, 32], strides = [1, 1]} : vector<4x96xf32> to vector<4x32xf32>
    %603 = arith.addf %601, %602 : vector<4x32xf32>
    %604 = arith.negf %603 : vector<4x32xf32>
    %605 = math.exp %604 : vector<4x32xf32>
    %cst_87 = arith.constant 1.000000e+00 : f32
    %606 = vector.broadcast %cst_87 : f32 to vector<4x32xf32>
    %607 = arith.addf %606, %605 : vector<4x32xf32>
    %608 = arith.divf %606, %607 : vector<4x32xf32>
    %609 = vector.extract_strided_slice %570 {offsets = [0, 32], sizes = [4, 32], strides = [1, 1]} : vector<4x96xf32> to vector<4x32xf32>
    %610 = vector.extract_strided_slice %572 {offsets = [0, 32], sizes = [4, 32], strides = [1, 1]} : vector<4x96xf32> to vector<4x32xf32>
    %611 = arith.addf %609, %610 : vector<4x32xf32>
    %612 = arith.negf %611 : vector<4x32xf32>
    %613 = math.exp %612 : vector<4x32xf32>
    %cst_88 = arith.constant 1.000000e+00 : f32
    %614 = vector.broadcast %cst_88 : f32 to vector<4x32xf32>
    %615 = arith.addf %614, %613 : vector<4x32xf32>
    %616 = arith.divf %614, %615 : vector<4x32xf32>
    %617 = vector.extract_strided_slice %570 {offsets = [0, 64], sizes = [4, 32], strides = [1, 1]} : vector<4x96xf32> to vector<4x32xf32>
    %618 = vector.extract_strided_slice %572 {offsets = [0, 64], sizes = [4, 32], strides = [1, 1]} : vector<4x96xf32> to vector<4x32xf32>
    %619 = arith.mulf %608, %618 : vector<4x32xf32>
    %620 = arith.addf %617, %619 : vector<4x32xf32>
    %621 = math.tanh %620 : vector<4x32xf32>
    %cst_89 = arith.constant 1.000000e+00 : f32
    %622 = vector.broadcast %cst_89 : f32 to vector<4x32xf32>
    %623 = arith.subf %622, %616 : vector<4x32xf32>
    %624 = arith.mulf %623, %621 : vector<4x32xf32>
    %625 = arith.mulf %616, %574 : vector<4x32xf32>
    %626 = arith.addf %624, %625 : vector<4x32xf32>
    %627 = vector.shape_cast %152 : vector<4x32xf32> to vector<4x1x32xf32>
    %628 = vector.shape_cast %216 : vector<4x32xf32> to vector<4x1x32xf32>
    %629 = vector.shape_cast %280 : vector<4x32xf32> to vector<4x1x32xf32>
    %630 = vector.shape_cast %344 : vector<4x32xf32> to vector<4x1x32xf32>
    %631 = vector.shape_cast %408 : vector<4x32xf32> to vector<4x1x32xf32>
    %632 = vector.shape_cast %472 : vector<4x32xf32> to vector<4x1x32xf32>
    %633 = vector.shape_cast %536 : vector<4x32xf32> to vector<4x1x32xf32>
    %634 = vector.shape_cast %600 : vector<4x32xf32> to vector<4x1x32xf32>
    %635 = tpu.concatenate %627, %628, %629, %630, %631, %632, %633, %634 in 1 : vector<4x1x32xf32>, vector<4x1x32xf32>, vector<4x1x32xf32>, vector<4x1x32xf32>, vector<4x1x32xf32>, vector<4x1x32xf32>, vector<4x1x32xf32>, vector<4x1x32xf32> -> vector<4x8x32xf32>
    %636 = vector.shape_cast %626 : vector<4x32xf32> to vector<4x1x32xf32>
    %637 = vector.shape_cast %562 : vector<4x32xf32> to vector<4x1x32xf32>
    %638 = vector.shape_cast %498 : vector<4x32xf32> to vector<4x1x32xf32>
    %639 = vector.shape_cast %434 : vector<4x32xf32> to vector<4x1x32xf32>
    %640 = vector.shape_cast %370 : vector<4x32xf32> to vector<4x1x32xf32>
    %641 = vector.shape_cast %306 : vector<4x32xf32> to vector<4x1x32xf32>
    %642 = vector.shape_cast %242 : vector<4x32xf32> to vector<4x1x32xf32>
    %643 = vector.shape_cast %178 : vector<4x32xf32> to vector<4x1x32xf32>
    %644 = tpu.concatenate %636, %637, %638, %639, %640, %641, %642, %643 in 1 : vector<4x1x32xf32>, vector<4x1x32xf32>, vector<4x1x32xf32>, vector<4x1x32xf32>, vector<4x1x32xf32>, vector<4x1x32xf32>, vector<4x1x32xf32>, vector<4x1x32xf32> -> vector<4x8x32xf32>
    %645 = tpu.concatenate %635, %644 in 2 : vector<4x8x32xf32>, vector<4x8x32xf32> -> vector<4x8x64xf32>
    %646 = vector.shape_cast %6 : vector<1x64xf32> to vector<1x1x64xf32>
    %647 = vector.broadcast %646 : vector<1x1x64xf32> to vector<4x8x64xf32>
    %648 = arith.mulf %645, %647 : vector<4x8x64xf32>
    %cst_90 = arith.constant dense<0.000000e+00> : vector<4x8xf32>
    %649 = vector.multi_reduction <add>, %648, %cst_90 [2] : vector<4x8x64xf32> to vector<4x8xf32>
    %650 = vector.shape_cast %649 : vector<4x8xf32> to vector<4x8x1xf32>
    %cst_91 = arith.constant dense<0xFF800000> : vector<4x1xf32>
    %651 = vector.multi_reduction <maximumf>, %650, %cst_91 [1] : vector<4x8x1xf32> to vector<4x1xf32>
    %652 = vector.shape_cast %651 : vector<4x1xf32> to vector<4x1x1xf32>
    %653 = vector.broadcast %652 : vector<4x1x1xf32> to vector<4x8x1xf32>
    %654 = arith.subf %650, %653 : vector<4x8x1xf32>
    %655 = math.exp %654 : vector<4x8x1xf32>
    %cst_92 = arith.constant dense<0.000000e+00> : vector<4x1xf32>
    %656 = vector.multi_reduction <add>, %655, %cst_92 [1] : vector<4x8x1xf32> to vector<4x1xf32>
    %657 = vector.shape_cast %656 : vector<4x1xf32> to vector<4x1x1xf32>
    %658 = tpu.reciprocal %657 {approx = true} : vector<4x1x1xf32> -> vector<4x1x1xf32>
    %659 = vector.broadcast %658 : vector<4x1x1xf32> to vector<4x8x1xf32>
    %660 = arith.mulf %655, %659 : vector<4x8x1xf32>
    %661 = vector.broadcast %660 : vector<4x8x1xf32> to vector<4x8x64xf32>
    %662 = arith.mulf %645, %661 : vector<4x8x64xf32>
    %663 = vector.shape_cast %662 : vector<4x8x64xf32> to vector<32x64xf32>
    %c0_93 = arith.constant 0 : index
    %c0_94 = arith.constant 0 : index
    %664 = vector.load %arg4[%c0_93, %c0_94] : memref<64x64xf32, #tpu.memory_space<vmem>>, vector<64x64xf32>
    %cst_95 = arith.constant dense<0.000000e+00> : vector<32x64xf32>
    %665 = tpu.matmul %663, %664, %cst_95 {dimension_numbers = #tpu.dot_dimension_numbers<[1], [0], [0], [1], [0, 0, 1, 1], [], []>} : vector<32x64xf32>, vector<64x64xf32>, vector<32x64xf32> -> vector<32x64xf32>
    %666 = vector.broadcast %7 : vector<1x64xf32> to vector<32x64xf32>
    %667 = arith.addf %665, %666 : vector<32x64xf32>
    %cst_96 = arith.constant 5.000000e-01 : f32
    %668 = vector.broadcast %cst_96 : f32 to vector<32x64xf32>
    %669 = arith.mulf %668, %667 : vector<32x64xf32>
    %cst_97 = arith.constant 0.707106769 : f32
    %670 = vector.broadcast %cst_97 : f32 to vector<32x64xf32>
    %671 = arith.mulf %667, %670 : vector<32x64xf32>
    %cst_98 = arith.constant 0.000000e+00 : f32
    %672 = vector.broadcast %cst_98 : f32 to vector<32x64xf32>
    %673 = arith.cmpf olt, %671, %672 : vector<32x64xf32>
    %cst_99 = arith.constant -1.000000e+00 : f32
    %cst_100 = arith.constant 1.000000e+00 : f32
    %674 = vector.broadcast %cst_99 : f32 to vector<32x64xf32>
    %675 = vector.broadcast %cst_100 : f32 to vector<32x64xf32>
    %676 = arith.select %673, %674, %675 : vector<32x64xi1>, vector<32x64xf32>
    %677 = math.absf %671 : vector<32x64xf32>
    %cst_101 = arith.constant 0.327591091 : f32
    %678 = vector.broadcast %cst_101 : f32 to vector<32x64xf32>
    %679 = arith.mulf %678, %677 : vector<32x64xf32>
    %cst_102 = arith.constant 1.000000e+00 : f32
    %680 = vector.broadcast %cst_102 : f32 to vector<32x64xf32>
    %681 = arith.addf %680, %679 : vector<32x64xf32>
    %cst_103 = arith.constant 1.000000e+00 : f32
    %682 = vector.broadcast %cst_103 : f32 to vector<32x64xf32>
    %683 = arith.divf %682, %681 : vector<32x64xf32>
    %cst_104 = arith.constant 1.06140542 : f32
    %684 = vector.broadcast %cst_104 : f32 to vector<32x64xf32>
    %685 = arith.mulf %683, %684 : vector<32x64xf32>
    %cst_105 = arith.constant -1.45315206 : f32
    %686 = vector.broadcast %cst_105 : f32 to vector<32x64xf32>
    %687 = arith.addf %686, %685 : vector<32x64xf32>
    %688 = arith.mulf %683, %687 : vector<32x64xf32>
    %cst_106 = arith.constant 1.42141378 : f32
    %689 = vector.broadcast %cst_106 : f32 to vector<32x64xf32>
    %690 = arith.addf %689, %688 : vector<32x64xf32>
    %691 = arith.mulf %683, %690 : vector<32x64xf32>
    %cst_107 = arith.constant -0.284496725 : f32
    %692 = vector.broadcast %cst_107 : f32 to vector<32x64xf32>
    %693 = arith.addf %692, %691 : vector<32x64xf32>
    %694 = arith.mulf %683, %693 : vector<32x64xf32>
    %cst_108 = arith.constant 0.254829586 : f32
    %695 = vector.broadcast %cst_108 : f32 to vector<32x64xf32>
    %696 = arith.addf %695, %694 : vector<32x64xf32>
    %697 = arith.mulf %683, %696 : vector<32x64xf32>
    %698 = arith.mulf %677, %677 : vector<32x64xf32>
    %cst_109 = arith.constant 0.000000e+00 : f32
    %699 = vector.broadcast %cst_109 : f32 to vector<32x64xf32>
    %700 = arith.subf %699, %698 : vector<32x64xf32>
    %701 = math.exp %700 : vector<32x64xf32>
    %702 = arith.mulf %697, %701 : vector<32x64xf32>
    %cst_110 = arith.constant 1.000000e+00 : f32
    %703 = vector.broadcast %cst_110 : f32 to vector<32x64xf32>
    %704 = arith.subf %703, %702 : vector<32x64xf32>
    %705 = arith.mulf %676, %704 : vector<32x64xf32>
    %cst_111 = arith.constant 1.000000e+00 : f32
    %706 = vector.broadcast %cst_111 : f32 to vector<32x64xf32>
    %707 = arith.addf %706, %705 : vector<32x64xf32>
    %708 = arith.mulf %669, %707 : vector<32x64xf32>
    %c0_112 = arith.constant 0 : index
    %c0_113 = arith.constant 0 : index
    %709 = vector.load %arg5[%c0_112, %c0_113] : memref<64x128xf32, #tpu.memory_space<vmem>>, vector<64x128xf32>
    %cst_114 = arith.constant dense<0.000000e+00> : vector<32x128xf32>
    %710 = tpu.matmul %708, %709, %cst_114 {dimension_numbers = #tpu.dot_dimension_numbers<[1], [0], [0], [1], [0, 0, 1, 1], [], []>} : vector<32x64xf32>, vector<64x128xf32>, vector<32x128xf32> -> vector<32x128xf32>
    %711 = vector.broadcast %12 : vector<1x128xf32> to vector<32x128xf32>
    %712 = arith.addf %710, %711 : vector<32x128xf32>
    %713 = vector.shape_cast %712 : vector<32x128xf32> to vector<4x8x128xf32>
    %cst_115 = arith.constant dense<0xFF800000> : vector<4x128xf32>
    %714 = vector.multi_reduction <maximumf>, %713, %cst_115 [1] : vector<4x8x128xf32> to vector<4x128xf32>
    %c0_116 = arith.constant 0 : index
    %c0_117 = arith.constant 0 : index
    %715 = vector.load %arg11[%c0_116, %c0_117] : memref<4x128xf32, #tpu.memory_space<vmem>>, vector<4x128xf32>
    tpu.vector_store %arg11[%c0_116, %c0_117], %714 {strides = array<i32>} : memref<4x128xf32, #tpu.memory_space<vmem>>, vector<4x128xf32>,
    %716 = vector.extract_strided_slice %714 {offsets = [0, 0], sizes = [4, 2], strides = [1, 1]} : vector<4x128xf32> to vector<4x2xf32>
    %c0_118 = arith.constant 0 : index
    %c0_119 = arith.constant 0 : index
    %717 = vector.load %arg1[%c0_118, %c0_119] : memref<4x2xf32, #tpu.memory_space<vmem>>, vector<4x2xf32>
    %718 = arith.addf %716, %717 : vector<4x2xf32>
    %719 = vector.extract_strided_slice %718 {offsets = [0, 0], sizes = [4, 1], strides = [1, 1]} : vector<4x2xf32> to vector<4x1xf32>
    %720 = vector.extract_strided_slice %718 {offsets = [0, 1], sizes = [4, 1], strides = [1, 1]} : vector<4x2xf32> to vector<4x1xf32>
    %721 = arith.cmpf oge, %719, %720 : vector<4x1xf32>
    %722 = arith.extui %721 : vector<4x1xi1> to vector<4x1xi32>
    %723 = arith.sitofp %722 : vector<4x1xi32> to vector<4x1xf32>
    %724 = vector.broadcast %723 : vector<4x1xf32> to vector<4x32xf32>
    %725 = vector.broadcast %15 : vector<1x32xf32> to vector<4x32xf32>
    %726 = arith.mulf %724, %725 : vector<4x32xf32>
    %cst_120 = arith.constant 1.000000e+00 : f32
    %727 = vector.broadcast %cst_120 : f32 to vector<4x1xf32>
    %728 = arith.subf %727, %723 : vector<4x1xf32>
    %729 = vector.broadcast %728 : vector<4x1xf32> to vector<4x32xf32>
    %730 = vector.broadcast %16 : vector<1x32xf32> to vector<4x32xf32>
    %731 = arith.mulf %729, %730 : vector<4x32xf32>
    %732 = arith.addf %726, %731 : vector<4x32xf32>
    %733 = vector.broadcast %9 : vector<1x32xf32> to vector<4x32xf32>
    %734 = arith.addf %732, %733 : vector<4x32xf32>
    %cst_121 = arith.constant dense<0.000000e+00> : vector<4xf32>
    %735 = vector.multi_reduction <add>, %734, %cst_121 [1] : vector<4x32xf32> to vector<4xf32>
    %736 = vector.shape_cast %735 : vector<4xf32> to vector<4x1xf32>
    %cst_122 = arith.constant 3.200000e+01 : f32
    %737 = vector.broadcast %cst_122 : f32 to vector<4x1xf32>
    %738 = arith.divf %736, %737 : vector<4x1xf32>
    %739 = vector.broadcast %738 : vector<4x1xf32> to vector<4x32xf32>
    %740 = arith.subf %734, %739 : vector<4x32xf32>
    %741 = arith.mulf %740, %740 : vector<4x32xf32>
    %cst_123 = arith.constant dense<0.000000e+00> : vector<4xf32>
    %742 = vector.multi_reduction <add>, %741, %cst_123 [1] : vector<4x32xf32> to vector<4xf32>
    %743 = vector.shape_cast %742 : vector<4xf32> to vector<4x1xf32>
    %cst_124 = arith.constant 3.200000e+01 : f32
    %744 = vector.broadcast %cst_124 : f32 to vector<4x1xf32>
    %745 = arith.divf %743, %744 : vector<4x1xf32>
    %746 = vector.broadcast %738 : vector<4x1xf32> to vector<4x32xf32>
    %747 = arith.subf %734, %746 : vector<4x32xf32>
    %cst_125 = arith.constant 9.99999974E-6 : f32
    %748 = vector.broadcast %cst_125 : f32 to vector<4x1xf32>
    %749 = arith.addf %745, %748 : vector<4x1xf32>
    %750 = math.rsqrt %749 : vector<4x1xf32>
    %751 = vector.broadcast %750 : vector<4x1xf32> to vector<4x32xf32>
    %752 = arith.mulf %747, %751 : vector<4x32xf32>
    %753 = vector.broadcast %10 : vector<1x32xf32> to vector<4x32xf32>
    %754 = arith.mulf %752, %753 : vector<4x32xf32>
    %755 = vector.broadcast %11 : vector<1x32xf32> to vector<4x32xf32>
    %756 = arith.addf %754, %755 : vector<4x32xf32>
    %c0_126 = arith.constant 0 : index
    %c0_127 = arith.constant 0 : index
    %757 = vector.load %arg6[%c0_126, %c0_127] : memref<128x32xf32, #tpu.memory_space<vmem>>, vector<128x32xf32>
    %758 = vector.shape_cast %112 : vector<4x8x64xf32> to vector<32x64xf32>
    %759 = vector.extract_strided_slice %757 {offsets = [0, 0], sizes = [64, 32], strides = [1, 1]} : vector<128x32xf32> to vector<64x32xf32>
    %cst_128 = arith.constant dense<0.000000e+00> : vector<32x32xf32>
    %760 = tpu.matmul %758, %759, %cst_128 {dimension_numbers = #tpu.dot_dimension_numbers<[1], [0], [0], [1], [0, 0, 1, 1], [], []>} : vector<32x64xf32>, vector<64x32xf32>, vector<32x32xf32> -> vector<32x32xf32>
    %761 = vector.extract_strided_slice %757 {offsets = [64, 0], sizes = [64, 32], strides = [1, 1]} : vector<128x32xf32> to vector<64x32xf32>
    %cst_129 = arith.constant dense<0.000000e+00> : vector<32x32xf32>
    %762 = tpu.matmul %663, %761, %cst_129 {dimension_numbers = #tpu.dot_dimension_numbers<[1], [0], [0], [1], [0, 0, 1, 1], [], []>} : vector<32x64xf32>, vector<64x32xf32>, vector<32x32xf32> -> vector<32x32xf32>
    %763 = arith.addf %760, %762 : vector<32x32xf32>
    %764 = vector.broadcast %13 : vector<1x32xf32> to vector<32x32xf32>
    %765 = arith.addf %763, %764 : vector<32x32xf32>
    %766 = vector.shape_cast %765 : vector<32x32xf32> to vector<4x8x32xf32>
    %767 = vector.extract_strided_slice %766 {offsets = [0, 0, 0], sizes = [2, 8, 32], strides = [1, 1, 1]} : vector<4x8x32xf32> to vector<2x8x32xf32>
    %768 = vector.extract_strided_slice %766 {offsets = [2, 0, 0], sizes = [2, 8, 32], strides = [1, 1, 1]} : vector<4x8x32xf32> to vector<2x8x32xf32>
    %cst_130 = arith.constant 5.000000e-01 : f32
    %769 = vector.broadcast %cst_130 : f32 to vector<2x8x32xf32>
    %770 = arith.mulf %769, %767 : vector<2x8x32xf32>
    %cst_131 = arith.constant 0.707106769 : f32
    %771 = vector.broadcast %cst_131 : f32 to vector<2x8x32xf32>
    %772 = arith.mulf %767, %771 : vector<2x8x32xf32>
    %cst_132 = arith.constant 0.000000e+00 : f32
    %773 = vector.broadcast %cst_132 : f32 to vector<2x8x32xf32>
    %774 = arith.cmpf olt, %772, %773 : vector<2x8x32xf32>
    %cst_133 = arith.constant -1.000000e+00 : f32
    %cst_134 = arith.constant 1.000000e+00 : f32
    %775 = vector.broadcast %cst_133 : f32 to vector<2x8x32xf32>
    %776 = vector.broadcast %cst_134 : f32 to vector<2x8x32xf32>
    %777 = arith.select %774, %775, %776 : vector<2x8x32xi1>, vector<2x8x32xf32>
    %778 = math.absf %772 : vector<2x8x32xf32>
    %cst_135 = arith.constant 0.327591091 : f32
    %779 = vector.broadcast %cst_135 : f32 to vector<2x8x32xf32>
    %780 = arith.mulf %779, %778 : vector<2x8x32xf32>
    %cst_136 = arith.constant 1.000000e+00 : f32
    %781 = vector.broadcast %cst_136 : f32 to vector<2x8x32xf32>
    %782 = arith.addf %781, %780 : vector<2x8x32xf32>
    %cst_137 = arith.constant 1.000000e+00 : f32
    %783 = vector.broadcast %cst_137 : f32 to vector<2x8x32xf32>
    %784 = arith.divf %783, %782 : vector<2x8x32xf32>
    %cst_138 = arith.constant 1.06140542 : f32
    %785 = vector.broadcast %cst_138 : f32 to vector<2x8x32xf32>
    %786 = arith.mulf %784, %785 : vector<2x8x32xf32>
    %cst_139 = arith.constant -1.45315206 : f32
    %787 = vector.broadcast %cst_139 : f32 to vector<2x8x32xf32>
    %788 = arith.addf %787, %786 : vector<2x8x32xf32>
    %789 = arith.mulf %784, %788 : vector<2x8x32xf32>
    %cst_140 = arith.constant 1.42141378 : f32
    %790 = vector.broadcast %cst_140 : f32 to vector<2x8x32xf32>
    %791 = arith.addf %790, %789 : vector<2x8x32xf32>
    %792 = arith.mulf %784, %791 : vector<2x8x32xf32>
    %cst_141 = arith.constant -0.284496725 : f32
    %793 = vector.broadcast %cst_141 : f32 to vector<2x8x32xf32>
    %794 = arith.addf %793, %792 : vector<2x8x32xf32>
    %795 = arith.mulf %784, %794 : vector<2x8x32xf32>
    %cst_142 = arith.constant 0.254829586 : f32
    %796 = vector.broadcast %cst_142 : f32 to vector<2x8x32xf32>
    %797 = arith.addf %796, %795 : vector<2x8x32xf32>
    %798 = arith.mulf %784, %797 : vector<2x8x32xf32>
    %799 = arith.mulf %778, %778 : vector<2x8x32xf32>
    %cst_143 = arith.constant 0.000000e+00 : f32
    %800 = vector.broadcast %cst_143 : f32 to vector<2x8x32xf32>
    %801 = arith.subf %800, %799 : vector<2x8x32xf32>
    %802 = math.exp %801 : vector<2x8x32xf32>
    %803 = arith.mulf %798, %802 : vector<2x8x32xf32>
    %cst_144 = arith.constant 1.000000e+00 : f32
    %804 = vector.broadcast %cst_144 : f32 to vector<2x8x32xf32>
    %805 = arith.subf %804, %803 : vector<2x8x32xf32>
    %806 = arith.mulf %777, %805 : vector<2x8x32xf32>
    %cst_145 = arith.constant 1.000000e+00 : f32
    %807 = vector.broadcast %cst_145 : f32 to vector<2x8x32xf32>
    %808 = arith.addf %807, %806 : vector<2x8x32xf32>
    %809 = arith.mulf %770, %808 : vector<2x8x32xf32>
    %cst_146 = arith.constant 5.000000e-01 : f32
    %810 = vector.broadcast %cst_146 : f32 to vector<2x8x32xf32>
    %811 = arith.mulf %810, %768 : vector<2x8x32xf32>
    %cst_147 = arith.constant 0.707106769 : f32
    %812 = vector.broadcast %cst_147 : f32 to vector<2x8x32xf32>
    %813 = arith.mulf %768, %812 : vector<2x8x32xf32>
    %cst_148 = arith.constant 0.000000e+00 : f32
    %814 = vector.broadcast %cst_148 : f32 to vector<2x8x32xf32>
    %815 = arith.cmpf olt, %813, %814 : vector<2x8x32xf32>
    %cst_149 = arith.constant -1.000000e+00 : f32
    %cst_150 = arith.constant 1.000000e+00 : f32
    %816 = vector.broadcast %cst_149 : f32 to vector<2x8x32xf32>
    %817 = vector.broadcast %cst_150 : f32 to vector<2x8x32xf32>
    %818 = arith.select %815, %816, %817 : vector<2x8x32xi1>, vector<2x8x32xf32>
    %819 = math.absf %813 : vector<2x8x32xf32>
    %cst_151 = arith.constant 0.327591091 : f32
    %820 = vector.broadcast %cst_151 : f32 to vector<2x8x32xf32>
    %821 = arith.mulf %820, %819 : vector<2x8x32xf32>
    %cst_152 = arith.constant 1.000000e+00 : f32
    %822 = vector.broadcast %cst_152 : f32 to vector<2x8x32xf32>
    %823 = arith.addf %822, %821 : vector<2x8x32xf32>
    %cst_153 = arith.constant 1.000000e+00 : f32
    %824 = vector.broadcast %cst_153 : f32 to vector<2x8x32xf32>
    %825 = arith.divf %824, %823 : vector<2x8x32xf32>
    %cst_154 = arith.constant 1.06140542 : f32
    %826 = vector.broadcast %cst_154 : f32 to vector<2x8x32xf32>
    %827 = arith.mulf %825, %826 : vector<2x8x32xf32>
    %cst_155 = arith.constant -1.45315206 : f32
    %828 = vector.broadcast %cst_155 : f32 to vector<2x8x32xf32>
    %829 = arith.addf %828, %827 : vector<2x8x32xf32>
    %830 = arith.mulf %825, %829 : vector<2x8x32xf32>
    %cst_156 = arith.constant 1.42141378 : f32
    %831 = vector.broadcast %cst_156 : f32 to vector<2x8x32xf32>
    %832 = arith.addf %831, %830 : vector<2x8x32xf32>
    %833 = arith.mulf %825, %832 : vector<2x8x32xf32>
    %cst_157 = arith.constant -0.284496725 : f32
    %834 = vector.broadcast %cst_157 : f32 to vector<2x8x32xf32>
    %835 = arith.addf %834, %833 : vector<2x8x32xf32>
    %836 = arith.mulf %825, %835 : vector<2x8x32xf32>
    %cst_158 = arith.constant 0.254829586 : f32
    %837 = vector.broadcast %cst_158 : f32 to vector<2x8x32xf32>
    %838 = arith.addf %837, %836 : vector<2x8x32xf32>
    %839 = arith.mulf %825, %838 : vector<2x8x32xf32>
    %840 = arith.mulf %819, %819 : vector<2x8x32xf32>
    %cst_159 = arith.constant 0.000000e+00 : f32
    %841 = vector.broadcast %cst_159 : f32 to vector<2x8x32xf32>
    %842 = arith.subf %841, %840 : vector<2x8x32xf32>
    %843 = math.exp %842 : vector<2x8x32xf32>
    %844 = arith.mulf %839, %843 : vector<2x8x32xf32>
    %cst_160 = arith.constant 1.000000e+00 : f32
    %845 = vector.broadcast %cst_160 : f32 to vector<2x8x32xf32>
    %846 = arith.subf %845, %844 : vector<2x8x32xf32>
    %847 = arith.mulf %818, %846 : vector<2x8x32xf32>
    %cst_161 = arith.constant 1.000000e+00 : f32
    %848 = vector.broadcast %cst_161 : f32 to vector<2x8x32xf32>
    %849 = arith.addf %848, %847 : vector<2x8x32xf32>
    %850 = arith.mulf %811, %849 : vector<2x8x32xf32>
    %851 = vector.extract_strided_slice %809 {offsets = [0, 7, 0], sizes = [2, 1, 32], strides = [1, 1, 1]} : vector<2x8x32xf32> to vector<2x1x32xf32>
    "tpu.trace_start"() <{level = 10 : i32, message = "bqh,bkh->bqk"}> : () -> ()
    %cst_162 = arith.constant dense<0.000000e+00> : vector<2x1x8xf32>
    %852 = tpu.matmul %851, %850, %cst_162 {dimension_numbers = #tpu.dot_dimension_numbers<[2], [2], [1], [1], [0, 0, 0, 1, 1, 1], [0], [0]>} : vector<2x1x32xf32>, vector<2x8x32xf32>, vector<2x1x8xf32> -> vector<2x1x8xf32>
    "tpu.trace_stop"() : () -> ()
    %cst_163 = arith.constant dense<0xFF800000> : vector<2x1xf32>
    %853 = vector.multi_reduction <maximumf>, %852, %cst_163 [2] : vector<2x1x8xf32> to vector<2x1xf32>
    %854 = vector.shape_cast %853 : vector<2x1xf32> to vector<2x1x1xf32>
    %855 = vector.broadcast %854 : vector<2x1x1xf32> to vector<2x1x8xf32>
    %856 = arith.subf %852, %855 : vector<2x1x8xf32>
    %857 = math.exp %856 : vector<2x1x8xf32>
    %cst_164 = arith.constant dense<0.000000e+00> : vector<2x1xf32>
    %858 = vector.multi_reduction <add>, %857, %cst_164 [2] : vector<2x1x8xf32> to vector<2x1xf32>
    %859 = vector.shape_cast %858 : vector<2x1xf32> to vector<2x1x1xf32>
    %860 = tpu.reciprocal %859 {approx = true} : vector<2x1x1xf32> -> vector<2x1x1xf32>
    %861 = vector.broadcast %860 : vector<2x1x1xf32> to vector<2x1x8xf32>
    %862 = arith.mulf %857, %861 : vector<2x1x8xf32>
    "tpu.trace_start"() <{level = 10 : i32, message = "bqk,bkh->bqh"}> : () -> ()
    %cst_165 = arith.constant dense<0.000000e+00> : vector<2x1x32xf32>
    %863 = tpu.matmul %862, %768, %cst_165 {dimension_numbers = #tpu.dot_dimension_numbers<[2], [1], [1], [2], [0, 0, 0, 1, 1, 2], [0], [0]>} : vector<2x1x8xf32>, vector<2x8x32xf32>, vector<2x1x32xf32> -> vector<2x1x32xf32>
    "tpu.trace_stop"() : () -> ()
    %864 = vector.shape_cast %863 : vector<2x1x32xf32> to vector<2x32xf32>
    %865 = vector.extract_strided_slice %850 {offsets = [0, 7, 0], sizes = [2, 1, 32], strides = [1, 1, 1]} : vector<2x8x32xf32> to vector<2x1x32xf32>
    "tpu.trace_start"() <{level = 10 : i32, message = "bqh,bkh->bqk"}> : () -> ()
    %cst_166 = arith.constant dense<0.000000e+00> : vector<2x1x8xf32>
    %866 = tpu.matmul %865, %809, %cst_166 {dimension_numbers = #tpu.dot_dimension_numbers<[2], [2], [1], [1], [0, 0, 0, 1, 1, 1], [0], [0]>} : vector<2x1x32xf32>, vector<2x8x32xf32>, vector<2x1x8xf32> -> vector<2x1x8xf32>
    "tpu.trace_stop"() : () -> ()
    %cst_167 = arith.constant dense<0xFF800000> : vector<2x1xf32>
    %867 = vector.multi_reduction <maximumf>, %866, %cst_167 [2] : vector<2x1x8xf32> to vector<2x1xf32>
    %868 = vector.shape_cast %867 : vector<2x1xf32> to vector<2x1x1xf32>
    %869 = vector.broadcast %868 : vector<2x1x1xf32> to vector<2x1x8xf32>
    %870 = arith.subf %866, %869 : vector<2x1x8xf32>
    %871 = math.exp %870 : vector<2x1x8xf32>
    %cst_168 = arith.constant dense<0.000000e+00> : vector<2x1xf32>
    %872 = vector.multi_reduction <add>, %871, %cst_168 [2] : vector<2x1x8xf32> to vector<2x1xf32>
    %873 = vector.shape_cast %872 : vector<2x1xf32> to vector<2x1x1xf32>
    %874 = tpu.reciprocal %873 {approx = true} : vector<2x1x1xf32> -> vector<2x1x1xf32>
    %875 = vector.broadcast %874 : vector<2x1x1xf32> to vector<2x1x8xf32>
    %876 = arith.mulf %871, %875 : vector<2x1x8xf32>
    "tpu.trace_start"() <{level = 10 : i32, message = "bqk,bkh->bqh"}> : () -> ()
    %cst_169 = arith.constant dense<0.000000e+00> : vector<2x1x32xf32>
    %877 = tpu.matmul %876, %767, %cst_169 {dimension_numbers = #tpu.dot_dimension_numbers<[2], [1], [1], [2], [0, 0, 0, 1, 1, 2], [0], [0]>} : vector<2x1x8xf32>, vector<2x8x32xf32>, vector<2x1x32xf32> -> vector<2x1x32xf32>
    "tpu.trace_stop"() : () -> ()
    %878 = vector.shape_cast %877 : vector<2x1x32xf32> to vector<2x32xf32>
    %879 = vector.extract_strided_slice %756 {offsets = [0, 0], sizes = [2, 32], strides = [1, 1]} : vector<4x32xf32> to vector<2x32xf32>
    %880 = vector.extract_strided_slice %756 {offsets = [2, 0], sizes = [2, 32], strides = [1, 1]} : vector<4x32xf32> to vector<2x32xf32>
    %881 = tpu.concatenate %864, %879, %878, %880, %70 in 1 : vector<2x32xf32>, vector<2x32xf32>, vector<2x32xf32>, vector<2x32xf32>, vector<2x32xf32> -> vector<2x160xf32>
    %cst_170 = arith.constant 5.000000e-01 : f32
    %882 = vector.broadcast %cst_170 : f32 to vector<2x160xf32>
    %883 = arith.mulf %882, %881 : vector<2x160xf32>
    %cst_171 = arith.constant 0.707106769 : f32
    %884 = vector.broadcast %cst_171 : f32 to vector<2x160xf32>
    %885 = arith.mulf %881, %884 : vector<2x160xf32>
    %cst_172 = arith.constant 0.000000e+00 : f32
    %886 = vector.broadcast %cst_172 : f32 to vector<2x160xf32>
    %887 = arith.cmpf olt, %885, %886 : vector<2x160xf32>
    %cst_173 = arith.constant -1.000000e+00 : f32
    %cst_174 = arith.constant 1.000000e+00 : f32
    %888 = vector.broadcast %cst_173 : f32 to vector<2x160xf32>
    %889 = vector.broadcast %cst_174 : f32 to vector<2x160xf32>
    %890 = arith.select %887, %888, %889 : vector<2x160xi1>, vector<2x160xf32>
    %891 = math.absf %885 : vector<2x160xf32>
    %cst_175 = arith.constant 0.327591091 : f32
    %892 = vector.broadcast %cst_175 : f32 to vector<2x160xf32>
    %893 = arith.mulf %892, %891 : vector<2x160xf32>
    %cst_176 = arith.constant 1.000000e+00 : f32
    %894 = vector.broadcast %cst_176 : f32 to vector<2x160xf32>
    %895 = arith.addf %894, %893 : vector<2x160xf32>
    %cst_177 = arith.constant 1.000000e+00 : f32
    %896 = vector.broadcast %cst_177 : f32 to vector<2x160xf32>
    %897 = arith.divf %896, %895 : vector<2x160xf32>
    %cst_178 = arith.constant 1.06140542 : f32
    %898 = vector.broadcast %cst_178 : f32 to vector<2x160xf32>
    %899 = arith.mulf %897, %898 : vector<2x160xf32>
    %cst_179 = arith.constant -1.45315206 : f32
    %900 = vector.broadcast %cst_179 : f32 to vector<2x160xf32>
    %901 = arith.addf %900, %899 : vector<2x160xf32>
    %902 = arith.mulf %897, %901 : vector<2x160xf32>
    %cst_180 = arith.constant 1.42141378 : f32
    %903 = vector.broadcast %cst_180 : f32 to vector<2x160xf32>
    %904 = arith.addf %903, %902 : vector<2x160xf32>
    %905 = arith.mulf %897, %904 : vector<2x160xf32>
    %cst_181 = arith.constant -0.284496725 : f32
    %906 = vector.broadcast %cst_181 : f32 to vector<2x160xf32>
    %907 = arith.addf %906, %905 : vector<2x160xf32>
    %908 = arith.mulf %897, %907 : vector<2x160xf32>
    %cst_182 = arith.constant 0.254829586 : f32
    %909 = vector.broadcast %cst_182 : f32 to vector<2x160xf32>
    %910 = arith.addf %909, %908 : vector<2x160xf32>
    %911 = arith.mulf %897, %910 : vector<2x160xf32>
    %912 = arith.mulf %891, %891 : vector<2x160xf32>
    %cst_183 = arith.constant 0.000000e+00 : f32
    %913 = vector.broadcast %cst_183 : f32 to vector<2x160xf32>
    %914 = arith.subf %913, %912 : vector<2x160xf32>
    %915 = math.exp %914 : vector<2x160xf32>
    %916 = arith.mulf %911, %915 : vector<2x160xf32>
    %cst_184 = arith.constant 1.000000e+00 : f32
    %917 = vector.broadcast %cst_184 : f32 to vector<2x160xf32>
    %918 = arith.subf %917, %916 : vector<2x160xf32>
    %919 = arith.mulf %890, %918 : vector<2x160xf32>
    %cst_185 = arith.constant 1.000000e+00 : f32
    %920 = vector.broadcast %cst_185 : f32 to vector<2x160xf32>
    %921 = arith.addf %920, %919 : vector<2x160xf32>
    %922 = arith.mulf %883, %921 : vector<2x160xf32>
    %c0_186 = arith.constant 0 : index
    %c0_187 = arith.constant 0 : index
    %923 = vector.load %arg7[%c0_186, %c0_187] : memref<160x128xf32, #tpu.memory_space<vmem>>, vector<160x128xf32>
    %cst_188 = arith.constant dense<0.000000e+00> : vector<2x128xf32>
    %924 = tpu.matmul %922, %923, %cst_188 {dimension_numbers = #tpu.dot_dimension_numbers<[1], [0], [0], [1], [0, 0, 1, 1], [], []>} : vector<2x160xf32>, vector<160x128xf32>, vector<2x128xf32> -> vector<2x128xf32>
    %925 = vector.broadcast %14 : vector<1x128xf32> to vector<2x128xf32>
    %926 = arith.addf %924, %925 : vector<2x128xf32>
    %cst_189 = arith.constant 5.000000e-01 : f32
    %927 = vector.broadcast %cst_189 : f32 to vector<2x128xf32>
    %928 = arith.mulf %927, %926 : vector<2x128xf32>
    %cst_190 = arith.constant 0.707106769 : f32
    %929 = vector.broadcast %cst_190 : f32 to vector<2x128xf32>
    %930 = arith.mulf %926, %929 : vector<2x128xf32>
    %cst_191 = arith.constant 0.000000e+00 : f32
    %931 = vector.broadcast %cst_191 : f32 to vector<2x128xf32>
    %932 = arith.cmpf olt, %930, %931 : vector<2x128xf32>
    %cst_192 = arith.constant -1.000000e+00 : f32
    %cst_193 = arith.constant 1.000000e+00 : f32
    %933 = vector.broadcast %cst_192 : f32 to vector<2x128xf32>
    %934 = vector.broadcast %cst_193 : f32 to vector<2x128xf32>
    %935 = arith.select %932, %933, %934 : vector<2x128xi1>, vector<2x128xf32>
    %936 = math.absf %930 : vector<2x128xf32>
    %cst_194 = arith.constant 0.327591091 : f32
    %937 = vector.broadcast %cst_194 : f32 to vector<2x128xf32>
    %938 = arith.mulf %937, %936 : vector<2x128xf32>
    %cst_195 = arith.constant 1.000000e+00 : f32
    %939 = vector.broadcast %cst_195 : f32 to vector<2x128xf32>
    %940 = arith.addf %939, %938 : vector<2x128xf32>
    %cst_196 = arith.constant 1.000000e+00 : f32
    %941 = vector.broadcast %cst_196 : f32 to vector<2x128xf32>
    %942 = arith.divf %941, %940 : vector<2x128xf32>
    %cst_197 = arith.constant 1.06140542 : f32
    %943 = vector.broadcast %cst_197 : f32 to vector<2x128xf32>
    %944 = arith.mulf %942, %943 : vector<2x128xf32>
    %cst_198 = arith.constant -1.45315206 : f32
    %945 = vector.broadcast %cst_198 : f32 to vector<2x128xf32>
    %946 = arith.addf %945, %944 : vector<2x128xf32>
    %947 = arith.mulf %942, %946 : vector<2x128xf32>
    %cst_199 = arith.constant 1.42141378 : f32
    %948 = vector.broadcast %cst_199 : f32 to vector<2x128xf32>
    %949 = arith.addf %948, %947 : vector<2x128xf32>
    %950 = arith.mulf %942, %949 : vector<2x128xf32>
    %cst_200 = arith.constant -0.284496725 : f32
    %951 = vector.broadcast %cst_200 : f32 to vector<2x128xf32>
    %952 = arith.addf %951, %950 : vector<2x128xf32>
    %953 = arith.mulf %942, %952 : vector<2x128xf32>
    %cst_201 = arith.constant 0.254829586 : f32
    %954 = vector.broadcast %cst_201 : f32 to vector<2x128xf32>
    %955 = arith.addf %954, %953 : vector<2x128xf32>
    %956 = arith.mulf %942, %955 : vector<2x128xf32>
    %957 = arith.mulf %936, %936 : vector<2x128xf32>
    %cst_202 = arith.constant 0.000000e+00 : f32
    %958 = vector.broadcast %cst_202 : f32 to vector<2x128xf32>
    %959 = arith.subf %958, %957 : vector<2x128xf32>
    %960 = math.exp %959 : vector<2x128xf32>
    %961 = arith.mulf %956, %960 : vector<2x128xf32>
    %cst_203 = arith.constant 1.000000e+00 : f32
    %962 = vector.broadcast %cst_203 : f32 to vector<2x128xf32>
    %963 = arith.subf %962, %961 : vector<2x128xf32>
    %964 = arith.mulf %935, %963 : vector<2x128xf32>
    %cst_204 = arith.constant 1.000000e+00 : f32
    %965 = vector.broadcast %cst_204 : f32 to vector<2x128xf32>
    %966 = arith.addf %965, %964 : vector<2x128xf32>
    %967 = arith.mulf %928, %966 : vector<2x128xf32>
    %c0_205 = arith.constant 0 : index
    %c0_206 = arith.constant 0 : index
    %968 = vector.load %arg8[%c0_205, %c0_206] : memref<128x128xf32, #tpu.memory_space<vmem>>, vector<128x128xf32>
    %cst_207 = arith.constant dense<0.000000e+00> : vector<2x128xf32>
    %969 = tpu.matmul %967, %968, %cst_207 {dimension_numbers = #tpu.dot_dimension_numbers<[1], [0], [0], [1], [0, 0, 1, 1], [], []>} : vector<2x128xf32>, vector<128x128xf32>, vector<2x128xf32> -> vector<2x128xf32>
    %970 = vector.broadcast %17 : vector<1x128xf32> to vector<2x128xf32>
    %971 = arith.addf %969, %970 : vector<2x128xf32>
    %c0_208 = arith.constant 0 : index
    %c0_209 = arith.constant 0 : index
    %972 = vector.load %arg10[%c0_208, %c0_209] : memref<2x128xf32, #tpu.memory_space<vmem>>, vector<2x128xf32>
    tpu.vector_store %arg10[%c0_208, %c0_209], %971 {strides = array<i32>} : memref<2x128xf32, #tpu.memory_space<vmem>>, vector<2x128xf32>,
    return
  }
}

</mosaic_0001>

<llo_original>
// kernel: model_forward.1
$region0: #{model_forward.1}
  #allocation0 [shape = 'u32[]', space=smem, size = 0x4, offset = 0x4, fixed_abs, tag = 'smem constant byte address 0x4 - core index']
  #allocation1 [shape = 'u32[144,128]{1,0:T(1,128)}', space=vmem, size = 0x12000, scoped, tag = 'internal scratch']
  %s0 = inlined_call_operand.vmem [shape: bf16[34,768], index: 0, kind: input, shape index: {}]
  %s1 = inlined_call_operand.vmem [shape: f32[4,2], index: 1, kind: input, shape index: {}]
  %s2 = inlined_call_operand.vmem [shape: bf16[768,416], index: 2, kind: input, shape index: {}]
  %s3 = inlined_call_operand.vmem [shape: f32[64,192], index: 3, kind: input, shape index: {}]
  %s4 = inlined_call_operand.vmem [shape: f32[64,64], index: 4, kind: input, shape index: {}]
  %s5 = inlined_call_operand.vmem [shape: f32[64,128], index: 5, kind: input, shape index: {}]
  %s6 = inlined_call_operand.vmem [shape: f32[128,32], index: 6, kind: input, shape index: {}]
  %s7 = inlined_call_operand.vmem [shape: f32[160,128], index: 7, kind: input, shape index: {}]
  %s8 = inlined_call_operand.vmem [shape: f32[128,128], index: 8, kind: input, shape index: {}]
  %s9 = inlined_call_operand.vmem [shape: f32[8,192], index: 9, kind: input, shape index: {}]
  %s10 = inlined_call_operand.hbm [shape: f32[2,128], index: 10, kind: output, shape index: {0}]
  %s11 = inlined_call_operand.vmem [shape: f32[4,128], index: 11, kind: output, shape index: {1}]
  %12 = xla_tuple %s10, %s11
  %s13 = sld [smem:[#allocation0]]
  $region58: #{model_forward.1} parent=0
    _
  %s15 = ssub.s32 1, %s13
  %s16 = scalar_select 0, %s15, %s13
  $region1: #{model_forward.1} parent=0
    #allocation2 [shape = 'u8[1024]{0}', space=vmem, size = 0x400, scoped, tag = 'output window, operand 0, single buffered']
    #allocation3 [shape = 's32[1]{0}', space=sflag, size = 0x4, scoped, tag = 'scoped memory for model_forward.1']
    %17 = vsyncpa [#allocation3], 0
    // Predicated region
    $region2: #{model_forward.1} parent=1 // pred_check
      _
    $region3: #{model_forward.1} parent=1 // pred_check_branch
      %19 = sbr.rel (0) target = $region5
    $region4: #{model_forward.1} parent=1 // pred_region
      _
    $region5: #{model_forward.1} parent=1 // pred_fallthru
      _
    // Predicated region
    $region6: #{model_forward.1} parent=1 // pred_check
      _
    $region7: #{model_forward.1} parent=1 // pred_check_branch
      %21 = sbr.rel (0) target = $region9
    $region8: #{model_forward.1} parent=1 // pred_region
      _
    $region9: #{model_forward.1} parent=1 // pred_fallthru
      _
    // Predicated region
    $region10: #{model_forward.1} parent=1 // pred_check
      _
    $region11: #{model_forward.1} parent=1 // pred_check_branch
      %23 = sbr.rel (0) target = $region13
    $region12: #{model_forward.1} parent=1 // pred_region
      _
    $region13: #{model_forward.1} parent=1 // pred_fallthru
      _
    // Predicated region
    $region14: #{model_forward.1} parent=1 // pred_check
      _
    $region15: #{model_forward.1} parent=1 // pred_check_branch
      %25 = sbr.rel (0) target = $region17
    $region16: #{model_forward.1} parent=1 // pred_region
      _
    $region17: #{model_forward.1} parent=1 // pred_fallthru
      _
    // Predicated region
    $region18: #{model_forward.1} parent=1 // pred_check
      _
    $region19: #{model_forward.1} parent=1 // pred_check_branch
      %27 = sbr.rel (0) target = $region21
    $region20: #{model_forward.1} parent=1 // pred_region
      _
    $region21: #{model_forward.1} parent=1 // pred_fallthru
      _
    // Predicated region
    $region22: #{model_forward.1} parent=1 // pred_check
      _
    $region23: #{model_forward.1} parent=1 // pred_check_branch
      %29 = sbr.rel (0) target = $region25
    $region24: #{model_forward.1} parent=1 // pred_region
      _
    $region25: #{model_forward.1} parent=1 // pred_fallthru
      _
    // Predicated region
    $region26: #{model_forward.1} parent=1 // pred_check
      _
    $region27: #{model_forward.1} parent=1 // pred_check_branch
      %31 = sbr.rel (0) target = $region29
    $region28: #{model_forward.1} parent=1 // pred_region
      _
    $region29: #{model_forward.1} parent=1 // pred_fallthru
      _
    // Predicated region
    $region30: #{model_forward.1} parent=1 // pred_check
      _
    $region31: #{model_forward.1} parent=1 // pred_check_branch
      %33 = sbr.rel (0) target = $region33
    $region32: #{model_forward.1} parent=1 // pred_region
      _
    $region33: #{model_forward.1} parent=1 // pred_fallthru
      _
    // Predicated region
    $region34: #{model_forward.1} parent=1 // pred_check
      _
    $region35: #{model_forward.1} parent=1 // pred_check_branch
      %35 = sbr.rel (0) target = $region37
    $region36: #{model_forward.1} parent=1 // pred_region
      _
    $region37: #{model_forward.1} parent=1 // pred_fallthru
      _
    // Predicated region
    $region38: #{model_forward.1} parent=1 // pred_check
      _
    $region39: #{model_forward.1} parent=1 // pred_check_branch
      %37 = sbr.rel (0) target = $region41
    $region40: #{model_forward.1} parent=1 // pred_region
      _
    $region41: #{model_forward.1} parent=1 // pred_fallthru
      _
    %v38 = vld [vmem:[%s9] sm:$0xff]
    %v39 = vld [vmem:[%s9 + $0x8] sm:$0xff]
    %v40 = vld [vmem:[%s0] sm:$0xff]
    %v41 = vld [vmem:[%s0 + $0x8] sm:$0xff]
    %v42 = vld [vmem:[%s0 + $0x10] sm:$0xff]
    %v43 = vld [vmem:[%s0 + $0x18] sm:$0xff]
    %v44 = vld [vmem:[%s0 + $0x20] sm:$0xff]
    %v45 = vld [vmem:[%s0 + $0x28] sm:$0xff]
    %v46 = vld [vmem:[%s0 + $0x30] sm:$0xff]
    %v47 = vld [vmem:[%s0 + $0x38] sm:$0xff]
    %v48 = vld [vmem:[%s0 + $0x40] sm:$0xff]
    %v49 = vld [vmem:[%s0 + $0x48] sm:$0xff]
    %v50 = vld [vmem:[%s0 + $0x50] sm:$0xff]
    %v51 = vld [vmem:[%s0 + $0x58] sm:$0xff]
    %v52 = vld [vmem:[%s0 + $0x60] sm:$0x11]
    %v53 = vld [vmem:[%s0 + $0x68] sm:$0x11]
    %v54 = vld [vmem:[%s0 + $0x70] sm:$0x11]
    %v55 = vld [vmem:[%s2] sm:$0xff]
    %v56 = vld [vmem:[%s2 + $0x8] sm:$0xff]
    %v57 = vld [vmem:[%s2 + $0x10] sm:$0xff]
    %v58 = vld [vmem:[%s2 + $0x18] sm:$0xff]
    %v59 = vld [vmem:[%s2 + $0x20] sm:$0xff]
    %v60 = vld [vmem:[%s2 + $0x28] sm:$0xff]
    %v61 = vld [vmem:[%s2 + $0x30] sm:$0xff]
    %v62 = vld [vmem:[%s2 + $0x38] sm:$0xff]
    %v63 = vld [vmem:[%s2 + $0x40] sm:$0xff]
    %v64 = vld [vmem:[%s2 + $0x48] sm:$0xff]
    %v65 = vld [vmem:[%s2 + $0x50] sm:$0xff]
    %v66 = vld [vmem:[%s2 + $0x58] sm:$0xff]
    %v67 = vld [vmem:[%s2 + $0x60] sm:$0xff]
    %v68 = vld [vmem:[%s2 + $0x68] sm:$0xff]
    %v69 = vld [vmem:[%s2 + $0x70] sm:$0xff]
    %v70 = vld [vmem:[%s2 + $0x78] sm:$0xff]
    %v71 = vld [vmem:[%s2 + $0x80] sm:$0xff]
    %v72 = vld [vmem:[%s2 + $0x88] sm:$0xff]
    %v73 = vld [vmem:[%s2 + $0x90] sm:$0xff]
    %v74 = vld [vmem:[%s2 + $0x98] sm:$0xff]
    %v75 = vld [vmem:[%s2 + $0xa0] sm:$0xff]
    %v76 = vld [vmem:[%s2 + $0xa8] sm:$0xff]
    %v77 = vld [vmem:[%s2 + $0xb0] sm:$0xff]
    %v78 = vld [vmem:[%s2 + $0xb8] sm:$0xff]
    %v79 = vld [vmem:[%s2 + $0xc0] sm:$0xff]
    %v80 = vld [vmem:[%s2 + $0xc8] sm:$0xff]
    %v81 = vld [vmem:[%s2 + $0xd0] sm:$0xff]
    %v82 = vld [vmem:[%s2 + $0xd8] sm:$0xff]
    %v83 = vld [vmem:[%s2 + $0xe0] sm:$0xff]
    %v84 = vld [vmem:[%s2 + $0xe8] sm:$0xff]
    %v85 = vld [vmem:[%s2 + $0xf0] sm:$0xff]
    %v86 = vld [vmem:[%s2 + $0xf8] sm:$0xff]
    %v87 = vld [vmem:[%s2 + $0x100] sm:$0xff]
    %v88 = vld [vmem:[%s2 + $0x108] sm:$0xff]
    %v89 = vld [vmem:[%s2 + $0x110] sm:$0xff]
    %v90 = vld [vmem:[%s2 + $0x118] sm:$0xff]
    %v91 = vld [vmem:[%s2 + $0x120] sm:$0xff]
    %v92 = vld [vmem:[%s2 + $0x128] sm:$0xff]
    %v93 = vld [vmem:[%s2 + $0x130] sm:$0xff]
    %v94 = vld [vmem:[%s2 + $0x138] sm:$0xff]
    %v95 = vld [vmem:[%s2 + $0x140] sm:$0xff]
    %v96 = vld [vmem:[%s2 + $0x148] sm:$0xff]
    %v97 = vld [vmem:[%s2 + $0x150] sm:$0xff]
    %v98 = vld [vmem:[%s2 + $0x158] sm:$0xff]
    %v99 = vld [vmem:[%s2 + $0x160] sm:$0xff]
    %v100 = vld [vmem:[%s2 + $0x168] sm:$0xff]
    %v101 = vld [vmem:[%s2 + $0x170] sm:$0xff]
    %v102 = vld [vmem:[%s2 + $0x178] sm:$0xff]
    %v103 = vld [vmem:[%s2 + $0x180] sm:$0xff]
    %v104 = vld [vmem:[%s2 + $0x188] sm:$0xff]
    %v105 = vld [vmem:[%s2 + $0x190] sm:$0xff]
    %v106 = vld [vmem:[%s2 + $0x198] sm:$0xff]
    %v107 = vld [vmem:[%s2 + $0x1a0] sm:$0xff]
    %v108 = vld [vmem:[%s2 + $0x1a8] sm:$0xff]
    %v109 = vld [vmem:[%s2 + $0x1b0] sm:$0xff]
    %v110 = vld [vmem:[%s2 + $0x1b8] sm:$0xff]
    %v111 = vld [vmem:[%s2 + $0x1c0] sm:$0xff]
    %v112 = vld [vmem:[%s2 + $0x1c8] sm:$0xff]
    %v113 = vld [vmem:[%s2 + $0x1d0] sm:$0xff]
    %v114 = vld [vmem:[%s2 + $0x1d8] sm:$0xff]
    %v115 = vld [vmem:[%s2 + $0x1e0] sm:$0xff]
    %v116 = vld [vmem:[%s2 + $0x1e8] sm:$0xff]
    %v117 = vld [vmem:[%s2 + $0x1f0] sm:$0xff]
    %v118 = vld [vmem:[%s2 + $0x1f8] sm:$0xff]
    %v119 = vld [vmem:[%s2 + $0x200] sm:$0xff]
    %v120 = vld [vmem:[%s2 + $0x208] sm:$0xff]
    %v121 = vld [vmem:[%s2 + $0x210] sm:$0xff]
    %v122 = vld [vmem:[%s2 + $0x218] sm:$0xff]
    %v123 = vld [vmem:[%s2 + $0x220] sm:$0xff]
    %v124 = vld [vmem:[%s2 + $0x228] sm:$0xff]
    %v125 = vld [vmem:[%s2 + $0x230] sm:$0xff]
    %v126 = vld [vmem:[%s2 + $0x238] sm:$0xff]
    %v127 = vld [vmem:[%s2 + $0x240] sm:$0xff]
    %v128 = vld [vmem:[%s2 + $0x248] sm:$0xff]
    %v129 = vld [vmem:[%s2 + $0x250] sm:$0xff]
    %v130 = vld [vmem:[%s2 + $0x258] sm:$0xff]
    %v131 = vld [vmem:[%s2 + $0x260] sm:$0xff]
    %v132 = vld [vmem:[%s2 + $0x268] sm:$0xff]
    %v133 = vld [vmem:[%s2 + $0x270] sm:$0xff]
    %v134 = vld [vmem:[%s2 + $0x278] sm:$0xff]
    %v135 = vld [vmem:[%s2 + $0x280] sm:$0xff]
    %v136 = vld [vmem:[%s2 + $0x288] sm:$0xff]
    %v137 = vld [vmem:[%s2 + $0x290] sm:$0xff]
    %v138 = vld [vmem:[%s2 + $0x298] sm:$0xff]
    %v139 = vld [vmem:[%s2 + $0x2a0] sm:$0xff]
    %v140 = vld [vmem:[%s2 + $0x2a8] sm:$0xff]
    %v141 = vld [vmem:[%s2 + $0x2b0] sm:$0xff]
    %v142 = vld [vmem:[%s2 + $0x2b8] sm:$0xff]
    %v143 = vld [vmem:[%s2 + $0x2c0] sm:$0xff]
    %v144 = vld [vmem:[%s2 + $0x2c8] sm:$0xff]
    %v145 = vld [vmem:[%s2 + $0x2d0] sm:$0xff]
    %v146 = vld [vmem:[%s2 + $0x2d8] sm:$0xff]
    %v147 = vld [vmem:[%s2 + $0x2e0] sm:$0xff]
    %v148 = vld [vmem:[%s2 + $0x2e8] sm:$0xff]
    %v149 = vld [vmem:[%s2 + $0x2f0] sm:$0xff]
    %v150 = vld [vmem:[%s2 + $0x2f8] sm:$0xff]
    %v151 = vld [vmem:[%s2 + $0x300] sm:$0xff]
    %v152 = vld [vmem:[%s2 + $0x308] sm:$0xff]
    %v153 = vld [vmem:[%s2 + $0x310] sm:$0xff]
    %v154 = vld [vmem:[%s2 + $0x318] sm:$0xff]
    %v155 = vld [vmem:[%s2 + $0x320] sm:$0xff]
    %v156 = vld [vmem:[%s2 + $0x328] sm:$0xff]
    %v157 = vld [vmem:[%s2 + $0x330] sm:$0xff]
    %v158 = vld [vmem:[%s2 + $0x338] sm:$0xff]
    %v159 = vld [vmem:[%s2 + $0x340] sm:$0xff]
    %v160 = vld [vmem:[%s2 + $0x348] sm:$0xff]
    %v161 = vld [vmem:[%s2 + $0x350] sm:$0xff]
    %v162 = vld [vmem:[%s2 + $0x358] sm:$0xff]
    %v163 = vld [vmem:[%s2 + $0x360] sm:$0xff]
    %v164 = vld [vmem:[%s2 + $0x368] sm:$0xff]
    %v165 = vld [vmem:[%s2 + $0x370] sm:$0xff]
    %v166 = vld [vmem:[%s2 + $0x378] sm:$0xff]
    %v167 = vld [vmem:[%s2 + $0x380] sm:$0xff]
    %v168 = vld [vmem:[%s2 + $0x388] sm:$0xff]
    %v169 = vld [vmem:[%s2 + $0x390] sm:$0xff]
    %v170 = vld [vmem:[%s2 + $0x398] sm:$0xff]
    %v171 = vld [vmem:[%s2 + $0x3a0] sm:$0xff]
    %v172 = vld [vmem:[%s2 + $0x3a8] sm:$0xff]
    %v173 = vld [vmem:[%s2 + $0x3b0] sm:$0xff]
    %v174 = vld [vmem:[%s2 + $0x3b8] sm:$0xff]
    %v175 = vld [vmem:[%s2 + $0x3c0] sm:$0xff]
    %v176 = vld [vmem:[%s2 + $0x3c8] sm:$0xff]
    %v177 = vld [vmem:[%s2 + $0x3d0] sm:$0xff]
    %v178 = vld [vmem:[%s2 + $0x3d8] sm:$0xff]
    %v179 = vld [vmem:[%s2 + $0x3e0] sm:$0xff]
    %v180 = vld [vmem:[%s2 + $0x3e8] sm:$0xff]
    %v181 = vld [vmem:[%s2 + $0x3f0] sm:$0xff]
    %v182 = vld [vmem:[%s2 + $0x3f8] sm:$0xff]
    %v183 = vld [vmem:[%s2 + $0x400] sm:$0xff]
    %v184 = vld [vmem:[%s2 + $0x408] sm:$0xff]
    %v185 = vld [vmem:[%s2 + $0x410] sm:$0xff]
    %v186 = vld [vmem:[%s2 + $0x418] sm:$0xff]
    %v187 = vld [vmem:[%s2 + $0x420] sm:$0xff]
    %v188 = vld [vmem:[%s2 + $0x428] sm:$0xff]
    %v189 = vld [vmem:[%s2 + $0x430] sm:$0xff]
    %v190 = vld [vmem:[%s2 + $0x438] sm:$0xff]
    %v191 = vld [vmem:[%s2 + $0x440] sm:$0xff]
    %v192 = vld [vmem:[%s2 + $0x448] sm:$0xff]
    %v193 = vld [vmem:[%s2 + $0x450] sm:$0xff]
    %v194 = vld [vmem:[%s2 + $0x458] sm:$0xff]
    %v195 = vld [vmem:[%s2 + $0x460] sm:$0xff]
    %v196 = vld [vmem:[%s2 + $0x468] sm:$0xff]
    %v197 = vld [vmem:[%s2 + $0x470] sm:$0xff]
    %v198 = vld [vmem:[%s2 + $0x478] sm:$0xff]
    %v199 = vld [vmem:[%s2 + $0x480] sm:$0xff]
    %v200 = vld [vmem:[%s2 + $0x488] sm:$0xff]
    %v201 = vld [vmem:[%s2 + $0x490] sm:$0xff]
    %v202 = vld [vmem:[%s2 + $0x498] sm:$0xff]
    %v203 = vld [vmem:[%s2 + $0x4a0] sm:$0xff]
    %v204 = vld [vmem:[%s2 + $0x4a8] sm:$0xff]
    %v205 = vld [vmem:[%s2 + $0x4b0] sm:$0xff]
    %v206 = vld [vmem:[%s2 + $0x4b8] sm:$0xff]
    %v207 = vld [vmem:[%s2 + $0x4c0] sm:$0xff]
    %v208 = vld [vmem:[%s2 + $0x4c8] sm:$0xff]
    %v209 = vld [vmem:[%s2 + $0x4d0] sm:$0xff]
    %v210 = vld [vmem:[%s2 + $0x4d8] sm:$0xff]
    %v211 = vld [vmem:[%s2 + $0x4e0] sm:$0xff]
    %v212 = vld [vmem:[%s2 + $0x4e8] sm:$0xff]
    %v213 = vld [vmem:[%s2 + $0x4f0] sm:$0xff]
    %v214 = vld [vmem:[%s2 + $0x4f8] sm:$0xff]
    %v215 = vld [vmem:[%s2 + $0x500] sm:$0xff]
    %v216 = vld [vmem:[%s2 + $0x508] sm:$0xff]
    %v217 = vld [vmem:[%s2 + $0x510] sm:$0xff]
    %v218 = vld [vmem:[%s2 + $0x518] sm:$0xff]
    %v219 = vld [vmem:[%s2 + $0x520] sm:$0xff]
    %v220 = vld [vmem:[%s2 + $0x528] sm:$0xff]
    %v221 = vld [vmem:[%s2 + $0x530] sm:$0xff]
    %v222 = vld [vmem:[%s2 + $0x538] sm:$0xff]
    %v223 = vld [vmem:[%s2 + $0x540] sm:$0xff]
    %v224 = vld [vmem:[%s2 + $0x548] sm:$0xff]
    %v225 = vld [vmem:[%s2 + $0x550] sm:$0xff]
    %v226 = vld [vmem:[%s2 + $0x558] sm:$0xff]
    %v227 = vld [vmem:[%s2 + $0x560] sm:$0xff]
    %v228 = vld [vmem:[%s2 + $0x568] sm:$0xff]
    %v229 = vld [vmem:[%s2 + $0x570] sm:$0xff]
    %v230 = vld [vmem:[%s2 + $0x578] sm:$0xff]
    %v231 = vld [vmem:[%s2 + $0x580] sm:$0xff]
    %v232 = vld [vmem:[%s2 + $0x588] sm:$0xff]
    %v233 = vld [vmem:[%s2 + $0x590] sm:$0xff]
    %v234 = vld [vmem:[%s2 + $0x598] sm:$0xff]
    %v235 = vld [vmem:[%s2 + $0x5a0] sm:$0xff]
    %v236 = vld [vmem:[%s2 + $0x5a8] sm:$0xff]
    %v237 = vld [vmem:[%s2 + $0x5b0] sm:$0xff]
    %v238 = vld [vmem:[%s2 + $0x5b8] sm:$0xff]
    %v239 = vld [vmem:[%s2 + $0x5c0] sm:$0xff]
    %v240 = vld [vmem:[%s2 + $0x5c8] sm:$0xff]
    %v241 = vld [vmem:[%s2 + $0x5d0] sm:$0xff]
    %v242 = vld [vmem:[%s2 + $0x5d8] sm:$0xff]
    %v243 = vld [vmem:[%s2 + $0x5e0] sm:$0xff]
    %v244 = vld [vmem:[%s2 + $0x5e8] sm:$0xff]
    %v245 = vld [vmem:[%s2 + $0x5f0] sm:$0xff]
    %v246 = vld [vmem:[%s2 + $0x5f8] sm:$0xff]
    %v262 = vunpack.c.l.b16 %v40
    %v263 = vunpack.c.h.b16 %v40
    %v264 = vunpack.c.l.b16 %v41
    %v265 = vunpack.c.h.b16 %v41
    %v266 = vunpack.c.l.b16 %v42
    %v267 = vunpack.c.h.b16 %v42
    %v268 = vunpack.c.l.b16 %v43
    %v269 = vunpack.c.h.b16 %v43
    %v270 = vunpack.c.l.b16 %v44
    %v271 = vunpack.c.h.b16 %v44
    %v272 = vunpack.c.l.b16 %v45
    %v273 = vunpack.c.h.b16 %v45
    %v274 = vunpack.c.l.b16 %v46
    %v275 = vunpack.c.h.b16 %v46
    %v276 = vunpack.c.l.b16 %v47
    %v277 = vunpack.c.h.b16 %v47
    %v278 = vunpack.c.l.b16 %v48
    %v279 = vunpack.c.h.b16 %v48
    %v280 = vunpack.c.l.b16 %v49
    %v281 = vunpack.c.h.b16 %v49
    %v282 = vunpack.c.l.b16 %v50
    %v283 = vunpack.c.h.b16 %v50
    %v284 = vunpack.c.l.b16 %v51
    %v285 = vunpack.c.h.b16 %v51
    %v286 = vunpack.c.l.b16 %v52
    %v287 = vunpack.c.h.b16 %v52
    %v288 = vunpack.c.l.b16 %v53
    %v289 = vunpack.c.h.b16 %v53
    %v290 = vunpack.c.l.b16 %v54
    %v291 = vunpack.c.h.b16 %v54
    %v292 = vpack.c.b16 %v268, %v262
    %v293 = vpack.c.b16 %v269, %v263
    %v294 = vpack.c.b16 %v270, %v264
    %v295 = vpack.c.b16 %v271, %v265
    %v296 = vpack.c.b16 %v272, %v266
    %v297 = vpack.c.b16 %v273, %v267
    %v298 = vpack.c.b16 %v280, %v274
    %v299 = vpack.c.b16 %v281, %v275
    %v300 = vpack.c.b16 %v282, %v276
    %v301 = vpack.c.b16 %v283, %v277
    %v302 = vpack.c.b16 %v284, %v278
    %v303 = vpack.c.b16 %v285, %v279
    %v304 = vpack.c.b16 %v286, %v286
    %v305 = vpack.c.b16 %v287, %v287
    %v306 = vpack.c.b16 %v288, %v288
    %v307 = vpack.c.b16 %v289, %v289
    %v308 = vpack.c.b16 %v290, %v290
    %v309 = vpack.c.b16 %v291, %v291
    %v520 = vunpack.c.l.b16 %v55
    %v521 = vunpack.c.h.b16 %v55
    %v522 = vunpack.c.l.b16 %v56
    %v523 = vunpack.c.h.b16 %v56
    %v524 = vunpack.c.l.b16 %v57
    %v525 = vunpack.c.h.b16 %v57
    %v526 = vunpack.c.l.b16 %v58
    %v527 = vunpack.c.h.b16 %v58
    %v528 = vunpack.c.l.b16 %v59
    %v529 = vunpack.c.h.b16 %v59
    %v530 = vunpack.c.l.b16 %v60
    %v531 = vunpack.c.h.b16 %v60
    %v532 = vunpack.c.l.b16 %v61
    %v533 = vunpack.c.h.b16 %v61
    %v534 = vunpack.c.l.b16 %v62
    %v535 = vunpack.c.h.b16 %v62
    %v536 = vunpack.c.l.b16 %v63
    %v537 = vunpack.c.h.b16 %v63
    %v538 = vunpack.c.l.b16 %v64
    %v539 = vunpack.c.h.b16 %v64
    %v540 = vunpack.c.l.b16 %v65
    %v541 = vunpack.c.h.b16 %v65
    %v542 = vunpack.c.l.b16 %v66
    %v543 = vunpack.c.h.b16 %v66
    %v544 = vunpack.c.l.b16 %v67
    %v545 = vunpack.c.h.b16 %v67
    %v546 = vunpack.c.l.b16 %v68
    %v547 = vunpack.c.h.b16 %v68
    %v548 = vunpack.c.l.b16 %v69
    %v549 = vunpack.c.h.b16 %v69
    %v550 = vunpack.c.l.b16 %v70
    %v551 = vunpack.c.h.b16 %v70
    %v552 = vunpack.c.l.b16 %v71
    %v553 = vunpack.c.h.b16 %v71
    %v554 = vunpack.c.l.b16 %v72
    %v555 = vunpack.c.h.b16 %v72
    %v556 = vunpack.c.l.b16 %v73
    %v557 = vunpack.c.h.b16 %v73
    %v558 = vunpack.c.l.b16 %v74
    %v559 = vunpack.c.h.b16 %v74
    %v560 = vunpack.c.l.b16 %v75
    %v561 = vunpack.c.h.b16 %v75
    %v562 = vunpack.c.l.b16 %v76
    %v563 = vunpack.c.h.b16 %v76
    %v564 = vunpack.c.l.b16 %v77
    %v565 = vunpack.c.h.b16 %v77
    %v566 = vunpack.c.l.b16 %v78
    %v567 = vunpack.c.h.b16 %v78
    %v568 = vunpack.c.l.b16 %v79
    %v569 = vunpack.c.h.b16 %v79
    %v570 = vunpack.c.l.b16 %v80
    %v571 = vunpack.c.h.b16 %v80
    %v572 = vunpack.c.l.b16 %v81
    %v573 = vunpack.c.h.b16 %v81
    %v574 = vunpack.c.l.b16 %v82
    %v575 = vunpack.c.h.b16 %v82
    %v576 = vunpack.c.l.b16 %v83
    %v577 = vunpack.c.h.b16 %v83
    %v578 = vunpack.c.l.b16 %v84
    %v579 = vunpack.c.h.b16 %v84
    %v580 = vunpack.c.l.b16 %v85
    %v581 = vunpack.c.h.b16 %v85
    %v582 = vunpack.c.l.b16 %v86
    %v583 = vunpack.c.h.b16 %v86
    %v584 = vunpack.c.l.b16 %v87
    %v585 = vunpack.c.h.b16 %v87
    %v586 = vunpack.c.l.b16 %v88
    %v587 = vunpack.c.h.b16 %v88
    %v588 = vunpack.c.l.b16 %v89
    %v589 = vunpack.c.h.b16 %v89
    %v590 = vunpack.c.l.b16 %v90
    %v591 = vunpack.c.h.b16 %v90
    %v592 = vunpack.c.l.b16 %v91
    %v593 = vunpack.c.h.b16 %v91
    %v594 = vunpack.c.l.b16 %v92
    %v595 = vunpack.c.h.b16 %v92
    %v596 = vunpack.c.l.b16 %v93
    %v597 = vunpack.c.h.b16 %v93
    %v598 = vunpack.c.l.b16 %v94
    %v599 = vunpack.c.h.b16 %v94
    %v600 = vunpack.c.l.b16 %v95
    %v601 = vunpack.c.h.b16 %v95
    %v602 = vunpack.c.l.b16 %v96
    %v603 = vunpack.c.h.b16 %v96
    %v604 = vunpack.c.l.b16 %v97
    %v605 = vunpack.c.h.b16 %v97
    %v606 = vunpack.c.l.b16 %v98
    %v607 = vunpack.c.h.b16 %v98
    %v608 = vunpack.c.l.b16 %v99
    %v609 = vunpack.c.h.b16 %v99
    %v610 = vunpack.c.l.b16 %v100
    %v611 = vunpack.c.h.b16 %v100
    %v612 = vunpack.c.l.b16 %v101
    %v613 = vunpack.c.h.b16 %v101
    %v614 = vunpack.c.l.b16 %v102
    %v615 = vunpack.c.h.b16 %v102
    %v616 = vunpack.c.l.b16 %v103
    %v617 = vunpack.c.h.b16 %v103
    %v618 = vunpack.c.l.b16 %v104
    %v619 = vunpack.c.h.b16 %v104
    %v620 = vunpack.c.l.b16 %v105
    %v621 = vunpack.c.h.b16 %v105
    %v622 = vunpack.c.l.b16 %v106
    %v623 = vunpack.c.h.b16 %v106
    %v624 = vunpack.c.l.b16 %v107
    %v625 = vunpack.c.h.b16 %v107
    %v626 = vunpack.c.l.b16 %v108
    %v627 = vunpack.c.h.b16 %v108
    %v628 = vunpack.c.l.b16 %v109
    %v629 = vunpack.c.h.b16 %v109
    %v630 = vunpack.c.l.b16 %v110
    %v631 = vunpack.c.h.b16 %v110
    %v632 = vunpack.c.l.b16 %v111
    %v633 = vunpack.c.h.b16 %v111
    %v634 = vunpack.c.l.b16 %v112
    %v635 = vunpack.c.h.b16 %v112
    %v636 = vunpack.c.l.b16 %v113
    %v637 = vunpack.c.h.b16 %v113
    %v638 = vunpack.c.l.b16 %v114
    %v639 = vunpack.c.h.b16 %v114
    %v640 = vunpack.c.l.b16 %v115
    %v641 = vunpack.c.h.b16 %v115
    %v642 = vunpack.c.l.b16 %v116
    %v643 = vunpack.c.h.b16 %v116
    %v644 = vunpack.c.l.b16 %v117
    %v645 = vunpack.c.h.b16 %v117
    %v646 = vunpack.c.l.b16 %v118
    %v647 = vunpack.c.h.b16 %v118
    %v648 = vunpack.c.l.b16 %v119
    %v649 = vunpack.c.h.b16 %v119
    %v650 = vunpack.c.l.b16 %v120
    %v651 = vunpack.c.h.b16 %v120
    %v652 = vunpack.c.l.b16 %v121
    %v653 = vunpack.c.h.b16 %v121
    %v654 = vunpack.c.l.b16 %v122
    %v655 = vunpack.c.h.b16 %v122
    %v656 = vunpack.c.l.b16 %v123
    %v657 = vunpack.c.h.b16 %v123
    %v658 = vunpack.c.l.b16 %v124
    %v659 = vunpack.c.h.b16 %v124
    %v660 = vunpack.c.l.b16 %v125
    %v661 = vunpack.c.h.b16 %v125
    %v662 = vunpack.c.l.b16 %v126
    %v663 = vunpack.c.h.b16 %v126
    %v664 = vunpack.c.l.b16 %v127
    %v665 = vunpack.c.h.b16 %v127
    %v666 = vunpack.c.l.b16 %v128
    %v667 = vunpack.c.h.b16 %v128
    %v668 = vunpack.c.l.b16 %v129
    %v669 = vunpack.c.h.b16 %v129
    %v670 = vunpack.c.l.b16 %v130
    %v671 = vunpack.c.h.b16 %v130
    %v672 = vunpack.c.l.b16 %v131
    %v673 = vunpack.c.h.b16 %v131
    %v674 = vunpack.c.l.b16 %v132
    %v675 = vunpack.c.h.b16 %v132
    %v676 = vunpack.c.l.b16 %v133
    %v677 = vunpack.c.h.b16 %v133
    %v678 = vunpack.c.l.b16 %v134
    %v679 = vunpack.c.h.b16 %v134
    %v680 = vunpack.c.l.b16 %v135
    %v681 = vunpack.c.h.b16 %v135
    %v682 = vunpack.c.l.b16 %v136
    %v683 = vunpack.c.h.b16 %v136
    %v684 = vunpack.c.l.b16 %v137
    %v685 = vunpack.c.h.b16 %v137
    %v686 = vunpack.c.l.b16 %v138
    %v687 = vunpack.c.h.b16 %v138
    %v688 = vunpack.c.l.b16 %v139
    %v689 = vunpack.c.h.b16 %v139
    %v690 = vunpack.c.l.b16 %v140
    %v691 = vunpack.c.h.b16 %v140
    %v692 = vunpack.c.l.b16 %v141
    %v693 = vunpack.c.h.b16 %v141
    %v694 = vunpack.c.l.b16 %v142
    %v695 = vunpack.c.h.b16 %v142
    %v696 = vunpack.c.l.b16 %v143
    %v697 = vunpack.c.h.b16 %v143
    %v698 = vunpack.c.l.b16 %v144
    %v699 = vunpack.c.h.b16 %v144
    %v700 = vunpack.c.l.b16 %v145
    %v701 = vunpack.c.h.b16 %v145
    %v702 = vunpack.c.l.b16 %v146
    %v703 = vunpack.c.h.b16 %v146
    %v704 = vunpack.c.l.b16 %v147
    %v705 = vunpack.c.h.b16 %v147
    %v706 = vunpack.c.l.b16 %v148
    %v707 = vunpack.c.h.b16 %v148
    %v708 = vunpack.c.l.b16 %v149
    %v709 = vunpack.c.h.b16 %v149
    %v710 = vunpack.c.l.b16 %v150
    %v711 = vunpack.c.h.b16 %v150
    %v712 = vunpack.c.l.b16 %v151
    %v713 = vunpack.c.h.b16 %v151
    %v714 = vunpack.c.l.b16 %v152
    %v715 = vunpack.c.h.b16 %v152
    %v716 = vunpack.c.l.b16 %v153
    %v717 = vunpack.c.h.b16 %v153
    %v718 = vunpack.c.l.b16 %v154
    %v719 = vunpack.c.h.b16 %v154
    %v720 = vunpack.c.l.b16 %v155
    %v721 = vunpack.c.h.b16 %v155
    %v722 = vunpack.c.l.b16 %v156
    %v723 = vunpack.c.h.b16 %v156
    %v724 = vunpack.c.l.b16 %v157
    %v725 = vunpack.c.h.b16 %v157
    %v726 = vunpack.c.l.b16 %v158
    %v727 = vunpack.c.h.b16 %v158
    %v728 = vunpack.c.l.b16 %v159
    %v729 = vunpack.c.h.b16 %v159
    %v730 = vunpack.c.l.b16 %v160
    %v731 = vunpack.c.h.b16 %v160
    %v732 = vunpack.c.l.b16 %v161
    %v733 = vunpack.c.h.b16 %v161
    %v734 = vunpack.c.l.b16 %v162
    %v735 = vunpack.c.h.b16 %v162
    %v736 = vunpack.c.l.b16 %v163
    %v737 = vunpack.c.h.b16 %v163
    %v738 = vunpack.c.l.b16 %v164
    %v739 = vunpack.c.h.b16 %v164
    %v740 = vunpack.c.l.b16 %v165
    %v741 = vunpack.c.h.b16 %v165
    %v742 = vunpack.c.l.b16 %v166
    %v743 = vunpack.c.h.b16 %v166
    %v744 = vunpack.c.l.b16 %v167
    %v745 = vunpack.c.h.b16 %v167
    %v746 = vunpack.c.l.b16 %v168
    %v747 = vunpack.c.h.b16 %v168
    %v748 = vunpack.c.l.b16 %v169
    %v749 = vunpack.c.h.b16 %v169
    %v750 = vunpack.c.l.b16 %v170
    %v751 = vunpack.c.h.b16 %v170
    %v752 = vunpack.c.l.b16 %v171
    %v753 = vunpack.c.h.b16 %v171
    %v754 = vunpack.c.l.b16 %v172
    %v755 = vunpack.c.h.b16 %v172
    %v756 = vunpack.c.l.b16 %v173
    %v757 = vunpack.c.h.b16 %v173
    %v758 = vunpack.c.l.b16 %v174
    %v759 = vunpack.c.h.b16 %v174
    %v760 = vunpack.c.l.b16 %v175
    %v761 = vunpack.c.h.b16 %v175
    %v762 = vunpack.c.l.b16 %v176
    %v763 = vunpack.c.h.b16 %v176
    %v764 = vunpack.c.l.b16 %v177
    %v765 = vunpack.c.h.b16 %v177
    %v766 = vunpack.c.l.b16 %v178
    %v767 = vunpack.c.h.b16 %v178
    %v768 = vunpack.c.l.b16 %v179
    %v769 = vunpack.c.h.b16 %v179
    %v770 = vunpack.c.l.b16 %v180
    %v771 = vunpack.c.h.b16 %v180
    %v772 = vunpack.c.l.b16 %v181
    %v773 = vunpack.c.h.b16 %v181
    %v774 = vunpack.c.l.b16 %v182
    %v775 = vunpack.c.h.b16 %v182
    %v776 = vunpack.c.l.b16 %v183
    %v777 = vunpack.c.h.b16 %v183
    %v778 = vunpack.c.l.b16 %v184
    %v779 = vunpack.c.h.b16 %v184
    %v780 = vunpack.c.l.b16 %v185
    %v781 = vunpack.c.h.b16 %v185
    %v782 = vunpack.c.l.b16 %v186
    %v783 = vunpack.c.h.b16 %v186
    %v784 = vunpack.c.l.b16 %v187
    %v785 = vunpack.c.h.b16 %v187
    %v786 = vunpack.c.l.b16 %v188
    %v787 = vunpack.c.h.b16 %v188
    %v788 = vunpack.c.l.b16 %v189
    %v789 = vunpack.c.h.b16 %v189
    %v790 = vunpack.c.l.b16 %v190
    %v791 = vunpack.c.h.b16 %v190
    %v792 = vunpack.c.l.b16 %v191
    %v793 = vunpack.c.h.b16 %v191
    %v794 = vunpack.c.l.b16 %v192
    %v795 = vunpack.c.h.b16 %v192
    %v796 = vunpack.c.l.b16 %v193
    %v797 = vunpack.c.h.b16 %v193
    %v798 = vunpack.c.l.b16 %v194
    %v799 = vunpack.c.h.b16 %v194
    %v800 = vunpack.c.l.b16 %v195
    %v801 = vunpack.c.h.b16 %v195
    %v802 = vunpack.c.l.b16 %v196
    %v803 = vunpack.c.h.b16 %v196
    %v804 = vunpack.c.l.b16 %v197
    %v805 = vunpack.c.h.b16 %v197
    %v806 = vunpack.c.l.b16 %v198
    %v807 = vunpack.c.h.b16 %v198
    %v808 = vunpack.c.l.b16 %v199
    %v809 = vunpack.c.h.b16 %v199
    %v810 = vunpack.c.l.b16 %v200
    %v811 = vunpack.c.h.b16 %v200
    %v812 = vunpack.c.l.b16 %v201
    %v813 = vunpack.c.h.b16 %v201
    %v814 = vunpack.c.l.b16 %v202
    %v815 = vunpack.c.h.b16 %v202
    %v816 = vunpack.c.l.b16 %v203
    %v817 = vunpack.c.h.b16 %v203
    %v818 = vunpack.c.l.b16 %v204
    %v819 = vunpack.c.h.b16 %v204
    %v820 = vunpack.c.l.b16 %v205
    %v821 = vunpack.c.h.b16 %v205
    %v822 = vunpack.c.l.b16 %v206
    %v823 = vunpack.c.h.b16 %v206
    %v824 = vunpack.c.l.b16 %v207
    %v825 = vunpack.c.h.b16 %v207
    %v826 = vunpack.c.l.b16 %v208
    %v827 = vunpack.c.h.b16 %v208
    %v828 = vunpack.c.l.b16 %v209
    %v829 = vunpack.c.h.b16 %v209
    %v830 = vunpack.c.l.b16 %v210
    %v831 = vunpack.c.h.b16 %v210
    %v832 = vunpack.c.l.b16 %v211
    %v833 = vunpack.c.h.b16 %v211
    %v834 = vunpack.c.l.b16 %v212
    %v835 = vunpack.c.h.b16 %v212
    %v836 = vunpack.c.l.b16 %v213
    %v837 = vunpack.c.h.b16 %v213
    %v838 = vunpack.c.l.b16 %v214
    %v839 = vunpack.c.h.b16 %v214
    %v840 = vunpack.c.l.b16 %v215
    %v841 = vunpack.c.h.b16 %v215
    %v842 = vunpack.c.l.b16 %v216
    %v843 = vunpack.c.h.b16 %v216
    %v844 = vunpack.c.l.b16 %v217
    %v845 = vunpack.c.h.b16 %v217
    %v846 = vunpack.c.l.b16 %v218
    %v847 = vunpack.c.h.b16 %v218
    %v848 = vunpack.c.l.b16 %v219
    %v849 = vunpack.c.h.b16 %v219
    %v850 = vunpack.c.l.b16 %v220
    %v851 = vunpack.c.h.b16 %v220
    %v852 = vunpack.c.l.b16 %v221
    %v853 = vunpack.c.h.b16 %v221
    %v854 = vunpack.c.l.b16 %v222
    %v855 = vunpack.c.h.b16 %v222
    %v856 = vunpack.c.l.b16 %v223
    %v857 = vunpack.c.h.b16 %v223
    %v858 = vunpack.c.l.b16 %v224
    %v859 = vunpack.c.h.b16 %v224
    %v860 = vunpack.c.l.b16 %v225
    %v861 = vunpack.c.h.b16 %v225
    %v862 = vunpack.c.l.b16 %v226
    %v863 = vunpack.c.h.b16 %v226
    %v864 = vunpack.c.l.b16 %v227
    %v865 = vunpack.c.h.b16 %v227
    %v866 = vunpack.c.l.b16 %v228
    %v867 = vunpack.c.h.b16 %v228
    %v868 = vunpack.c.l.b16 %v229
    %v869 = vunpack.c.h.b16 %v229
    %v870 = vunpack.c.l.b16 %v230
    %v871 = vunpack.c.h.b16 %v230
    %v872 = vunpack.c.l.b16 %v231
    %v873 = vunpack.c.h.b16 %v231
    %v874 = vunpack.c.l.b16 %v232
    %v875 = vunpack.c.h.b16 %v232
    %v876 = vunpack.c.l.b16 %v233
    %v877 = vunpack.c.h.b16 %v233
    %v878 = vunpack.c.l.b16 %v234
    %v879 = vunpack.c.h.b16 %v234
    %v880 = vunpack.c.l.b16 %v235
    %v881 = vunpack.c.h.b16 %v235
    %v882 = vunpack.c.l.b16 %v236
    %v883 = vunpack.c.h.b16 %v236
    %v884 = vunpack.c.l.b16 %v237
    %v885 = vunpack.c.h.b16 %v237
    %v886 = vunpack.c.l.b16 %v238
    %v887 = vunpack.c.h.b16 %v238
    %v888 = vunpack.c.l.b16 %v239
    %v889 = vunpack.c.h.b16 %v239
    %v890 = vunpack.c.l.b16 %v240
    %v891 = vunpack.c.h.b16 %v240
    %v892 = vunpack.c.l.b16 %v241
    %v893 = vunpack.c.h.b16 %v241
    %v894 = vunpack.c.l.b16 %v242
    %v895 = vunpack.c.h.b16 %v242
    %v896 = vunpack.c.l.b16 %v243
    %v897 = vunpack.c.h.b16 %v243
    %v898 = vunpack.c.l.b16 %v244
    %v899 = vunpack.c.h.b16 %v244
    %v900 = vunpack.c.l.b16 %v245
    %v901 = vunpack.c.h.b16 %v245
    %v902 = vunpack.c.l.b16 %v246
    %v903 = vunpack.c.h.b16 %v246
    %v904 = vpack.c.b16 %v524, %v520
    %v905 = vpack.c.b16 %v525, %v521
    %v906 = vpack.c.b16 %v526, %v522
    %v907 = vpack.c.b16 %v527, %v523
    %v908 = vpack.c.b16 %v532, %v528
    %v909 = vpack.c.b16 %v533, %v529
    %v910 = vpack.c.b16 %v534, %v530
    %v911 = vpack.c.b16 %v535, %v531
    %v912 = vpack.c.b16 %v540, %v536
    %v913 = vpack.c.b16 %v541, %v537
    %v914 = vpack.c.b16 %v542, %v538
    %v915 = vpack.c.b16 %v543, %v539
    %v916 = vpack.c.b16 %v548, %v544
    %v917 = vpack.c.b16 %v549, %v545
    %v918 = vpack.c.b16 %v550, %v546
    %v919 = vpack.c.b16 %v551, %v547
    %v920 = vpack.c.b16 %v556, %v552
    %v921 = vpack.c.b16 %v557, %v553
    %v922 = vpack.c.b16 %v558, %v554
    %v923 = vpack.c.b16 %v559, %v555
    %v924 = vpack.c.b16 %v564, %v560
    %v925 = vpack.c.b16 %v565, %v561
    %v926 = vpack.c.b16 %v566, %v562
    %v927 = vpack.c.b16 %v567, %v563
    %v928 = vpack.c.b16 %v572, %v568
    %v929 = vpack.c.b16 %v573, %v569
    %v930 = vpack.c.b16 %v574, %v570
    %v931 = vpack.c.b16 %v575, %v571
    %v932 = vpack.c.b16 %v580, %v576
    %v933 = vpack.c.b16 %v581, %v577
    %v934 = vpack.c.b16 %v582, %v578
    %v935 = vpack.c.b16 %v583, %v579
    %v936 = vpack.c.b16 %v588, %v584
    %v937 = vpack.c.b16 %v589, %v585
    %v938 = vpack.c.b16 %v590, %v586
    %v939 = vpack.c.b16 %v591, %v587
    %v940 = vpack.c.b16 %v596, %v592
    %v941 = vpack.c.b16 %v597, %v593
    %v942 = vpack.c.b16 %v598, %v594
    %v943 = vpack.c.b16 %v599, %v595
    %v944 = vpack.c.b16 %v604, %v600
    %v945 = vpack.c.b16 %v605, %v601
    %v946 = vpack.c.b16 %v606, %v602
    %v947 = vpack.c.b16 %v607, %v603
    %v948 = vpack.c.b16 %v612, %v608
    %v949 = vpack.c.b16 %v613, %v609
    %v950 = vpack.c.b16 %v614, %v610
    %v951 = vpack.c.b16 %v615, %v611
    %v952 = vpack.c.b16 %v620, %v616
    %v953 = vpack.c.b16 %v621, %v617
    %v954 = vpack.c.b16 %v622, %v618
    %v955 = vpack.c.b16 %v623, %v619
    %v956 = vpack.c.b16 %v628, %v624
    %v957 = vpack.c.b16 %v629, %v625
    %v958 = vpack.c.b16 %v630, %v626
    %v959 = vpack.c.b16 %v631, %v627
    %v960 = vpack.c.b16 %v636, %v632
    %v961 = vpack.c.b16 %v637, %v633
    %v962 = vpack.c.b16 %v638, %v634
    %v963 = vpack.c.b16 %v639, %v635
    %v964 = vpack.c.b16 %v644, %v640
    %v965 = vpack.c.b16 %v645, %v641
    %v966 = vpack.c.b16 %v646, %v642
    %v967 = vpack.c.b16 %v647, %v643
    %v968 = vpack.c.b16 %v652, %v648
    %v969 = vpack.c.b16 %v653, %v649
    %v970 = vpack.c.b16 %v654, %v650
    %v971 = vpack.c.b16 %v655, %v651
    %v972 = vpack.c.b16 %v660, %v656
    %v973 = vpack.c.b16 %v661, %v657
    %v974 = vpack.c.b16 %v662, %v658
    %v975 = vpack.c.b16 %v663, %v659
    %v976 = vpack.c.b16 %v668, %v664
    %v977 = vpack.c.b16 %v669, %v665
    %v978 = vpack.c.b16 %v670, %v666
    %v979 = vpack.c.b16 %v671, %v667
    %v980 = vpack.c.b16 %v676, %v672
    %v981 = vpack.c.b16 %v677, %v673
    %v982 = vpack.c.b16 %v678, %v674
    %v983 = vpack.c.b16 %v679, %v675
    %v984 = vpack.c.b16 %v684, %v680
    %v985 = vpack.c.b16 %v685, %v681
    %v986 = vpack.c.b16 %v686, %v682
    %v987 = vpack.c.b16 %v687, %v683
    %v988 = vpack.c.b16 %v692, %v688
    %v989 = vpack.c.b16 %v693, %v689
    %v990 = vpack.c.b16 %v694, %v690
    %v991 = vpack.c.b16 %v695, %v691
    %v992 = vpack.c.b16 %v700, %v696
    %v993 = vpack.c.b16 %v701, %v697
    %v994 = vpack.c.b16 %v702, %v698
    %v995 = vpack.c.b16 %v703, %v699
    %v996 = vpack.c.b16 %v708, %v704
    %v997 = vpack.c.b16 %v709, %v705
    %v998 = vpack.c.b16 %v710, %v706
    %v999 = vpack.c.b16 %v711, %v707
    %v1000 = vpack.c.b16 %v716, %v712
    %v1001 = vpack.c.b16 %v717, %v713
    %v1002 = vpack.c.b16 %v718, %v714
    %v1003 = vpack.c.b16 %v719, %v715
    %v1004 = vpack.c.b16 %v724, %v720
    %v1005 = vpack.c.b16 %v725, %v721
    %v1006 = vpack.c.b16 %v726, %v722
    %v1007 = vpack.c.b16 %v727, %v723
    %v1008 = vpack.c.b16 %v732, %v728
    %v1009 = vpack.c.b16 %v733, %v729
    %v1010 = vpack.c.b16 %v734, %v730
    %v1011 = vpack.c.b16 %v735, %v731
    %v1012 = vpack.c.b16 %v740, %v736
    %v1013 = vpack.c.b16 %v741, %v737
    %v1014 = vpack.c.b16 %v742, %v738
    %v1015 = vpack.c.b16 %v743, %v739
    %v1016 = vpack.c.b16 %v748, %v744
    %v1017 = vpack.c.b16 %v749, %v745
    %v1018 = vpack.c.b16 %v750, %v746
    %v1019 = vpack.c.b16 %v751, %v747
    %v1020 = vpack.c.b16 %v756, %v752
    %v1021 = vpack.c.b16 %v757, %v753
    %v1022 = vpack.c.b16 %v758, %v754
    %v1023 = vpack.c.b16 %v759, %v755
    %v1024 = vpack.c.b16 %v764, %v760
    %v1025 = vpack.c.b16 %v765, %v761
    %v1026 = vpack.c.b16 %v766, %v762
    %v1027 = vpack.c.b16 %v767, %v763
    %v1028 = vpack.c.b16 %v772, %v768
    %v1029 = vpack.c.b16 %v773, %v769
    %v1030 = vpack.c.b16 %v774, %v770
    %v1031 = vpack.c.b16 %v775, %v771
    %v1032 = vpack.c.b16 %v780, %v776
    %v1033 = vpack.c.b16 %v781, %v777
    %v1034 = vpack.c.b16 %v782, %v778
    %v1035 = vpack.c.b16 %v783, %v779
    %v1036 = vpack.c.b16 %v788, %v784
    %v1037 = vpack.c.b16 %v789, %v785
    %v1038 = vpack.c.b16 %v790, %v786
    %v1039 = vpack.c.b16 %v791, %v787
    %v1040 = vpack.c.b16 %v796, %v792
    %v1041 = vpack.c.b16 %v797, %v793
    %v1042 = vpack.c.b16 %v798, %v794
    %v1043 = vpack.c.b16 %v799, %v795
    %v1044 = vpack.c.b16 %v804, %v800
    %v1045 = vpack.c.b16 %v805, %v801
    %v1046 = vpack.c.b16 %v806, %v802
    %v1047 = vpack.c.b16 %v807, %v803
    %v1048 = vpack.c.b16 %v812, %v808
    %v1049 = vpack.c.b16 %v813, %v809
    %v1050 = vpack.c.b16 %v814, %v810
    %v1051 = vpack.c.b16 %v815, %v811
    %v1052 = vpack.c.b16 %v820, %v816
    %v1053 = vpack.c.b16 %v821, %v817
    %v1054 = vpack.c.b16 %v822, %v818
    %v1055 = vpack.c.b16 %v823, %v819
    %v1056 = vpack.c.b16 %v828, %v824
    %v1057 = vpack.c.b16 %v829, %v825
    %v1058 = vpack.c.b16 %v830, %v826
    %v1059 = vpack.c.b16 %v831, %v827
    %v1060 = vpack.c.b16 %v836, %v832
    %v1061 = vpack.c.b16 %v837, %v833
    %v1062 = vpack.c.b16 %v838, %v834
    %v1063 = vpack.c.b16 %v839, %v835
    %v1064 = vpack.c.b16 %v844, %v840
    %v1065 = vpack.c.b16 %v845, %v841
    %v1066 = vpack.c.b16 %v846, %v842
    %v1067 = vpack.c.b16 %v847, %v843
    %v1068 = vpack.c.b16 %v852, %v848
    %v1069 = vpack.c.b16 %v853, %v849
    %v1070 = vpack.c.b16 %v854, %v850
    %v1071 = vpack.c.b16 %v855, %v851
    %v1072 = vpack.c.b16 %v860, %v856
    %v1073 = vpack.c.b16 %v861, %v857
    %v1074 = vpack.c.b16 %v862, %v858
    %v1075 = vpack.c.b16 %v863, %v859
    %v1076 = vpack.c.b16 %v868, %v864
    %v1077 = vpack.c.b16 %v869, %v865
    %v1078 = vpack.c.b16 %v870, %v866
    %v1079 = vpack.c.b16 %v871, %v867
    %v1080 = vpack.c.b16 %v876, %v872
    %v1081 = vpack.c.b16 %v877, %v873
    %v1082 = vpack.c.b16 %v878, %v874
    %v1083 = vpack.c.b16 %v879, %v875
    %v1084 = vpack.c.b16 %v884, %v880
    %v1085 = vpack.c.b16 %v885, %v881
    %v1086 = vpack.c.b16 %v886, %v882
    %v1087 = vpack.c.b16 %v887, %v883
    %v1088 = vpack.c.b16 %v892, %v888
    %v1089 = vpack.c.b16 %v893, %v889
    %v1090 = vpack.c.b16 %v894, %v890
    %v1091 = vpack.c.b16 %v895, %v891
    %v1092 = vpack.c.b16 %v900, %v896
    %v1093 = vpack.c.b16 %v901, %v897
    %v1094 = vpack.c.b16 %v902, %v898
    %v1095 = vpack.c.b16 %v903, %v899
    %1288 = vmatprep.subr.bf16.mxu0 %v905
    %1289 = vmatpush1.bf16.msra.mxu0 %v904
    %1290 = vmatprep.subr.bf16.mxu0 %v909
    %1291 = vmatpush1.bf16.msra.mxu0 %v908
    %1292 = vmatprep.subr.bf16.mxu0 %v913
    %1293 = vmatpush1.bf16.msra.mxu0 %v912
    %1294 = vmatprep.subr.bf16.mxu0 %v917
    %1295 = vmatpush1.bf16.msra.mxu0 %v916
    %1296 = vmatprep.subr.bf16.mxu0 %v921
    %1297 = vmatpush1.bf16.msra.mxu0 %v920
    %1298 = vmatprep.subr.bf16.mxu0 %v925
    %1299 = vmatpush1.bf16.msra.mxu0 %v924
    %1300 = vmatprep.subr.bf16.mxu0 %v929
    %1301 = vmatpush1.bf16.msra.mxu0 %v928
    %1302 = vmatprep.subr.bf16.mxu0 %v933
    %1303 = vmatpush1.bf16.msra.mxu0 %v932
    %1304 = vmatprep.subr.bf16.mxu0 %v937
    %1305 = vmatpush1.bf16.msra.mxu0 %v936
    %1306 = vmatprep.subr.bf16.mxu0 %v941
    %1307 = vmatpush1.bf16.msra.mxu0 %v940
    %1308 = vmatprep.subr.bf16.mxu0 %v945
    %1309 = vmatpush1.bf16.msra.mxu0 %v944
    %1310 = vmatprep.subr.bf16.mxu0 %v949
    %1311 = vmatpush1.bf16.msra.mxu0 %v948
    %1312 = vmatprep.subr.bf16.mxu0 %v953
    %1313 = vmatpush1.bf16.msra.mxu0 %v952
    %1314 = vmatprep.subr.bf16.mxu0 %v957
    %1315 = vmatpush1.bf16.msra.mxu0 %v956
    %1316 = vmatprep.subr.bf16.mxu0 %v961
    %1317 = vmatpush1.bf16.msra.mxu0 %v960
    %1318 = vmatprep.subr.bf16.mxu0 %v965
    %1319 = vmatpush1.bf16.msra.mxu0 %v964
    %1320 = vmatprep.mubr.bf16.mxu0 %v293
    %1321 = vmatmul.mubr.bf16.gmra.mrb[0].mxu0 %v292
    %v1322 = vpop.f32.mrb[0].mxu0
    %v1323 = vadd.f32 0.0, %v1322
    %v1324 = vpop.f32.mrb[0].mxu0
    %v1325 = vadd.f32 0.0, %v1324
    %v1326 = vpop.f32.mrb[0].mxu0
    %v1327 = vadd.f32 0.0, %v1326
    %v1328 = vpop.f32.mrb[0].mxu0
    %v1329 = vadd.f32 0.0, %v1328
    %1330 = vmatprep.mubr.bf16.mxu0 %v299
    %1331 = vmatmul.mubr.bf16.gmra.mrb[0].mxu0 %v298
    %v1332 = vpop.f32.mrb[0].mxu0
    %v1333 = vadd.f32 0.0, %v1332
    %v1334 = vpop.f32.mrb[0].mxu0
    %v1335 = vadd.f32 0.0, %v1334
    %v1336 = vpop.f32.mrb[0].mxu0
    %v1337 = vadd.f32 0.0, %v1336
    %v1338 = vpop.f32.mrb[0].mxu0
    %v1339 = vadd.f32 0.0, %v1338
    %1340 = vmatprep.mubr.bf16.mxu0 %v305
    %1341 = vmatmul.mubr.bf16.gmra.mrb[0].mxu0 %v304
    %v1342 = vpop.f32.mrb[0].mxu0
    %v1343 = vpop.f32.mrb[0].mxu0
    %v1344 = vpop.f32.mrb[0].mxu0
    %v1345 = vpop.f32.mrb[0].mxu0
    %1346 = vdwg.mxu0
    %1347 = vmatprep.subr.bf16.mxu0 %v969
    %1348 = vmatpush1.bf16.msra.mxu0 %v968
    %1349 = vmatprep.subr.bf16.mxu0 %v973
    %1350 = vmatpush1.bf16.msra.mxu0 %v972
    %1351 = vmatprep.subr.bf16.mxu0 %v977
    %1352 = vmatpush1.bf16.msra.mxu0 %v976
    %1353 = vmatprep.subr.bf16.mxu0 %v981
    %1354 = vmatpush1.bf16.msra.mxu0 %v980
    %1355 = vmatprep.subr.bf16.mxu0 %v985
    %1356 = vmatpush1.bf16.msra.mxu0 %v984
    %1357 = vmatprep.subr.bf16.mxu0 %v989
    %1358 = vmatpush1.bf16.msra.mxu0 %v988
    %1359 = vmatprep.subr.bf16.mxu0 %v993
    %1360 = vmatpush1.bf16.msra.mxu0 %v992
    %1361 = vmatprep.subr.bf16.mxu0 %v997
    %1362 = vmatpush1.bf16.msra.mxu0 %v996
    %1363 = vmatprep.subr.bf16.mxu0 %v1001
    %1364 = vmatpush1.bf16.msra.mxu0 %v1000
    %1365 = vmatprep.subr.bf16.mxu0 %v1005
    %1366 = vmatpush1.bf16.msra.mxu0 %v1004
    %1367 = vmatprep.subr.bf16.mxu0 %v1009
    %1368 = vmatpush1.bf16.msra.mxu0 %v1008
    %1369 = vmatprep.subr.bf16.mxu0 %v1013
    %1370 = vmatpush1.bf16.msra.mxu0 %v1012
    %1371 = vmatprep.subr.bf16.mxu0 %v1017
    %1372 = vmatpush1.bf16.msra.mxu0 %v1016
    %1373 = vmatprep.subr.bf16.mxu0 %v1021
    %1374 = vmatpush1.bf16.msra.mxu0 %v1020
    %1375 = vmatprep.subr.bf16.mxu0 %v1025
    %1376 = vmatpush1.bf16.msra.mxu0 %v1024
    %1377 = vmatprep.subr.bf16.mxu0 %v1029
    %1378 = vmatpush1.bf16.msra.mxu0 %v1028
    %1379 = vmatprep.mubr.bf16.mxu0 %v295
    %1380 = vmatmul.mubr.bf16.gmra.mrb[0].mxu0 %v294
    %v1381 = vpop.f32.mrb[0].mxu0
    %v1382 = vadd.f32 %v1323, %v1381
    %v1383 = vpop.f32.mrb[0].mxu0
    %v1384 = vadd.f32 %v1325, %v1383
    %v1385 = vpop.f32.mrb[0].mxu0
    %v1386 = vadd.f32 %v1327, %v1385
    %v1387 = vpop.f32.mrb[0].mxu0
    %v1388 = vadd.f32 %v1329, %v1387
    %1389 = vmatprep.mubr.bf16.mxu0 %v301
    %1390 = vmatmul.mubr.bf16.gmra.mrb[0].mxu0 %v300
    %v1391 = vpop.f32.mrb[0].mxu0
    %v1392 = vadd.f32 %v1333, %v1391
    %v1393 = vpop.f32.mrb[0].mxu0
    %v1394 = vadd.f32 %v1335, %v1393
    %v1395 = vpop.f32.mrb[0].mxu0
    %v1396 = vadd.f32 %v1337, %v1395
    %v1397 = vpop.f32.mrb[0].mxu0
    %v1398 = vadd.f32 %v1339, %v1397
    %1399 = vmatprep.mubr.bf16.mxu0 %v307
    %1400 = vmatmul.mubr.bf16.gmra.mrb[0].mxu0 %v306
    %v1401 = vpop.f32.mrb[0].mxu0
    %v1402 = vpop.f32.mrb[0].mxu0
    %v1403 = vpop.f32.mrb[0].mxu0
    %v1404 = vpop.f32.mrb[0].mxu0
    %1405 = vdwg.mxu0
    %1406 = vmatprep.subr.bf16.mxu0 %v1033
    %1407 = vmatpush1.bf16.msra.mxu0 %v1032
    %1408 = vmatprep.subr.bf16.mxu0 %v1037
    %1409 = vmatpush1.bf16.msra.mxu0 %v1036
    %1410 = vmatprep.subr.bf16.mxu0 %v1041
    %1411 = vmatpush1.bf16.msra.mxu0 %v1040
    %1412 = vmatprep.subr.bf16.mxu0 %v1045
    %1413 = vmatpush1.bf16.msra.mxu0 %v1044
    %1414 = vmatprep.subr.bf16.mxu0 %v1049
    %1415 = vmatpush1.bf16.msra.mxu0 %v1048
    %1416 = vmatprep.subr.bf16.mxu0 %v1053
    %1417 = vmatpush1.bf16.msra.mxu0 %v1052
    %1418 = vmatprep.subr.bf16.mxu0 %v1057
    %1419 = vmatpush1.bf16.msra.mxu0 %v1056
    %1420 = vmatprep.subr.bf16.mxu0 %v1061
    %1421 = vmatpush1.bf16.msra.mxu0 %v1060
    %1422 = vmatprep.subr.bf16.mxu0 %v1065
    %1423 = vmatpush1.bf16.msra.mxu0 %v1064
    %1424 = vmatprep.subr.bf16.mxu0 %v1069
    %1425 = vmatpush1.bf16.msra.mxu0 %v1068
    %1426 = vmatprep.subr.bf16.mxu0 %v1073
    %1427 = vmatpush1.bf16.msra.mxu0 %v1072
    %1428 = vmatprep.subr.bf16.mxu0 %v1077
    %1429 = vmatpush1.bf16.msra.mxu0 %v1076
    %1430 = vmatprep.subr.bf16.mxu0 %v1081
    %1431 = vmatpush1.bf16.msra.mxu0 %v1080
    %1432 = vmatprep.subr.bf16.mxu0 %v1085
    %1433 = vmatpush1.bf16.msra.mxu0 %v1084
    %1434 = vmatprep.subr.bf16.mxu0 %v1089
    %1435 = vmatpush1.bf16.msra.mxu0 %v1088
    %1436 = vmatprep.subr.bf16.mxu0 %v1093
    %1437 = vmatpush1.bf16.msra.mxu0 %v1092
    %1438 = vmatprep.mubr.bf16.mxu0 %v297
    %1439 = vmatmul.mubr.bf16.gmra.mrb[0].mxu0 %v296
    %v1440 = vpop.f32.mrb[0].mxu0
    %v1441 = vadd.f32 %v1382, %v1440
    %v1442 = vpop.f32.mrb[0].mxu0
    %v1443 = vadd.f32 %v1384, %v1442
    %v1444 = vpop.f32.mrb[0].mxu0
    %v1445 = vadd.f32 %v1386, %v1444
    %v1446 = vpop.f32.mrb[0].mxu0
    %v1447 = vadd.f32 %v1388, %v1446
    %1448 = vmatprep.mubr.bf16.mxu0 %v303
    %1449 = vmatmul.mubr.bf16.gmra.mrb[0].mxu0 %v302
    %v1450 = vpop.f32.mrb[0].mxu0
    %v1451 = vadd.f32 %v1392, %v1450
    %v1452 = vpop.f32.mrb[0].mxu0
    %v1453 = vadd.f32 %v1394, %v1452
    %v1454 = vpop.f32.mrb[0].mxu0
    %v1455 = vadd.f32 %v1396, %v1454
    %v1456 = vpop.f32.mrb[0].mxu0
    %v1457 = vadd.f32 %v1398, %v1456
    %1458 = vmatprep.mubr.bf16.mxu0 %v309
    %1459 = vmatmul.mubr.bf16.gmra.mrb[0].mxu0 %v308
    %v1460 = vpop.f32.mrb[0].mxu0
    %v1461 = vpop.f32.mrb[0].mxu0
    %v1462 = vpop.f32.mrb[0].mxu0
    %v1463 = vpop.f32.mrb[0].mxu0
    %1464 = vdwg.mxu0
    %1465 = vmatprep.subr.bf16.mxu0 %v907
    %1466 = vmatpush1.bf16.msra.mxu0 %v906
    %1467 = vmatprep.subr.bf16.mxu0 %v911
    %1468 = vmatpush1.bf16.msra.mxu0 %v910
    %1469 = vmatprep.subr.bf16.mxu0 %v915
    %1470 = vmatpush1.bf16.msra.mxu0 %v914
    %1471 = vmatprep.subr.bf16.mxu0 %v919
    %1472 = vmatpush1.bf16.msra.mxu0 %v918
    %1473 = vmatprep.subr.bf16.mxu0 %v923
    %1474 = vmatpush1.bf16.msra.mxu0 %v922
    %1475 = vmatprep.subr.bf16.mxu0 %v927
    %1476 = vmatpush1.bf16.msra.mxu0 %v926
    %1477 = vmatprep.subr.bf16.mxu0 %v931
    %1478 = vmatpush1.bf16.msra.mxu0 %v930
    %1479 = vmatprep.subr.bf16.mxu0 %v935
    %1480 = vmatpush1.bf16.msra.mxu0 %v934
    %1481 = vmatprep.subr.bf16.mxu0 %v939
    %1482 = vmatpush1.bf16.msra.mxu0 %v938
    %1483 = vmatprep.subr.bf16.mxu0 %v943
    %1484 = vmatpush1.bf16.msra.mxu0 %v942
    %1485 = vmatprep.subr.bf16.mxu0 %v947
    %1486 = vmatpush1.bf16.msra.mxu0 %v946
    %1487 = vmatprep.subr.bf16.mxu0 %v951
    %1488 = vmatpush1.bf16.msra.mxu0 %v950
    %1489 = vmatprep.subr.bf16.mxu0 %v955
    %1490 = vmatpush1.bf16.msra.mxu0 %v954
    %1491 = vmatprep.subr.bf16.mxu0 %v959
    %1492 = vmatpush1.bf16.msra.mxu0 %v958
    %1493 = vmatprep.subr.bf16.mxu0 %v963
    %1494 = vmatpush1.bf16.msra.mxu0 %v962
    %1495 = vmatprep.subr.bf16.mxu0 %v967
    %1496 = vmatpush1.bf16.msra.mxu0 %v966
    %1497 = vmatprep.mubr.bf16.mxu0 %v293
    %1498 = vmatmul.mubr.bf16.gmra.mrb[0].mxu0 %v292
    %v1499 = vpop.f32.mrb[0].mxu0
    %v1500 = vadd.f32 0.0, %v1499
    %v1501 = vpop.f32.mrb[0].mxu0
    %v1502 = vpop.f32.mrb[0].mxu0
    %v1503 = vadd.f32 0.0, %v1502
    %v1504 = vpop.f32.mrb[0].mxu0
    %1505 = vmatprep.mubr.bf16.mxu0 %v299
    %1506 = vmatmul.mubr.bf16.gmra.mrb[0].mxu0 %v298
    %v1507 = vpop.f32.mrb[0].mxu0
    %v1508 = vadd.f32 0.0, %v1507
    %v1509 = vpop.f32.mrb[0].mxu0
    %v1510 = vpop.f32.mrb[0].mxu0
    %v1511 = vadd.f32 0.0, %v1510
    %v1512 = vpop.f32.mrb[0].mxu0
    %1513 = vmatprep.mubr.bf16.mxu0 %v305
    %1514 = vmatmul.mubr.bf16.gmra.mrb[0].mxu0 %v304
    %v1515 = vpop.f32.mrb[0].mxu0
    %v1516 = vpop.f32.mrb[0].mxu0
    %v1517 = vadd.f32 0.0, %v1516
    %v1518 = vpop.f32.mrb[0].mxu0
    %v1519 = vpop.f32.mrb[0].mxu0
    %1520 = vdwg.mxu0
    %1521 = vmatprep.subr.bf16.mxu0 %v971
    %1522 = vmatpush1.bf16.msra.mxu0 %v970
    %1523 = vmatprep.subr.bf16.mxu0 %v975
    %1524 = vmatpush1.bf16.msra.mxu0 %v974
    %1525 = vmatprep.subr.bf16.mxu0 %v979
    %1526 = vmatpush1.bf16.msra.mxu0 %v978
    %1527 = vmatprep.subr.bf16.mxu0 %v983
    %1528 = vmatpush1.bf16.msra.mxu0 %v982
    %1529 = vmatprep.subr.bf16.mxu0 %v987
    %1530 = vmatpush1.bf16.msra.mxu0 %v986
    %1531 = vmatprep.subr.bf16.mxu0 %v991
    %1532 = vmatpush1.bf16.msra.mxu0 %v990
    %1533 = vmatprep.subr.bf16.mxu0 %v995
    %1534 = vmatpush1.bf16.msra.mxu0 %v994
    %1535 = vmatprep.subr.bf16.mxu0 %v999
    %1536 = vmatpush1.bf16.msra.mxu0 %v998
    %1537 = vmatprep.subr.bf16.mxu0 %v1003
    %1538 = vmatpush1.bf16.msra.mxu0 %v1002
    %1539 = vmatprep.subr.bf16.mxu0 %v1007
    %1540 = vmatpush1.bf16.msra.mxu0 %v1006
    %1541 = vmatprep.subr.bf16.mxu0 %v1011
    %1542 = vmatpush1.bf16.msra.mxu0 %v1010
    %1543 = vmatprep.subr.bf16.mxu0 %v1015
    %1544 = vmatpush1.bf16.msra.mxu0 %v1014
    %1545 = vmatprep.subr.bf16.mxu0 %v1019
    %1546 = vmatpush1.bf16.msra.mxu0 %v1018
    %1547 = vmatprep.subr.bf16.mxu0 %v1023
    %1548 = vmatpush1.bf16.msra.mxu0 %v1022
    %1549 = vmatprep.subr.bf16.mxu0 %v1027
    %1550 = vmatpush1.bf16.msra.mxu0 %v1026
    %1551 = vmatprep.subr.bf16.mxu0 %v1031
    %1552 = vmatpush1.bf16.msra.mxu0 %v1030
    %1553 = vmatprep.mubr.bf16.mxu0 %v295
    %1554 = vmatmul.mubr.bf16.gmra.mrb[0].mxu0 %v294
    %v1555 = vpop.f32.mrb[0].mxu0
    %v1556 = vadd.f32 %v1500, %v1555
    %v1557 = vpop.f32.mrb[0].mxu0
    %v1558 = vpop.f32.mrb[0].mxu0
    %v1559 = vadd.f32 %v1503, %v1558
    %v1560 = vpop.f32.mrb[0].mxu0
    %1561 = vmatprep.mubr.bf16.mxu0 %v301
    %1562 = vmatmul.mubr.bf16.gmra.mrb[0].mxu0 %v300
    %v1563 = vpop.f32.mrb[0].mxu0
    %v1564 = vadd.f32 %v1508, %v1563
    %v1565 = vpop.f32.mrb[0].mxu0
    %v1566 = vpop.f32.mrb[0].mxu0
    %v1567 = vadd.f32 %v1511, %v1566
    %v1568 = vpop.f32.mrb[0].mxu0
    %1569 = vmatprep.mubr.bf16.mxu0 %v307
    %1570 = vmatmul.mubr.bf16.gmra.mrb[0].mxu0 %v306
    %v1571 = vpop.f32.mrb[0].mxu0
    %v1572 = vpop.f32.mrb[0].mxu0
    %v1573 = vadd.f32 %v1517, %v1572
    %v1574 = vpop.f32.mrb[0].mxu0
    %v1575 = vpop.f32.mrb[0].mxu0
    %1576 = vdwg.mxu0
    %1577 = vmatprep.subr.bf16.mxu0 %v1035
    %1578 = vmatpush1.bf16.msra.mxu0 %v1034
    %1579 = vmatprep.subr.bf16.mxu0 %v1039
    %1580 = vmatpush1.bf16.msra.mxu0 %v1038
    %1581 = vmatprep.subr.bf16.mxu0 %v1043
    %1582 = vmatpush1.bf16.msra.mxu0 %v1042
    %1583 = vmatprep.subr.bf16.mxu0 %v1047
    %1584 = vmatpush1.bf16.msra.mxu0 %v1046
    %1585 = vmatprep.subr.bf16.mxu0 %v1051
    %1586 = vmatpush1.bf16.msra.mxu0 %v1050
    %1587 = vmatprep.subr.bf16.mxu0 %v1055
    %1588 = vmatpush1.bf16.msra.mxu0 %v1054
    %1589 = vmatprep.subr.bf16.mxu0 %v1059
    %1590 = vmatpush1.bf16.msra.mxu0 %v1058
    %1591 = vmatprep.subr.bf16.mxu0 %v1063
    %1592 = vmatpush1.bf16.msra.mxu0 %v1062
    %1593 = vmatprep.subr.bf16.mxu0 %v1067
    %1594 = vmatpush1.bf16.msra.mxu0 %v1066
    %1595 = vmatprep.subr.bf16.mxu0 %v1071
    %1596 = vmatpush1.bf16.msra.mxu0 %v1070
    %1597 = vmatprep.subr.bf16.mxu0 %v1075
    %1598 = vmatpush1.bf16.msra.mxu0 %v1074
    %1599 = vmatprep.subr.bf16.mxu0 %v1079
    %1600 = vmatpush1.bf16.msra.mxu0 %v1078
    %1601 = vmatprep.subr.bf16.mxu0 %v1083
    %1602 = vmatpush1.bf16.msra.mxu0 %v1082
    %1603 = vmatprep.subr.bf16.mxu0 %v1087
    %1604 = vmatpush1.bf16.msra.mxu0 %v1086
    %1605 = vmatprep.subr.bf16.mxu0 %v1091
    %1606 = vmatpush1.bf16.msra.mxu0 %v1090
    %1607 = vmatprep.subr.bf16.mxu0 %v1095
    %1608 = vmatpush1.bf16.msra.mxu0 %v1094
    %1609 = vmatprep.mubr.bf16.mxu0 %v297
    %1610 = vmatmul.mubr.bf16.gmra.mrb[0].mxu0 %v296
    %v1611 = vpop.f32.mrb[0].mxu0
    %v1612 = vadd.f32 %v1556, %v1611
    %v1613 = vpop.f32.mrb[0].mxu0
    %v1614 = vpop.f32.mrb[0].mxu0
    %v1615 = vadd.f32 %v1559, %v1614
    %v1616 = vpop.f32.mrb[0].mxu0
    %1617 = vmatprep.mubr.bf16.mxu0 %v303
    %1618 = vmatmul.mubr.bf16.gmra.mrb[0].mxu0 %v302
    %v1619 = vpop.f32.mrb[0].mxu0
    %v1620 = vadd.f32 %v1564, %v1619
    %v1621 = vpop.f32.mrb[0].mxu0
    %v1622 = vpop.f32.mrb[0].mxu0
    %v1623 = vadd.f32 %v1567, %v1622
    %v1624 = vpop.f32.mrb[0].mxu0
    %1625 = vmatprep.mubr.bf16.mxu0 %v309
    %1626 = vmatmul.mubr.bf16.gmra.mrb[0].mxu0 %v308
    %v1627 = vpop.f32.mrb[0].mxu0
    %v1628 = vpop.f32.mrb[0].mxu0
    %v1629 = vadd.f32 %v1573, %v1628
    %v1630 = vpop.f32.mrb[0].mxu0
    %v1631 = vpop.f32.mrb[0].mxu0
    %1632 = vdwg.mxu0
    %v1633 = vlaneseq
    %v1634 = vshrl.u32 %v1633, 7
    %v1635 = vsub.s32 0, %v1634
    %v1636 = vrot.slane %v38, %v1635
    %v1637 = vlaneseq
    %v1638 = vshrl.u32 %v1637, 7
    %v1639 = vsub.s32 0, %v1638
    %v1640 = vrot.slane %v39, %v1639
    %v1641 = vadd.f32 %v1441, %v1636
    %v1642 = vadd.f32 %v1443, %v1640
    %v1643 = vadd.f32 %v1445, %v1636
    %v1644 = vadd.f32 %v1447, %v1640
    %v1645 = vadd.f32 %v1451, %v1636
    %v1646 = vadd.f32 %v1453, %v1640
    %v1647 = vadd.f32 %v1455, %v1636
    %v1648 = vadd.f32 %v1457, %v1640
    %v1649 = vlaneseq
    %v1650 = vshrl.u32 %v1649, 7
    %v1651 = vsub.s32 1, %v1650
    %v1652 = vrot.slane %v38, %v1651
    %v1653 = vlaneseq
    %v1654 = vshrl.u32 %v1653, 7
    %v1655 = vsub.s32 1, %v1654
    %v1656 = vrot.slane %v39, %v1655
    %1659 = vrot.lane.b32.xlu0 %v1652, 64
    %v1660 = vpop.permute.xlu0 %1659
    %1661 = vrot.lane.b32.xlu0 %v1656, 64
    %v1662 = vpop.permute.xlu0 %1661
    %vm1663 = vcmask 523264
    %v1664 = vsel %vm1663, %v1660, %v1662
    %v1667 = vadd.f32 %v1443, %v1660
    %v1668 = vadd.f32 %v1612, %v1664
    %v1669 = vadd.f32 %v1447, %v1660
    %v1670 = vadd.f32 %v1615, %v1664
    %v1671 = vadd.f32 %v1453, %v1660
    %v1672 = vadd.f32 %v1620, %v1664
    %v1673 = vadd.f32 %v1457, %v1660
    %v1674 = vadd.f32 %v1623, %v1664
    %v1675 = vlaneseq
    %v1676 = vshrl.u32 %v1675, 7
    %v1677 = vsub.s32 4, %v1676
    %v1678 = vrot.slane %v38, %v1677
    %1680 = vrot.lane.b32.xlu0 %v1678, 64
    %v1681 = vpop.permute.xlu0 %1680
    %v1683 = vadd.f32 %v1629, %v1681
    %v1684 = vmul.f32 %v1683, 0.5
    %v1685 = vmul.f32 %v1683, 0.70710677
    %vm1686 = vcmp.lt.f32.partialorder %v1685, 0.0
    %v1687 = vsel %vm1686, -1.0, 1.0
    %v1688 = vand.u32 2147483647, %v1685
    %v1689 = vmul.f32 %v1688, 0.3275911
    %v1690 = vadd.f32 %v1689, 1.0
    %v1691 = vrcp.pop %v1690
    %v1692 = vmul.f32 1.0, %v1691
    %v1693 = vmul.f32 %v1692, 1.0614054
    %v1694 = vadd.f32 %v1693, -1.4531521
    %v1695 = vmul.f32 %v1692, %v1694
    %v1696 = vadd.f32 %v1695, 1.4214138
    %v1697 = vmul.f32 %v1692, %v1696
    %v1698 = vadd.f32 %v1697, -0.28449672
    %v1699 = vmul.f32 %v1692, %v1698
    %v1700 = vadd.f32 %v1699, 0.2548296
    %v1701 = vmul.f32 %v1692, %v1700
    %v1702 = vmul.f32 %v1688, %v1688
    %v1703 = vsub.f32 0.0, %v1702
    %v1704 = vmul.f32 %v1703, 1.442695
    %v1705 = vpow.pop %v1704
    %v1706 = vmul.f32 %v1701, %v1705
    %v1707 = vsub.f32 1.0, %v1706
    %v1708 = vmul.f32 %v1687, %v1707
    %v1709 = vadd.f32 %v1708, 1.0
    %v1710 = vmul.f32 %v1684, %v1709
    %1712 = vrot.lane.b32.xlu0 %v1641, 64
    %v1713 = vpop.permute.xlu0 %1712
    %v1714 = vsel %vm1663, %v1641, 0
    %v1716 = vsel %vm1663, %v1713, 0
    %1718 = vmatprep.subr.mxu0 0.0
    %1719 = vmatpush1.xpose.msra.mxu0 %v1716
    %1720 = vmatprep.subr.mxu0 0.0
    %1721 = vmatpush1.xpose.msra.mxu0 0.0
    %1722 = vmatprep.subr.mxu0 0.0
    %1723 = vmatpush1.xpose.msra.mxu0 0.0
    %1724 = vmatprep.subr.mxu0 0.0
    %1725 = vmatpush1.xpose.msra.mxu0 0.0
    %1726 = vmatprep.subr.mxu0 0.0
    %1727 = vmatpush1.xpose.msra.mxu0 0.0
    %1728 = vmatprep.subr.mxu0 0.0
    %1729 = vmatpush1.xpose.msra.mxu0 0.0
    %1730 = vmatprep.subr.mxu0 0.0
    %1731 = vmatpush1.xpose.msra.mxu0 0.0
    %1732 = vmatprep.subr.mxu0 0.0
    %1733 = vmatpush1.xpose.msra.mxu0 0.0
    %1734 = vmatprep.subr.mxu0 0.0
    %1735 = vmatpush1.xpose.msra.mxu0 0.0
    %1736 = vmatprep.subr.mxu0 0.0
    %1737 = vmatpush1.xpose.msra.mxu0 0.0
    %1738 = vmatprep.subr.mxu0 0.0
    %1739 = vmatpush1.xpose.msra.mxu0 0.0
    %1740 = vmatprep.subr.mxu0 0.0
    %1741 = vmatpush1.xpose.msra.mxu0 0.0
    %1742 = vmatprep.subr.mxu0 0.0
    %1743 = vmatpush1.xpose.msra.mxu0 0.0
    %1744 = vmatprep.subr.mxu0 0.0
    %1745 = vmatpush1.xpose.msra.mxu0 0.0
    %1746 = vmatprep.subr.mxu0 0.0
    %1747 = vmatpush1.xpose.msra.mxu0 0.0
    %1748 = vmatprep.subr.mxu0 0.0
    %1749 = vmatpush1.xpose.msra.mxu0 0.0
    %1750 = vmatprep.subr.mxu0 0.0
    %1751 = vmatpush1.xpose.msra.mxu0 0.0
    %1752 = vmatprep.subr.mxu0 0.0
    %1753 = vmatpush1.xpose.msra.mxu0 0.0
    %1754 = vmatprep.subr.mxu0 0.0
    %1755 = vmatpush1.xpose.msra.mxu0 0.0
    %1756 = vmatprep.subr.mxu0 0.0
    %1757 = vmatpush1.xpose.msra.mxu0 0.0
    %1758 = vmatprep.subr.mxu0 0.0
    %1759 = vmatpush1.xpose.msra.mxu0 0.0
    %1760 = vmatprep.subr.mxu0 0.0
    %1761 = vmatpush1.xpose.msra.mxu0 0.0
    %1762 = vmatprep.subr.mxu0 0.0
    %1763 = vmatpush1.xpose.msra.mxu0 0.0
    %1764 = vmatprep.subr.mxu0 0.0
    %1765 = vmatpush1.xpose.msra.mxu0 0.0
    %1766 = vmatprep.subr.mxu0 0.0
    %1767 = vmatpush1.xpose.msra.mxu0 0.0
    %1768 = vmatprep.subr.mxu0 0.0
    %1769 = vmatpush1.xpose.msra.mxu0 0.0
    %1770 = vmatprep.subr.mxu0 0.0
    %1771 = vmatpush1.xpose.msra.mxu0 0.0
    %1772 = vmatprep.subr.mxu0 0.0
    %1773 = vmatpush1.xpose.msra.mxu0 0.0
    %1774 = vmatprep.subr.mxu0 0.0
    %1775 = vmatpush1.xpose.msra.mxu0 0.0
    %1776 = vmatprep.subr.mxu0 0.0
    %1777 = vmatpush1.xpose.msra.mxu0 0.0
    %1778 = vmatprep.subr.mxu0 0.0
    %1779 = vmatpush1.xpose.msra.mxu0 0.0
    %1780 = vmatprep.subr.mxu0 0.0
    %1781 = vmatpush1.xpose.msra.mxu0 0.0
    %1782 = vmatprep.mubr.f32.mxu0 0.0
    %1783 = vmatmul.mubr.f32.gmra.mrb[0].mxu0 %v1714
    %v1784 = vpop.f32.mrb[0].mxu0
    %v1785 = vadd.f32 0.0, %v1784
    %v1786 = vpop.f32.mrb[0].mxu0
    %1787 = vdwg.mxu0
    %1789 = vrot.lane.b32.xlu0 %v1643, 64
    %v1790 = vpop.permute.xlu0 %1789
    %v1791 = vsel %vm1663, %v1643, 0
    %v1793 = vsel %vm1663, %v1790, 0
    %1795 = vmatprep.subr.mxu0 0.0
    %1796 = vmatpush1.xpose.msra.mxu0 %v1793
    %1797 = vmatprep.subr.mxu0 0.0
    %1798 = vmatpush1.xpose.msra.mxu0 0.0
    %1799 = vmatprep.subr.mxu0 0.0
    %1800 = vmatpush1.xpose.msra.mxu0 0.0
    %1801 = vmatprep.subr.mxu0 0.0
    %1802 = vmatpush1.xpose.msra.mxu0 0.0
    %1803 = vmatprep.subr.mxu0 0.0
    %1804 = vmatpush1.xpose.msra.mxu0 0.0
    %1805 = vmatprep.subr.mxu0 0.0
    %1806 = vmatpush1.xpose.msra.mxu0 0.0
    %1807 = vmatprep.subr.mxu0 0.0
    %1808 = vmatpush1.xpose.msra.mxu0 0.0
    %1809 = vmatprep.subr.mxu0 0.0
    %1810 = vmatpush1.xpose.msra.mxu0 0.0
    %1811 = vmatprep.subr.mxu0 0.0
    %1812 = vmatpush1.xpose.msra.mxu0 0.0
    %1813 = vmatprep.subr.mxu0 0.0
    %1814 = vmatpush1.xpose.msra.mxu0 0.0
    %1815 = vmatprep.subr.mxu0 0.0
    %1816 = vmatpush1.xpose.msra.mxu0 0.0
    %1817 = vmatprep.subr.mxu0 0.0
    %1818 = vmatpush1.xpose.msra.mxu0 0.0
    %1819 = vmatprep.subr.mxu0 0.0
    %1820 = vmatpush1.xpose.msra.mxu0 0.0
    %1821 = vmatprep.subr.mxu0 0.0
    %1822 = vmatpush1.xpose.msra.mxu0 0.0
    %1823 = vmatprep.subr.mxu0 0.0
    %1824 = vmatpush1.xpose.msra.mxu0 0.0
    %1825 = vmatprep.subr.mxu0 0.0
    %1826 = vmatpush1.xpose.msra.mxu0 0.0
    %1827 = vmatprep.subr.mxu0 0.0
    %1828 = vmatpush1.xpose.msra.mxu0 0.0
    %1829 = vmatprep.subr.mxu0 0.0
    %1830 = vmatpush1.xpose.msra.mxu0 0.0
    %1831 = vmatprep.subr.mxu0 0.0
    %1832 = vmatpush1.xpose.msra.mxu0 0.0
    %1833 = vmatprep.subr.mxu0 0.0
    %1834 = vmatpush1.xpose.msra.mxu0 0.0
    %1835 = vmatprep.subr.mxu0 0.0
    %1836 = vmatpush1.xpose.msra.mxu0 0.0
    %1837 = vmatprep.subr.mxu0 0.0
    %1838 = vmatpush1.xpose.msra.mxu0 0.0
    %1839 = vmatprep.subr.mxu0 0.0
    %1840 = vmatpush1.xpose.msra.mxu0 0.0
    %1841 = vmatprep.subr.mxu0 0.0
    %1842 = vmatpush1.xpose.msra.mxu0 0.0
    %1843 = vmatprep.subr.mxu0 0.0
    %1844 = vmatpush1.xpose.msra.mxu0 0.0
    %1845 = vmatprep.subr.mxu0 0.0
    %1846 = vmatpush1.xpose.msra.mxu0 0.0
    %1847 = vmatprep.subr.mxu0 0.0
    %1848 = vmatpush1.xpose.msra.mxu0 0.0
    %1849 = vmatprep.subr.mxu0 0.0
    %1850 = vmatpush1.xpose.msra.mxu0 0.0
    %1851 = vmatprep.subr.mxu0 0.0
    %1852 = vmatpush1.xpose.msra.mxu0 0.0
    %1853 = vmatprep.subr.mxu0 0.0
    %1854 = vmatpush1.xpose.msra.mxu0 0.0
    %1855 = vmatprep.subr.mxu0 0.0
    %1856 = vmatpush1.xpose.msra.mxu0 0.0
    %1857 = vmatprep.subr.mxu0 0.0
    %1858 = vmatpush1.xpose.msra.mxu0 0.0
    %1859 = vmatprep.mubr.f32.mxu0 0.0
    %1860 = vmatmul.mubr.f32.gmra.mrb[0].mxu0 %v1791
    %v1861 = vpop.f32.mrb[0].mxu0
    %v1862 = vadd.f32 0.0, %v1861
    %v1863 = vpop.f32.mrb[0].mxu0
    %1864 = vdwg.mxu0
    %1866 = vrot.lane.b32.xlu0 %v1645, 64
    %v1867 = vpop.permute.xlu0 %1866
    %v1868 = vsel %vm1663, %v1645, 0
    %v1870 = vsel %vm1663, %v1867, 0
    %1872 = vmatprep.subr.mxu0 0.0
    %1873 = vmatpush1.xpose.msra.mxu0 %v1870
    %1874 = vmatprep.subr.mxu0 0.0
    %1875 = vmatpush1.xpose.msra.mxu0 0.0
    %1876 = vmatprep.subr.mxu0 0.0
    %1877 = vmatpush1.xpose.msra.mxu0 0.0
    %1878 = vmatprep.subr.mxu0 0.0
    %1879 = vmatpush1.xpose.msra.mxu0 0.0
    %1880 = vmatprep.subr.mxu0 0.0
    %1881 = vmatpush1.xpose.msra.mxu0 0.0
    %1882 = vmatprep.subr.mxu0 0.0
    %1883 = vmatpush1.xpose.msra.mxu0 0.0
    %1884 = vmatprep.subr.mxu0 0.0
    %1885 = vmatpush1.xpose.msra.mxu0 0.0
    %1886 = vmatprep.subr.mxu0 0.0
    %1887 = vmatpush1.xpose.msra.mxu0 0.0
    %1888 = vmatprep.subr.mxu0 0.0
    %1889 = vmatpush1.xpose.msra.mxu0 0.0
    %1890 = vmatprep.subr.mxu0 0.0
    %1891 = vmatpush1.xpose.msra.mxu0 0.0
    %1892 = vmatprep.subr.mxu0 0.0
    %1893 = vmatpush1.xpose.msra.mxu0 0.0
    %1894 = vmatprep.subr.mxu0 0.0
    %1895 = vmatpush1.xpose.msra.mxu0 0.0
    %1896 = vmatprep.subr.mxu0 0.0
    %1897 = vmatpush1.xpose.msra.mxu0 0.0
    %1898 = vmatprep.subr.mxu0 0.0
    %1899 = vmatpush1.xpose.msra.mxu0 0.0
    %1900 = vmatprep.subr.mxu0 0.0
    %1901 = vmatpush1.xpose.msra.mxu0 0.0
    %1902 = vmatprep.subr.mxu0 0.0
    %1903 = vmatpush1.xpose.msra.mxu0 0.0
    %1904 = vmatprep.subr.mxu0 0.0
    %1905 = vmatpush1.xpose.msra.mxu0 0.0
    %1906 = vmatprep.subr.mxu0 0.0
    %1907 = vmatpush1.xpose.msra.mxu0 0.0
    %1908 = vmatprep.subr.mxu0 0.0
    %1909 = vmatpush1.xpose.msra.mxu0 0.0
    %1910 = vmatprep.subr.mxu0 0.0
    %1911 = vmatpush1.xpose.msra.mxu0 0.0
    %1912 = vmatprep.subr.mxu0 0.0
    %1913 = vmatpush1.xpose.msra.mxu0 0.0
    %1914 = vmatprep.subr.mxu0 0.0
    %1915 = vmatpush1.xpose.msra.mxu0 0.0
    %1916 = vmatprep.subr.mxu0 0.0
    %1917 = vmatpush1.xpose.msra.mxu0 0.0
    %1918 = vmatprep.subr.mxu0 0.0
    %1919 = vmatpush1.xpose.msra.mxu0 0.0
    %1920 = vmatprep.subr.mxu0 0.0
    %1921 = vmatpush1.xpose.msra.mxu0 0.0
    %1922 = vmatprep.subr.mxu0 0.0
    %1923 = vmatpush1.xpose.msra.mxu0 0.0
    %1924 = vmatprep.subr.mxu0 0.0
    %1925 = vmatpush1.xpose.msra.mxu0 0.0
    %1926 = vmatprep.subr.mxu0 0.0
    %1927 = vmatpush1.xpose.msra.mxu0 0.0
    %1928 = vmatprep.subr.mxu0 0.0
    %1929 = vmatpush1.xpose.msra.mxu0 0.0
    %1930 = vmatprep.subr.mxu0 0.0
    %1931 = vmatpush1.xpose.msra.mxu0 0.0
    %1932 = vmatprep.subr.mxu0 0.0
    %1933 = vmatpush1.xpose.msra.mxu0 0.0
    %1934 = vmatprep.subr.mxu0 0.0
    %1935 = vmatpush1.xpose.msra.mxu0 0.0
    %1936 = vmatprep.mubr.f32.mxu0 0.0
    %1937 = vmatmul.mubr.f32.gmra.mrb[0].mxu0 %v1868
    %v1938 = vpop.f32.mrb[0].mxu0
    %v1939 = vadd.f32 0.0, %v1938
    %v1940 = vpop.f32.mrb[0].mxu0
    %1941 = vdwg.mxu0
    %1943 = vrot.lane.b32.xlu0 %v1647, 64
    %v1944 = vpop.permute.xlu0 %1943
    %v1945 = vsel %vm1663, %v1647, 0
    %v1947 = vsel %vm1663, %v1944, 0
    %1949 = vmatprep.subr.mxu0 0.0
    %1950 = vmatpush1.xpose.msra.mxu0 %v1947
    %1951 = vmatprep.subr.mxu0 0.0
    %1952 = vmatpush1.xpose.msra.mxu0 0.0
    %1953 = vmatprep.subr.mxu0 0.0
    %1954 = vmatpush1.xpose.msra.mxu0 0.0
    %1955 = vmatprep.subr.mxu0 0.0
    %1956 = vmatpush1.xpose.msra.mxu0 0.0
    %1957 = vmatprep.subr.mxu0 0.0
    %1958 = vmatpush1.xpose.msra.mxu0 0.0
    %1959 = vmatprep.subr.mxu0 0.0
    %1960 = vmatpush1.xpose.msra.mxu0 0.0
    %1961 = vmatprep.subr.mxu0 0.0
    %1962 = vmatpush1.xpose.msra.mxu0 0.0
    %1963 = vmatprep.subr.mxu0 0.0
    %1964 = vmatpush1.xpose.msra.mxu0 0.0
    %1965 = vmatprep.subr.mxu0 0.0
    %1966 = vmatpush1.xpose.msra.mxu0 0.0
    %1967 = vmatprep.subr.mxu0 0.0
    %1968 = vmatpush1.xpose.msra.mxu0 0.0
    %1969 = vmatprep.subr.mxu0 0.0
    %1970 = vmatpush1.xpose.msra.mxu0 0.0
    %1971 = vmatprep.subr.mxu0 0.0
    %1972 = vmatpush1.xpose.msra.mxu0 0.0
    %1973 = vmatprep.subr.mxu0 0.0
    %1974 = vmatpush1.xpose.msra.mxu0 0.0
    %1975 = vmatprep.subr.mxu0 0.0
    %1976 = vmatpush1.xpose.msra.mxu0 0.0
    %1977 = vmatprep.subr.mxu0 0.0
    %1978 = vmatpush1.xpose.msra.mxu0 0.0
    %1979 = vmatprep.subr.mxu0 0.0
    %1980 = vmatpush1.xpose.msra.mxu0 0.0
    %1981 = vmatprep.subr.mxu0 0.0
    %1982 = vmatpush1.xpose.msra.mxu0 0.0
    %1983 = vmatprep.subr.mxu0 0.0
    %1984 = vmatpush1.xpose.msra.mxu0 0.0
    %1985 = vmatprep.subr.mxu0 0.0
    %1986 = vmatpush1.xpose.msra.mxu0 0.0
    %1987 = vmatprep.subr.mxu0 0.0
    %1988 = vmatpush1.xpose.msra.mxu0 0.0
    %1989 = vmatprep.subr.mxu0 0.0
    %1990 = vmatpush1.xpose.msra.mxu0 0.0
    %1991 = vmatprep.subr.mxu0 0.0
    %1992 = vmatpush1.xpose.msra.mxu0 0.0
    %1993 = vmatprep.subr.mxu0 0.0
    %1994 = vmatpush1.xpose.msra.mxu0 0.0
    %1995 = vmatprep.subr.mxu0 0.0
    %1996 = vmatpush1.xpose.msra.mxu0 0.0
    %1997 = vmatprep.subr.mxu0 0.0
    %1998 = vmatpush1.xpose.msra.mxu0 0.0
    %1999 = vmatprep.subr.mxu0 0.0
    %2000 = vmatpush1.xpose.msra.mxu0 0.0
    %2001 = vmatprep.subr.mxu0 0.0
    %2002 = vmatpush1.xpose.msra.mxu0 0.0
    %2003 = vmatprep.subr.mxu0 0.0
    %2004 = vmatpush1.xpose.msra.mxu0 0.0
    %2005 = vmatprep.subr.mxu0 0.0
    %2006 = vmatpush1.xpose.msra.mxu0 0.0
    %2007 = vmatprep.subr.mxu0 0.0
    %2008 = vmatpush1.xpose.msra.mxu0 0.0
    %2009 = vmatprep.subr.mxu0 0.0
    %2010 = vmatpush1.xpose.msra.mxu0 0.0
    %2011 = vmatprep.subr.mxu0 0.0
    %2012 = vmatpush1.xpose.msra.mxu0 0.0
    %2013 = vmatprep.mubr.f32.mxu0 0.0
    %2014 = vmatmul.mubr.f32.gmra.mrb[0].mxu0 %v1945
    %v2015 = vpop.f32.mrb[0].mxu0
    %v2016 = vadd.f32 0.0, %v2015
    %v2017 = vpop.f32.mrb[0].mxu0
    %2018 = vdwg.mxu0
    %v2019 = vmul.f32 %v1785, 0.17677669
    %v2020 = vmul.f32 %v1862, 0.17677669
    %v2021 = vmul.f32 %v1939, 0.17677669
    %v2022 = vmul.f32 %v2016, 0.17677669
    %vm2023 = vcmask 64512
    %v2024 = vsel %vm2023, %v2019, -inf
    %2025 = vmax.xlane.f32.xlu0 %v2024
    %v2026 = vpop.xlane.xlu0 %2025
    %v2027 = vsel %vm2023, %v2020, -inf
    %2028 = vmax.xlane.f32.xlu0 %v2027
    %v2029 = vpop.xlane.xlu0 %2028
    %v2030 = vsel %vm2023, %v2021, -inf
    %2031 = vmax.xlane.f32.xlu0 %v2030
    %v2032 = vpop.xlane.xlu0 %2031
    %v2033 = vsel %vm2023, %v2022, -inf
    %2034 = vmax.xlane.f32.xlu0 %v2033
    %v2035 = vpop.xlane.xlu0 %2034
    %v2036 = vsub.f32 %v2019, %v2026
    %v2037 = vsub.f32 %v2020, %v2029
    %v2038 = vsub.f32 %v2021, %v2032
    %v2039 = vsub.f32 %v2022, %v2035
    %v2040 = vmul.f32 %v2036, 1.442695
    %v2041 = vpow.pop %v2040
    %v2042 = vmul.f32 %v2037, 1.442695
    %v2043 = vpow.pop %v2042
    %v2044 = vmul.f32 %v2038, 1.442695
    %v2045 = vpow.pop %v2044
    %v2046 = vmul.f32 %v2039, 1.442695
    %v2047 = vpow.pop %v2046
    %v2048 = vsel %vm2023, %v2041, 0.0
    %2049 = vadd.xlane.f32.xlu0 %v2048
    %v2050 = vpop.xlane.xlu0 %2049
    %v2051 = vsel %vm2023, %v2043, 0.0
    %2052 = vadd.xlane.f32.xlu0 %v2051
    %v2053 = vpop.xlane.xlu0 %2052
    %v2054 = vsel %vm2023, %v2045, 0.0
    %2055 = vadd.xlane.f32.xlu0 %v2054
    %v2056 = vpop.xlane.xlu0 %2055
    %v2057 = vsel %vm2023, %v2047, 0.0
    %2058 = vadd.xlane.f32.xlu0 %v2057
    %v2059 = vpop.xlane.xlu0 %2058
    %v2060 = vrcp.pop %v2050
    %v2061 = vrcp.pop %v2053
    %v2062 = vrcp.pop %v2056
    %v2063 = vrcp.pop %v2059
    %v2064 = vmul.f32 %v2041, %v2060
    %v2065 = vmul.f32 %v2043, %v2061
    %v2066 = vmul.f32 %v2045, %v2062
    %v2067 = vmul.f32 %v2047, %v2063
    %v2069 = vsel %vm2023, %v2064, 0
    %2071 = vmatprep.subr.mxu0 0.0
    %2072 = vmatpush1.msra.mxu0 %v1642
    %2073 = vmatprep.subr.mxu0 0.0
    %2074 = vmatpush1.msra.mxu0 0.0
    %2075 = vmatprep.subr.mxu0 0.0
    %2076 = vmatpush1.msra.mxu0 0.0
    %2077 = vmatprep.subr.mxu0 0.0
    %2078 = vmatpush1.msra.mxu0 0.0
    %2079 = vmatprep.subr.mxu0 0.0
    %2080 = vmatpush1.msra.mxu0 0.0
    %2081 = vmatprep.subr.mxu0 0.0
    %2082 = vmatpush1.msra.mxu0 0.0
    %2083 = vmatprep.subr.mxu0 0.0
    %2084 = vmatpush1.msra.mxu0 0.0
    %2085 = vmatprep.subr.mxu0 0.0
    %2086 = vmatpush1.msra.mxu0 0.0
    %2087 = vmatprep.subr.mxu0 0.0
    %2088 = vmatpush1.msra.mxu0 0.0
    %2089 = vmatprep.subr.mxu0 0.0
    %2090 = vmatpush1.msra.mxu0 0.0
    %2091 = vmatprep.subr.mxu0 0.0
    %2092 = vmatpush1.msra.mxu0 0.0
    %2093 = vmatprep.subr.mxu0 0.0
    %2094 = vmatpush1.msra.mxu0 0.0
    %2095 = vmatprep.subr.mxu0 0.0
    %2096 = vmatpush1.msra.mxu0 0.0
    %2097 = vmatprep.subr.mxu0 0.0
    %2098 = vmatpush1.msra.mxu0 0.0
    %2099 = vmatprep.subr.mxu0 0.0
    %2100 = vmatpush1.msra.mxu0 0.0
    %2101 = vmatprep.subr.mxu0 0.0
    %2102 = vmatpush1.msra.mxu0 0.0
    %2103 = vmatprep.subr.mxu0 0.0
    %2104 = vmatpush1.msra.mxu0 0.0
    %2105 = vmatprep.subr.mxu0 0.0
    %2106 = vmatpush1.msra.mxu0 0.0
    %2107 = vmatprep.subr.mxu0 0.0
    %2108 = vmatpush1.msra.mxu0 0.0
    %2109 = vmatprep.subr.mxu0 0.0
    %2110 = vmatpush1.msra.mxu0 0.0
    %2111 = vmatprep.subr.mxu0 0.0
    %2112 = vmatpush1.msra.mxu0 0.0
    %2113 = vmatprep.subr.mxu0 0.0
    %2114 = vmatpush1.msra.mxu0 0.0
    %2115 = vmatprep.subr.mxu0 0.0
    %2116 = vmatpush1.msra.mxu0 0.0
    %2117 = vmatprep.subr.mxu0 0.0
    %2118 = vmatpush1.msra.mxu0 0.0
    %2119 = vmatprep.subr.mxu0 0.0
    %2120 = vmatpush1.msra.mxu0 0.0
    %2121 = vmatprep.subr.mxu0 0.0
    %2122 = vmatpush1.msra.mxu0 0.0
    %2123 = vmatprep.subr.mxu0 0.0
    %2124 = vmatpush1.msra.mxu0 0.0
    %2125 = vmatprep.subr.mxu0 0.0
    %2126 = vmatpush1.msra.mxu0 0.0
    %2127 = vmatprep.subr.mxu0 0.0
    %2128 = vmatpush1.msra.mxu0 0.0
    %2129 = vmatprep.subr.mxu0 0.0
    %2130 = vmatpush1.msra.mxu0 0.0
    %2131 = vmatprep.subr.mxu0 0.0
    %2132 = vmatpush1.msra.mxu0 0.0
    %2133 = vmatprep.subr.mxu0 0.0
    %2134 = vmatpush1.msra.mxu0 0.0
    %2135 = vmatprep.mubr.f32.mxu0 0.0
    %2136 = vmatmul.mubr.f32.gmra.mrb[0].mxu0 %v2069
    %v2137 = vpop.f32.mrb[0].mxu0
    %v2138 = vadd.f32 0.0, %v2137
    %v2139 = vpop.f32.mrb[0].mxu0
    %2140 = vdwg.mxu0
    %v2142 = vsel %vm2023, %v2065, 0
    %2144 = vmatprep.subr.mxu0 0.0
    %2145 = vmatpush1.msra.mxu0 %v1644
    %2146 = vmatprep.subr.mxu0 0.0
    %2147 = vmatpush1.msra.mxu0 0.0
    %2148 = vmatprep.subr.mxu0 0.0
    %2149 = vmatpush1.msra.mxu0 0.0
    %2150 = vmatprep.subr.mxu0 0.0
    %2151 = vmatpush1.msra.mxu0 0.0
    %2152 = vmatprep.subr.mxu0 0.0
    %2153 = vmatpush1.msra.mxu0 0.0
    %2154 = vmatprep.subr.mxu0 0.0
    %2155 = vmatpush1.msra.mxu0 0.0
    %2156 = vmatprep.subr.mxu0 0.0
    %2157 = vmatpush1.msra.mxu0 0.0
    %2158 = vmatprep.subr.mxu0 0.0
    %2159 = vmatpush1.msra.mxu0 0.0
    %2160 = vmatprep.subr.mxu0 0.0
    %2161 = vmatpush1.msra.mxu0 0.0
    %2162 = vmatprep.subr.mxu0 0.0
    %2163 = vmatpush1.msra.mxu0 0.0
    %2164 = vmatprep.subr.mxu0 0.0
    %2165 = vmatpush1.msra.mxu0 0.0
    %2166 = vmatprep.subr.mxu0 0.0
    %2167 = vmatpush1.msra.mxu0 0.0
    %2168 = vmatprep.subr.mxu0 0.0
    %2169 = vmatpush1.msra.mxu0 0.0
    %2170 = vmatprep.subr.mxu0 0.0
    %2171 = vmatpush1.msra.mxu0 0.0
    %2172 = vmatprep.subr.mxu0 0.0
    %2173 = vmatpush1.msra.mxu0 0.0
    %2174 = vmatprep.subr.mxu0 0.0
    %2175 = vmatpush1.msra.mxu0 0.0
    %2176 = vmatprep.subr.mxu0 0.0
    %2177 = vmatpush1.msra.mxu0 0.0
    %2178 = vmatprep.subr.mxu0 0.0
    %2179 = vmatpush1.msra.mxu0 0.0
    %2180 = vmatprep.subr.mxu0 0.0
    %2181 = vmatpush1.msra.mxu0 0.0
    %2182 = vmatprep.subr.mxu0 0.0
    %2183 = vmatpush1.msra.mxu0 0.0
    %2184 = vmatprep.subr.mxu0 0.0
    %2185 = vmatpush1.msra.mxu0 0.0
    %2186 = vmatprep.subr.mxu0 0.0
    %2187 = vmatpush1.msra.mxu0 0.0
    %2188 = vmatprep.subr.mxu0 0.0
    %2189 = vmatpush1.msra.mxu0 0.0
    %2190 = vmatprep.subr.mxu0 0.0
    %2191 = vmatpush1.msra.mxu0 0.0
    %2192 = vmatprep.subr.mxu0 0.0
    %2193 = vmatpush1.msra.mxu0 0.0
    %2194 = vmatprep.subr.mxu0 0.0
    %2195 = vmatpush1.msra.mxu0 0.0
    %2196 = vmatprep.subr.mxu0 0.0
    %2197 = vmatpush1.msra.mxu0 0.0
    %2198 = vmatprep.subr.mxu0 0.0
    %2199 = vmatpush1.msra.mxu0 0.0
    %2200 = vmatprep.subr.mxu0 0.0
    %2201 = vmatpush1.msra.mxu0 0.0
    %2202 = vmatprep.subr.mxu0 0.0
    %2203 = vmatpush1.msra.mxu0 0.0
    %2204 = vmatprep.subr.mxu0 0.0
    %2205 = vmatpush1.msra.mxu0 0.0
    %2206 = vmatprep.subr.mxu0 0.0
    %2207 = vmatpush1.msra.mxu0 0.0
    %2208 = vmatprep.mubr.f32.mxu0 0.0
    %2209 = vmatmul.mubr.f32.gmra.mrb[0].mxu0 %v2142
    %v2210 = vpop.f32.mrb[0].mxu0
    %v2211 = vadd.f32 0.0, %v2210
    %v2212 = vpop.f32.mrb[0].mxu0
    %2213 = vdwg.mxu0
    %v2215 = vsel %vm2023, %v2066, 0
    %2217 = vmatprep.subr.mxu0 0.0
    %2218 = vmatpush1.msra.mxu0 %v1646
    %2219 = vmatprep.subr.mxu0 0.0
    %2220 = vmatpush1.msra.mxu0 0.0
    %2221 = vmatprep.subr.mxu0 0.0
    %2222 = vmatpush1.msra.mxu0 0.0
    %2223 = vmatprep.subr.mxu0 0.0
    %2224 = vmatpush1.msra.mxu0 0.0
    %2225 = vmatprep.subr.mxu0 0.0
    %2226 = vmatpush1.msra.mxu0 0.0
    %2227 = vmatprep.subr.mxu0 0.0
    %2228 = vmatpush1.msra.mxu0 0.0
    %2229 = vmatprep.subr.mxu0 0.0
    %2230 = vmatpush1.msra.mxu0 0.0
    %2231 = vmatprep.subr.mxu0 0.0
    %2232 = vmatpush1.msra.mxu0 0.0
    %2233 = vmatprep.subr.mxu0 0.0
    %2234 = vmatpush1.msra.mxu0 0.0
    %2235 = vmatprep.subr.mxu0 0.0
    %2236 = vmatpush1.msra.mxu0 0.0
    %2237 = vmatprep.subr.mxu0 0.0
    %2238 = vmatpush1.msra.mxu0 0.0
    %2239 = vmatprep.subr.mxu0 0.0
    %2240 = vmatpush1.msra.mxu0 0.0
    %2241 = vmatprep.subr.mxu0 0.0
    %2242 = vmatpush1.msra.mxu0 0.0
    %2243 = vmatprep.subr.mxu0 0.0
    %2244 = vmatpush1.msra.mxu0 0.0
    %2245 = vmatprep.subr.mxu0 0.0
    %2246 = vmatpush1.msra.mxu0 0.0
    %2247 = vmatprep.subr.mxu0 0.0
    %2248 = vmatpush1.msra.mxu0 0.0
    %2249 = vmatprep.subr.mxu0 0.0
    %2250 = vmatpush1.msra.mxu0 0.0
    %2251 = vmatprep.subr.mxu0 0.0
    %2252 = vmatpush1.msra.mxu0 0.0
    %2253 = vmatprep.subr.mxu0 0.0
    %2254 = vmatpush1.msra.mxu0 0.0
    %2255 = vmatprep.subr.mxu0 0.0
    %2256 = vmatpush1.msra.mxu0 0.0
    %2257 = vmatprep.subr.mxu0 0.0
    %2258 = vmatpush1.msra.mxu0 0.0
    %2259 = vmatprep.subr.mxu0 0.0
    %2260 = vmatpush1.msra.mxu0 0.0
    %2261 = vmatprep.subr.mxu0 0.0
    %2262 = vmatpush1.msra.mxu0 0.0
    %2263 = vmatprep.subr.mxu0 0.0
    %2264 = vmatpush1.msra.mxu0 0.0
    %2265 = vmatprep.subr.mxu0 0.0
    %2266 = vmatpush1.msra.mxu0 0.0
    %2267 = vmatprep.subr.mxu0 0.0
    %2268 = vmatpush1.msra.mxu0 0.0
    %2269 = vmatprep.subr.mxu0 0.0
    %2270 = vmatpush1.msra.mxu0 0.0
    %2271 = vmatprep.subr.mxu0 0.0
    %2272 = vmatpush1.msra.mxu0 0.0
    %2273 = vmatprep.subr.mxu0 0.0
    %2274 = vmatpush1.msra.mxu0 0.0
    %2275 = vmatprep.subr.mxu0 0.0
    %2276 = vmatpush1.msra.mxu0 0.0
    %2277 = vmatprep.subr.mxu0 0.0
    %2278 = vmatpush1.msra.mxu0 0.0
    %2279 = vmatprep.subr.mxu0 0.0
    %2280 = vmatpush1.msra.mxu0 0.0
    %2281 = vmatprep.mubr.f32.mxu0 0.0
    %2282 = vmatmul.mubr.f32.gmra.mrb[0].mxu0 %v2215
    %v2283 = vpop.f32.mrb[0].mxu0
    %v2284 = vadd.f32 0.0, %v2283
    %v2285 = vpop.f32.mrb[0].mxu0
    %2286 = vdwg.mxu0
    %v2288 = vsel %vm2023, %v2067, 0
    %2290 = vmatprep.subr.mxu0 0.0
    %2291 = vmatpush1.msra.mxu0 %v1648
    %2292 = vmatprep.subr.mxu0 0.0
    %2293 = vmatpush1.msra.mxu0 0.0
    %2294 = vmatprep.subr.mxu0 0.0
    %2295 = vmatpush1.msra.mxu0 0.0
    %2296 = vmatprep.subr.mxu0 0.0
    %2297 = vmatpush1.msra.mxu0 0.0
    %2298 = vmatprep.subr.mxu0 0.0
    %2299 = vmatpush1.msra.mxu0 0.0
    %2300 = vmatprep.subr.mxu0 0.0
    %2301 = vmatpush1.msra.mxu0 0.0
    %2302 = vmatprep.subr.mxu0 0.0
    %2303 = vmatpush1.msra.mxu0 0.0
    %2304 = vmatprep.subr.mxu0 0.0
    %2305 = vmatpush1.msra.mxu0 0.0
    %2306 = vmatprep.subr.mxu0 0.0
    %2307 = vmatpush1.msra.mxu0 0.0
    %2308 = vmatprep.subr.mxu0 0.0
    %2309 = vmatpush1.msra.mxu0 0.0
    %2310 = vmatprep.subr.mxu0 0.0
    %2311 = vmatpush1.msra.mxu0 0.0
    %2312 = vmatprep.subr.mxu0 0.0
    %2313 = vmatpush1.msra.mxu0 0.0
    %2314 = vmatprep.subr.mxu0 0.0
    %2315 = vmatpush1.msra.mxu0 0.0
    %2316 = vmatprep.subr.mxu0 0.0
    %2317 = vmatpush1.msra.mxu0 0.0
    %2318 = vmatprep.subr.mxu0 0.0
    %2319 = vmatpush1.msra.mxu0 0.0
    %2320 = vmatprep.subr.mxu0 0.0
    %2321 = vmatpush1.msra.mxu0 0.0
    %2322 = vmatprep.subr.mxu0 0.0
    %2323 = vmatpush1.msra.mxu0 0.0
    %2324 = vmatprep.subr.mxu0 0.0
    %2325 = vmatpush1.msra.mxu0 0.0
    %2326 = vmatprep.subr.mxu0 0.0
    %2327 = vmatpush1.msra.mxu0 0.0
    %2328 = vmatprep.subr.mxu0 0.0
    %2329 = vmatpush1.msra.mxu0 0.0
    %2330 = vmatprep.subr.mxu0 0.0
    %2331 = vmatpush1.msra.mxu0 0.0
    %2332 = vmatprep.subr.mxu0 0.0
    %2333 = vmatpush1.msra.mxu0 0.0
    %2334 = vmatprep.subr.mxu0 0.0
    %2335 = vmatpush1.msra.mxu0 0.0
    %2336 = vmatprep.subr.mxu0 0.0
    %2337 = vmatpush1.msra.mxu0 0.0
    %2338 = vmatprep.subr.mxu0 0.0
    %2339 = vmatpush1.msra.mxu0 0.0
    %2340 = vmatprep.subr.mxu0 0.0
    %2341 = vmatpush1.msra.mxu0 0.0
    %2342 = vmatprep.subr.mxu0 0.0
    %2343 = vmatpush1.msra.mxu0 0.0
    %2344 = vmatprep.subr.mxu0 0.0
    %2345 = vmatpush1.msra.mxu0 0.0
    %2346 = vmatprep.subr.mxu0 0.0
    %2347 = vmatpush1.msra.mxu0 0.0
    %2348 = vmatprep.subr.mxu0 0.0
    %2349 = vmatpush1.msra.mxu0 0.0
    %2350 = vmatprep.subr.mxu0 0.0
    %2351 = vmatpush1.msra.mxu0 0.0
    %2352 = vmatprep.subr.mxu0 0.0
    %2353 = vmatpush1.msra.mxu0 0.0
    %2354 = vmatprep.mubr.f32.mxu0 0.0
    %2355 = vmatmul.mubr.f32.gmra.mrb[0].mxu0 %v2288
    %v2356 = vpop.f32.mrb[0].mxu0
    %v2357 = vadd.f32 0.0, %v2356
    %v2358 = vpop.f32.mrb[0].mxu0
    %2359 = vdwg.mxu0
    %v2360 = vsel %vm1663, %v2138, 0.0
    %2361 = vadd.xlane.f32.xlu0 %v2360
    %v2362 = vpop.xlane.xlu0 %2361
    %v2363 = vsel %vm1663, %v2211, 0.0
    %2364 = vadd.xlane.f32.xlu0 %v2363
    %v2365 = vpop.xlane.xlu0 %2364
    %v2366 = vsel %vm1663, %v2284, 0.0
    %2367 = vadd.xlane.f32.xlu0 %v2366
    %v2368 = vpop.xlane.xlu0 %2367
    %v2369 = vsel %vm1663, %v2357, 0.0
    %2370 = vadd.xlane.f32.xlu0 %v2369
    %v2371 = vpop.xlane.xlu0 %2370
    %v2372 = vrcp.pop 64.0
    %v2373 = vmul.f32 %v2362, %v2372
    %v2374 = vmul.f32 %v2365, %v2372
    %v2375 = vmul.f32 %v2368, %v2372
    %v2376 = vmul.f32 %v2371, %v2372
    %v2377 = vsub.f32 %v2138, %v2373
    %v2378 = vsub.f32 %v2211, %v2374
    %v2379 = vsub.f32 %v2284, %v2375
    %v2380 = vsub.f32 %v2357, %v2376
    %v2381 = vmul.f32 %v2377, %v2377
    %v2382 = vmul.f32 %v2378, %v2378
    %v2383 = vmul.f32 %v2379, %v2379
    %v2384 = vmul.f32 %v2380, %v2380
    %v2385 = vsel %vm1663, %v2381, 0.0
    %2386 = vadd.xlane.f32.xlu0 %v2385
    %v2387 = vpop.xlane.xlu0 %2386
    %v2388 = vsel %vm1663, %v2382, 0.0
    %2389 = vadd.xlane.f32.xlu0 %v2388
    %v2390 = vpop.xlane.xlu0 %2389
    %v2391 = vsel %vm1663, %v2383, 0.0
    %2392 = vadd.xlane.f32.xlu0 %v2391
    %v2393 = vpop.xlane.xlu0 %2392
    %v2394 = vsel %vm1663, %v2384, 0.0
    %2395 = vadd.xlane.f32.xlu0 %v2394
    %v2396 = vpop.xlane.xlu0 %2395
    %v2397 = vmul.f32 %v2387, %v2372
    %v2398 = vmul.f32 %v2390, %v2372
    %v2399 = vmul.f32 %v2393, %v2372
    %v2400 = vmul.f32 %v2396, %v2372
    %v2401 = vadd.f32 %v2397, 1e-05
    %v2402 = vadd.f32 %v2398, 1e-05
    %v2403 = vadd.f32 %v2399, 1e-05
    %v2404 = vadd.f32 %v2400, 1e-05
    %v2405 = vrsqrt.pop %v2401
    %v2406 = vrsqrt.pop %v2402
    %v2407 = vrsqrt.pop %v2403
    %v2408 = vrsqrt.pop %v2404
    %v2409 = vmul.f32 %v2377, %v2405
    %v2410 = vmul.f32 %v2378, %v2406
    %v2411 = vmul.f32 %v2379, %v2407
    %v2412 = vmul.f32 %v2380, %v2408
    %v2413 = vlaneseq
    %v2414 = vshrl.u32 %v2413, 7
    %v2415 = vsub.s32 3, %v2414
    %v2416 = vrot.slane %v38, %v2415
    %v2417 = vmul.f32 %v2409, %v2416
    %v2418 = vmul.f32 %v2410, %v2416
    %v2419 = vmul.f32 %v2411, %v2416
    %v2420 = vmul.f32 %v2412, %v2416
    %2422 = vrot.lane.b32.xlu0 %v2416, 64
    %v2423 = vpop.permute.xlu0 %2422
    %v2425 = vadd.f32 %v2417, %v2423
    %v2426 = vadd.f32 %v2418, %v2423
    %v2427 = vadd.f32 %v2419, %v2423
    %v2428 = vadd.f32 %v2420, %v2423
    %v2429 = vld [vmem:[%s3] sm:$0xff]
    %v2430 = vld [vmem:[%s3 + $0x8] sm:$0xff]
    %v2431 = vld [vmem:[%s3 + $0x10] sm:$0xff]
    %v2432 = vld [vmem:[%s3 + $0x18] sm:$0xff]
    %v2433 = vld [vmem:[%s3 + $0x20] sm:$0xff]
    %v2434 = vld [vmem:[%s3 + $0x28] sm:$0xff]
    %v2435 = vld [vmem:[%s3 + $0x30] sm:$0xff]
    %v2436 = vld [vmem:[%s3 + $0x38] sm:$0xff]
    %v2437 = vld [vmem:[%s3 + $0x40] sm:$0xff]
    %v2438 = vld [vmem:[%s3 + $0x48] sm:$0xff]
    %v2439 = vld [vmem:[%s3 + $0x50] sm:$0xff]
    %v2440 = vld [vmem:[%s3 + $0x58] sm:$0xff]
    %v2441 = vld [vmem:[%s3 + $0x60] sm:$0xff]
    %v2442 = vld [vmem:[%s3 + $0x68] sm:$0xff]
    %v2443 = vld [vmem:[%s3 + $0x70] sm:$0xff]
    %v2444 = vld [vmem:[%s3 + $0x78] sm:$0xff]
    %v2445 = vlaneseq
    %v2446 = vshrl.u32 %v2445, 7
    %v2447 = vsub.s32 2, %v2446
    %v2448 = vrot.slane %v38, %v2447
    %v2449 = vlaneseq
    %v2450 = vshrl.u32 %v2449, 7
    %v2451 = vsub.s32 2, %v2450
    %v2452 = vrot.slane %v39, %v2451
    %v2454 = vsel %vm1663, 0.0, 0
    %2456 = vmatprep.subr.mxu0 %v2430
    %2457 = vmatpush1.msra.mxu0 %v2429
    %2458 = vmatprep.subr.mxu0 %v2432
    %2459 = vmatpush1.msra.mxu0 %v2431
    %2460 = vmatprep.subr.mxu0 %v2434
    %2461 = vmatpush1.msra.mxu0 %v2433
    %2462 = vmatprep.subr.mxu0 %v2436
    %2463 = vmatpush1.msra.mxu0 %v2435
    %2464 = vmatprep.subr.mxu0 %v2438
    %2465 = vmatpush1.msra.mxu0 %v2437
    %2466 = vmatprep.subr.mxu0 %v2440
    %2467 = vmatpush1.msra.mxu0 %v2439
    %2468 = vmatprep.subr.mxu0 %v2442
    %2469 = vmatpush1.msra.mxu0 %v2441
    %2470 = vmatprep.subr.mxu0 %v2444
    %2471 = vmatpush1.msra.mxu0 %v2443
    %2472 = vmatprep.subr.mxu0 0.0
    %2473 = vmatpush1.msra.mxu0 0.0
    %2474 = vmatprep.subr.mxu0 0.0
    %2475 = vmatpush1.msra.mxu0 0.0
    %2476 = vmatprep.subr.mxu0 0.0
    %2477 = vmatpush1.msra.mxu0 0.0
    %2478 = vmatprep.subr.mxu0 0.0
    %2479 = vmatpush1.msra.mxu0 0.0
    %2480 = vmatprep.subr.mxu0 0.0
    %2481 = vmatpush1.msra.mxu0 0.0
    %2482 = vmatprep.subr.mxu0 0.0
    %2483 = vmatpush1.msra.mxu0 0.0
    %2484 = vmatprep.subr.mxu0 0.0
    %2485 = vmatpush1.msra.mxu0 0.0
    %2486 = vmatprep.subr.mxu0 0.0
    %2487 = vmatpush1.msra.mxu0 0.0
    %2488 = vmatprep.subr.mxu0 0.0
    %2489 = vmatpush1.msra.mxu0 0.0
    %2490 = vmatprep.subr.mxu0 0.0
    %2491 = vmatpush1.msra.mxu0 0.0
    %2492 = vmatprep.subr.mxu0 0.0
    %2493 = vmatpush1.msra.mxu0 0.0
    %2494 = vmatprep.subr.mxu0 0.0
    %2495 = vmatpush1.msra.mxu0 0.0
    %2496 = vmatprep.subr.mxu0 0.0
    %2497 = vmatpush1.msra.mxu0 0.0
    %2498 = vmatprep.subr.mxu0 0.0
    %2499 = vmatpush1.msra.mxu0 0.0
    %2500 = vmatprep.subr.mxu0 0.0
    %2501 = vmatpush1.msra.mxu0 0.0
    %2502 = vmatprep.subr.mxu0 0.0
    %2503 = vmatpush1.msra.mxu0 0.0
    %2504 = vmatprep.subr.mxu0 0.0
    %2505 = vmatpush1.msra.mxu0 0.0
    %2506 = vmatprep.subr.mxu0 0.0
    %2507 = vmatpush1.msra.mxu0 0.0
    %2508 = vmatprep.subr.mxu0 0.0
    %2509 = vmatpush1.msra.mxu0 0.0
    %2510 = vmatprep.subr.mxu0 0.0
    %2511 = vmatpush1.msra.mxu0 0.0
    %2512 = vmatprep.subr.mxu0 0.0
    %2513 = vmatpush1.msra.mxu0 0.0
    %2514 = vmatprep.subr.mxu0 0.0
    %2515 = vmatpush1.msra.mxu0 0.0
    %2516 = vmatprep.subr.mxu0 0.0
    %2517 = vmatpush1.msra.mxu0 0.0
    %2518 = vmatprep.subr.mxu0 0.0
    %2519 = vmatpush1.msra.mxu0 0.0
    %2520 = vmatprep.mubr.f32.mxu0 0.0
    %2521 = vmatmul.mubr.f32.gmra.mrb[0].mxu0 %v2454
    %v2522 = vpop.f32.mrb[0].mxu0
    %v2523 = vadd.f32 %v2448, %v2522
    %v2524 = vpop.f32.mrb[0].mxu0
    %v2525 = vadd.f32 %v2452, %v2524
    %2526 = vdwg.mxu0
    %v2528 = vrot.slane %v2523, 1
    %v2529 = vrot.slane %v2523, 2
    %v2530 = vrot.slane %v2523, 3
    %2531 = vrot.lane.b32.xlu0 %v2523, 64
    %v2532 = vpop.permute.xlu0 %2531
    %2533 = vrot.lane.b32.xlu0 %v2528, 64
    %v2534 = vpop.permute.xlu0 %2533
    %2535 = vrot.lane.b32.xlu0 %v2529, 64
    %v2536 = vpop.permute.xlu0 %2535
    %2537 = vrot.lane.b32.xlu0 %v2530, 64
    %v2538 = vpop.permute.xlu0 %2537
    %v2543 = vadd.f32 %v1667, %v2532
    %v2544 = vadd.f32 %v1669, %v2534
    %v2545 = vadd.f32 %v1671, %v2536
    %v2546 = vadd.f32 %v1673, %v2538
    %v2547 = vxor.u32 %v2543, 2147483648
    %v2548 = vxor.u32 %v2544, 2147483648
    %v2549 = vxor.u32 %v2545, 2147483648
    %v2550 = vxor.u32 %v2546, 2147483648
    %v2551 = vmul.f32 %v2547, 1.442695
    %v2552 = vpow.pop %v2551
    %v2553 = vmul.f32 %v2548, 1.442695
    %v2554 = vpow.pop %v2553
    %v2555 = vmul.f32 %v2549, 1.442695
    %v2556 = vpow.pop %v2555
    %v2557 = vmul.f32 %v2550, 1.442695
    %v2558 = vpow.pop %v2557
    %v2559 = vadd.f32 %v2552, 1.0
    %v2560 = vadd.f32 %v2554, 1.0
    %v2561 = vadd.f32 %v2556, 1.0
    %v2562 = vadd.f32 %v2558, 1.0
    %v2563 = vrcp.pop %v2559
    %v2564 = vmul.f32 1.0, %v2563
    %v2565 = vrcp.pop %v2560
    %v2566 = vmul.f32 1.0, %v2565
    %v2567 = vrcp.pop %v2561
    %v2568 = vmul.f32 1.0, %v2567
    %v2569 = vrcp.pop %v2562
    %v2570 = vmul.f32 1.0, %v2569
    %v2575 = vmul.f32 %v2564, %v2523
    %v2576 = vmul.f32 %v2566, %v2528
    %v2577 = vmul.f32 %v2568, %v2529
    %v2578 = vmul.f32 %v2570, %v2530
    %2583 = vrot.lane.b32.xlu0 %v2575, 64
    %v2584 = vpop.permute.xlu0 %2583
    %2585 = vrot.lane.b32.xlu0 %v2576, 64
    %v2586 = vpop.permute.xlu0 %2585
    %2587 = vrot.lane.b32.xlu0 %v2577, 64
    %v2588 = vpop.permute.xlu0 %2587
    %2589 = vrot.lane.b32.xlu0 %v2578, 64
    %v2590 = vpop.permute.xlu0 %2589
    %v2595 = vadd.f32 %v1668, %v2584
    %v2596 = vadd.f32 %v1670, %v2586
    %v2597 = vadd.f32 %v1672, %v2588
    %v2598 = vadd.f32 %v1674, %v2590
    %v2599 = vtanh.pop %v2595
    %v2600 = vtanh.pop %v2596
    %v2601 = vtanh.pop %v2597
    %v2602 = vtanh.pop %v2598
    %v2603 = vsub.f32 1.0, %v2564
    %v2604 = vsub.f32 1.0, %v2566
    %v2605 = vsub.f32 1.0, %v2568
    %v2606 = vsub.f32 1.0, %v2570
    %2611 = vrot.lane.b32.xlu0 %v2599, 96
    %v2612 = vpop.permute.xlu0 %2611
    %2613 = vrot.lane.b32.xlu0 %v2600, 96
    %v2614 = vpop.permute.xlu0 %2613
    %2615 = vrot.lane.b32.xlu0 %v2601, 96
    %v2616 = vpop.permute.xlu0 %2615
    %2617 = vrot.lane.b32.xlu0 %v2602, 96
    %v2618 = vpop.permute.xlu0 %2617
    %v2623 = vmul.f32 %v2603, %v2612
    %v2624 = vmul.f32 %v2604, %v2614
    %v2625 = vmul.f32 %v2605, %v2616
    %v2626 = vmul.f32 %v2606, %v2618
    %v2627 = vmul.f32 %v2564, 0.0
    %v2628 = vmul.f32 %v2566, 0.0
    %v2629 = vmul.f32 %v2568, 0.0
    %v2630 = vmul.f32 %v2570, 0.0
    %v2631 = vadd.f32 %v2623, %v2627
    %v2632 = vadd.f32 %v2624, %v2628
    %v2633 = vadd.f32 %v2625, %v2629
    %v2634 = vadd.f32 %v2626, %v2630
    %v2635 = vrot.slane %v2523, 4
    %2636 = vrot.lane.b32.xlu0 %v2635, 64
    %v2637 = vpop.permute.xlu0 %2636
    %v2639 = vadd.f32 %v1668, %v2534
    %v2640 = vadd.f32 %v1670, %v2536
    %v2641 = vadd.f32 %v1672, %v2538
    %v2642 = vadd.f32 %v1674, %v2637
    %v2643 = vxor.u32 %v2639, 2147483648
    %v2644 = vxor.u32 %v2640, 2147483648
    %v2645 = vxor.u32 %v2641, 2147483648
    %v2646 = vxor.u32 %v2642, 2147483648
    %v2647 = vmul.f32 %v2643, 1.442695
    %v2648 = vpow.pop %v2647
    %v2649 = vmul.f32 %v2644, 1.442695
    %v2650 = vpow.pop %v2649
    %v2651 = vmul.f32 %v2645, 1.442695
    %v2652 = vpow.pop %v2651
    %v2653 = vmul.f32 %v2646, 1.442695
    %v2654 = vpow.pop %v2653
    %v2655 = vadd.f32 %v2648, 1.0
    %v2656 = vadd.f32 %v2650, 1.0
    %v2657 = vadd.f32 %v2652, 1.0
    %v2658 = vadd.f32 %v2654, 1.0
    %v2659 = vrcp.pop %v2655
    %v2660 = vmul.f32 1.0, %v2659
    %v2661 = vrcp.pop %v2656
    %v2662 = vmul.f32 1.0, %v2661
    %v2663 = vrcp.pop %v2657
    %v2664 = vmul.f32 1.0, %v2663
    %v2665 = vrcp.pop %v2658
    %v2666 = vmul.f32 1.0, %v2665
    %v2668 = vrot.slane %v2525, 1
    %v2669 = vrot.slane %v2525, 2
    %v2670 = vrot.slane %v2525, 3
    %v2671 = vrot.slane %v2525, 4
    %2672 = vrot.lane.b32.xlu0 %v2668, 64
    %v2673 = vpop.permute.xlu0 %2672
    %2674 = vrot.lane.b32.xlu0 %v2669, 64
    %v2675 = vpop.permute.xlu0 %2674
    %2676 = vrot.lane.b32.xlu0 %v2670, 64
    %v2677 = vpop.permute.xlu0 %2676
    %2678 = vrot.lane.b32.xlu0 %v2671, 64
    %v2679 = vpop.permute.xlu0 %2678
    %v2684 = vadd.f32 %v1668, %v2673
    %v2685 = vadd.f32 %v1670, %v2675
    %v2686 = vadd.f32 %v1672, %v2677
    %v2687 = vadd.f32 %v1674, %v2679
    %v2688 = vxor.u32 %v2684, 2147483648
    %v2689 = vxor.u32 %v2685, 2147483648
    %v2690 = vxor.u32 %v2686, 2147483648
    %v2691 = vxor.u32 %v2687, 2147483648
    %v2692 = vmul.f32 %v2688, 1.442695
    %v2693 = vpow.pop %v2692
    %v2694 = vmul.f32 %v2689, 1.442695
    %v2695 = vpow.pop %v2694
    %v2696 = vmul.f32 %v2690, 1.442695
    %v2697 = vpow.pop %v2696
    %v2698 = vmul.f32 %v2691, 1.442695
    %v2699 = vpow.pop %v2698
    %v2700 = vadd.f32 %v2693, 1.0
    %v2701 = vadd.f32 %v2695, 1.0
    %v2702 = vadd.f32 %v2697, 1.0
    %v2703 = vadd.f32 %v2699, 1.0
    %v2704 = vrcp.pop %v2700
    %v2705 = vmul.f32 1.0, %v2704
    %v2706 = vrcp.pop %v2701
    %v2707 = vmul.f32 1.0, %v2706
    %v2708 = vrcp.pop %v2702
    %v2709 = vmul.f32 1.0, %v2708
    %v2710 = vrcp.pop %v2703
    %v2711 = vmul.f32 1.0, %v2710
    %v2716 = vmul.f32 %v2660, %v2668
    %v2717 = vmul.f32 %v2662, %v2669
    %v2718 = vmul.f32 %v2664, %v2670
    %v2719 = vmul.f32 %v2666, %v2671
    %2724 = vrot.lane.b32.xlu0 %v2716, 64
    %v2725 = vpop.permute.xlu0 %2724
    %2726 = vrot.lane.b32.xlu0 %v2717, 64
    %v2727 = vpop.permute.xlu0 %2726
    %2728 = vrot.lane.b32.xlu0 %v2718, 64
    %v2729 = vpop.permute.xlu0 %2728
    %2730 = vrot.lane.b32.xlu0 %v2719, 64
    %v2731 = vpop.permute.xlu0 %2730
    %v2736 = vadd.f32 %v1668, %v2725
    %v2737 = vadd.f32 %v1670, %v2727
    %v2738 = vadd.f32 %v1672, %v2729
    %v2739 = vadd.f32 %v1674, %v2731
    %v2740 = vtanh.pop %v2736
    %v2741 = vtanh.pop %v2737
    %v2742 = vtanh.pop %v2738
    %v2743 = vtanh.pop %v2739
    %v2744 = vsub.f32 1.0, %v2705
    %v2745 = vsub.f32 1.0, %v2707
    %v2746 = vsub.f32 1.0, %v2709
    %v2747 = vsub.f32 1.0, %v2711
    %2752 = vrot.lane.b32.xlu0 %v2740, 96
    %v2753 = vpop.permute.xlu0 %2752
    %2754 = vrot.lane.b32.xlu0 %v2741, 96
    %v2755 = vpop.permute.xlu0 %2754
    %2756 = vrot.lane.b32.xlu0 %v2742, 96
    %v2757 = vpop.permute.xlu0 %2756
    %2758 = vrot.lane.b32.xlu0 %v2743, 96
    %v2759 = vpop.permute.xlu0 %2758
    %v2764 = vmul.f32 %v2744, %v2753
    %v2765 = vmul.f32 %v2745, %v2755
    %v2766 = vmul.f32 %v2746, %v2757
    %v2767 = vmul.f32 %v2747, %v2759
    %v2768 = vmul.f32 %v2705, 0.0
    %v2769 = vmul.f32 %v2707, 0.0
    %v2770 = vmul.f32 %v2709, 0.0
    %v2771 = vmul.f32 %v2711, 0.0
    %v2772 = vadd.f32 %v2764, %v2768
    %v2773 = vadd.f32 %v2765, %v2769
    %v2774 = vadd.f32 %v2766, %v2770
    %v2775 = vadd.f32 %v2767, %v2771
    %v2780 = vrot.slane %v2632, 7
    %vm2781 = vcmask 1041409
    %v2782 = vsel %vm2781, %v2780, %v2631
    %v2783 = vrot.slane %v2633, 6
    %vm2784 = vcmask 1042434
    %v2785 = vsel %vm2784, %v2783, %v2782
    %v2786 = vrot.slane %v2634, 5
    %vm2787 = vcmask 1043459
    %v2788 = vsel %vm2787, %v2786, %v2785
    %2789 = vrot.lane.b32.xlu0 %v2788, 32
    %v2790 = vpop.permute.xlu0 %2789
    %v2796 = vrot.slane %v2772, 7
    %v2797 = vrot.slane %v2773, 6
    %v2798 = vsel %vm2781, %v2797, %v2796
    %v2799 = vrot.slane %v2774, 5
    %v2800 = vsel %vm2784, %v2799, %v2798
    %v2801 = vrot.slane %v2775, 4
    %v2802 = vsel %vm2787, %v2801, %v2800
    %2803 = vrot.lane.b32.xlu0 %v2802, 96
    %v2804 = vpop.permute.xlu0 %2803
    %vm2806 = vcmask 261120
    %v2807 = vsel %vm2806, %v2790, %v2804
    %v2809 = vsel %vm1663, %v2807, 0
    %2811 = vmatprep.subr.mxu0 %v2430
    %2812 = vmatpush1.msra.mxu0 %v2429
    %2813 = vmatprep.subr.mxu0 %v2432
    %2814 = vmatpush1.msra.mxu0 %v2431
    %2815 = vmatprep.subr.mxu0 %v2434
    %2816 = vmatpush1.msra.mxu0 %v2433
    %2817 = vmatprep.subr.mxu0 %v2436
    %2818 = vmatpush1.msra.mxu0 %v2435
    %2819 = vmatprep.subr.mxu0 %v2438
    %2820 = vmatpush1.msra.mxu0 %v2437
    %2821 = vmatprep.subr.mxu0 %v2440
    %2822 = vmatpush1.msra.mxu0 %v2439
    %2823 = vmatprep.subr.mxu0 %v2442
    %2824 = vmatpush1.msra.mxu0 %v2441
    %2825 = vmatprep.subr.mxu0 %v2444
    %2826 = vmatpush1.msra.mxu0 %v2443
    %2827 = vmatprep.subr.mxu0 0.0
    %2828 = vmatpush1.msra.mxu0 0.0
    %2829 = vmatprep.subr.mxu0 0.0
    %2830 = vmatpush1.msra.mxu0 0.0
    %2831 = vmatprep.subr.mxu0 0.0
    %2832 = vmatpush1.msra.mxu0 0.0
    %2833 = vmatprep.subr.mxu0 0.0
    %2834 = vmatpush1.msra.mxu0 0.0
    %2835 = vmatprep.subr.mxu0 0.0
    %2836 = vmatpush1.msra.mxu0 0.0
    %2837 = vmatprep.subr.mxu0 0.0
    %2838 = vmatpush1.msra.mxu0 0.0
    %2839 = vmatprep.subr.mxu0 0.0
    %2840 = vmatpush1.msra.mxu0 0.0
    %2841 = vmatprep.subr.mxu0 0.0
    %2842 = vmatpush1.msra.mxu0 0.0
    %2843 = vmatprep.subr.mxu0 0.0
    %2844 = vmatpush1.msra.mxu0 0.0
    %2845 = vmatprep.subr.mxu0 0.0
    %2846 = vmatpush1.msra.mxu0 0.0
    %2847 = vmatprep.subr.mxu0 0.0
    %2848 = vmatpush1.msra.mxu0 0.0
    %2849 = vmatprep.subr.mxu0 0.0
    %2850 = vmatpush1.msra.mxu0 0.0
    %2851 = vmatprep.subr.mxu0 0.0
    %2852 = vmatpush1.msra.mxu0 0.0
    %2853 = vmatprep.subr.mxu0 0.0
    %2854 = vmatpush1.msra.mxu0 0.0
    %2855 = vmatprep.subr.mxu0 0.0
    %2856 = vmatpush1.msra.mxu0 0.0
    %2857 = vmatprep.subr.mxu0 0.0
    %2858 = vmatpush1.msra.mxu0 0.0
    %2859 = vmatprep.subr.mxu0 0.0
    %2860 = vmatpush1.msra.mxu0 0.0
    %2861 = vmatprep.subr.mxu0 0.0
    %2862 = vmatpush1.msra.mxu0 0.0
    %2863 = vmatprep.subr.mxu0 0.0
    %2864 = vmatpush1.msra.mxu0 0.0
    %2865 = vmatprep.subr.mxu0 0.0
    %2866 = vmatpush1.msra.mxu0 0.0
    %2867 = vmatprep.subr.mxu0 0.0
    %2868 = vmatpush1.msra.mxu0 0.0
    %2869 = vmatprep.subr.mxu0 0.0
    %2870 = vmatpush1.msra.mxu0 0.0
    %2871 = vmatprep.subr.mxu0 0.0
    %2872 = vmatpush1.msra.mxu0 0.0
    %2873 = vmatprep.subr.mxu0 0.0
    %2874 = vmatpush1.msra.mxu0 0.0
    %2875 = vmatprep.mubr.f32.mxu0 0.0
    %2876 = vmatmul.mubr.f32.gmra.mrb[0].mxu0 %v2809
    %v2877 = vpop.f32.mrb[0].mxu0
    %v2878 = vadd.f32 %v2448, %v2877
    %v2879 = vpop.f32.mrb[0].mxu0
    %v2880 = vadd.f32 %v2452, %v2879
    %2881 = vdwg.mxu0
    %v2883 = vrot.slane %v2878, 7
    %v2884 = vrot.slane %v2878, 1
    %v2885 = vrot.slane %v2878, 2
    %2886 = vrot.lane.b32.xlu0 %v2883, 64
    %v2887 = vpop.permute.xlu0 %2886
    %2888 = vrot.lane.b32.xlu0 %v2878, 64
    %v2889 = vpop.permute.xlu0 %2888
    %2890 = vrot.lane.b32.xlu0 %v2884, 64
    %v2891 = vpop.permute.xlu0 %2890
    %2892 = vrot.lane.b32.xlu0 %v2885, 64
    %v2893 = vpop.permute.xlu0 %2892
    %v2898 = vadd.f32 %v1667, %v2887
    %v2899 = vadd.f32 %v1669, %v2889
    %v2900 = vadd.f32 %v1671, %v2891
    %v2901 = vadd.f32 %v1673, %v2893
    %v2902 = vxor.u32 %v2898, 2147483648
    %v2903 = vxor.u32 %v2899, 2147483648
    %v2904 = vxor.u32 %v2900, 2147483648
    %v2905 = vxor.u32 %v2901, 2147483648
    %v2906 = vmul.f32 %v2902, 1.442695
    %v2907 = vpow.pop %v2906
    %v2908 = vmul.f32 %v2903, 1.442695
    %v2909 = vpow.pop %v2908
    %v2910 = vmul.f32 %v2904, 1.442695
    %v2911 = vpow.pop %v2910
    %v2912 = vmul.f32 %v2905, 1.442695
    %v2913 = vpow.pop %v2912
    %v2914 = vadd.f32 %v2907, 1.0
    %v2915 = vadd.f32 %v2909, 1.0
    %v2916 = vadd.f32 %v2911, 1.0
    %v2917 = vadd.f32 %v2913, 1.0
    %v2918 = vrcp.pop %v2914
    %v2919 = vmul.f32 1.0, %v2918
    %v2920 = vrcp.pop %v2915
    %v2921 = vmul.f32 1.0, %v2920
    %v2922 = vrcp.pop %v2916
    %v2923 = vmul.f32 1.0, %v2922
    %v2924 = vrcp.pop %v2917
    %v2925 = vmul.f32 1.0, %v2924
    %v2930 = vmul.f32 %v2919, %v2883
    %v2931 = vmul.f32 %v2921, %v2878
    %v2932 = vmul.f32 %v2923, %v2884
    %v2933 = vmul.f32 %v2925, %v2885
    %2938 = vrot.lane.b32.xlu0 %v2930, 64
    %v2939 = vpop.permute.xlu0 %2938
    %2940 = vrot.lane.b32.xlu0 %v2931, 64
    %v2941 = vpop.permute.xlu0 %2940
    %2942 = vrot.lane.b32.xlu0 %v2932, 64
    %v2943 = vpop.permute.xlu0 %2942
    %2944 = vrot.lane.b32.xlu0 %v2933, 64
    %v2945 = vpop.permute.xlu0 %2944
    %v2950 = vadd.f32 %v1668, %v2939
    %v2951 = vadd.f32 %v1670, %v2941
    %v2952 = vadd.f32 %v1672, %v2943
    %v2953 = vadd.f32 %v1674, %v2945
    %v2954 = vtanh.pop %v2950
    %v2955 = vtanh.pop %v2951
    %v2956 = vtanh.pop %v2952
    %v2957 = vtanh.pop %v2953
    %v2958 = vsub.f32 1.0, %v2919
    %v2959 = vsub.f32 1.0, %v2921
    %v2960 = vsub.f32 1.0, %v2923
    %v2961 = vsub.f32 1.0, %v2925
    %2966 = vrot.lane.b32.xlu0 %v2954, 96
    %v2967 = vpop.permute.xlu0 %2966
    %2968 = vrot.lane.b32.xlu0 %v2955, 96
    %v2969 = vpop.permute.xlu0 %2968
    %2970 = vrot.lane.b32.xlu0 %v2956, 96
    %v2971 = vpop.permute.xlu0 %2970
    %2972 = vrot.lane.b32.xlu0 %v2957, 96
    %v2973 = vpop.permute.xlu0 %2972
    %v2978 = vmul.f32 %v2958, %v2967
    %v2979 = vmul.f32 %v2959, %v2969
    %v2980 = vmul.f32 %v2960, %v2971
    %v2981 = vmul.f32 %v2961, %v2973
    %v2982 = vrot.slane %v2807, 7
    %v2983 = vrot.slane %v2807, 1
    %v2984 = vrot.slane %v2807, 2
    %2985 = vrot.lane.b32.xlu0 %v2982, 96
    %v2986 = vpop.permute.xlu0 %2985
    %2987 = vrot.lane.b32.xlu0 %v2807, 96
    %v2988 = vpop.permute.xlu0 %2987
    %2989 = vrot.lane.b32.xlu0 %v2983, 96
    %v2990 = vpop.permute.xlu0 %2989
    %2991 = vrot.lane.b32.xlu0 %v2984, 96
    %v2992 = vpop.permute.xlu0 %2991
    %v2997 = vmul.f32 %v2919, %v2986
    %v2998 = vmul.f32 %v2921, %v2988
    %v2999 = vmul.f32 %v2923, %v2990
    %v3000 = vmul.f32 %v2925, %v2992
    %v3001 = vadd.f32 %v2978, %v2997
    %v3002 = vadd.f32 %v2979, %v2998
    %v3003 = vadd.f32 %v2980, %v2999
    %v3004 = vadd.f32 %v2981, %v3000
    %v3005 = vrot.slane %v2878, 3
    %v3006 = vrot.slane %v2878, 4
    %v3007 = vrot.slane %v2878, 5
    %3008 = vrot.lane.b32.xlu0 %v3005, 64
    %v3009 = vpop.permute.xlu0 %3008
    %3010 = vrot.lane.b32.xlu0 %v3006, 64
    %v3011 = vpop.permute.xlu0 %3010
    %3012 = vrot.lane.b32.xlu0 %v3007, 64
    %v3013 = vpop.permute.xlu0 %3012
    %v3017 = vadd.f32 %v1668, %v2893
    %v3018 = vadd.f32 %v1670, %v3009
    %v3019 = vadd.f32 %v1672, %v3011
    %v3020 = vadd.f32 %v1674, %v3013
    %v3021 = vxor.u32 %v3017, 2147483648
    %v3022 = vxor.u32 %v3018, 2147483648
    %v3023 = vxor.u32 %v3019, 2147483648
    %v3024 = vxor.u32 %v3020, 2147483648
    %v3025 = vmul.f32 %v3021, 1.442695
    %v3026 = vpow.pop %v3025
    %v3027 = vmul.f32 %v3022, 1.442695
    %v3028 = vpow.pop %v3027
    %v3029 = vmul.f32 %v3023, 1.442695
    %v3030 = vpow.pop %v3029
    %v3031 = vmul.f32 %v3024, 1.442695
    %v3032 = vpow.pop %v3031
    %v3033 = vadd.f32 %v3026, 1.0
    %v3034 = vadd.f32 %v3028, 1.0
    %v3035 = vadd.f32 %v3030, 1.0
    %v3036 = vadd.f32 %v3032, 1.0
    %v3037 = vrcp.pop %v3033
    %v3038 = vmul.f32 1.0, %v3037
    %v3039 = vrcp.pop %v3034
    %v3040 = vmul.f32 1.0, %v3039
    %v3041 = vrcp.pop %v3035
    %v3042 = vmul.f32 1.0, %v3041
    %v3043 = vrcp.pop %v3036
    %v3044 = vmul.f32 1.0, %v3043
    %v3046 = vrot.slane %v2880, 2
    %v3047 = vrot.slane %v2880, 3
    %v3048 = vrot.slane %v2880, 4
    %v3049 = vrot.slane %v2880, 5
    %3050 = vrot.lane.b32.xlu0 %v3046, 64
    %v3051 = vpop.permute.xlu0 %3050
    %3052 = vrot.lane.b32.xlu0 %v3047, 64
    %v3053 = vpop.permute.xlu0 %3052
    %3054 = vrot.lane.b32.xlu0 %v3048, 64
    %v3055 = vpop.permute.xlu0 %3054
    %3056 = vrot.lane.b32.xlu0 %v3049, 64
    %v3057 = vpop.permute.xlu0 %3056
    %v3062 = vadd.f32 %v1668, %v3051
    %v3063 = vadd.f32 %v1670, %v3053
    %v3064 = vadd.f32 %v1672, %v3055
    %v3065 = vadd.f32 %v1674, %v3057
    %v3066 = vxor.u32 %v3062, 2147483648
    %v3067 = vxor.u32 %v3063, 2147483648
    %v3068 = vxor.u32 %v3064, 2147483648
    %v3069 = vxor.u32 %v3065, 2147483648
    %v3070 = vmul.f32 %v3066, 1.442695
    %v3071 = vpow.pop %v3070
    %v3072 = vmul.f32 %v3067, 1.442695
    %v3073 = vpow.pop %v3072
    %v3074 = vmul.f32 %v3068, 1.442695
    %v3075 = vpow.pop %v3074
    %v3076 = vmul.f32 %v3069, 1.442695
    %v3077 = vpow.pop %v3076
    %v3078 = vadd.f32 %v3071, 1.0
    %v3079 = vadd.f32 %v3073, 1.0
    %v3080 = vadd.f32 %v3075, 1.0
    %v3081 = vadd.f32 %v3077, 1.0
    %v3082 = vrcp.pop %v3078
    %v3083 = vmul.f32 1.0, %v3082
    %v3084 = vrcp.pop %v3079
    %v3085 = vmul.f32 1.0, %v3084
    %v3086 = vrcp.pop %v3080
    %v3087 = vmul.f32 1.0, %v3086
    %v3088 = vrcp.pop %v3081
    %v3089 = vmul.f32 1.0, %v3088
    %v3094 = vmul.f32 %v3038, %v3046
    %v3095 = vmul.f32 %v3040, %v3047
    %v3096 = vmul.f32 %v3042, %v3048
    %v3097 = vmul.f32 %v3044, %v3049
    %3102 = vrot.lane.b32.xlu0 %v3094, 64
    %v3103 = vpop.permute.xlu0 %3102
    %3104 = vrot.lane.b32.xlu0 %v3095, 64
    %v3105 = vpop.permute.xlu0 %3104
    %3106 = vrot.lane.b32.xlu0 %v3096, 64
    %v3107 = vpop.permute.xlu0 %3106
    %3108 = vrot.lane.b32.xlu0 %v3097, 64
    %v3109 = vpop.permute.xlu0 %3108
    %v3114 = vadd.f32 %v1668, %v3103
    %v3115 = vadd.f32 %v1670, %v3105
    %v3116 = vadd.f32 %v1672, %v3107
    %v3117 = vadd.f32 %v1674, %v3109
    %v3118 = vtanh.pop %v3114
    %v3119 = vtanh.pop %v3115
    %v3120 = vtanh.pop %v3116
    %v3121 = vtanh.pop %v3117
    %v3122 = vsub.f32 1.0, %v3083
    %v3123 = vsub.f32 1.0, %v3085
    %v3124 = vsub.f32 1.0, %v3087
    %v3125 = vsub.f32 1.0, %v3089
    %3130 = vrot.lane.b32.xlu0 %v3118, 96
    %v3131 = vpop.permute.xlu0 %3130
    %3132 = vrot.lane.b32.xlu0 %v3119, 96
    %v3133 = vpop.permute.xlu0 %3132
    %3134 = vrot.lane.b32.xlu0 %v3120, 96
    %v3135 = vpop.permute.xlu0 %3134
    %3136 = vrot.lane.b32.xlu0 %v3121, 96
    %v3137 = vpop.permute.xlu0 %3136
    %v3142 = vmul.f32 %v3122, %v3131
    %v3143 = vmul.f32 %v3123, %v3133
    %v3144 = vmul.f32 %v3124, %v3135
    %v3145 = vmul.f32 %v3125, %v3137
    %v3146 = vrot.slane %v2807, 3
    %v3147 = vrot.slane %v2807, 4
    %v3148 = vrot.slane %v2807, 5
    %3149 = vrot.lane.b32.xlu0 %v2984, 32
    %v3150 = vpop.permute.xlu0 %3149
    %3151 = vrot.lane.b32.xlu0 %v3146, 32
    %v3152 = vpop.permute.xlu0 %3151
    %3153 = vrot.lane.b32.xlu0 %v3147, 32
    %v3154 = vpop.permute.xlu0 %3153
    %3155 = vrot.lane.b32.xlu0 %v3148, 32
    %v3156 = vpop.permute.xlu0 %3155
    %v3161 = vmul.f32 %v3083, %v3150
    %v3162 = vmul.f32 %v3085, %v3152
    %v3163 = vmul.f32 %v3087, %v3154
    %v3164 = vmul.f32 %v3089, %v3156
    %v3165 = vadd.f32 %v3142, %v3161
    %v3166 = vadd.f32 %v3143, %v3162
    %v3167 = vadd.f32 %v3144, %v3163
    %v3168 = vadd.f32 %v3145, %v3164
    %v3173 = vrot.slane %v3002, 7
    %v3174 = vsel %vm2784, %v3173, %v3001
    %v3175 = vrot.slane %v3003, 6
    %v3176 = vsel %vm2787, %v3175, %v3174
    %v3177 = vrot.slane %v3004, 5
    %vm3178 = vcmask 1044484
    %v3179 = vsel %vm3178, %v3177, %v3176
    %3180 = vrot.lane.b32.xlu0 %v3179, 32
    %v3181 = vpop.permute.xlu0 %3180
    %v3187 = vrot.slane %v3165, 5
    %v3188 = vrot.slane %v3166, 4
    %v3189 = vsel %vm2784, %v3188, %v3187
    %v3190 = vrot.slane %v3167, 3
    %v3191 = vsel %vm2787, %v3190, %v3189
    %v3192 = vrot.slane %v3168, 2
    %v3193 = vsel %vm3178, %v3192, %v3191
    %3194 = vrot.lane.b32.xlu0 %v3193, 96
    %v3195 = vpop.permute.xlu0 %3194
    %v3197 = vsel %vm2806, %v3181, %v3195
    %v3199 = vrot.slane %v3197, 1
    %v3200 = vsel %vm1663, %v3199, 0
    %3202 = vmatprep.subr.mxu0 %v2430
    %3203 = vmatpush1.msra.mxu0 %v2429
    %3204 = vmatprep.subr.mxu0 %v2432
    %3205 = vmatpush1.msra.mxu0 %v2431
    %3206 = vmatprep.subr.mxu0 %v2434
    %3207 = vmatpush1.msra.mxu0 %v2433
    %3208 = vmatprep.subr.mxu0 %v2436
    %3209 = vmatpush1.msra.mxu0 %v2435
    %3210 = vmatprep.subr.mxu0 %v2438
    %3211 = vmatpush1.msra.mxu0 %v2437
    %3212 = vmatprep.subr.mxu0 %v2440
    %3213 = vmatpush1.msra.mxu0 %v2439
    %3214 = vmatprep.subr.mxu0 %v2442
    %3215 = vmatpush1.msra.mxu0 %v2441
    %3216 = vmatprep.subr.mxu0 %v2444
    %3217 = vmatpush1.msra.mxu0 %v2443
    %3218 = vmatprep.subr.mxu0 0.0
    %3219 = vmatpush1.msra.mxu0 0.0
    %3220 = vmatprep.subr.mxu0 0.0
    %3221 = vmatpush1.msra.mxu0 0.0
    %3222 = vmatprep.subr.mxu0 0.0
    %3223 = vmatpush1.msra.mxu0 0.0
    %3224 = vmatprep.subr.mxu0 0.0
    %3225 = vmatpush1.msra.mxu0 0.0
    %3226 = vmatprep.subr.mxu0 0.0
    %3227 = vmatpush1.msra.mxu0 0.0
    %3228 = vmatprep.subr.mxu0 0.0
    %3229 = vmatpush1.msra.mxu0 0.0
    %3230 = vmatprep.subr.mxu0 0.0
    %3231 = vmatpush1.msra.mxu0 0.0
    %3232 = vmatprep.subr.mxu0 0.0
    %3233 = vmatpush1.msra.mxu0 0.0
    %3234 = vmatprep.subr.mxu0 0.0
    %3235 = vmatpush1.msra.mxu0 0.0
    %3236 = vmatprep.subr.mxu0 0.0
    %3237 = vmatpush1.msra.mxu0 0.0
    %3238 = vmatprep.subr.mxu0 0.0
    %3239 = vmatpush1.msra.mxu0 0.0
    %3240 = vmatprep.subr.mxu0 0.0
    %3241 = vmatpush1.msra.mxu0 0.0
    %3242 = vmatprep.subr.mxu0 0.0
    %3243 = vmatpush1.msra.mxu0 0.0
    %3244 = vmatprep.subr.mxu0 0.0
    %3245 = vmatpush1.msra.mxu0 0.0
    %3246 = vmatprep.subr.mxu0 0.0
    %3247 = vmatpush1.msra.mxu0 0.0
    %3248 = vmatprep.subr.mxu0 0.0
    %3249 = vmatpush1.msra.mxu0 0.0
    %3250 = vmatprep.subr.mxu0 0.0
    %3251 = vmatpush1.msra.mxu0 0.0
    %3252 = vmatprep.subr.mxu0 0.0
    %3253 = vmatpush1.msra.mxu0 0.0
    %3254 = vmatprep.subr.mxu0 0.0
    %3255 = vmatpush1.msra.mxu0 0.0
    %3256 = vmatprep.subr.mxu0 0.0
    %3257 = vmatpush1.msra.mxu0 0.0
    %3258 = vmatprep.subr.mxu0 0.0
    %3259 = vmatpush1.msra.mxu0 0.0
    %3260 = vmatprep.subr.mxu0 0.0
    %3261 = vmatpush1.msra.mxu0 0.0
    %3262 = vmatprep.subr.mxu0 0.0
    %3263 = vmatpush1.msra.mxu0 0.0
    %3264 = vmatprep.subr.mxu0 0.0
    %3265 = vmatpush1.msra.mxu0 0.0
    %3266 = vmatprep.mubr.f32.mxu0 0.0
    %3267 = vmatmul.mubr.f32.gmra.mrb[0].mxu0 %v3200
    %v3268 = vpop.f32.mrb[0].mxu0
    %v3269 = vadd.f32 %v2448, %v3268
    %v3270 = vpop.f32.mrb[0].mxu0
    %v3271 = vadd.f32 %v2452, %v3270
    %3272 = vdwg.mxu0
    %v3274 = vrot.slane %v3269, 6
    %v3275 = vrot.slane %v3269, 7
    %v3276 = vrot.slane %v3269, 1
    %3277 = vrot.lane.b32.xlu0 %v3274, 64
    %v3278 = vpop.permute.xlu0 %3277
    %3279 = vrot.lane.b32.xlu0 %v3275, 64
    %v3280 = vpop.permute.xlu0 %3279
    %3281 = vrot.lane.b32.xlu0 %v3269, 64
    %v3282 = vpop.permute.xlu0 %3281
    %3283 = vrot.lane.b32.xlu0 %v3276, 64
    %v3284 = vpop.permute.xlu0 %3283
    %v3289 = vadd.f32 %v1667, %v3278
    %v3290 = vadd.f32 %v1669, %v3280
    %v3291 = vadd.f32 %v1671, %v3282
    %v3292 = vadd.f32 %v1673, %v3284
    %v3293 = vxor.u32 %v3289, 2147483648
    %v3294 = vxor.u32 %v3290, 2147483648
    %v3295 = vxor.u32 %v3291, 2147483648
    %v3296 = vxor.u32 %v3292, 2147483648
    %v3297 = vmul.f32 %v3293, 1.442695
    %v3298 = vpow.pop %v3297
    %v3299 = vmul.f32 %v3294, 1.442695
    %v3300 = vpow.pop %v3299
    %v3301 = vmul.f32 %v3295, 1.442695
    %v3302 = vpow.pop %v3301
    %v3303 = vmul.f32 %v3296, 1.442695
    %v3304 = vpow.pop %v3303
    %v3305 = vadd.f32 %v3298, 1.0
    %v3306 = vadd.f32 %v3300, 1.0
    %v3307 = vadd.f32 %v3302, 1.0
    %v3308 = vadd.f32 %v3304, 1.0
    %v3309 = vrcp.pop %v3305
    %v3310 = vmul.f32 1.0, %v3309
    %v3311 = vrcp.pop %v3306
    %v3312 = vmul.f32 1.0, %v3311
    %v3313 = vrcp.pop %v3307
    %v3314 = vmul.f32 1.0, %v3313
    %v3315 = vrcp.pop %v3308
    %v3316 = vmul.f32 1.0, %v3315
    %v3321 = vmul.f32 %v3310, %v3274
    %v3322 = vmul.f32 %v3312, %v3275
    %v3323 = vmul.f32 %v3314, %v3269
    %v3324 = vmul.f32 %v3316, %v3276
    %3329 = vrot.lane.b32.xlu0 %v3321, 64
    %v3330 = vpop.permute.xlu0 %3329
    %3331 = vrot.lane.b32.xlu0 %v3322, 64
    %v3332 = vpop.permute.xlu0 %3331
    %3333 = vrot.lane.b32.xlu0 %v3323, 64
    %v3334 = vpop.permute.xlu0 %3333
    %3335 = vrot.lane.b32.xlu0 %v3324, 64
    %v3336 = vpop.permute.xlu0 %3335
    %v3341 = vadd.f32 %v1668, %v3330
    %v3342 = vadd.f32 %v1670, %v3332
    %v3343 = vadd.f32 %v1672, %v3334
    %v3344 = vadd.f32 %v1674, %v3336
    %v3345 = vtanh.pop %v3341
    %v3346 = vtanh.pop %v3342
    %v3347 = vtanh.pop %v3343
    %v3348 = vtanh.pop %v3344
    %v3349 = vsub.f32 1.0, %v3310
    %v3350 = vsub.f32 1.0, %v3312
    %v3351 = vsub.f32 1.0, %v3314
    %v3352 = vsub.f32 1.0, %v3316
    %3357 = vrot.lane.b32.xlu0 %v3345, 96
    %v3358 = vpop.permute.xlu0 %3357
    %3359 = vrot.lane.b32.xlu0 %v3346, 96
    %v3360 = vpop.permute.xlu0 %3359
    %3361 = vrot.lane.b32.xlu0 %v3347, 96
    %v3362 = vpop.permute.xlu0 %3361
    %3363 = vrot.lane.b32.xlu0 %v3348, 96
    %v3364 = vpop.permute.xlu0 %3363
    %v3369 = vmul.f32 %v3349, %v3358
    %v3370 = vmul.f32 %v3350, %v3360
    %v3371 = vmul.f32 %v3351, %v3362
    %v3372 = vmul.f32 %v3352, %v3364
    %v3373 = vrot.slane %v3197, 7
    %v3374 = vrot.slane %v3197, 2
    %3375 = vrot.lane.b32.xlu0 %v3373, 96
    %v3376 = vpop.permute.xlu0 %3375
    %3377 = vrot.lane.b32.xlu0 %v3197, 96
    %v3378 = vpop.permute.xlu0 %3377
    %3379 = vrot.lane.b32.xlu0 %v3199, 96
    %v3380 = vpop.permute.xlu0 %3379
    %3381 = vrot.lane.b32.xlu0 %v3374, 96
    %v3382 = vpop.permute.xlu0 %3381
    %v3387 = vmul.f32 %v3310, %v3376
    %v3388 = vmul.f32 %v3312, %v3378
    %v3389 = vmul.f32 %v3314, %v3380
    %v3390 = vmul.f32 %v3316, %v3382
    %v3391 = vadd.f32 %v3369, %v3387
    %v3392 = vadd.f32 %v3370, %v3388
    %v3393 = vadd.f32 %v3371, %v3389
    %v3394 = vadd.f32 %v3372, %v3390
    %v3395 = vrot.slane %v3269, 3
    %v3396 = vrot.slane %v3269, 4
    %v3397 = vrot.slane %v3269, 5
    %3398 = vrot.lane.b32.xlu0 %v3395, 64
    %v3399 = vpop.permute.xlu0 %3398
    %3400 = vrot.lane.b32.xlu0 %v3396, 64
    %v3401 = vpop.permute.xlu0 %3400
    %3402 = vrot.lane.b32.xlu0 %v3397, 64
    %v3403 = vpop.permute.xlu0 %3402
    %v3407 = vadd.f32 %v1668, %v3399
    %v3408 = vadd.f32 %v1670, %v3401
    %v3409 = vadd.f32 %v1672, %v3403
    %v3410 = vadd.f32 %v1674, %v3278
    %v3411 = vxor.u32 %v3407, 2147483648
    %v3412 = vxor.u32 %v3408, 2147483648
    %v3413 = vxor.u32 %v3409, 2147483648
    %v3414 = vxor.u32 %v3410, 2147483648
    %v3415 = vmul.f32 %v3411, 1.442695
    %v3416 = vpow.pop %v3415
    %v3417 = vmul.f32 %v3412, 1.442695
    %v3418 = vpow.pop %v3417
    %v3419 = vmul.f32 %v3413, 1.442695
    %v3420 = vpow.pop %v3419
    %v3421 = vmul.f32 %v3414, 1.442695
    %v3422 = vpow.pop %v3421
    %v3423 = vadd.f32 %v3416, 1.0
    %v3424 = vadd.f32 %v3418, 1.0
    %v3425 = vadd.f32 %v3420, 1.0
    %v3426 = vadd.f32 %v3422, 1.0
    %v3427 = vrcp.pop %v3423
    %v3428 = vmul.f32 1.0, %v3427
    %v3429 = vrcp.pop %v3424
    %v3430 = vmul.f32 1.0, %v3429
    %v3431 = vrcp.pop %v3425
    %v3432 = vmul.f32 1.0, %v3431
    %v3433 = vrcp.pop %v3426
    %v3434 = vmul.f32 1.0, %v3433
    %v3436 = vrot.slane %v3271, 3
    %v3437 = vrot.slane %v3271, 4
    %v3438 = vrot.slane %v3271, 5
    %v3439 = vrot.slane %v3271, 6
    %3440 = vrot.lane.b32.xlu0 %v3436, 64
    %v3441 = vpop.permute.xlu0 %3440
    %3442 = vrot.lane.b32.xlu0 %v3437, 64
    %v3443 = vpop.permute.xlu0 %3442
    %3444 = vrot.lane.b32.xlu0 %v3438, 64
    %v3445 = vpop.permute.xlu0 %3444
    %3446 = vrot.lane.b32.xlu0 %v3439, 64
    %v3447 = vpop.permute.xlu0 %3446
    %v3452 = vadd.f32 %v1668, %v3441
    %v3453 = vadd.f32 %v1670, %v3443
    %v3454 = vadd.f32 %v1672, %v3445
    %v3455 = vadd.f32 %v1674, %v3447
    %v3456 = vxor.u32 %v3452, 2147483648
    %v3457 = vxor.u32 %v3453, 2147483648
    %v3458 = vxor.u32 %v3454, 2147483648
    %v3459 = vxor.u32 %v3455, 2147483648
    %v3460 = vmul.f32 %v3456, 1.442695
    %v3461 = vpow.pop %v3460
    %v3462 = vmul.f32 %v3457, 1.442695
    %v3463 = vpow.pop %v3462
    %v3464 = vmul.f32 %v3458, 1.442695
    %v3465 = vpow.pop %v3464
    %v3466 = vmul.f32 %v3459, 1.442695
    %v3467 = vpow.pop %v3466
    %v3468 = vadd.f32 %v3461, 1.0
    %v3469 = vadd.f32 %v3463, 1.0
    %v3470 = vadd.f32 %v3465, 1.0
    %v3471 = vadd.f32 %v3467, 1.0
    %v3472 = vrcp.pop %v3468
    %v3473 = vmul.f32 1.0, %v3472
    %v3474 = vrcp.pop %v3469
    %v3475 = vmul.f32 1.0, %v3474
    %v3476 = vrcp.pop %v3470
    %v3477 = vmul.f32 1.0, %v3476
    %v3478 = vrcp.pop %v3471
    %v3479 = vmul.f32 1.0, %v3478
    %v3484 = vmul.f32 %v3428, %v3436
    %v3485 = vmul.f32 %v3430, %v3437
    %v3486 = vmul.f32 %v3432, %v3438
    %v3487 = vmul.f32 %v3434, %v3439
    %3492 = vrot.lane.b32.xlu0 %v3484, 64
    %v3493 = vpop.permute.xlu0 %3492
    %3494 = vrot.lane.b32.xlu0 %v3485, 64
    %v3495 = vpop.permute.xlu0 %3494
    %3496 = vrot.lane.b32.xlu0 %v3486, 64
    %v3497 = vpop.permute.xlu0 %3496
    %3498 = vrot.lane.b32.xlu0 %v3487, 64
    %v3499 = vpop.permute.xlu0 %3498
    %v3504 = vadd.f32 %v1668, %v3493
    %v3505 = vadd.f32 %v1670, %v3495
    %v3506 = vadd.f32 %v1672, %v3497
    %v3507 = vadd.f32 %v1674, %v3499
    %v3508 = vtanh.pop %v3504
    %v3509 = vtanh.pop %v3505
    %v3510 = vtanh.pop %v3506
    %v3511 = vtanh.pop %v3507
    %v3512 = vsub.f32 1.0, %v3473
    %v3513 = vsub.f32 1.0, %v3475
    %v3514 = vsub.f32 1.0, %v3477
    %v3515 = vsub.f32 1.0, %v3479
    %3520 = vrot.lane.b32.xlu0 %v3508, 96
    %v3521 = vpop.permute.xlu0 %3520
    %3522 = vrot.lane.b32.xlu0 %v3509, 96
    %v3523 = vpop.permute.xlu0 %3522
    %3524 = vrot.lane.b32.xlu0 %v3510, 96
    %v3525 = vpop.permute.xlu0 %3524
    %3526 = vrot.lane.b32.xlu0 %v3511, 96
    %v3527 = vpop.permute.xlu0 %3526
    %v3532 = vmul.f32 %v3512, %v3521
    %v3533 = vmul.f32 %v3513, %v3523
    %v3534 = vmul.f32 %v3514, %v3525
    %v3535 = vmul.f32 %v3515, %v3527
    %v3536 = vrot.slane %v3197, 4
    %v3537 = vrot.slane %v3197, 5
    %v3538 = vrot.slane %v3197, 6
    %3539 = vrot.lane.b32.xlu0 %v3536, 32
    %v3540 = vpop.permute.xlu0 %3539
    %3541 = vrot.lane.b32.xlu0 %v3537, 32
    %v3542 = vpop.permute.xlu0 %3541
    %3543 = vrot.lane.b32.xlu0 %v3538, 32
    %v3544 = vpop.permute.xlu0 %3543
    %3545 = vrot.lane.b32.xlu0 %v3373, 32
    %v3546 = vpop.permute.xlu0 %3545
    %v3551 = vmul.f32 %v3473, %v3540
    %v3552 = vmul.f32 %v3475, %v3542
    %v3553 = vmul.f32 %v3477, %v3544
    %v3554 = vmul.f32 %v3479, %v3546
    %v3555 = vadd.f32 %v3532, %v3551
    %v3556 = vadd.f32 %v3533, %v3552
    %v3557 = vadd.f32 %v3534, %v3553
    %v3558 = vadd.f32 %v3535, %v3554
    %v3563 = vrot.slane %v3392, 7
    %v3564 = vsel %vm2787, %v3563, %v3391
    %v3565 = vrot.slane %v3393, 6
    %v3566 = vsel %vm3178, %v3565, %v3564
    %v3567 = vrot.slane %v3394, 5
    %vm3568 = vcmask 1045509
    %v3569 = vsel %vm3568, %v3567, %v3566
    %3570 = vrot.lane.b32.xlu0 %v3569, 32
    %v3571 = vpop.permute.xlu0 %3570
    %v3577 = vrot.slane %v3555, 3
    %v3578 = vrot.slane %v3556, 2
    %v3579 = vsel %vm2787, %v3578, %v3577
    %v3580 = vrot.slane %v3557, 1
    %v3581 = vsel %vm3178, %v3580, %v3579
    %v3582 = vsel %vm3568, %v3558, %v3581
    %3583 = vrot.lane.b32.xlu0 %v3582, 96
    %v3584 = vpop.permute.xlu0 %3583
    %v3586 = vsel %vm2806, %v3571, %v3584
    %v3588 = vrot.slane %v3586, 2
    %v3589 = vsel %vm1663, %v3588, 0
    %3591 = vmatprep.subr.mxu0 %v2430
    %3592 = vmatpush1.msra.mxu0 %v2429
    %3593 = vmatprep.subr.mxu0 %v2432
    %3594 = vmatpush1.msra.mxu0 %v2431
    %3595 = vmatprep.subr.mxu0 %v2434
    %3596 = vmatpush1.msra.mxu0 %v2433
    %3597 = vmatprep.subr.mxu0 %v2436
    %3598 = vmatpush1.msra.mxu0 %v2435
    %3599 = vmatprep.subr.mxu0 %v2438
    %3600 = vmatpush1.msra.mxu0 %v2437
    %3601 = vmatprep.subr.mxu0 %v2440
    %3602 = vmatpush1.msra.mxu0 %v2439
    %3603 = vmatprep.subr.mxu0 %v2442
    %3604 = vmatpush1.msra.mxu0 %v2441
    %3605 = vmatprep.subr.mxu0 %v2444
    %3606 = vmatpush1.msra.mxu0 %v2443
    %3607 = vmatprep.subr.mxu0 0.0
    %3608 = vmatpush1.msra.mxu0 0.0
    %3609 = vmatprep.subr.mxu0 0.0
    %3610 = vmatpush1.msra.mxu0 0.0
    %3611 = vmatprep.subr.mxu0 0.0
    %3612 = vmatpush1.msra.mxu0 0.0
    %3613 = vmatprep.subr.mxu0 0.0
    %3614 = vmatpush1.msra.mxu0 0.0
    %3615 = vmatprep.subr.mxu0 0.0
    %3616 = vmatpush1.msra.mxu0 0.0
    %3617 = vmatprep.subr.mxu0 0.0
    %3618 = vmatpush1.msra.mxu0 0.0
    %3619 = vmatprep.subr.mxu0 0.0
    %3620 = vmatpush1.msra.mxu0 0.0
    %3621 = vmatprep.subr.mxu0 0.0
    %3622 = vmatpush1.msra.mxu0 0.0
    %3623 = vmatprep.subr.mxu0 0.0
    %3624 = vmatpush1.msra.mxu0 0.0
    %3625 = vmatprep.subr.mxu0 0.0
    %3626 = vmatpush1.msra.mxu0 0.0
    %3627 = vmatprep.subr.mxu0 0.0
    %3628 = vmatpush1.msra.mxu0 0.0
    %3629 = vmatprep.subr.mxu0 0.0
    %3630 = vmatpush1.msra.mxu0 0.0
    %3631 = vmatprep.subr.mxu0 0.0
    %3632 = vmatpush1.msra.mxu0 0.0
    %3633 = vmatprep.subr.mxu0 0.0
    %3634 = vmatpush1.msra.mxu0 0.0
    %3635 = vmatprep.subr.mxu0 0.0
    %3636 = vmatpush1.msra.mxu0 0.0
    %3637 = vmatprep.subr.mxu0 0.0
    %3638 = vmatpush1.msra.mxu0 0.0
    %3639 = vmatprep.subr.mxu0 0.0
    %3640 = vmatpush1.msra.mxu0 0.0
    %3641 = vmatprep.subr.mxu0 0.0
    %3642 = vmatpush1.msra.mxu0 0.0
    %3643 = vmatprep.subr.mxu0 0.0
    %3644 = vmatpush1.msra.mxu0 0.0
    %3645 = vmatprep.subr.mxu0 0.0
    %3646 = vmatpush1.msra.mxu0 0.0
    %3647 = vmatprep.subr.mxu0 0.0
    %3648 = vmatpush1.msra.mxu0 0.0
    %3649 = vmatprep.subr.mxu0 0.0
    %3650 = vmatpush1.msra.mxu0 0.0
    %3651 = vmatprep.subr.mxu0 0.0
    %3652 = vmatpush1.msra.mxu0 0.0
    %3653 = vmatprep.subr.mxu0 0.0
    %3654 = vmatpush1.msra.mxu0 0.0
    %3655 = vmatprep.mubr.f32.mxu0 0.0
    %3656 = vmatmul.mubr.f32.gmra.mrb[0].mxu0 %v3589
    %v3657 = vpop.f32.mrb[0].mxu0
    %v3658 = vadd.f32 %v2448, %v3657
    %v3659 = vpop.f32.mrb[0].mxu0
    %v3660 = vadd.f32 %v2452, %v3659
    %3661 = vdwg.mxu0
    %v3663 = vrot.slane %v3658, 5
    %v3664 = vrot.slane %v3658, 6
    %v3665 = vrot.slane %v3658, 7
    %3666 = vrot.lane.b32.xlu0 %v3663, 64
    %v3667 = vpop.permute.xlu0 %3666
    %3668 = vrot.lane.b32.xlu0 %v3664, 64
    %v3669 = vpop.permute.xlu0 %3668
    %3670 = vrot.lane.b32.xlu0 %v3665, 64
    %v3671 = vpop.permute.xlu0 %3670
    %3672 = vrot.lane.b32.xlu0 %v3658, 64
    %v3673 = vpop.permute.xlu0 %3672
    %v3678 = vadd.f32 %v1667, %v3667
    %v3679 = vadd.f32 %v1669, %v3669
    %v3680 = vadd.f32 %v1671, %v3671
    %v3681 = vadd.f32 %v1673, %v3673
    %v3682 = vxor.u32 %v3678, 2147483648
    %v3683 = vxor.u32 %v3679, 2147483648
    %v3684 = vxor.u32 %v3680, 2147483648
    %v3685 = vxor.u32 %v3681, 2147483648
    %v3686 = vmul.f32 %v3682, 1.442695
    %v3687 = vpow.pop %v3686
    %v3688 = vmul.f32 %v3683, 1.442695
    %v3689 = vpow.pop %v3688
    %v3690 = vmul.f32 %v3684, 1.442695
    %v3691 = vpow.pop %v3690
    %v3692 = vmul.f32 %v3685, 1.442695
    %v3693 = vpow.pop %v3692
    %v3694 = vadd.f32 %v3687, 1.0
    %v3695 = vadd.f32 %v3689, 1.0
    %v3696 = vadd.f32 %v3691, 1.0
    %v3697 = vadd.f32 %v3693, 1.0
    %v3698 = vrcp.pop %v3694
    %v3699 = vmul.f32 1.0, %v3698
    %v3700 = vrcp.pop %v3695
    %v3701 = vmul.f32 1.0, %v3700
    %v3702 = vrcp.pop %v3696
    %v3703 = vmul.f32 1.0, %v3702
    %v3704 = vrcp.pop %v3697
    %v3705 = vmul.f32 1.0, %v3704
    %v3710 = vmul.f32 %v3699, %v3663
    %v3711 = vmul.f32 %v3701, %v3664
    %v3712 = vmul.f32 %v3703, %v3665
    %v3713 = vmul.f32 %v3705, %v3658
    %3718 = vrot.lane.b32.xlu0 %v3710, 64
    %v3719 = vpop.permute.xlu0 %3718
    %3720 = vrot.lane.b32.xlu0 %v3711, 64
    %v3721 = vpop.permute.xlu0 %3720
    %3722 = vrot.lane.b32.xlu0 %v3712, 64
    %v3723 = vpop.permute.xlu0 %3722
    %3724 = vrot.lane.b32.xlu0 %v3713, 64
    %v3725 = vpop.permute.xlu0 %3724
    %v3730 = vadd.f32 %v1668, %v3719
    %v3731 = vadd.f32 %v1670, %v3721
    %v3732 = vadd.f32 %v1672, %v3723
    %v3733 = vadd.f32 %v1674, %v3725
    %v3734 = vtanh.pop %v3730
    %v3735 = vtanh.pop %v3731
    %v3736 = vtanh.pop %v3732
    %v3737 = vtanh.pop %v3733
    %v3738 = vsub.f32 1.0, %v3699
    %v3739 = vsub.f32 1.0, %v3701
    %v3740 = vsub.f32 1.0, %v3703
    %v3741 = vsub.f32 1.0, %v3705
    %3746 = vrot.lane.b32.xlu0 %v3734, 96
    %v3747 = vpop.permute.xlu0 %3746
    %3748 = vrot.lane.b32.xlu0 %v3735, 96
    %v3749 = vpop.permute.xlu0 %3748
    %3750 = vrot.lane.b32.xlu0 %v3736, 96
    %v3751 = vpop.permute.xlu0 %3750
    %3752 = vrot.lane.b32.xlu0 %v3737, 96
    %v3753 = vpop.permute.xlu0 %3752
    %v3758 = vmul.f32 %v3738, %v3747
    %v3759 = vmul.f32 %v3739, %v3749
    %v3760 = vmul.f32 %v3740, %v3751
    %v3761 = vmul.f32 %v3741, %v3753
    %v3762 = vrot.slane %v3586, 7
    %v3763 = vrot.slane %v3586, 1
    %3764 = vrot.lane.b32.xlu0 %v3762, 96
    %v3765 = vpop.permute.xlu0 %3764
    %3766 = vrot.lane.b32.xlu0 %v3586, 96
    %v3767 = vpop.permute.xlu0 %3766
    %3768 = vrot.lane.b32.xlu0 %v3763, 96
    %v3769 = vpop.permute.xlu0 %3768
    %3770 = vrot.lane.b32.xlu0 %v3588, 96
    %v3771 = vpop.permute.xlu0 %3770
    %v3776 = vmul.f32 %v3699, %v3765
    %v3777 = vmul.f32 %v3701, %v3767
    %v3778 = vmul.f32 %v3703, %v3769
    %v3779 = vmul.f32 %v3705, %v3771
    %v3780 = vadd.f32 %v3758, %v3776
    %v3781 = vadd.f32 %v3759, %v3777
    %v3782 = vadd.f32 %v3760, %v3778
    %v3783 = vadd.f32 %v3761, %v3779
    %v3784 = vrot.slane %v3658, 4
    %3785 = vrot.lane.b32.xlu0 %v3784, 64
    %v3786 = vpop.permute.xlu0 %3785
    %v3788 = vadd.f32 %v1668, %v3786
    %v3789 = vadd.f32 %v1670, %v3667
    %v3790 = vadd.f32 %v1672, %v3669
    %v3791 = vadd.f32 %v1674, %v3671
    %v3792 = vxor.u32 %v3788, 2147483648
    %v3793 = vxor.u32 %v3789, 2147483648
    %v3794 = vxor.u32 %v3790, 2147483648
    %v3795 = vxor.u32 %v3791, 2147483648
    %v3796 = vmul.f32 %v3792, 1.442695
    %v3797 = vpow.pop %v3796
    %v3798 = vmul.f32 %v3793, 1.442695
    %v3799 = vpow.pop %v3798
    %v3800 = vmul.f32 %v3794, 1.442695
    %v3801 = vpow.pop %v3800
    %v3802 = vmul.f32 %v3795, 1.442695
    %v3803 = vpow.pop %v3802
    %v3804 = vadd.f32 %v3797, 1.0
    %v3805 = vadd.f32 %v3799, 1.0
    %v3806 = vadd.f32 %v3801, 1.0
    %v3807 = vadd.f32 %v3803, 1.0
    %v3808 = vrcp.pop %v3804
    %v3809 = vmul.f32 1.0, %v3808
    %v3810 = vrcp.pop %v3805
    %v3811 = vmul.f32 1.0, %v3810
    %v3812 = vrcp.pop %v3806
    %v3813 = vmul.f32 1.0, %v3812
    %v3814 = vrcp.pop %v3807
    %v3815 = vmul.f32 1.0, %v3814
    %v3817 = vrot.slane %v3660, 4
    %v3818 = vrot.slane %v3660, 5
    %v3819 = vrot.slane %v3660, 6
    %v3820 = vrot.slane %v3660, 7
    %3821 = vrot.lane.b32.xlu0 %v3817, 64
    %v3822 = vpop.permute.xlu0 %3821
    %3823 = vrot.lane.b32.xlu0 %v3818, 64
    %v3824 = vpop.permute.xlu0 %3823
    %3825 = vrot.lane.b32.xlu0 %v3819, 64
    %v3826 = vpop.permute.xlu0 %3825
    %3827 = vrot.lane.b32.xlu0 %v3820, 64
    %v3828 = vpop.permute.xlu0 %3827
    %v3833 = vadd.f32 %v1668, %v3822
    %v3834 = vadd.f32 %v1670, %v3824
    %v3835 = vadd.f32 %v1672, %v3826
    %v3836 = vadd.f32 %v1674, %v3828
    %v3837 = vxor.u32 %v3833, 2147483648
    %v3838 = vxor.u32 %v3834, 2147483648
    %v3839 = vxor.u32 %v3835, 2147483648
    %v3840 = vxor.u32 %v3836, 2147483648
    %v3841 = vmul.f32 %v3837, 1.442695
    %v3842 = vpow.pop %v3841
    %v3843 = vmul.f32 %v3838, 1.442695
    %v3844 = vpow.pop %v3843
    %v3845 = vmul.f32 %v3839, 1.442695
    %v3846 = vpow.pop %v3845
    %v3847 = vmul.f32 %v3840, 1.442695
    %v3848 = vpow.pop %v3847
    %v3849 = vadd.f32 %v3842, 1.0
    %v3850 = vadd.f32 %v3844, 1.0
    %v3851 = vadd.f32 %v3846, 1.0
    %v3852 = vadd.f32 %v3848, 1.0
    %v3853 = vrcp.pop %v3849
    %v3854 = vmul.f32 1.0, %v3853
    %v3855 = vrcp.pop %v3850
    %v3856 = vmul.f32 1.0, %v3855
    %v3857 = vrcp.pop %v3851
    %v3858 = vmul.f32 1.0, %v3857
    %v3859 = vrcp.pop %v3852
    %v3860 = vmul.f32 1.0, %v3859
    %v3865 = vmul.f32 %v3809, %v3817
    %v3866 = vmul.f32 %v3811, %v3818
    %v3867 = vmul.f32 %v3813, %v3819
    %v3868 = vmul.f32 %v3815, %v3820
    %3873 = vrot.lane.b32.xlu0 %v3865, 64
    %v3874 = vpop.permute.xlu0 %3873
    %3875 = vrot.lane.b32.xlu0 %v3866, 64
    %v3876 = vpop.permute.xlu0 %3875
    %3877 = vrot.lane.b32.xlu0 %v3867, 64
    %v3878 = vpop.permute.xlu0 %3877
    %3879 = vrot.lane.b32.xlu0 %v3868, 64
    %v3880 = vpop.permute.xlu0 %3879
    %v3885 = vadd.f32 %v1668, %v3874
    %v3886 = vadd.f32 %v1670, %v3876
    %v3887 = vadd.f32 %v1672, %v3878
    %v3888 = vadd.f32 %v1674, %v3880
    %v3889 = vtanh.pop %v3885
    %v3890 = vtanh.pop %v3886
    %v3891 = vtanh.pop %v3887
    %v3892 = vtanh.pop %v3888
    %v3893 = vsub.f32 1.0, %v3854
    %v3894 = vsub.f32 1.0, %v3856
    %v3895 = vsub.f32 1.0, %v3858
    %v3896 = vsub.f32 1.0, %v3860
    %3901 = vrot.lane.b32.xlu0 %v3889, 96
    %v3902 = vpop.permute.xlu0 %3901
    %3903 = vrot.lane.b32.xlu0 %v3890, 96
    %v3904 = vpop.permute.xlu0 %3903
    %3905 = vrot.lane.b32.xlu0 %v3891, 96
    %v3906 = vpop.permute.xlu0 %3905
    %3907 = vrot.lane.b32.xlu0 %v3892, 96
    %v3908 = vpop.permute.xlu0 %3907
    %v3913 = vmul.f32 %v3893, %v3902
    %v3914 = vmul.f32 %v3894, %v3904
    %v3915 = vmul.f32 %v3895, %v3906
    %v3916 = vmul.f32 %v3896, %v3908
    %v3917 = vrot.slane %v3586, 6
    %3918 = vrot.lane.b32.xlu0 %v3917, 32
    %v3919 = vpop.permute.xlu0 %3918
    %3920 = vrot.lane.b32.xlu0 %v3762, 32
    %v3921 = vpop.permute.xlu0 %3920
    %3922 = vrot.lane.b32.xlu0 %v3586, 32
    %v3923 = vpop.permute.xlu0 %3922
    %3924 = vrot.lane.b32.xlu0 %v3763, 32
    %v3925 = vpop.permute.xlu0 %3924
    %v3930 = vmul.f32 %v3854, %v3919
    %v3931 = vmul.f32 %v3856, %v3921
    %v3932 = vmul.f32 %v3858, %v3923
    %v3933 = vmul.f32 %v3860, %v3925
    %v3934 = vadd.f32 %v3913, %v3930
    %v3935 = vadd.f32 %v3914, %v3931
    %v3936 = vadd.f32 %v3915, %v3932
    %v3937 = vadd.f32 %v3916, %v3933
    %v3942 = vrot.slane %v3781, 7
    %v3943 = vsel %vm3178, %v3942, %v3780
    %v3944 = vrot.slane %v3782, 6
    %v3945 = vsel %vm3568, %v3944, %v3943
    %v3946 = vrot.slane %v3783, 5
    %vm3947 = vcmask 1046534
    %v3948 = vsel %vm3947, %v3946, %v3945
    %3949 = vrot.lane.b32.xlu0 %v3948, 32
    %v3950 = vpop.permute.xlu0 %3949
    %v3956 = vrot.slane %v3934, 1
    %v3957 = vsel %vm3178, %v3935, %v3956
    %v3958 = vrot.slane %v3936, 7
    %v3959 = vsel %vm3568, %v3958, %v3957
    %v3960 = vrot.slane %v3937, 6
    %v3961 = vsel %vm3947, %v3960, %v3959
    %3962 = vrot.lane.b32.xlu0 %v3961, 96
    %v3963 = vpop.permute.xlu0 %3962
    %v3965 = vsel %vm2806, %v3950, %v3963
    %v3967 = vrot.slane %v3965, 3
    %v3968 = vsel %vm1663, %v3967, 0
    %3970 = vmatprep.subr.mxu0 %v2430
    %3971 = vmatpush1.msra.mxu0 %v2429
    %3972 = vmatprep.subr.mxu0 %v2432
    %3973 = vmatpush1.msra.mxu0 %v2431
    %3974 = vmatprep.subr.mxu0 %v2434
    %3975 = vmatpush1.msra.mxu0 %v2433
    %3976 = vmatprep.subr.mxu0 %v2436
    %3977 = vmatpush1.msra.mxu0 %v2435
    %3978 = vmatprep.subr.mxu0 %v2438
    %3979 = vmatpush1.msra.mxu0 %v2437
    %3980 = vmatprep.subr.mxu0 %v2440
    %3981 = vmatpush1.msra.mxu0 %v2439
    %3982 = vmatprep.subr.mxu0 %v2442
    %3983 = vmatpush1.msra.mxu0 %v2441
    %3984 = vmatprep.subr.mxu0 %v2444
    %3985 = vmatpush1.msra.mxu0 %v2443
    %3986 = vmatprep.subr.mxu0 0.0
    %3987 = vmatpush1.msra.mxu0 0.0
    %3988 = vmatprep.subr.mxu0 0.0
    %3989 = vmatpush1.msra.mxu0 0.0
    %3990 = vmatprep.subr.mxu0 0.0
    %3991 = vmatpush1.msra.mxu0 0.0
    %3992 = vmatprep.subr.mxu0 0.0
    %3993 = vmatpush1.msra.mxu0 0.0
    %3994 = vmatprep.subr.mxu0 0.0
    %3995 = vmatpush1.msra.mxu0 0.0
    %3996 = vmatprep.subr.mxu0 0.0
    %3997 = vmatpush1.msra.mxu0 0.0
    %3998 = vmatprep.subr.mxu0 0.0
    %3999 = vmatpush1.msra.mxu0 0.0
    %4000 = vmatprep.subr.mxu0 0.0
    %4001 = vmatpush1.msra.mxu0 0.0
    %4002 = vmatprep.subr.mxu0 0.0
    %4003 = vmatpush1.msra.mxu0 0.0
    %4004 = vmatprep.subr.mxu0 0.0
    %4005 = vmatpush1.msra.mxu0 0.0
    %4006 = vmatprep.subr.mxu0 0.0
    %4007 = vmatpush1.msra.mxu0 0.0
    %4008 = vmatprep.subr.mxu0 0.0
    %4009 = vmatpush1.msra.mxu0 0.0
    %4010 = vmatprep.subr.mxu0 0.0
    %4011 = vmatpush1.msra.mxu0 0.0
    %4012 = vmatprep.subr.mxu0 0.0
    %4013 = vmatpush1.msra.mxu0 0.0
    %4014 = vmatprep.subr.mxu0 0.0
    %4015 = vmatpush1.msra.mxu0 0.0
    %4016 = vmatprep.subr.mxu0 0.0
    %4017 = vmatpush1.msra.mxu0 0.0
    %4018 = vmatprep.subr.mxu0 0.0
    %4019 = vmatpush1.msra.mxu0 0.0
    %4020 = vmatprep.subr.mxu0 0.0
    %4021 = vmatpush1.msra.mxu0 0.0
    %4022 = vmatprep.subr.mxu0 0.0
    %4023 = vmatpush1.msra.mxu0 0.0
    %4024 = vmatprep.subr.mxu0 0.0
    %4025 = vmatpush1.msra.mxu0 0.0
    %4026 = vmatprep.subr.mxu0 0.0
    %4027 = vmatpush1.msra.mxu0 0.0
    %4028 = vmatprep.subr.mxu0 0.0
    %4029 = vmatpush1.msra.mxu0 0.0
    %4030 = vmatprep.subr.mxu0 0.0
    %4031 = vmatpush1.msra.mxu0 0.0
    %4032 = vmatprep.subr.mxu0 0.0
    %4033 = vmatpush1.msra.mxu0 0.0
    %4034 = vmatprep.mubr.f32.mxu0 0.0
    %4035 = vmatmul.mubr.f32.gmra.mrb[0].mxu0 %v3968
    %v4036 = vpop.f32.mrb[0].mxu0
    %v4037 = vadd.f32 %v2448, %v4036
    %v4038 = vpop.f32.mrb[0].mxu0
    %v4039 = vadd.f32 %v2452, %v4038
    %4040 = vdwg.mxu0
    %v4042 = vrot.slane %v4037, 4
    %v4043 = vrot.slane %v4037, 5
    %v4044 = vrot.slane %v4037, 6
    %v4045 = vrot.slane %v4037, 7
    %4046 = vrot.lane.b32.xlu0 %v4042, 64
    %v4047 = vpop.permute.xlu0 %4046
    %4048 = vrot.lane.b32.xlu0 %v4043, 64
    %v4049 = vpop.permute.xlu0 %4048
    %4050 = vrot.lane.b32.xlu0 %v4044, 64
    %v4051 = vpop.permute.xlu0 %4050
    %4052 = vrot.lane.b32.xlu0 %v4045, 64
    %v4053 = vpop.permute.xlu0 %4052
    %v4058 = vadd.f32 %v1667, %v4047
    %v4059 = vadd.f32 %v1669, %v4049
    %v4060 = vadd.f32 %v1671, %v4051
    %v4061 = vadd.f32 %v1673, %v4053
    %v4062 = vxor.u32 %v4058, 2147483648
    %v4063 = vxor.u32 %v4059, 2147483648
    %v4064 = vxor.u32 %v4060, 2147483648
    %v4065 = vxor.u32 %v4061, 2147483648
    %v4066 = vmul.f32 %v4062, 1.442695
    %v4067 = vpow.pop %v4066
    %v4068 = vmul.f32 %v4063, 1.442695
    %v4069 = vpow.pop %v4068
    %v4070 = vmul.f32 %v4064, 1.442695
    %v4071 = vpow.pop %v4070
    %v4072 = vmul.f32 %v4065, 1.442695
    %v4073 = vpow.pop %v4072
    %v4074 = vadd.f32 %v4067, 1.0
    %v4075 = vadd.f32 %v4069, 1.0
    %v4076 = vadd.f32 %v4071, 1.0
    %v4077 = vadd.f32 %v4073, 1.0
    %v4078 = vrcp.pop %v4074
    %v4079 = vmul.f32 1.0, %v4078
    %v4080 = vrcp.pop %v4075
    %v4081 = vmul.f32 1.0, %v4080
    %v4082 = vrcp.pop %v4076
    %v4083 = vmul.f32 1.0, %v4082
    %v4084 = vrcp.pop %v4077
    %v4085 = vmul.f32 1.0, %v4084
    %v4090 = vmul.f32 %v4079, %v4042
    %v4091 = vmul.f32 %v4081, %v4043
    %v4092 = vmul.f32 %v4083, %v4044
    %v4093 = vmul.f32 %v4085, %v4045
    %4098 = vrot.lane.b32.xlu0 %v4090, 64
    %v4099 = vpop.permute.xlu0 %4098
    %4100 = vrot.lane.b32.xlu0 %v4091, 64
    %v4101 = vpop.permute.xlu0 %4100
    %4102 = vrot.lane.b32.xlu0 %v4092, 64
    %v4103 = vpop.permute.xlu0 %4102
    %4104 = vrot.lane.b32.xlu0 %v4093, 64
    %v4105 = vpop.permute.xlu0 %4104
    %v4110 = vadd.f32 %v1668, %v4099
    %v4111 = vadd.f32 %v1670, %v4101
    %v4112 = vadd.f32 %v1672, %v4103
    %v4113 = vadd.f32 %v1674, %v4105
    %v4114 = vtanh.pop %v4110
    %v4115 = vtanh.pop %v4111
    %v4116 = vtanh.pop %v4112
    %v4117 = vtanh.pop %v4113
    %v4118 = vsub.f32 1.0, %v4079
    %v4119 = vsub.f32 1.0, %v4081
    %v4120 = vsub.f32 1.0, %v4083
    %v4121 = vsub.f32 1.0, %v4085
    %4126 = vrot.lane.b32.xlu0 %v4114, 96
    %v4127 = vpop.permute.xlu0 %4126
    %4128 = vrot.lane.b32.xlu0 %v4115, 96
    %v4129 = vpop.permute.xlu0 %4128
    %4130 = vrot.lane.b32.xlu0 %v4116, 96
    %v4131 = vpop.permute.xlu0 %4130
    %4132 = vrot.lane.b32.xlu0 %v4117, 96
    %v4133 = vpop.permute.xlu0 %4132
    %v4138 = vmul.f32 %v4118, %v4127
    %v4139 = vmul.f32 %v4119, %v4129
    %v4140 = vmul.f32 %v4120, %v4131
    %v4141 = vmul.f32 %v4121, %v4133
    %v4142 = vrot.slane %v3965, 7
    %v4143 = vrot.slane %v3965, 1
    %v4144 = vrot.slane %v3965, 2
    %4145 = vrot.lane.b32.xlu0 %v4142, 96
    %v4146 = vpop.permute.xlu0 %4145
    %4147 = vrot.lane.b32.xlu0 %v3965, 96
    %v4148 = vpop.permute.xlu0 %4147
    %4149 = vrot.lane.b32.xlu0 %v4143, 96
    %v4150 = vpop.permute.xlu0 %4149
    %4151 = vrot.lane.b32.xlu0 %v4144, 96
    %v4152 = vpop.permute.xlu0 %4151
    %v4157 = vmul.f32 %v4079, %v4146
    %v4158 = vmul.f32 %v4081, %v4148
    %v4159 = vmul.f32 %v4083, %v4150
    %v4160 = vmul.f32 %v4085, %v4152
    %v4161 = vadd.f32 %v4138, %v4157
    %v4162 = vadd.f32 %v4139, %v4158
    %v4163 = vadd.f32 %v4140, %v4159
    %v4164 = vadd.f32 %v4141, %v4160
    %4165 = vrot.lane.b32.xlu0 %v4037, 64
    %v4166 = vpop.permute.xlu0 %4165
    %v4168 = vadd.f32 %v1668, %v4049
    %v4169 = vadd.f32 %v1670, %v4051
    %v4170 = vadd.f32 %v1672, %v4053
    %v4171 = vadd.f32 %v1674, %v4166
    %v4172 = vxor.u32 %v4168, 2147483648
    %v4173 = vxor.u32 %v4169, 2147483648
    %v4174 = vxor.u32 %v4170, 2147483648
    %v4175 = vxor.u32 %v4171, 2147483648
    %v4176 = vmul.f32 %v4172, 1.442695
    %v4177 = vpow.pop %v4176
    %v4178 = vmul.f32 %v4173, 1.442695
    %v4179 = vpow.pop %v4178
    %v4180 = vmul.f32 %v4174, 1.442695
    %v4181 = vpow.pop %v4180
    %v4182 = vmul.f32 %v4175, 1.442695
    %v4183 = vpow.pop %v4182
    %v4184 = vadd.f32 %v4177, 1.0
    %v4185 = vadd.f32 %v4179, 1.0
    %v4186 = vadd.f32 %v4181, 1.0
    %v4187 = vadd.f32 %v4183, 1.0
    %v4188 = vrcp.pop %v4184
    %v4189 = vmul.f32 1.0, %v4188
    %v4190 = vrcp.pop %v4185
    %v4191 = vmul.f32 1.0, %v4190
    %v4192 = vrcp.pop %v4186
    %v4193 = vmul.f32 1.0, %v4192
    %v4194 = vrcp.pop %v4187
    %v4195 = vmul.f32 1.0, %v4194
    %v4197 = vrot.slane %v4039, 5
    %v4198 = vrot.slane %v4039, 6
    %v4199 = vrot.slane %v4039, 7
    %4200 = vrot.lane.b32.xlu0 %v4197, 64
    %v4201 = vpop.permute.xlu0 %4200
    %4202 = vrot.lane.b32.xlu0 %v4198, 64
    %v4203 = vpop.permute.xlu0 %4202
    %4204 = vrot.lane.b32.xlu0 %v4199, 64
    %v4205 = vpop.permute.xlu0 %4204
    %4206 = vrot.lane.b32.xlu0 %v4039, 64
    %v4207 = vpop.permute.xlu0 %4206
    %v4212 = vadd.f32 %v1668, %v4201
    %v4213 = vadd.f32 %v1670, %v4203
    %v4214 = vadd.f32 %v1672, %v4205
    %v4215 = vadd.f32 %v1674, %v4207
    %v4216 = vxor.u32 %v4212, 2147483648
    %v4217 = vxor.u32 %v4213, 2147483648
    %v4218 = vxor.u32 %v4214, 2147483648
    %v4219 = vxor.u32 %v4215, 2147483648
    %v4220 = vmul.f32 %v4216, 1.442695
    %v4221 = vpow.pop %v4220
    %v4222 = vmul.f32 %v4217, 1.442695
    %v4223 = vpow.pop %v4222
    %v4224 = vmul.f32 %v4218, 1.442695
    %v4225 = vpow.pop %v4224
    %v4226 = vmul.f32 %v4219, 1.442695
    %v4227 = vpow.pop %v4226
    %v4228 = vadd.f32 %v4221, 1.0
    %v4229 = vadd.f32 %v4223, 1.0
    %v4230 = vadd.f32 %v4225, 1.0
    %v4231 = vadd.f32 %v4227, 1.0
    %v4232 = vrcp.pop %v4228
    %v4233 = vmul.f32 1.0, %v4232
    %v4234 = vrcp.pop %v4229
    %v4235 = vmul.f32 1.0, %v4234
    %v4236 = vrcp.pop %v4230
    %v4237 = vmul.f32 1.0, %v4236
    %v4238 = vrcp.pop %v4231
    %v4239 = vmul.f32 1.0, %v4238
    %v4244 = vmul.f32 %v4189, %v4197
    %v4245 = vmul.f32 %v4191, %v4198
    %v4246 = vmul.f32 %v4193, %v4199
    %v4247 = vmul.f32 %v4195, %v4039
    %4252 = vrot.lane.b32.xlu0 %v4244, 64
    %v4253 = vpop.permute.xlu0 %4252
    %4254 = vrot.lane.b32.xlu0 %v4245, 64
    %v4255 = vpop.permute.xlu0 %4254
    %4256 = vrot.lane.b32.xlu0 %v4246, 64
    %v4257 = vpop.permute.xlu0 %4256
    %4258 = vrot.lane.b32.xlu0 %v4247, 64
    %v4259 = vpop.permute.xlu0 %4258
    %v4264 = vadd.f32 %v1668, %v4253
    %v4265 = vadd.f32 %v1670, %v4255
    %v4266 = vadd.f32 %v1672, %v4257
    %v4267 = vadd.f32 %v1674, %v4259
    %v4268 = vtanh.pop %v4264
    %v4269 = vtanh.pop %v4265
    %v4270 = vtanh.pop %v4266
    %v4271 = vtanh.pop %v4267
    %v4272 = vsub.f32 1.0, %v4233
    %v4273 = vsub.f32 1.0, %v4235
    %v4274 = vsub.f32 1.0, %v4237
    %v4275 = vsub.f32 1.0, %v4239
    %4280 = vrot.lane.b32.xlu0 %v4268, 96
    %v4281 = vpop.permute.xlu0 %4280
    %4282 = vrot.lane.b32.xlu0 %v4269, 96
    %v4283 = vpop.permute.xlu0 %4282
    %4284 = vrot.lane.b32.xlu0 %v4270, 96
    %v4285 = vpop.permute.xlu0 %4284
    %4286 = vrot.lane.b32.xlu0 %v4271, 96
    %v4287 = vpop.permute.xlu0 %4286
    %v4292 = vmul.f32 %v4272, %v4281
    %v4293 = vmul.f32 %v4273, %v4283
    %v4294 = vmul.f32 %v4274, %v4285
    %v4295 = vmul.f32 %v4275, %v4287
    %4296 = vrot.lane.b32.xlu0 %v3965, 32
    %v4297 = vpop.permute.xlu0 %4296
    %4298 = vrot.lane.b32.xlu0 %v4143, 32
    %v4299 = vpop.permute.xlu0 %4298
    %4300 = vrot.lane.b32.xlu0 %v4144, 32
    %v4301 = vpop.permute.xlu0 %4300
    %4302 = vrot.lane.b32.xlu0 %v3967, 32
    %v4303 = vpop.permute.xlu0 %4302
    %v4308 = vmul.f32 %v4233, %v4297
    %v4309 = vmul.f32 %v4235, %v4299
    %v4310 = vmul.f32 %v4237, %v4301
    %v4311 = vmul.f32 %v4239, %v4303
    %v4312 = vadd.f32 %v4292, %v4308
    %v4313 = vadd.f32 %v4293, %v4309
    %v4314 = vadd.f32 %v4294, %v4310
    %v4315 = vadd.f32 %v4295, %v4311
    %v4320 = vrot.slane %v4162, 7
    %v4321 = vsel %vm3568, %v4320, %v4161
    %v4322 = vrot.slane %v4163, 6
    %v4323 = vsel %vm3947, %v4322, %v4321
    %v4324 = vrot.slane %v4164, 5
    %vm4325 = vcmask 1047559
    %v4326 = vsel %vm4325, %v4324, %v4323
    %4327 = vrot.lane.b32.xlu0 %v4326, 32
    %v4328 = vpop.permute.xlu0 %4327
    %v4334 = vrot.slane %v4312, 7
    %v4335 = vrot.slane %v4313, 6
    %v4336 = vsel %vm3568, %v4335, %v4334
    %v4337 = vrot.slane %v4314, 5
    %v4338 = vsel %vm3947, %v4337, %v4336
    %v4339 = vrot.slane %v4315, 4
    %v4340 = vsel %vm4325, %v4339, %v4338
    %4341 = vrot.lane.b32.xlu0 %v4340, 96
    %v4342 = vpop.permute.xlu0 %4341
    %v4344 = vsel %vm2806, %v4328, %v4342
    %v4346 = vrot.slane %v4344, 4
    %v4347 = vsel %vm1663, %v4346, 0
    %4349 = vmatprep.subr.mxu0 %v2430
    %4350 = vmatpush1.msra.mxu0 %v2429
    %4351 = vmatprep.subr.mxu0 %v2432
    %4352 = vmatpush1.msra.mxu0 %v2431
    %4353 = vmatprep.subr.mxu0 %v2434
    %4354 = vmatpush1.msra.mxu0 %v2433
    %4355 = vmatprep.subr.mxu0 %v2436
    %4356 = vmatpush1.msra.mxu0 %v2435
    %4357 = vmatprep.subr.mxu0 %v2438
    %4358 = vmatpush1.msra.mxu0 %v2437
    %4359 = vmatprep.subr.mxu0 %v2440
    %4360 = vmatpush1.msra.mxu0 %v2439
    %4361 = vmatprep.subr.mxu0 %v2442
    %4362 = vmatpush1.msra.mxu0 %v2441
    %4363 = vmatprep.subr.mxu0 %v2444
    %4364 = vmatpush1.msra.mxu0 %v2443
    %4365 = vmatprep.subr.mxu0 0.0
    %4366 = vmatpush1.msra.mxu0 0.0
    %4367 = vmatprep.subr.mxu0 0.0
    %4368 = vmatpush1.msra.mxu0 0.0
    %4369 = vmatprep.subr.mxu0 0.0
    %4370 = vmatpush1.msra.mxu0 0.0
    %4371 = vmatprep.subr.mxu0 0.0
    %4372 = vmatpush1.msra.mxu0 0.0
    %4373 = vmatprep.subr.mxu0 0.0
    %4374 = vmatpush1.msra.mxu0 0.0
    %4375 = vmatprep.subr.mxu0 0.0
    %4376 = vmatpush1.msra.mxu0 0.0
    %4377 = vmatprep.subr.mxu0 0.0
    %4378 = vmatpush1.msra.mxu0 0.0
    %4379 = vmatprep.subr.mxu0 0.0
    %4380 = vmatpush1.msra.mxu0 0.0
    %4381 = vmatprep.subr.mxu0 0.0
    %4382 = vmatpush1.msra.mxu0 0.0
    %4383 = vmatprep.subr.mxu0 0.0
    %4384 = vmatpush1.msra.mxu0 0.0
    %4385 = vmatprep.subr.mxu0 0.0
    %4386 = vmatpush1.msra.mxu0 0.0
    %4387 = vmatprep.subr.mxu0 0.0
    %4388 = vmatpush1.msra.mxu0 0.0
    %4389 = vmatprep.subr.mxu0 0.0
    %4390 = vmatpush1.msra.mxu0 0.0
    %4391 = vmatprep.subr.mxu0 0.0
    %4392 = vmatpush1.msra.mxu0 0.0
    %4393 = vmatprep.subr.mxu0 0.0
    %4394 = vmatpush1.msra.mxu0 0.0
    %4395 = vmatprep.subr.mxu0 0.0
    %4396 = vmatpush1.msra.mxu0 0.0
    %4397 = vmatprep.subr.mxu0 0.0
    %4398 = vmatpush1.msra.mxu0 0.0
    %4399 = vmatprep.subr.mxu0 0.0
    %4400 = vmatpush1.msra.mxu0 0.0
    %4401 = vmatprep.subr.mxu0 0.0
    %4402 = vmatpush1.msra.mxu0 0.0
    %4403 = vmatprep.subr.mxu0 0.0
    %4404 = vmatpush1.msra.mxu0 0.0
    %4405 = vmatprep.subr.mxu0 0.0
    %4406 = vmatpush1.msra.mxu0 0.0
    %4407 = vmatprep.subr.mxu0 0.0
    %4408 = vmatpush1.msra.mxu0 0.0
    %4409 = vmatprep.subr.mxu0 0.0
    %4410 = vmatpush1.msra.mxu0 0.0
    %4411 = vmatprep.subr.mxu0 0.0
    %4412 = vmatpush1.msra.mxu0 0.0
    %4413 = vmatprep.mubr.f32.mxu0 0.0
    %4414 = vmatmul.mubr.f32.gmra.mrb[0].mxu0 %v4347
    %v4415 = vpop.f32.mrb[0].mxu0
    %v4416 = vadd.f32 %v2448, %v4415
    %v4417 = vpop.f32.mrb[0].mxu0
    %v4418 = vadd.f32 %v2452, %v4417
    %4419 = vdwg.mxu0
    %v4421 = vrot.slane %v4416, 3
    %v4422 = vrot.slane %v4416, 4
    %v4423 = vrot.slane %v4416, 5
    %v4424 = vrot.slane %v4416, 6
    %4425 = vrot.lane.b32.xlu0 %v4421, 64
    %v4426 = vpop.permute.xlu0 %4425
    %4427 = vrot.lane.b32.xlu0 %v4422, 64
    %v4428 = vpop.permute.xlu0 %4427
    %4429 = vrot.lane.b32.xlu0 %v4423, 64
    %v4430 = vpop.permute.xlu0 %4429
    %4431 = vrot.lane.b32.xlu0 %v4424, 64
    %v4432 = vpop.permute.xlu0 %4431
    %v4437 = vadd.f32 %v1667, %v4426
    %v4438 = vadd.f32 %v1669, %v4428
    %v4439 = vadd.f32 %v1671, %v4430
    %v4440 = vadd.f32 %v1673, %v4432
    %v4441 = vxor.u32 %v4437, 2147483648
    %v4442 = vxor.u32 %v4438, 2147483648
    %v4443 = vxor.u32 %v4439, 2147483648
    %v4444 = vxor.u32 %v4440, 2147483648
    %v4445 = vmul.f32 %v4441, 1.442695
    %v4446 = vpow.pop %v4445
    %v4447 = vmul.f32 %v4442, 1.442695
    %v4448 = vpow.pop %v4447
    %v4449 = vmul.f32 %v4443, 1.442695
    %v4450 = vpow.pop %v4449
    %v4451 = vmul.f32 %v4444, 1.442695
    %v4452 = vpow.pop %v4451
    %v4453 = vadd.f32 %v4446, 1.0
    %v4454 = vadd.f32 %v4448, 1.0
    %v4455 = vadd.f32 %v4450, 1.0
    %v4456 = vadd.f32 %v4452, 1.0
    %v4457 = vrcp.pop %v4453
    %v4458 = vmul.f32 1.0, %v4457
    %v4459 = vrcp.pop %v4454
    %v4460 = vmul.f32 1.0, %v4459
    %v4461 = vrcp.pop %v4455
    %v4462 = vmul.f32 1.0, %v4461
    %v4463 = vrcp.pop %v4456
    %v4464 = vmul.f32 1.0, %v4463
    %v4469 = vmul.f32 %v4458, %v4421
    %v4470 = vmul.f32 %v4460, %v4422
    %v4471 = vmul.f32 %v4462, %v4423
    %v4472 = vmul.f32 %v4464, %v4424
    %4477 = vrot.lane.b32.xlu0 %v4469, 64
    %v4478 = vpop.permute.xlu0 %4477
    %4479 = vrot.lane.b32.xlu0 %v4470, 64
    %v4480 = vpop.permute.xlu0 %4479
    %4481 = vrot.lane.b32.xlu0 %v4471, 64
    %v4482 = vpop.permute.xlu0 %4481
    %4483 = vrot.lane.b32.xlu0 %v4472, 64
    %v4484 = vpop.permute.xlu0 %4483
    %v4489 = vadd.f32 %v1668, %v4478
    %v4490 = vadd.f32 %v1670, %v4480
    %v4491 = vadd.f32 %v1672, %v4482
    %v4492 = vadd.f32 %v1674, %v4484
    %v4493 = vtanh.pop %v4489
    %v4494 = vtanh.pop %v4490
    %v4495 = vtanh.pop %v4491
    %v4496 = vtanh.pop %v4492
    %v4497 = vsub.f32 1.0, %v4458
    %v4498 = vsub.f32 1.0, %v4460
    %v4499 = vsub.f32 1.0, %v4462
    %v4500 = vsub.f32 1.0, %v4464
    %4505 = vrot.lane.b32.xlu0 %v4493, 96
    %v4506 = vpop.permute.xlu0 %4505
    %4507 = vrot.lane.b32.xlu0 %v4494, 96
    %v4508 = vpop.permute.xlu0 %4507
    %4509 = vrot.lane.b32.xlu0 %v4495, 96
    %v4510 = vpop.permute.xlu0 %4509
    %4511 = vrot.lane.b32.xlu0 %v4496, 96
    %v4512 = vpop.permute.xlu0 %4511
    %v4517 = vmul.f32 %v4497, %v4506
    %v4518 = vmul.f32 %v4498, %v4508
    %v4519 = vmul.f32 %v4499, %v4510
    %v4520 = vmul.f32 %v4500, %v4512
    %v4521 = vrot.slane %v4344, 7
    %v4522 = vrot.slane %v4344, 1
    %v4523 = vrot.slane %v4344, 2
    %4524 = vrot.lane.b32.xlu0 %v4521, 96
    %v4525 = vpop.permute.xlu0 %4524
    %4526 = vrot.lane.b32.xlu0 %v4344, 96
    %v4527 = vpop.permute.xlu0 %4526
    %4528 = vrot.lane.b32.xlu0 %v4522, 96
    %v4529 = vpop.permute.xlu0 %4528
    %4530 = vrot.lane.b32.xlu0 %v4523, 96
    %v4531 = vpop.permute.xlu0 %4530
    %v4536 = vmul.f32 %v4458, %v4525
    %v4537 = vmul.f32 %v4460, %v4527
    %v4538 = vmul.f32 %v4462, %v4529
    %v4539 = vmul.f32 %v4464, %v4531
    %v4540 = vadd.f32 %v4517, %v4536
    %v4541 = vadd.f32 %v4518, %v4537
    %v4542 = vadd.f32 %v4519, %v4538
    %v4543 = vadd.f32 %v4520, %v4539
    %v4544 = vrot.slane %v4416, 7
    %v4545 = vrot.slane %v4416, 1
    %4546 = vrot.lane.b32.xlu0 %v4544, 64
    %v4547 = vpop.permute.xlu0 %4546
    %4548 = vrot.lane.b32.xlu0 %v4416, 64
    %v4549 = vpop.permute.xlu0 %4548
    %4550 = vrot.lane.b32.xlu0 %v4545, 64
    %v4551 = vpop.permute.xlu0 %4550
    %v4555 = vadd.f32 %v1668, %v4432
    %v4556 = vadd.f32 %v1670, %v4547
    %v4557 = vadd.f32 %v1672, %v4549
    %v4558 = vadd.f32 %v1674, %v4551
    %v4559 = vxor.u32 %v4555, 2147483648
    %v4560 = vxor.u32 %v4556, 2147483648
    %v4561 = vxor.u32 %v4557, 2147483648
    %v4562 = vxor.u32 %v4558, 2147483648
    %v4563 = vmul.f32 %v4559, 1.442695
    %v4564 = vpow.pop %v4563
    %v4565 = vmul.f32 %v4560, 1.442695
    %v4566 = vpow.pop %v4565
    %v4567 = vmul.f32 %v4561, 1.442695
    %v4568 = vpow.pop %v4567
    %v4569 = vmul.f32 %v4562, 1.442695
    %v4570 = vpow.pop %v4569
    %v4571 = vadd.f32 %v4564, 1.0
    %v4572 = vadd.f32 %v4566, 1.0
    %v4573 = vadd.f32 %v4568, 1.0
    %v4574 = vadd.f32 %v4570, 1.0
    %v4575 = vrcp.pop %v4571
    %v4576 = vmul.f32 1.0, %v4575
    %v4577 = vrcp.pop %v4572
    %v4578 = vmul.f32 1.0, %v4577
    %v4579 = vrcp.pop %v4573
    %v4580 = vmul.f32 1.0, %v4579
    %v4581 = vrcp.pop %v4574
    %v4582 = vmul.f32 1.0, %v4581
    %v4584 = vrot.slane %v4418, 6
    %v4585 = vrot.slane %v4418, 7
    %v4586 = vrot.slane %v4418, 1
    %4587 = vrot.lane.b32.xlu0 %v4584, 64
    %v4588 = vpop.permute.xlu0 %4587
    %4589 = vrot.lane.b32.xlu0 %v4585, 64
    %v4590 = vpop.permute.xlu0 %4589
    %4591 = vrot.lane.b32.xlu0 %v4418, 64
    %v4592 = vpop.permute.xlu0 %4591
    %4593 = vrot.lane.b32.xlu0 %v4586, 64
    %v4594 = vpop.permute.xlu0 %4593
    %v4599 = vadd.f32 %v1668, %v4588
    %v4600 = vadd.f32 %v1670, %v4590
    %v4601 = vadd.f32 %v1672, %v4592
    %v4602 = vadd.f32 %v1674, %v4594
    %v4603 = vxor.u32 %v4599, 2147483648
    %v4604 = vxor.u32 %v4600, 2147483648
    %v4605 = vxor.u32 %v4601, 2147483648
    %v4606 = vxor.u32 %v4602, 2147483648
    %v4607 = vmul.f32 %v4603, 1.442695
    %v4608 = vpow.pop %v4607
    %v4609 = vmul.f32 %v4604, 1.442695
    %v4610 = vpow.pop %v4609
    %v4611 = vmul.f32 %v4605, 1.442695
    %v4612 = vpow.pop %v4611
    %v4613 = vmul.f32 %v4606, 1.442695
    %v4614 = vpow.pop %v4613
    %v4615 = vadd.f32 %v4608, 1.0
    %v4616 = vadd.f32 %v4610, 1.0
    %v4617 = vadd.f32 %v4612, 1.0
    %v4618 = vadd.f32 %v4614, 1.0
    %v4619 = vrcp.pop %v4615
    %v4620 = vmul.f32 1.0, %v4619
    %v4621 = vrcp.pop %v4616
    %v4622 = vmul.f32 1.0, %v4621
    %v4623 = vrcp.pop %v4617
    %v4624 = vmul.f32 1.0, %v4623
    %v4625 = vrcp.pop %v4618
    %v4626 = vmul.f32 1.0, %v4625
    %v4631 = vmul.f32 %v4576, %v4584
    %v4632 = vmul.f32 %v4578, %v4585
    %v4633 = vmul.f32 %v4580, %v4418
    %v4634 = vmul.f32 %v4582, %v4586
    %4639 = vrot.lane.b32.xlu0 %v4631, 64
    %v4640 = vpop.permute.xlu0 %4639
    %4641 = vrot.lane.b32.xlu0 %v4632, 64
    %v4642 = vpop.permute.xlu0 %4641
    %4643 = vrot.lane.b32.xlu0 %v4633, 64
    %v4644 = vpop.permute.xlu0 %4643
    %4645 = vrot.lane.b32.xlu0 %v4634, 64
    %v4646 = vpop.permute.xlu0 %4645
    %v4651 = vadd.f32 %v1668, %v4640
    %v4652 = vadd.f32 %v1670, %v4642
    %v4653 = vadd.f32 %v1672, %v4644
    %v4654 = vadd.f32 %v1674, %v4646
    %v4655 = vtanh.pop %v4651
    %v4656 = vtanh.pop %v4652
    %v4657 = vtanh.pop %v4653
    %v4658 = vtanh.pop %v4654
    %v4659 = vsub.f32 1.0, %v4620
    %v4660 = vsub.f32 1.0, %v4622
    %v4661 = vsub.f32 1.0, %v4624
    %v4662 = vsub.f32 1.0, %v4626
    %4667 = vrot.lane.b32.xlu0 %v4655, 96
    %v4668 = vpop.permute.xlu0 %4667
    %4669 = vrot.lane.b32.xlu0 %v4656, 96
    %v4670 = vpop.permute.xlu0 %4669
    %4671 = vrot.lane.b32.xlu0 %v4657, 96
    %v4672 = vpop.permute.xlu0 %4671
    %4673 = vrot.lane.b32.xlu0 %v4658, 96
    %v4674 = vpop.permute.xlu0 %4673
    %v4679 = vmul.f32 %v4659, %v4668
    %v4680 = vmul.f32 %v4660, %v4670
    %v4681 = vmul.f32 %v4661, %v4672
    %v4682 = vmul.f32 %v4662, %v4674
    %v4683 = vrot.slane %v4344, 3
    %v4684 = vrot.slane %v4344, 5
    %4685 = vrot.lane.b32.xlu0 %v4523, 32
    %v4686 = vpop.permute.xlu0 %4685
    %4687 = vrot.lane.b32.xlu0 %v4683, 32
    %v4688 = vpop.permute.xlu0 %4687
    %4689 = vrot.lane.b32.xlu0 %v4346, 32
    %v4690 = vpop.permute.xlu0 %4689
    %4691 = vrot.lane.b32.xlu0 %v4684, 32
    %v4692 = vpop.permute.xlu0 %4691
    %v4697 = vmul.f32 %v4620, %v4686
    %v4698 = vmul.f32 %v4622, %v4688
    %v4699 = vmul.f32 %v4624, %v4690
    %v4700 = vmul.f32 %v4626, %v4692
    %v4701 = vadd.f32 %v4679, %v4697
    %v4702 = vadd.f32 %v4680, %v4698
    %v4703 = vadd.f32 %v4681, %v4699
    %v4704 = vadd.f32 %v4682, %v4700
    %v4709 = vrot.slane %v4541, 7
    %v4710 = vsel %vm3947, %v4709, %v4540
    %v4711 = vrot.slane %v4542, 6
    %v4712 = vsel %vm4325, %v4711, %v4710
    %v4713 = vrot.slane %v4543, 5
    %4714 = vrot.lane.b32.xlu0 %v4712, 32
    %v4715 = vpop.permute.xlu0 %4714
    %4716 = vrot.lane.b32.xlu0 %v4713, 32
    %v4717 = vpop.permute.xlu0 %4716
    %v4724 = vrot.slane %v4701, 5
    %v4725 = vrot.slane %v4702, 4
    %v4726 = vsel %vm3947, %v4725, %v4724
    %v4727 = vrot.slane %v4703, 3
    %v4728 = vsel %vm4325, %v4727, %v4726
    %v4729 = vrot.slane %v4704, 2
    %4730 = vrot.lane.b32.xlu0 %v4728, 96
    %v4731 = vpop.permute.xlu0 %4730
    %4732 = vrot.lane.b32.xlu0 %v4729, 96
    %v4733 = vpop.permute.xlu0 %4732
    %v4736 = vsel %vm2806, %v4715, %v4731
    %v4737 = vsel %vm2806, %v4717, %v4733
    %vm4740 = vcmask 1042432
    %v4741 = vrot.slane %v4736, 5
    %v4742 = vrot.slane %v4737, 5
    %v4743 = vsel %vm4740, %v4741, %v4742
    %v4744 = vsel %vm1663, %v4743, 0
    %4746 = vmatprep.subr.mxu0 %v2430
    %4747 = vmatpush1.msra.mxu0 %v2429
    %4748 = vmatprep.subr.mxu0 %v2432
    %4749 = vmatpush1.msra.mxu0 %v2431
    %4750 = vmatprep.subr.mxu0 %v2434
    %4751 = vmatpush1.msra.mxu0 %v2433
    %4752 = vmatprep.subr.mxu0 %v2436
    %4753 = vmatpush1.msra.mxu0 %v2435
    %4754 = vmatprep.subr.mxu0 %v2438
    %4755 = vmatpush1.msra.mxu0 %v2437
    %4756 = vmatprep.subr.mxu0 %v2440
    %4757 = vmatpush1.msra.mxu0 %v2439
    %4758 = vmatprep.subr.mxu0 %v2442
    %4759 = vmatpush1.msra.mxu0 %v2441
    %4760 = vmatprep.subr.mxu0 %v2444
    %4761 = vmatpush1.msra.mxu0 %v2443
    %4762 = vmatprep.subr.mxu0 0.0
    %4763 = vmatpush1.msra.mxu0 0.0
    %4764 = vmatprep.subr.mxu0 0.0
    %4765 = vmatpush1.msra.mxu0 0.0
    %4766 = vmatprep.subr.mxu0 0.0
    %4767 = vmatpush1.msra.mxu0 0.0
    %4768 = vmatprep.subr.mxu0 0.0
    %4769 = vmatpush1.msra.mxu0 0.0
    %4770 = vmatprep.subr.mxu0 0.0
    %4771 = vmatpush1.msra.mxu0 0.0
    %4772 = vmatprep.subr.mxu0 0.0
    %4773 = vmatpush1.msra.mxu0 0.0
    %4774 = vmatprep.subr.mxu0 0.0
    %4775 = vmatpush1.msra.mxu0 0.0
    %4776 = vmatprep.subr.mxu0 0.0
    %4777 = vmatpush1.msra.mxu0 0.0
    %4778 = vmatprep.subr.mxu0 0.0
    %4779 = vmatpush1.msra.mxu0 0.0
    %4780 = vmatprep.subr.mxu0 0.0
    %4781 = vmatpush1.msra.mxu0 0.0
    %4782 = vmatprep.subr.mxu0 0.0
    %4783 = vmatpush1.msra.mxu0 0.0
    %4784 = vmatprep.subr.mxu0 0.0
    %4785 = vmatpush1.msra.mxu0 0.0
    %4786 = vmatprep.subr.mxu0 0.0
    %4787 = vmatpush1.msra.mxu0 0.0
    %4788 = vmatprep.subr.mxu0 0.0
    %4789 = vmatpush1.msra.mxu0 0.0
    %4790 = vmatprep.subr.mxu0 0.0
    %4791 = vmatpush1.msra.mxu0 0.0
    %4792 = vmatprep.subr.mxu0 0.0
    %4793 = vmatpush1.msra.mxu0 0.0
    %4794 = vmatprep.subr.mxu0 0.0
    %4795 = vmatpush1.msra.mxu0 0.0
    %4796 = vmatprep.subr.mxu0 0.0
    %4797 = vmatpush1.msra.mxu0 0.0
    %4798 = vmatprep.subr.mxu0 0.0
    %4799 = vmatpush1.msra.mxu0 0.0
    %4800 = vmatprep.subr.mxu0 0.0
    %4801 = vmatpush1.msra.mxu0 0.0
    %4802 = vmatprep.subr.mxu0 0.0
    %4803 = vmatpush1.msra.mxu0 0.0
    %4804 = vmatprep.subr.mxu0 0.0
    %4805 = vmatpush1.msra.mxu0 0.0
    %4806 = vmatprep.subr.mxu0 0.0
    %4807 = vmatpush1.msra.mxu0 0.0
    %4808 = vmatprep.subr.mxu0 0.0
    %4809 = vmatpush1.msra.mxu0 0.0
    %4810 = vmatprep.mubr.f32.mxu0 0.0
    %4811 = vmatmul.mubr.f32.gmra.mrb[0].mxu0 %v4744
    %v4812 = vpop.f32.mrb[0].mxu0
    %v4813 = vadd.f32 %v2448, %v4812
    %v4814 = vpop.f32.mrb[0].mxu0
    %v4815 = vadd.f32 %v2452, %v4814
    %4816 = vdwg.mxu0
    %v4818 = vrot.slane %v4813, 2
    %v4819 = vrot.slane %v4813, 3
    %v4820 = vrot.slane %v4813, 4
    %v4821 = vrot.slane %v4813, 5
    %4822 = vrot.lane.b32.xlu0 %v4818, 64
    %v4823 = vpop.permute.xlu0 %4822
    %4824 = vrot.lane.b32.xlu0 %v4819, 64
    %v4825 = vpop.permute.xlu0 %4824
    %4826 = vrot.lane.b32.xlu0 %v4820, 64
    %v4827 = vpop.permute.xlu0 %4826
    %4828 = vrot.lane.b32.xlu0 %v4821, 64
    %v4829 = vpop.permute.xlu0 %4828
    %v4834 = vadd.f32 %v1667, %v4823
    %v4835 = vadd.f32 %v1669, %v4825
    %v4836 = vadd.f32 %v1671, %v4827
    %v4837 = vadd.f32 %v1673, %v4829
    %v4838 = vxor.u32 %v4834, 2147483648
    %v4839 = vxor.u32 %v4835, 2147483648
    %v4840 = vxor.u32 %v4836, 2147483648
    %v4841 = vxor.u32 %v4837, 2147483648
    %v4842 = vmul.f32 %v4838, 1.442695
    %v4843 = vpow.pop %v4842
    %v4844 = vmul.f32 %v4839, 1.442695
    %v4845 = vpow.pop %v4844
    %v4846 = vmul.f32 %v4840, 1.442695
    %v4847 = vpow.pop %v4846
    %v4848 = vmul.f32 %v4841, 1.442695
    %v4849 = vpow.pop %v4848
    %v4850 = vadd.f32 %v4843, 1.0
    %v4851 = vadd.f32 %v4845, 1.0
    %v4852 = vadd.f32 %v4847, 1.0
    %v4853 = vadd.f32 %v4849, 1.0
    %v4854 = vrcp.pop %v4850
    %v4855 = vmul.f32 1.0, %v4854
    %v4856 = vrcp.pop %v4851
    %v4857 = vmul.f32 1.0, %v4856
    %v4858 = vrcp.pop %v4852
    %v4859 = vmul.f32 1.0, %v4858
    %v4860 = vrcp.pop %v4853
    %v4861 = vmul.f32 1.0, %v4860
    %v4866 = vmul.f32 %v4855, %v4818
    %v4867 = vmul.f32 %v4857, %v4819
    %v4868 = vmul.f32 %v4859, %v4820
    %v4869 = vmul.f32 %v4861, %v4821
    %4874 = vrot.lane.b32.xlu0 %v4866, 64
    %v4875 = vpop.permute.xlu0 %4874
    %4876 = vrot.lane.b32.xlu0 %v4867, 64
    %v4877 = vpop.permute.xlu0 %4876
    %4878 = vrot.lane.b32.xlu0 %v4868, 64
    %v4879 = vpop.permute.xlu0 %4878
    %4880 = vrot.lane.b32.xlu0 %v4869, 64
    %v4881 = vpop.permute.xlu0 %4880
    %v4886 = vadd.f32 %v1668, %v4875
    %v4887 = vadd.f32 %v1670, %v4877
    %v4888 = vadd.f32 %v1672, %v4879
    %v4889 = vadd.f32 %v1674, %v4881
    %v4890 = vtanh.pop %v4886
    %v4891 = vtanh.pop %v4887
    %v4892 = vtanh.pop %v4888
    %v4893 = vtanh.pop %v4889
    %v4894 = vsub.f32 1.0, %v4855
    %v4895 = vsub.f32 1.0, %v4857
    %v4896 = vsub.f32 1.0, %v4859
    %v4897 = vsub.f32 1.0, %v4861
    %4902 = vrot.lane.b32.xlu0 %v4890, 96
    %v4903 = vpop.permute.xlu0 %4902
    %4904 = vrot.lane.b32.xlu0 %v4891, 96
    %v4905 = vpop.permute.xlu0 %4904
    %4906 = vrot.lane.b32.xlu0 %v4892, 96
    %v4907 = vpop.permute.xlu0 %4906
    %4908 = vrot.lane.b32.xlu0 %v4893, 96
    %v4909 = vpop.permute.xlu0 %4908
    %v4914 = vmul.f32 %v4894, %v4903
    %v4915 = vmul.f32 %v4895, %v4905
    %v4916 = vmul.f32 %v4896, %v4907
    %v4917 = vmul.f32 %v4897, %v4909
    %v4918 = vrot.slane %v4736, 7
    %v4919 = vrot.slane %v4736, 1
    %v4920 = vrot.slane %v4737, 2
    %4921 = vrot.lane.b32.xlu0 %v4918, 96
    %v4922 = vpop.permute.xlu0 %4921
    %4923 = vrot.lane.b32.xlu0 %v4736, 96
    %v4924 = vpop.permute.xlu0 %4923
    %4925 = vrot.lane.b32.xlu0 %v4919, 96
    %v4926 = vpop.permute.xlu0 %4925
    %4927 = vrot.lane.b32.xlu0 %v4920, 96
    %v4928 = vpop.permute.xlu0 %4927
    %v4933 = vmul.f32 %v4855, %v4922
    %v4934 = vmul.f32 %v4857, %v4924
    %v4935 = vmul.f32 %v4859, %v4926
    %v4936 = vmul.f32 %v4861, %v4928
    %v4937 = vadd.f32 %v4914, %v4933
    %v4938 = vadd.f32 %v4915, %v4934
    %v4939 = vadd.f32 %v4916, %v4935
    %v4940 = vadd.f32 %v4917, %v4936
    %v4941 = vrot.slane %v4813, 7
    %v4942 = vrot.slane %v4813, 1
    %4943 = vrot.lane.b32.xlu0 %v4941, 64
    %v4944 = vpop.permute.xlu0 %4943
    %4945 = vrot.lane.b32.xlu0 %v4813, 64
    %v4946 = vpop.permute.xlu0 %4945
    %4947 = vrot.lane.b32.xlu0 %v4942, 64
    %v4948 = vpop.permute.xlu0 %4947
    %v4952 = vadd.f32 %v1668, %v4944
    %v4953 = vadd.f32 %v1670, %v4946
    %v4954 = vadd.f32 %v1672, %v4948
    %v4955 = vadd.f32 %v1674, %v4823
    %v4956 = vxor.u32 %v4952, 2147483648
    %v4957 = vxor.u32 %v4953, 2147483648
    %v4958 = vxor.u32 %v4954, 2147483648
    %v4959 = vxor.u32 %v4955, 2147483648
    %v4960 = vmul.f32 %v4956, 1.442695
    %v4961 = vpow.pop %v4960
    %v4962 = vmul.f32 %v4957, 1.442695
    %v4963 = vpow.pop %v4962
    %v4964 = vmul.f32 %v4958, 1.442695
    %v4965 = vpow.pop %v4964
    %v4966 = vmul.f32 %v4959, 1.442695
    %v4967 = vpow.pop %v4966
    %v4968 = vadd.f32 %v4961, 1.0
    %v4969 = vadd.f32 %v4963, 1.0
    %v4970 = vadd.f32 %v4965, 1.0
    %v4971 = vadd.f32 %v4967, 1.0
    %v4972 = vrcp.pop %v4968
    %v4973 = vmul.f32 1.0, %v4972
    %v4974 = vrcp.pop %v4969
    %v4975 = vmul.f32 1.0, %v4974
    %v4976 = vrcp.pop %v4970
    %v4977 = vmul.f32 1.0, %v4976
    %v4978 = vrcp.pop %v4971
    %v4979 = vmul.f32 1.0, %v4978
    %v4981 = vrot.slane %v4815, 7
    %v4982 = vrot.slane %v4815, 1
    %v4983 = vrot.slane %v4815, 2
    %4984 = vrot.lane.b32.xlu0 %v4981, 64
    %v4985 = vpop.permute.xlu0 %4984
    %4986 = vrot.lane.b32.xlu0 %v4815, 64
    %v4987 = vpop.permute.xlu0 %4986
    %4988 = vrot.lane.b32.xlu0 %v4982, 64
    %v4989 = vpop.permute.xlu0 %4988
    %4990 = vrot.lane.b32.xlu0 %v4983, 64
    %v4991 = vpop.permute.xlu0 %4990
    %v4996 = vadd.f32 %v1668, %v4985
    %v4997 = vadd.f32 %v1670, %v4987
    %v4998 = vadd.f32 %v1672, %v4989
    %v4999 = vadd.f32 %v1674, %v4991
    %v5000 = vxor.u32 %v4996, 2147483648
    %v5001 = vxor.u32 %v4997, 2147483648
    %v5002 = vxor.u32 %v4998, 2147483648
    %v5003 = vxor.u32 %v4999, 2147483648
    %v5004 = vmul.f32 %v5000, 1.442695
    %v5005 = vpow.pop %v5004
    %v5006 = vmul.f32 %v5001, 1.442695
    %v5007 = vpow.pop %v5006
    %v5008 = vmul.f32 %v5002, 1.442695
    %v5009 = vpow.pop %v5008
    %v5010 = vmul.f32 %v5003, 1.442695
    %v5011 = vpow.pop %v5010
    %v5012 = vadd.f32 %v5005, 1.0
    %v5013 = vadd.f32 %v5007, 1.0
    %v5014 = vadd.f32 %v5009, 1.0
    %v5015 = vadd.f32 %v5011, 1.0
    %v5016 = vrcp.pop %v5012
    %v5017 = vmul.f32 1.0, %v5016
    %v5018 = vrcp.pop %v5013
    %v5019 = vmul.f32 1.0, %v5018
    %v5020 = vrcp.pop %v5014
    %v5021 = vmul.f32 1.0, %v5020
    %v5022 = vrcp.pop %v5015
    %v5023 = vmul.f32 1.0, %v5022
    %v5028 = vmul.f32 %v4973, %v4981
    %v5029 = vmul.f32 %v4975, %v4815
    %v5030 = vmul.f32 %v4977, %v4982
    %v5031 = vmul.f32 %v4979, %v4983
    %5036 = vrot.lane.b32.xlu0 %v5028, 64
    %v5037 = vpop.permute.xlu0 %5036
    %5038 = vrot.lane.b32.xlu0 %v5029, 64
    %v5039 = vpop.permute.xlu0 %5038
    %5040 = vrot.lane.b32.xlu0 %v5030, 64
    %v5041 = vpop.permute.xlu0 %5040
    %5042 = vrot.lane.b32.xlu0 %v5031, 64
    %v5043 = vpop.permute.xlu0 %5042
    %v5048 = vadd.f32 %v1668, %v5037
    %v5049 = vadd.f32 %v1670, %v5039
    %v5050 = vadd.f32 %v1672, %v5041
    %v5051 = vadd.f32 %v1674, %v5043
    %v5052 = vtanh.pop %v5048
    %v5053 = vtanh.pop %v5049
    %v5054 = vtanh.pop %v5050
    %v5055 = vtanh.pop %v5051
    %v5056 = vsub.f32 1.0, %v5017
    %v5057 = vsub.f32 1.0, %v5019
    %v5058 = vsub.f32 1.0, %v5021
    %v5059 = vsub.f32 1.0, %v5023
    %5064 = vrot.lane.b32.xlu0 %v5052, 96
    %v5065 = vpop.permute.xlu0 %5064
    %5066 = vrot.lane.b32.xlu0 %v5053, 96
    %v5067 = vpop.permute.xlu0 %5066
    %5068 = vrot.lane.b32.xlu0 %v5054, 96
    %v5069 = vpop.permute.xlu0 %5068
    %5070 = vrot.lane.b32.xlu0 %v5055, 96
    %v5071 = vpop.permute.xlu0 %5070
    %v5076 = vmul.f32 %v5056, %v5065
    %v5077 = vmul.f32 %v5057, %v5067
    %v5078 = vmul.f32 %v5058, %v5069
    %v5079 = vmul.f32 %v5059, %v5071
    %v5080 = vrot.slane %v4736, 4
    %v5081 = vrot.slane %v4736, 6
    %v5082 = vrot.slane %v4737, 7
    %5083 = vrot.lane.b32.xlu0 %v5080, 32
    %v5084 = vpop.permute.xlu0 %5083
    %5085 = vrot.lane.b32.xlu0 %v4741, 32
    %v5086 = vpop.permute.xlu0 %5085
    %5087 = vrot.lane.b32.xlu0 %v5081, 32
    %v5088 = vpop.permute.xlu0 %5087
    %5089 = vrot.lane.b32.xlu0 %v5082, 32
    %v5090 = vpop.permute.xlu0 %5089
    %v5095 = vmul.f32 %v5017, %v5084
    %v5096 = vmul.f32 %v5019, %v5086
    %v5097 = vmul.f32 %v5021, %v5088
    %v5098 = vmul.f32 %v5023, %v5090
    %v5099 = vadd.f32 %v5076, %v5095
    %v5100 = vadd.f32 %v5077, %v5096
    %v5101 = vadd.f32 %v5078, %v5097
    %v5102 = vadd.f32 %v5079, %v5098
    %v5107 = vrot.slane %v4938, 7
    %v5108 = vsel %vm4325, %v5107, %v4937
    %v5109 = vrot.slane %v4939, 6
    %v5110 = vrot.slane %v4940, 5
    %v5111 = vsel %vm2781, %v5110, %v5109
    %5112 = vrot.lane.b32.xlu0 %v5108, 32
    %v5113 = vpop.permute.xlu0 %5112
    %5114 = vrot.lane.b32.xlu0 %v5111, 32
    %v5115 = vpop.permute.xlu0 %5114
    %v5122 = vrot.slane %v5099, 3
    %v5123 = vrot.slane %v5100, 2
    %v5124 = vsel %vm4325, %v5123, %v5122
    %v5125 = vrot.slane %v5101, 1
    %v5126 = vsel %vm2781, %v5102, %v5125
    %5127 = vrot.lane.b32.xlu0 %v5124, 96
    %v5128 = vpop.permute.xlu0 %5127
    %5129 = vrot.lane.b32.xlu0 %v5126, 96
    %v5130 = vpop.permute.xlu0 %5129
    %v5133 = vsel %vm2806, %v5113, %v5128
    %v5134 = vsel %vm2806, %v5115, %v5130
    %vm5137 = vcmask 1041408
    %v5138 = vrot.slane %v5133, 6
    %v5139 = vrot.slane %v5134, 6
    %v5140 = vsel %vm5137, %v5138, %v5139
    %v5141 = vsel %vm1663, %v5140, 0
    %5143 = vmatprep.subr.mxu0 %v2430
    %5144 = vmatpush1.msra.mxu0 %v2429
    %5145 = vmatprep.subr.mxu0 %v2432
    %5146 = vmatpush1.msra.mxu0 %v2431
    %5147 = vmatprep.subr.mxu0 %v2434
    %5148 = vmatpush1.msra.mxu0 %v2433
    %5149 = vmatprep.subr.mxu0 %v2436
    %5150 = vmatpush1.msra.mxu0 %v2435
    %5151 = vmatprep.subr.mxu0 %v2438
    %5152 = vmatpush1.msra.mxu0 %v2437
    %5153 = vmatprep.subr.mxu0 %v2440
    %5154 = vmatpush1.msra.mxu0 %v2439
    %5155 = vmatprep.subr.mxu0 %v2442
    %5156 = vmatpush1.msra.mxu0 %v2441
    %5157 = vmatprep.subr.mxu0 %v2444
    %5158 = vmatpush1.msra.mxu0 %v2443
    %5159 = vmatprep.subr.mxu0 0.0
    %5160 = vmatpush1.msra.mxu0 0.0
    %5161 = vmatprep.subr.mxu0 0.0
    %5162 = vmatpush1.msra.mxu0 0.0
    %5163 = vmatprep.subr.mxu0 0.0
    %5164 = vmatpush1.msra.mxu0 0.0
    %5165 = vmatprep.subr.mxu0 0.0
    %5166 = vmatpush1.msra.mxu0 0.0
    %5167 = vmatprep.subr.mxu0 0.0
    %5168 = vmatpush1.msra.mxu0 0.0
    %5169 = vmatprep.subr.mxu0 0.0
    %5170 = vmatpush1.msra.mxu0 0.0
    %5171 = vmatprep.subr.mxu0 0.0
    %5172 = vmatpush1.msra.mxu0 0.0
    %5173 = vmatprep.subr.mxu0 0.0
    %5174 = vmatpush1.msra.mxu0 0.0
    %5175 = vmatprep.subr.mxu0 0.0
    %5176 = vmatpush1.msra.mxu0 0.0
    %5177 = vmatprep.subr.mxu0 0.0
    %5178 = vmatpush1.msra.mxu0 0.0
    %5179 = vmatprep.subr.mxu0 0.0
    %5180 = vmatpush1.msra.mxu0 0.0
    %5181 = vmatprep.subr.mxu0 0.0
    %5182 = vmatpush1.msra.mxu0 0.0
    %5183 = vmatprep.subr.mxu0 0.0
    %5184 = vmatpush1.msra.mxu0 0.0
    %5185 = vmatprep.subr.mxu0 0.0
    %5186 = vmatpush1.msra.mxu0 0.0
    %5187 = vmatprep.subr.mxu0 0.0
    %5188 = vmatpush1.msra.mxu0 0.0
    %5189 = vmatprep.subr.mxu0 0.0
    %5190 = vmatpush1.msra.mxu0 0.0
    %5191 = vmatprep.subr.mxu0 0.0
    %5192 = vmatpush1.msra.mxu0 0.0
    %5193 = vmatprep.subr.mxu0 0.0
    %5194 = vmatpush1.msra.mxu0 0.0
    %5195 = vmatprep.subr.mxu0 0.0
    %5196 = vmatpush1.msra.mxu0 0.0
    %5197 = vmatprep.subr.mxu0 0.0
    %5198 = vmatpush1.msra.mxu0 0.0
    %5199 = vmatprep.subr.mxu0 0.0
    %5200 = vmatpush1.msra.mxu0 0.0
    %5201 = vmatprep.subr.mxu0 0.0
    %5202 = vmatpush1.msra.mxu0 0.0
    %5203 = vmatprep.subr.mxu0 0.0
    %5204 = vmatpush1.msra.mxu0 0.0
    %5205 = vmatprep.subr.mxu0 0.0
    %5206 = vmatpush1.msra.mxu0 0.0
    %5207 = vmatprep.mubr.f32.mxu0 0.0
    %5208 = vmatmul.mubr.f32.gmra.mrb[0].mxu0 %v5141
    %v5209 = vpop.f32.mrb[0].mxu0
    %v5210 = vadd.f32 %v2448, %v5209
    %v5211 = vpop.f32.mrb[0].mxu0
    %v5212 = vadd.f32 %v2452, %v5211
    %5213 = vdwg.mxu0
    %v5215 = vrot.slane %v5210, 1
    %v5216 = vrot.slane %v5210, 2
    %v5217 = vrot.slane %v5210, 3
    %v5218 = vrot.slane %v5210, 4
    %5219 = vrot.lane.b32.xlu0 %v5215, 64
    %v5220 = vpop.permute.xlu0 %5219
    %5221 = vrot.lane.b32.xlu0 %v5216, 64
    %v5222 = vpop.permute.xlu0 %5221
    %5223 = vrot.lane.b32.xlu0 %v5217, 64
    %v5224 = vpop.permute.xlu0 %5223
    %5225 = vrot.lane.b32.xlu0 %v5218, 64
    %v5226 = vpop.permute.xlu0 %5225
    %v5231 = vadd.f32 %v1667, %v5220
    %v5232 = vadd.f32 %v1669, %v5222
    %v5233 = vadd.f32 %v1671, %v5224
    %v5234 = vadd.f32 %v1673, %v5226
    %v5235 = vxor.u32 %v5231, 2147483648
    %v5236 = vxor.u32 %v5232, 2147483648
    %v5237 = vxor.u32 %v5233, 2147483648
    %v5238 = vxor.u32 %v5234, 2147483648
    %v5239 = vmul.f32 %v5235, 1.442695
    %v5240 = vpow.pop %v5239
    %v5241 = vmul.f32 %v5236, 1.442695
    %v5242 = vpow.pop %v5241
    %v5243 = vmul.f32 %v5237, 1.442695
    %v5244 = vpow.pop %v5243
    %v5245 = vmul.f32 %v5238, 1.442695
    %v5246 = vpow.pop %v5245
    %v5247 = vadd.f32 %v5240, 1.0
    %v5248 = vadd.f32 %v5242, 1.0
    %v5249 = vadd.f32 %v5244, 1.0
    %v5250 = vadd.f32 %v5246, 1.0
    %v5251 = vrcp.pop %v5247
    %v5252 = vmul.f32 1.0, %v5251
    %v5253 = vrcp.pop %v5248
    %v5254 = vmul.f32 1.0, %v5253
    %v5255 = vrcp.pop %v5249
    %v5256 = vmul.f32 1.0, %v5255
    %v5257 = vrcp.pop %v5250
    %v5258 = vmul.f32 1.0, %v5257
    %v5263 = vmul.f32 %v5252, %v5215
    %v5264 = vmul.f32 %v5254, %v5216
    %v5265 = vmul.f32 %v5256, %v5217
    %v5266 = vmul.f32 %v5258, %v5218
    %5271 = vrot.lane.b32.xlu0 %v5263, 64
    %v5272 = vpop.permute.xlu0 %5271
    %5273 = vrot.lane.b32.xlu0 %v5264, 64
    %v5274 = vpop.permute.xlu0 %5273
    %5275 = vrot.lane.b32.xlu0 %v5265, 64
    %v5276 = vpop.permute.xlu0 %5275
    %5277 = vrot.lane.b32.xlu0 %v5266, 64
    %v5278 = vpop.permute.xlu0 %5277
    %v5283 = vadd.f32 %v1668, %v5272
    %v5284 = vadd.f32 %v1670, %v5274
    %v5285 = vadd.f32 %v1672, %v5276
    %v5286 = vadd.f32 %v1674, %v5278
    %v5287 = vtanh.pop %v5283
    %v5288 = vtanh.pop %v5284
    %v5289 = vtanh.pop %v5285
    %v5290 = vtanh.pop %v5286
    %v5291 = vsub.f32 1.0, %v5252
    %v5292 = vsub.f32 1.0, %v5254
    %v5293 = vsub.f32 1.0, %v5256
    %v5294 = vsub.f32 1.0, %v5258
    %5299 = vrot.lane.b32.xlu0 %v5287, 96
    %v5300 = vpop.permute.xlu0 %5299
    %5301 = vrot.lane.b32.xlu0 %v5288, 96
    %v5302 = vpop.permute.xlu0 %5301
    %5303 = vrot.lane.b32.xlu0 %v5289, 96
    %v5304 = vpop.permute.xlu0 %5303
    %5305 = vrot.lane.b32.xlu0 %v5290, 96
    %v5306 = vpop.permute.xlu0 %5305
    %v5311 = vmul.f32 %v5291, %v5300
    %v5312 = vmul.f32 %v5292, %v5302
    %v5313 = vmul.f32 %v5293, %v5304
    %v5314 = vmul.f32 %v5294, %v5306
    %v5315 = vrot.slane %v5133, 7
    %v5316 = vrot.slane %v5134, 1
    %v5317 = vrot.slane %v5134, 2
    %5318 = vrot.lane.b32.xlu0 %v5315, 96
    %v5319 = vpop.permute.xlu0 %5318
    %5320 = vrot.lane.b32.xlu0 %v5133, 96
    %v5321 = vpop.permute.xlu0 %5320
    %5322 = vrot.lane.b32.xlu0 %v5316, 96
    %v5323 = vpop.permute.xlu0 %5322
    %5324 = vrot.lane.b32.xlu0 %v5317, 96
    %v5325 = vpop.permute.xlu0 %5324
    %v5330 = vmul.f32 %v5252, %v5319
    %v5331 = vmul.f32 %v5254, %v5321
    %v5332 = vmul.f32 %v5256, %v5323
    %v5333 = vmul.f32 %v5258, %v5325
    %v5334 = vadd.f32 %v5311, %v5330
    %v5335 = vadd.f32 %v5312, %v5331
    %v5336 = vadd.f32 %v5313, %v5332
    %v5337 = vadd.f32 %v5314, %v5333
    %5338 = vrot.lane.b32.xlu0 %v5210, 64
    %v5339 = vpop.permute.xlu0 %5338
    %v5341 = vadd.f32 %v1668, %v5339
    %v5342 = vadd.f32 %v1670, %v5220
    %v5343 = vadd.f32 %v1672, %v5222
    %v5344 = vadd.f32 %v1674, %v5224
    %v5345 = vxor.u32 %v5341, 2147483648
    %v5346 = vxor.u32 %v5342, 2147483648
    %v5347 = vxor.u32 %v5343, 2147483648
    %v5348 = vxor.u32 %v5344, 2147483648
    %v5349 = vmul.f32 %v5345, 1.442695
    %v5350 = vpow.pop %v5349
    %v5351 = vmul.f32 %v5346, 1.442695
    %v5352 = vpow.pop %v5351
    %v5353 = vmul.f32 %v5347, 1.442695
    %v5354 = vpow.pop %v5353
    %v5355 = vmul.f32 %v5348, 1.442695
    %v5356 = vpow.pop %v5355
    %v5357 = vadd.f32 %v5350, 1.0
    %v5358 = vadd.f32 %v5352, 1.0
    %v5359 = vadd.f32 %v5354, 1.0
    %v5360 = vadd.f32 %v5356, 1.0
    %v5361 = vrcp.pop %v5357
    %v5362 = vmul.f32 1.0, %v5361
    %v5363 = vrcp.pop %v5358
    %v5364 = vmul.f32 1.0, %v5363
    %v5365 = vrcp.pop %v5359
    %v5366 = vmul.f32 1.0, %v5365
    %v5367 = vrcp.pop %v5360
    %v5368 = vmul.f32 1.0, %v5367
    %v5370 = vrot.slane %v5212, 1
    %v5371 = vrot.slane %v5212, 2
    %v5372 = vrot.slane %v5212, 3
    %5373 = vrot.lane.b32.xlu0 %v5212, 64
    %v5374 = vpop.permute.xlu0 %5373
    %5375 = vrot.lane.b32.xlu0 %v5370, 64
    %v5376 = vpop.permute.xlu0 %5375
    %5377 = vrot.lane.b32.xlu0 %v5371, 64
    %v5378 = vpop.permute.xlu0 %5377
    %5379 = vrot.lane.b32.xlu0 %v5372, 64
    %v5380 = vpop.permute.xlu0 %5379
    %v5385 = vadd.f32 %v1668, %v5374
    %v5386 = vadd.f32 %v1670, %v5376
    %v5387 = vadd.f32 %v1672, %v5378
    %v5388 = vadd.f32 %v1674, %v5380
    %v5389 = vxor.u32 %v5385, 2147483648
    %v5390 = vxor.u32 %v5386, 2147483648
    %v5391 = vxor.u32 %v5387, 2147483648
    %v5392 = vxor.u32 %v5388, 2147483648
    %v5393 = vmul.f32 %v5389, 1.442695
    %v5394 = vpow.pop %v5393
    %v5395 = vmul.f32 %v5390, 1.442695
    %v5396 = vpow.pop %v5395
    %v5397 = vmul.f32 %v5391, 1.442695
    %v5398 = vpow.pop %v5397
    %v5399 = vmul.f32 %v5392, 1.442695
    %v5400 = vpow.pop %v5399
    %v5401 = vadd.f32 %v5394, 1.0
    %v5402 = vadd.f32 %v5396, 1.0
    %v5403 = vadd.f32 %v5398, 1.0
    %v5404 = vadd.f32 %v5400, 1.0
    %v5405 = vrcp.pop %v5401
    %v5406 = vmul.f32 1.0, %v5405
    %v5407 = vrcp.pop %v5402
    %v5408 = vmul.f32 1.0, %v5407
    %v5409 = vrcp.pop %v5403
    %v5410 = vmul.f32 1.0, %v5409
    %v5411 = vrcp.pop %v5404
    %v5412 = vmul.f32 1.0, %v5411
    %v5417 = vmul.f32 %v5362, %v5212
    %v5418 = vmul.f32 %v5364, %v5370
    %v5419 = vmul.f32 %v5366, %v5371
    %v5420 = vmul.f32 %v5368, %v5372
    %5425 = vrot.lane.b32.xlu0 %v5417, 64
    %v5426 = vpop.permute.xlu0 %5425
    %5427 = vrot.lane.b32.xlu0 %v5418, 64
    %v5428 = vpop.permute.xlu0 %5427
    %5429 = vrot.lane.b32.xlu0 %v5419, 64
    %v5430 = vpop.permute.xlu0 %5429
    %5431 = vrot.lane.b32.xlu0 %v5420, 64
    %v5432 = vpop.permute.xlu0 %5431
    %v5437 = vadd.f32 %v1668, %v5426
    %v5438 = vadd.f32 %v1670, %v5428
    %v5439 = vadd.f32 %v1672, %v5430
    %v5440 = vadd.f32 %v1674, %v5432
    %v5441 = vtanh.pop %v5437
    %v5442 = vtanh.pop %v5438
    %v5443 = vtanh.pop %v5439
    %v5444 = vtanh.pop %v5440
    %v5445 = vsub.f32 1.0, %v5406
    %v5446 = vsub.f32 1.0, %v5408
    %v5447 = vsub.f32 1.0, %v5410
    %v5448 = vsub.f32 1.0, %v5412
    %5453 = vrot.lane.b32.xlu0 %v5441, 96
    %v5454 = vpop.permute.xlu0 %5453
    %5455 = vrot.lane.b32.xlu0 %v5442, 96
    %v5456 = vpop.permute.xlu0 %5455
    %5457 = vrot.lane.b32.xlu0 %v5443, 96
    %v5458 = vpop.permute.xlu0 %5457
    %5459 = vrot.lane.b32.xlu0 %v5444, 96
    %v5460 = vpop.permute.xlu0 %5459
    %v5465 = vmul.f32 %v5445, %v5454
    %v5466 = vmul.f32 %v5446, %v5456
    %v5467 = vmul.f32 %v5447, %v5458
    %v5468 = vmul.f32 %v5448, %v5460
    %5469 = vrot.lane.b32.xlu0 %v5138, 32
    %v5470 = vpop.permute.xlu0 %5469
    %5471 = vrot.lane.b32.xlu0 %v5315, 32
    %v5472 = vpop.permute.xlu0 %5471
    %5473 = vrot.lane.b32.xlu0 %v5134, 32
    %v5474 = vpop.permute.xlu0 %5473
    %5475 = vrot.lane.b32.xlu0 %v5316, 32
    %v5476 = vpop.permute.xlu0 %5475
    %v5481 = vmul.f32 %v5406, %v5470
    %v5482 = vmul.f32 %v5408, %v5472
    %v5483 = vmul.f32 %v5410, %v5474
    %v5484 = vmul.f32 %v5412, %v5476
    %v5485 = vadd.f32 %v5465, %v5481
    %v5486 = vadd.f32 %v5466, %v5482
    %v5487 = vadd.f32 %v5467, %v5483
    %v5488 = vadd.f32 %v5468, %v5484
    %vm5489 = vcmask 1040384
    %v5490 = vsel %vm5489, %v2631, %v3001
    %v5491 = vsel %vm5489, %v2632, %v3002
    %v5492 = vsel %vm5489, %v2633, %v3003
    %v5493 = vsel %vm5489, %v2634, %v3004
    %v5494 = vsel %vm5137, %v5490, %v3391
    %v5495 = vsel %vm5137, %v5491, %v3392
    %v5496 = vsel %vm5137, %v5492, %v3393
    %v5497 = vsel %vm5137, %v5493, %v3394
    %v5498 = vsel %vm4740, %v5494, %v3780
    %v5499 = vsel %vm4740, %v5495, %v3781
    %v5500 = vsel %vm4740, %v5496, %v3782
    %v5501 = vsel %vm4740, %v5497, %v3783
    %vm5502 = vcmask 1043456
    %v5503 = vsel %vm5502, %v5498, %v4161
    %v5504 = vsel %vm5502, %v5499, %v4162
    %v5505 = vsel %vm5502, %v5500, %v4163
    %v5506 = vsel %vm5502, %v5501, %v4164
    %vm5507 = vcmask 1044480
    %v5508 = vsel %vm5507, %v5503, %v4540
    %v5509 = vsel %vm5507, %v5504, %v4541
    %v5510 = vsel %vm5507, %v5505, %v4542
    %v5511 = vsel %vm5507, %v5506, %v4543
    %vm5512 = vcmask 1045504
    %v5513 = vsel %vm5512, %v5508, %v4937
    %v5514 = vsel %vm5512, %v5509, %v4938
    %v5515 = vsel %vm5512, %v5510, %v4939
    %v5516 = vsel %vm5512, %v5511, %v4940
    %vm5517 = vcmask 1046528
    %v5518 = vsel %vm5517, %v5513, %v5334
    %v5519 = vsel %vm5517, %v5514, %v5335
    %v5520 = vsel %vm5517, %v5515, %v5336
    %v5521 = vsel %vm5517, %v5516, %v5337
    %v5522 = vsel %vm5489, %v5485, %v5099
    %v5523 = vsel %vm5489, %v5486, %v5100
    %v5524 = vsel %vm5489, %v5487, %v5101
    %v5525 = vsel %vm5489, %v5488, %v5102
    %v5526 = vsel %vm5137, %v5522, %v4701
    %v5527 = vsel %vm5137, %v5523, %v4702
    %v5528 = vsel %vm5137, %v5524, %v4703
    %v5529 = vsel %vm5137, %v5525, %v4704
    %v5530 = vsel %vm4740, %v5526, %v4312
    %v5531 = vsel %vm4740, %v5527, %v4313
    %v5532 = vsel %vm4740, %v5528, %v4314
    %v5533 = vsel %vm4740, %v5529, %v4315
    %v5534 = vsel %vm5502, %v5530, %v3934
    %v5535 = vsel %vm5502, %v5531, %v3935
    %v5536 = vsel %vm5502, %v5532, %v3936
    %v5537 = vsel %vm5502, %v5533, %v3937
    %v5538 = vsel %vm5507, %v5534, %v3555
    %v5539 = vsel %vm5507, %v5535, %v3556
    %v5540 = vsel %vm5507, %v5536, %v3557
    %v5541 = vsel %vm5507, %v5537, %v3558
    %v5542 = vsel %vm5512, %v5538, %v3165
    %v5543 = vsel %vm5512, %v5539, %v3166
    %v5544 = vsel %vm5512, %v5540, %v3167
    %v5545 = vsel %vm5512, %v5541, %v3168
    %v5546 = vsel %vm5517, %v5542, %v2772
    %v5547 = vsel %vm5517, %v5543, %v2773
    %v5548 = vsel %vm5517, %v5544, %v2774
    %v5549 = vsel %vm5517, %v5545, %v2775
    %5554 = vrot.lane.b32.xlu0 %v5518, 32
    %v5555 = vpop.permute.xlu0 %5554
    %5556 = vrot.lane.b32.xlu0 %v5519, 32
    %v5557 = vpop.permute.xlu0 %5556
    %5558 = vrot.lane.b32.xlu0 %v5520, 32
    %v5559 = vpop.permute.xlu0 %5558
    %5560 = vrot.lane.b32.xlu0 %v5521, 32
    %v5561 = vpop.permute.xlu0 %5560
    %5570 = vrot.lane.b32.xlu0 %v5546, 96
    %v5571 = vpop.permute.xlu0 %5570
    %5572 = vrot.lane.b32.xlu0 %v5547, 96
    %v5573 = vpop.permute.xlu0 %5572
    %5574 = vrot.lane.b32.xlu0 %v5548, 96
    %v5575 = vpop.permute.xlu0 %5574
    %5576 = vrot.lane.b32.xlu0 %v5549, 96
    %v5577 = vpop.permute.xlu0 %5576
    %v5582 = vsel %vm2806, %v5555, %v5571
    %v5583 = vsel %vm2806, %v5557, %v5573
    %v5584 = vsel %vm2806, %v5559, %v5575
    %v5585 = vsel %vm2806, %v5561, %v5577
    %v5586 = vlaneseq
    %v5587 = vshrl.u32 %v5586, 7
    %v5588 = vsub.s32 3, %v5587
    %v5589 = vrot.slane %v39, %v5588
    %v5590 = vmul.f32 %v5582, %v5589
    %v5591 = vmul.f32 %v5583, %v5589
    %v5592 = vmul.f32 %v5584, %v5589
    %v5593 = vmul.f32 %v5585, %v5589
    %v5594 = vsel %vm1663, %v5590, 0.0
    %5595 = vadd.xlane.f32.xlu0 %v5594
    %v5596 = vpop.xlane.xlu0 %5595
    %v5597 = vsel %vm1663, %v5591, 0.0
    %5598 = vadd.xlane.f32.xlu0 %v5597
    %v5599 = vpop.xlane.xlu0 %5598
    %v5600 = vsel %vm1663, %v5592, 0.0
    %5601 = vadd.xlane.f32.xlu0 %v5600
    %v5602 = vpop.xlane.xlu0 %5601
    %v5603 = vsel %vm1663, %v5593, 0.0
    %5604 = vadd.xlane.f32.xlu0 %v5603
    %v5605 = vpop.xlane.xlu0 %5604
    %v5606 = vrot.slane %v5596, 4
    %v5607 = vmax.f32 %v5596, %v5606
    %v5608 = vrot.slane %v5607, 2
    %v5609 = vmax.f32 %v5607, %v5608
    %v5610 = vrot.slane %v5609, 1
    %v5611 = vmax.f32 %v5609, %v5610
    %v5612 = vrot.slane %v5599, 4
    %v5613 = vmax.f32 %v5599, %v5612
    %v5614 = vrot.slane %v5613, 2
    %v5615 = vmax.f32 %v5613, %v5614
    %v5616 = vrot.slane %v5615, 1
    %v5617 = vmax.f32 %v5615, %v5616
    %v5618 = vrot.slane %v5602, 4
    %v5619 = vmax.f32 %v5602, %v5618
    %v5620 = vrot.slane %v5619, 2
    %v5621 = vmax.f32 %v5619, %v5620
    %v5622 = vrot.slane %v5621, 1
    %v5623 = vmax.f32 %v5621, %v5622
    %v5624 = vrot.slane %v5605, 4
    %v5625 = vmax.f32 %v5605, %v5624
    %v5626 = vrot.slane %v5625, 2
    %v5627 = vmax.f32 %v5625, %v5626
    %v5628 = vrot.slane %v5627, 1
    %v5629 = vmax.f32 %v5627, %v5628
    %v5630 = vsub.f32 %v5596, %v5611
    %v5631 = vsub.f32 %v5599, %v5617
    %v5632 = vsub.f32 %v5602, %v5623
    %v5633 = vsub.f32 %v5605, %v5629
    %v5634 = vmul.f32 %v5630, 1.442695
    %v5635 = vpow.pop %v5634
    %v5636 = vmul.f32 %v5631, 1.442695
    %v5637 = vpow.pop %v5636
    %v5638 = vmul.f32 %v5632, 1.442695
    %v5639 = vpow.pop %v5638
    %v5640 = vmul.f32 %v5633, 1.442695
    %v5641 = vpow.pop %v5640
    %v5642 = vrot.slane %v5635, 4
    %v5643 = vadd.f32 %v5635, %v5642
    %v5644 = vrot.slane %v5643, 2
    %v5645 = vadd.f32 %v5643, %v5644
    %v5646 = vrot.slane %v5645, 1
    %v5647 = vadd.f32 %v5645, %v5646
    %v5648 = vrot.slane %v5637, 4
    %v5649 = vadd.f32 %v5637, %v5648
    %v5650 = vrot.slane %v5649, 2
    %v5651 = vadd.f32 %v5649, %v5650
    %v5652 = vrot.slane %v5651, 1
    %v5653 = vadd.f32 %v5651, %v5652
    %v5654 = vrot.slane %v5639, 4
    %v5655 = vadd.f32 %v5639, %v5654
    %v5656 = vrot.slane %v5655, 2
    %v5657 = vadd.f32 %v5655, %v5656
    %v5658 = vrot.slane %v5657, 1
    %v5659 = vadd.f32 %v5657, %v5658
    %v5660 = vrot.slane %v5641, 4
    %v5661 = vadd.f32 %v5641, %v5660
    %v5662 = vrot.slane %v5661, 2
    %v5663 = vadd.f32 %v5661, %v5662
    %v5664 = vrot.slane %v5663, 1
    %v5665 = vadd.f32 %v5663, %v5664
    %v5666 = vrcp.pop %v5647
    %v5667 = vrcp.pop %v5653
    %v5668 = vrcp.pop %v5659
    %v5669 = vrcp.pop %v5665
    %v5670 = vmul.f32 %v5635, %v5666
    %v5671 = vmul.f32 %v5637, %v5667
    %v5672 = vmul.f32 %v5639, %v5668
    %v5673 = vmul.f32 %v5641, %v5669
    %v5674 = vmul.f32 %v5582, %v5670
    %v5675 = vmul.f32 %v5583, %v5671
    %v5676 = vmul.f32 %v5584, %v5672
    %v5677 = vmul.f32 %v5585, %v5673
    %v5678 = vld [vmem:[%s4] sm:$0xff]
    %v5679 = vld [vmem:[%s4 + $0x8] sm:$0xff]
    %v5680 = vld [vmem:[%s4 + $0x10] sm:$0xff]
    %v5681 = vld [vmem:[%s4 + $0x18] sm:$0xff]
    %v5682 = vld [vmem:[%s4 + $0x20] sm:$0xff]
    %v5683 = vld [vmem:[%s4 + $0x28] sm:$0xff]
    %v5684 = vld [vmem:[%s4 + $0x30] sm:$0xff]
    %v5685 = vld [vmem:[%s4 + $0x38] sm:$0xff]
    %v5687 = vsel %vm1663, %v5674, 0
    %v5690 = vsel %vm1663, %v5675, 0
    %v5693 = vsel %vm1663, %v5676, 0
    %v5696 = vsel %vm1663, %v5677, 0
    %5698 = vmatprep.subr.mxu0 0.0
    %5699 = vmatpush1.msra.mxu0 %v5678
    %5700 = vmatprep.subr.mxu0 0.0
    %5701 = vmatpush1.msra.mxu0 %v5679
    %5702 = vmatprep.subr.mxu0 0.0
    %5703 = vmatpush1.msra.mxu0 %v5680
    %5704 = vmatprep.subr.mxu0 0.0
    %5705 = vmatpush1.msra.mxu0 %v5681
    %5706 = vmatprep.subr.mxu0 0.0
    %5707 = vmatpush1.msra.mxu0 %v5682
    %5708 = vmatprep.subr.mxu0 0.0
    %5709 = vmatpush1.msra.mxu0 %v5683
    %5710 = vmatprep.subr.mxu0 0.0
    %5711 = vmatpush1.msra.mxu0 %v5684
    %5712 = vmatprep.subr.mxu0 0.0
    %5713 = vmatpush1.msra.mxu0 %v5685
    %5714 = vmatprep.subr.mxu0 0.0
    %5715 = vmatpush1.msra.mxu0 0.0
    %5716 = vmatprep.subr.mxu0 0.0
    %5717 = vmatpush1.msra.mxu0 0.0
    %5718 = vmatprep.subr.mxu0 0.0
    %5719 = vmatpush1.msra.mxu0 0.0
    %5720 = vmatprep.subr.mxu0 0.0
    %5721 = vmatpush1.msra.mxu0 0.0
    %5722 = vmatprep.subr.mxu0 0.0
    %5723 = vmatpush1.msra.mxu0 0.0
    %5724 = vmatprep.subr.mxu0 0.0
    %5725 = vmatpush1.msra.mxu0 0.0
    %5726 = vmatprep.subr.mxu0 0.0
    %5727 = vmatpush1.msra.mxu0 0.0
    %5728 = vmatprep.subr.mxu0 0.0
    %5729 = vmatpush1.msra.mxu0 0.0
    %5730 = vmatprep.subr.mxu0 0.0
    %5731 = vmatpush1.msra.mxu0 0.0
    %5732 = vmatprep.subr.mxu0 0.0
    %5733 = vmatpush1.msra.mxu0 0.0
    %5734 = vmatprep.subr.mxu0 0.0
    %5735 = vmatpush1.msra.mxu0 0.0
    %5736 = vmatprep.subr.mxu0 0.0
    %5737 = vmatpush1.msra.mxu0 0.0
    %5738 = vmatprep.subr.mxu0 0.0
    %5739 = vmatpush1.msra.mxu0 0.0
    %5740 = vmatprep.subr.mxu0 0.0
    %5741 = vmatpush1.msra.mxu0 0.0
    %5742 = vmatprep.subr.mxu0 0.0
    %5743 = vmatpush1.msra.mxu0 0.0
    %5744 = vmatprep.subr.mxu0 0.0
    %5745 = vmatpush1.msra.mxu0 0.0
    %5746 = vmatprep.subr.mxu0 0.0
    %5747 = vmatpush1.msra.mxu0 0.0
    %5748 = vmatprep.subr.mxu0 0.0
    %5749 = vmatpush1.msra.mxu0 0.0
    %5750 = vmatprep.subr.mxu0 0.0
    %5751 = vmatpush1.msra.mxu0 0.0
    %5752 = vmatprep.subr.mxu0 0.0
    %5753 = vmatpush1.msra.mxu0 0.0
    %5754 = vmatprep.subr.mxu0 0.0
    %5755 = vmatpush1.msra.mxu0 0.0
    %5756 = vmatprep.subr.mxu0 0.0
    %5757 = vmatpush1.msra.mxu0 0.0
    %5758 = vmatprep.subr.mxu0 0.0
    %5759 = vmatpush1.msra.mxu0 0.0
    %5760 = vmatprep.subr.mxu0 0.0
    %5761 = vmatpush1.msra.mxu0 0.0
    %5762 = vmatprep.mubr.f32.mxu0 0.0
    %5763 = vmatmul.mubr.f32.gmra.mrb[0].mxu0 %v5687
    %v5764 = vpop.f32.mrb[0].mxu0
    %v5765 = vadd.f32 %v1678, %v5764
    %v5766 = vpop.f32.mrb[0].mxu0
    %5767 = vmatprep.mubr.f32.mxu0 0.0
    %5768 = vmatmul.mubr.f32.gmra.mrb[0].mxu0 %v5690
    %v5769 = vpop.f32.mrb[0].mxu0
    %v5770 = vadd.f32 %v1678, %v5769
    %v5771 = vpop.f32.mrb[0].mxu0
    %5772 = vmatprep.mubr.f32.mxu0 0.0
    %5773 = vmatmul.mubr.f32.gmra.mrb[0].mxu0 %v5693
    %v5774 = vpop.f32.mrb[0].mxu0
    %v5775 = vadd.f32 %v1678, %v5774
    %v5776 = vpop.f32.mrb[0].mxu0
    %5777 = vmatprep.mubr.f32.mxu0 0.0
    %5778 = vmatmul.mubr.f32.gmra.mrb[0].mxu0 %v5696
    %v5779 = vpop.f32.mrb[0].mxu0
    %v5780 = vadd.f32 %v1678, %v5779
    %v5781 = vpop.f32.mrb[0].mxu0
    %5782 = vdwg.mxu0
    %v5783 = vmul.f32 %v5765, 0.5
    %v5784 = vmul.f32 %v5770, 0.5
    %v5785 = vmul.f32 %v5775, 0.5
    %v5786 = vmul.f32 %v5780, 0.5
    %v5787 = vmul.f32 %v5765, 0.70710677
    %v5788 = vmul.f32 %v5770, 0.70710677
    %v5789 = vmul.f32 %v5775, 0.70710677
    %v5790 = vmul.f32 %v5780, 0.70710677
    %vm5791 = vcmp.lt.f32.partialorder %v5787, 0.0
    %vm5792 = vcmp.lt.f32.partialorder %v5788, 0.0
    %vm5793 = vcmp.lt.f32.partialorder %v5789, 0.0
    %vm5794 = vcmp.lt.f32.partialorder %v5790, 0.0
    %v5795 = vsel %vm5791, -1.0, 1.0
    %v5796 = vsel %vm5792, -1.0, 1.0
    %v5797 = vsel %vm5793, -1.0, 1.0
    %v5798 = vsel %vm5794, -1.0, 1.0
    %v5799 = vand.u32 2147483647, %v5787
    %v5800 = vand.u32 2147483647, %v5788
    %v5801 = vand.u32 2147483647, %v5789
    %v5802 = vand.u32 2147483647, %v5790
    %v5803 = vmul.f32 %v5799, 0.3275911
    %v5804 = vmul.f32 %v5800, 0.3275911
    %v5805 = vmul.f32 %v5801, 0.3275911
    %v5806 = vmul.f32 %v5802, 0.3275911
    %v5807 = vadd.f32 %v5803, 1.0
    %v5808 = vadd.f32 %v5804, 1.0
    %v5809 = vadd.f32 %v5805, 1.0
    %v5810 = vadd.f32 %v5806, 1.0
    %v5811 = vrcp.pop %v5807
    %v5812 = vmul.f32 1.0, %v5811
    %v5813 = vrcp.pop %v5808
    %v5814 = vmul.f32 1.0, %v5813
    %v5815 = vrcp.pop %v5809
    %v5816 = vmul.f32 1.0, %v5815
    %v5817 = vrcp.pop %v5810
    %v5818 = vmul.f32 1.0, %v5817
    %v5819 = vmul.f32 %v5812, 1.0614054
    %v5820 = vmul.f32 %v5814, 1.0614054
    %v5821 = vmul.f32 %v5816, 1.0614054
    %v5822 = vmul.f32 %v5818, 1.0614054
    %v5823 = vadd.f32 %v5819, -1.4531521
    %v5824 = vadd.f32 %v5820, -1.4531521
    %v5825 = vadd.f32 %v5821, -1.4531521
    %v5826 = vadd.f32 %v5822, -1.4531521
    %v5827 = vmul.f32 %v5812, %v5823
    %v5828 = vmul.f32 %v5814, %v5824
    %v5829 = vmul.f32 %v5816, %v5825
    %v5830 = vmul.f32 %v5818, %v5826
    %v5831 = vadd.f32 %v5827, 1.4214138
    %v5832 = vadd.f32 %v5828, 1.4214138
    %v5833 = vadd.f32 %v5829, 1.4214138
    %v5834 = vadd.f32 %v5830, 1.4214138
    %v5835 = vmul.f32 %v5812, %v5831
    %v5836 = vmul.f32 %v5814, %v5832
    %v5837 = vmul.f32 %v5816, %v5833
    %v5838 = vmul.f32 %v5818, %v5834
    %v5839 = vadd.f32 %v5835, -0.28449672
    %v5840 = vadd.f32 %v5836, -0.28449672
    %v5841 = vadd.f32 %v5837, -0.28449672
    %v5842 = vadd.f32 %v5838, -0.28449672
    %v5843 = vmul.f32 %v5812, %v5839
    %v5844 = vmul.f32 %v5814, %v5840
    %v5845 = vmul.f32 %v5816, %v5841
    %v5846 = vmul.f32 %v5818, %v5842
    %v5847 = vadd.f32 %v5843, 0.2548296
    %v5848 = vadd.f32 %v5844, 0.2548296
    %v5849 = vadd.f32 %v5845, 0.2548296
    %v5850 = vadd.f32 %v5846, 0.2548296
    %v5851 = vmul.f32 %v5812, %v5847
    %v5852 = vmul.f32 %v5814, %v5848
    %v5853 = vmul.f32 %v5816, %v5849
    %v5854 = vmul.f32 %v5818, %v5850
    %v5855 = vmul.f32 %v5799, %v5799
    %v5856 = vmul.f32 %v5800, %v5800
    %v5857 = vmul.f32 %v5801, %v5801
    %v5858 = vmul.f32 %v5802, %v5802
    %v5859 = vsub.f32 0.0, %v5855
    %v5860 = vsub.f32 0.0, %v5856
    %v5861 = vsub.f32 0.0, %v5857
    %v5862 = vsub.f32 0.0, %v5858
    %v5863 = vmul.f32 %v5859, 1.442695
    %v5864 = vpow.pop %v5863
    %v5865 = vmul.f32 %v5860, 1.442695
    %v5866 = vpow.pop %v5865
    %v5867 = vmul.f32 %v5861, 1.442695
    %v5868 = vpow.pop %v5867
    %v5869 = vmul.f32 %v5862, 1.442695
    %v5870 = vpow.pop %v5869
    %v5871 = vmul.f32 %v5851, %v5864
    %v5872 = vmul.f32 %v5852, %v5866
    %v5873 = vmul.f32 %v5853, %v5868
    %v5874 = vmul.f32 %v5854, %v5870
    %v5875 = vsub.f32 1.0, %v5871
    %v5876 = vsub.f32 1.0, %v5872
    %v5877 = vsub.f32 1.0, %v5873
    %v5878 = vsub.f32 1.0, %v5874
    %v5879 = vmul.f32 %v5795, %v5875
    %v5880 = vmul.f32 %v5796, %v5876
    %v5881 = vmul.f32 %v5797, %v5877
    %v5882 = vmul.f32 %v5798, %v5878
    %v5883 = vadd.f32 %v5879, 1.0
    %v5884 = vadd.f32 %v5880, 1.0
    %v5885 = vadd.f32 %v5881, 1.0
    %v5886 = vadd.f32 %v5882, 1.0
    %v5887 = vmul.f32 %v5783, %v5883
    %v5888 = vmul.f32 %v5784, %v5884
    %v5889 = vmul.f32 %v5785, %v5885
    %v5890 = vmul.f32 %v5786, %v5886
    %v5891 = vld [vmem:[%s5] sm:$0xff]
    %v5892 = vld [vmem:[%s5 + $0x8] sm:$0xff]
    %v5893 = vld [vmem:[%s5 + $0x10] sm:$0xff]
    %v5894 = vld [vmem:[%s5 + $0x18] sm:$0xff]
    %v5895 = vld [vmem:[%s5 + $0x20] sm:$0xff]
    %v5896 = vld [vmem:[%s5 + $0x28] sm:$0xff]
    %v5897 = vld [vmem:[%s5 + $0x30] sm:$0xff]
    %v5898 = vld [vmem:[%s5 + $0x38] sm:$0xff]
    %v5899 = vlaneseq
    %v5900 = vshrl.u32 %v5899, 7
    %v5901 = vsub.s32 5, %v5900
    %v5902 = vrot.slane %v38, %v5901
    %v5904 = vsel %vm1663, %v5887, 0
    %v5907 = vsel %vm1663, %v5888, 0
    %v5910 = vsel %vm1663, %v5889, 0
    %v5913 = vsel %vm1663, %v5890, 0
    %5915 = vmatprep.subr.mxu0 0.0
    %5916 = vmatpush1.msra.mxu0 %v5891
    %5917 = vmatprep.subr.mxu0 0.0
    %5918 = vmatpush1.msra.mxu0 %v5892
    %5919 = vmatprep.subr.mxu0 0.0
    %5920 = vmatpush1.msra.mxu0 %v5893
    %5921 = vmatprep.subr.mxu0 0.0
    %5922 = vmatpush1.msra.mxu0 %v5894
    %5923 = vmatprep.subr.mxu0 0.0
    %5924 = vmatpush1.msra.mxu0 %v5895
    %5925 = vmatprep.subr.mxu0 0.0
    %5926 = vmatpush1.msra.mxu0 %v5896
    %5927 = vmatprep.subr.mxu0 0.0
    %5928 = vmatpush1.msra.mxu0 %v5897
    %5929 = vmatprep.subr.mxu0 0.0
    %5930 = vmatpush1.msra.mxu0 %v5898
    %5931 = vmatprep.subr.mxu0 0.0
    %5932 = vmatpush1.msra.mxu0 0.0
    %5933 = vmatprep.subr.mxu0 0.0
    %5934 = vmatpush1.msra.mxu0 0.0
    %5935 = vmatprep.subr.mxu0 0.0
    %5936 = vmatpush1.msra.mxu0 0.0
    %5937 = vmatprep.subr.mxu0 0.0
    %5938 = vmatpush1.msra.mxu0 0.0
    %5939 = vmatprep.subr.mxu0 0.0
    %5940 = vmatpush1.msra.mxu0 0.0
    %5941 = vmatprep.subr.mxu0 0.0
    %5942 = vmatpush1.msra.mxu0 0.0
    %5943 = vmatprep.subr.mxu0 0.0
    %5944 = vmatpush1.msra.mxu0 0.0
    %5945 = vmatprep.subr.mxu0 0.0
    %5946 = vmatpush1.msra.mxu0 0.0
    %5947 = vmatprep.subr.mxu0 0.0
    %5948 = vmatpush1.msra.mxu0 0.0
    %5949 = vmatprep.subr.mxu0 0.0
    %5950 = vmatpush1.msra.mxu0 0.0
    %5951 = vmatprep.subr.mxu0 0.0
    %5952 = vmatpush1.msra.mxu0 0.0
    %5953 = vmatprep.subr.mxu0 0.0
    %5954 = vmatpush1.msra.mxu0 0.0
    %5955 = vmatprep.subr.mxu0 0.0
    %5956 = vmatpush1.msra.mxu0 0.0
    %5957 = vmatprep.subr.mxu0 0.0
    %5958 = vmatpush1.msra.mxu0 0.0
    %5959 = vmatprep.subr.mxu0 0.0
    %5960 = vmatpush1.msra.mxu0 0.0
    %5961 = vmatprep.subr.mxu0 0.0
    %5962 = vmatpush1.msra.mxu0 0.0
    %5963 = vmatprep.subr.mxu0 0.0
    %5964 = vmatpush1.msra.mxu0 0.0
    %5965 = vmatprep.subr.mxu0 0.0
    %5966 = vmatpush1.msra.mxu0 0.0
    %5967 = vmatprep.subr.mxu0 0.0
    %5968 = vmatpush1.msra.mxu0 0.0
    %5969 = vmatprep.subr.mxu0 0.0
    %5970 = vmatpush1.msra.mxu0 0.0
    %5971 = vmatprep.subr.mxu0 0.0
    %5972 = vmatpush1.msra.mxu0 0.0
    %5973 = vmatprep.subr.mxu0 0.0
    %5974 = vmatpush1.msra.mxu0 0.0
    %5975 = vmatprep.subr.mxu0 0.0
    %5976 = vmatpush1.msra.mxu0 0.0
    %5977 = vmatprep.subr.mxu0 0.0
    %5978 = vmatpush1.msra.mxu0 0.0
    %5979 = vmatprep.mubr.f32.mxu0 0.0
    %5980 = vmatmul.mubr.f32.gmra.mrb[0].mxu0 %v5904
    %v5981 = vpop.f32.mrb[0].mxu0
    %v5982 = vadd.f32 %v5902, %v5981
    %v5983 = vpop.f32.mrb[0].mxu0
    %5984 = vmatprep.mubr.f32.mxu0 0.0
    %5985 = vmatmul.mubr.f32.gmra.mrb[0].mxu0 %v5907
    %v5986 = vpop.f32.mrb[0].mxu0
    %v5987 = vadd.f32 %v5902, %v5986
    %v5988 = vpop.f32.mrb[0].mxu0
    %5989 = vmatprep.mubr.f32.mxu0 0.0
    %5990 = vmatmul.mubr.f32.gmra.mrb[0].mxu0 %v5910
    %v5991 = vpop.f32.mrb[0].mxu0
    %v5992 = vadd.f32 %v5902, %v5991
    %v5993 = vpop.f32.mrb[0].mxu0
    %5994 = vmatprep.mubr.f32.mxu0 0.0
    %5995 = vmatmul.mubr.f32.gmra.mrb[0].mxu0 %v5913
    %v5996 = vpop.f32.mrb[0].mxu0
    %v5997 = vadd.f32 %v5902, %v5996
    %v5998 = vpop.f32.mrb[0].mxu0
    %5999 = vdwg.mxu0
    %v6000 = vrot.slane %v5982, 4
    %v6001 = vmax.f32 %v5982, %v6000
    %v6002 = vrot.slane %v6001, 2
    %v6003 = vmax.f32 %v6001, %v6002
    %v6004 = vrot.slane %v6003, 1
    %v6005 = vmax.f32 %v6003, %v6004
    %v6006 = vrot.slane %v5987, 4
    %v6007 = vmax.f32 %v5987, %v6006
    %v6008 = vrot.slane %v6007, 2
    %v6009 = vmax.f32 %v6007, %v6008
    %v6010 = vrot.slane %v6009, 1
    %v6011 = vmax.f32 %v6009, %v6010
    %v6012 = vrot.slane %v5992, 4
    %v6013 = vmax.f32 %v5992, %v6012
    %v6014 = vrot.slane %v6013, 2
    %v6015 = vmax.f32 %v6013, %v6014
    %v6016 = vrot.slane %v6015, 1
    %v6017 = vmax.f32 %v6015, %v6016
    %v6018 = vrot.slane %v5997, 4
    %v6019 = vmax.f32 %v5997, %v6018
    %v6020 = vrot.slane %v6019, 2
    %v6021 = vmax.f32 %v6019, %v6020
    %v6022 = vrot.slane %v6021, 1
    %v6023 = vmax.f32 %v6021, %v6022
    %v6028 = vsel %vm2781, %v6011, %v6005
    %v6029 = vsel %vm2784, %v6017, %v6028
    %v6030 = vsel %vm2787, %v6023, %v6029
    %6032 = vst [vmem:[%s11] sm:$0xf] %v6030
    %v6033 = vld [vmem:[%s1] sm:$0xf]
    %v6035 = vrot.slane %v6033, 1
    %v6036 = vrot.slane %v6033, 2
    %v6037 = vrot.slane %v6033, 3
    %v6042 = vadd.f32 %v6005, %v6033
    %v6043 = vadd.f32 %v6011, %v6035
    %v6044 = vadd.f32 %v6017, %v6036
    %v6045 = vadd.f32 %v6023, %v6037
    %6050 = vrot.lane.b32.xlu0 %v6042, 127
    %v6051 = vpop.permute.xlu0 %6050
    %6052 = vrot.lane.b32.xlu0 %v6043, 127
    %v6053 = vpop.permute.xlu0 %6052
    %6054 = vrot.lane.b32.xlu0 %v6044, 127
    %v6055 = vpop.permute.xlu0 %6054
    %6056 = vrot.lane.b32.xlu0 %v6045, 127
    %v6057 = vpop.permute.xlu0 %6056
    %vm6062 = vcmp.ge.f32.partialorder %v6042, %v6051
    %vm6063 = vcmp.ge.f32.partialorder %v6043, %v6053
    %vm6064 = vcmp.ge.f32.partialorder %v6044, %v6055
    %vm6065 = vcmp.ge.f32.partialorder %v6045, %v6057
    %v6066 = vsel %vm6062, 1, 0
    %v6067 = vsel %vm6063, 1, 0
    %v6068 = vsel %vm6064, 1, 0
    %v6069 = vsel %vm6065, 1, 0
    %v6070 = vcvt.s32.f32 %v6066
    %v6071 = vcvt.s32.f32 %v6067
    %v6072 = vcvt.s32.f32 %v6068
    %v6073 = vcvt.s32.f32 %v6069
    %6075 = vset.pattern.permute.xlu0 0
    %6076 = vperm.xlu0 %6075, %v6070
    %v6077 = vpop.permute.xlu0 %6076
    %6080 = vset.pattern.permute.xlu0 0
    %6081 = vperm.xlu0 %6080, %v6071
    %v6082 = vpop.permute.xlu0 %6081
    %6085 = vset.pattern.permute.xlu0 0
    %6086 = vperm.xlu0 %6085, %v6072
    %v6087 = vpop.permute.xlu0 %6086
    %6090 = vset.pattern.permute.xlu0 0
    %6091 = vperm.xlu0 %6090, %v6073
    %v6092 = vpop.permute.xlu0 %6091
    %v6094 = vlaneseq
    %v6095 = vshrl.u32 %v6094, 7
    %v6096 = vsub.s32 6, %v6095
    %v6097 = vrot.slane %v39, %v6096
    %v6098 = vmul.f32 %v6077, %v6097
    %v6099 = vmul.f32 %v6082, %v6097
    %v6100 = vmul.f32 %v6087, %v6097
    %v6101 = vmul.f32 %v6092, %v6097
    %v6102 = vsub.f32 1.0, %v6070
    %v6103 = vsub.f32 1.0, %v6071
    %v6104 = vsub.f32 1.0, %v6072
    %v6105 = vsub.f32 1.0, %v6073
    %6107 = vset.pattern.permute.xlu0 0
    %6108 = vperm.xlu0 %6107, %v6102
    %v6109 = vpop.permute.xlu0 %6108
    %6112 = vset.pattern.permute.xlu0 0
    %6113 = vperm.xlu0 %6112, %v6103
    %v6114 = vpop.permute.xlu0 %6113
    %6117 = vset.pattern.permute.xlu0 0
    %6118 = vperm.xlu0 %6117, %v6104
    %v6119 = vpop.permute.xlu0 %6118
    %6122 = vset.pattern.permute.xlu0 0
    %6123 = vperm.xlu0 %6122, %v6105
    %v6124 = vpop.permute.xlu0 %6123
    %6127 = vrot.lane.b32.xlu0 %v6097, 96
    %v6128 = vpop.permute.xlu0 %6127
    %v6130 = vmul.f32 %v6109, %v6128
    %v6131 = vmul.f32 %v6114, %v6128
    %v6132 = vmul.f32 %v6119, %v6128
    %v6133 = vmul.f32 %v6124, %v6128
    %v6134 = vadd.f32 %v6098, %v6130
    %v6135 = vadd.f32 %v6099, %v6131
    %v6136 = vadd.f32 %v6100, %v6132
    %v6137 = vadd.f32 %v6101, %v6133
    %6138 = vrot.lane.b32.xlu0 %v1678, 32
    %v6139 = vpop.permute.xlu0 %6138
    %v6141 = vadd.f32 %v6134, %v6139
    %v6142 = vadd.f32 %v6135, %v6139
    %v6143 = vadd.f32 %v6136, %v6139
    %v6144 = vadd.f32 %v6137, %v6139
    %v6149 = vrot.slane %v6142, 7
    %v6150 = vsel %vm2781, %v6149, %v6141
    %v6151 = vrot.slane %v6143, 6
    %v6152 = vsel %vm2784, %v6151, %v6150
    %v6153 = vrot.slane %v6144, 5
    %v6154 = vsel %vm2787, %v6153, %v6152
    %vm6156 = vcmask 257024
    %v6157 = vsel %vm6156, %v6154, 0.0
    %6158 = vadd.xlane.f32.xlu0 %v6157
    %v6159 = vpop.xlane.xlu0 %6158
    %v6160 = vrcp.pop 32.0
    %v6161 = vmul.f32 %v6159, %v6160
    %v6163 = vrot.slane %v6161, 1
    %v6164 = vrot.slane %v6161, 2
    %v6165 = vrot.slane %v6161, 3
    %v6170 = vsub.f32 %v6141, %v6161
    %v6171 = vsub.f32 %v6142, %v6163
    %v6172 = vsub.f32 %v6143, %v6164
    %v6173 = vsub.f32 %v6144, %v6165
    %v6174 = vmul.f32 %v6170, %v6170
    %v6175 = vmul.f32 %v6171, %v6171
    %v6176 = vmul.f32 %v6172, %v6172
    %v6177 = vmul.f32 %v6173, %v6173
    %v6182 = vrot.slane %v6175, 7
    %v6183 = vsel %vm2781, %v6182, %v6174
    %v6184 = vrot.slane %v6176, 6
    %v6185 = vsel %vm2784, %v6184, %v6183
    %v6186 = vrot.slane %v6177, 5
    %v6187 = vsel %vm2787, %v6186, %v6185
    %v6189 = vsel %vm6156, %v6187, 0.0
    %6190 = vadd.xlane.f32.xlu0 %v6189
    %v6191 = vpop.xlane.xlu0 %6190
    %v6192 = vmul.f32 %v6191, %v6160
    %v6193 = vadd.f32 %v6192, 1e-05
    %v6194 = vrsqrt.pop %v6193
    %v6196 = vrot.slane %v6194, 1
    %v6197 = vrot.slane %v6194, 2
    %v6198 = vrot.slane %v6194, 3
    %v6203 = vmul.f32 %v6170, %v6194
    %v6204 = vmul.f32 %v6171, %v6196
    %v6205 = vmul.f32 %v6172, %v6197
    %v6206 = vmul.f32 %v6173, %v6198
    %v6207 = vlaneseq
    %v6208 = vshrl.u32 %v6207, 7
    %v6209 = vsub.s32 4, %v6208
    %v6210 = vrot.slane %v39, %v6209
    %v6211 = vmul.f32 %v6203, %v6210
    %v6212 = vmul.f32 %v6204, %v6210
    %v6213 = vmul.f32 %v6205, %v6210
    %v6214 = vmul.f32 %v6206, %v6210
    %6216 = vrot.lane.b32.xlu0 %v6210, 96
    %v6217 = vpop.permute.xlu0 %6216
    %v6219 = vadd.f32 %v6211, %v6217
    %v6220 = vadd.f32 %v6212, %v6217
    %v6221 = vadd.f32 %v6213, %v6217
    %v6222 = vadd.f32 %v6214, %v6217
    %v6223 = vld [vmem:[%s6] sm:$0xff]
    %v6224 = vld [vmem:[%s6 + $0x8] sm:$0xff]
    %v6225 = vld [vmem:[%s6 + $0x10] sm:$0xff]
    %v6226 = vld [vmem:[%s6 + $0x18] sm:$0xff]
    %v6227 = vld [vmem:[%s6 + $0x20] sm:$0xff]
    %v6228 = vld [vmem:[%s6 + $0x28] sm:$0xff]
    %v6229 = vld [vmem:[%s6 + $0x30] sm:$0xff]
    %v6230 = vld [vmem:[%s6 + $0x38] sm:$0xff]
    %v6231 = vld [vmem:[%s6 + $0x40] sm:$0xff]
    %v6232 = vld [vmem:[%s6 + $0x48] sm:$0xff]
    %v6233 = vld [vmem:[%s6 + $0x50] sm:$0xff]
    %v6234 = vld [vmem:[%s6 + $0x58] sm:$0xff]
    %v6235 = vld [vmem:[%s6 + $0x60] sm:$0xff]
    %v6236 = vld [vmem:[%s6 + $0x68] sm:$0xff]
    %v6237 = vld [vmem:[%s6 + $0x70] sm:$0xff]
    %v6238 = vld [vmem:[%s6 + $0x78] sm:$0xff]
    %6239 = vmatprep.subr.mxu0 0.0
    %6240 = vmatpush1.msra.mxu0 %v6231
    %6241 = vmatprep.subr.mxu0 0.0
    %6242 = vmatpush1.msra.mxu0 %v6232
    %6243 = vmatprep.subr.mxu0 0.0
    %6244 = vmatpush1.msra.mxu0 %v6233
    %6245 = vmatprep.subr.mxu0 0.0
    %6246 = vmatpush1.msra.mxu0 %v6234
    %6247 = vmatprep.subr.mxu0 0.0
    %6248 = vmatpush1.msra.mxu0 %v6235
    %6249 = vmatprep.subr.mxu0 0.0
    %6250 = vmatpush1.msra.mxu0 %v6236
    %6251 = vmatprep.subr.mxu0 0.0
    %6252 = vmatpush1.msra.mxu0 %v6237
    %6253 = vmatprep.subr.mxu0 0.0
    %6254 = vmatpush1.msra.mxu0 %v6238
    %6255 = vmatprep.subr.mxu0 0.0
    %6256 = vmatpush1.msra.mxu0 0.0
    %6257 = vmatprep.subr.mxu0 0.0
    %6258 = vmatpush1.msra.mxu0 0.0
    %6259 = vmatprep.subr.mxu0 0.0
    %6260 = vmatpush1.msra.mxu0 0.0
    %6261 = vmatprep.subr.mxu0 0.0
    %6262 = vmatpush1.msra.mxu0 0.0
    %6263 = vmatprep.subr.mxu0 0.0
    %6264 = vmatpush1.msra.mxu0 0.0
    %6265 = vmatprep.subr.mxu0 0.0
    %6266 = vmatpush1.msra.mxu0 0.0
    %6267 = vmatprep.subr.mxu0 0.0
    %6268 = vmatpush1.msra.mxu0 0.0
    %6269 = vmatprep.subr.mxu0 0.0
    %6270 = vmatpush1.msra.mxu0 0.0
    %6271 = vmatprep.subr.mxu0 0.0
    %6272 = vmatpush1.msra.mxu0 0.0
    %6273 = vmatprep.subr.mxu0 0.0
    %6274 = vmatpush1.msra.mxu0 0.0
    %6275 = vmatprep.subr.mxu0 0.0
    %6276 = vmatpush1.msra.mxu0 0.0
    %6277 = vmatprep.subr.mxu0 0.0
    %6278 = vmatpush1.msra.mxu0 0.0
    %6279 = vmatprep.subr.mxu0 0.0
    %6280 = vmatpush1.msra.mxu0 0.0
    %6281 = vmatprep.subr.mxu0 0.0
    %6282 = vmatpush1.msra.mxu0 0.0
    %6283 = vmatprep.subr.mxu0 0.0
    %6284 = vmatpush1.msra.mxu0 0.0
    %6285 = vmatprep.subr.mxu0 0.0
    %6286 = vmatpush1.msra.mxu0 0.0
    %6287 = vmatprep.subr.mxu0 0.0
    %6288 = vmatpush1.msra.mxu0 0.0
    %6289 = vmatprep.subr.mxu0 0.0
    %6290 = vmatpush1.msra.mxu0 0.0
    %6291 = vmatprep.subr.mxu0 0.0
    %6292 = vmatpush1.msra.mxu0 0.0
    %6293 = vmatprep.subr.mxu0 0.0
    %6294 = vmatpush1.msra.mxu0 0.0
    %6295 = vmatprep.subr.mxu0 0.0
    %6296 = vmatpush1.msra.mxu0 0.0
    %6297 = vmatprep.subr.mxu0 0.0
    %6298 = vmatpush1.msra.mxu0 0.0
    %6299 = vmatprep.subr.mxu0 0.0
    %6300 = vmatpush1.msra.mxu0 0.0
    %6301 = vmatprep.subr.mxu0 0.0
    %6302 = vmatpush1.msra.mxu0 0.0
    %6303 = vmatprep.mubr.f32.mxu0 0.0
    %6304 = vmatmul.mubr.f32.gmra.mrb[0].mxu0 %v5687
    %v6305 = vpop.f32.mrb[0].mxu0
    %v6306 = vadd.f32 0.0, %v6305
    %v6307 = vpop.f32.mrb[0].mxu0
    %6308 = vmatprep.mubr.f32.mxu0 0.0
    %6309 = vmatmul.mubr.f32.gmra.mrb[0].mxu0 %v5690
    %v6310 = vpop.f32.mrb[0].mxu0
    %v6311 = vadd.f32 0.0, %v6310
    %v6312 = vpop.f32.mrb[0].mxu0
    %6313 = vmatprep.mubr.f32.mxu0 0.0
    %6314 = vmatmul.mubr.f32.gmra.mrb[0].mxu0 %v5693
    %v6315 = vpop.f32.mrb[0].mxu0
    %v6316 = vadd.f32 0.0, %v6315
    %v6317 = vpop.f32.mrb[0].mxu0
    %6318 = vmatprep.mubr.f32.mxu0 0.0
    %6319 = vmatmul.mubr.f32.gmra.mrb[0].mxu0 %v5696
    %v6320 = vpop.f32.mrb[0].mxu0
    %v6321 = vadd.f32 0.0, %v6320
    %v6322 = vpop.f32.mrb[0].mxu0
    %6323 = vdwg.mxu0
    %v6325 = vsel %vm1663, %v2425, 0
    %v6328 = vsel %vm1663, %v2426, 0
    %v6331 = vsel %vm1663, %v2427, 0
    %v6334 = vsel %vm1663, %v2428, 0
    %6336 = vmatprep.subr.mxu0 0.0
    %6337 = vmatpush1.msra.mxu0 %v6223
    %6338 = vmatprep.subr.mxu0 0.0
    %6339 = vmatpush1.msra.mxu0 %v6224
    %6340 = vmatprep.subr.mxu0 0.0
    %6341 = vmatpush1.msra.mxu0 %v6225
    %6342 = vmatprep.subr.mxu0 0.0
    %6343 = vmatpush1.msra.mxu0 %v6226
    %6344 = vmatprep.subr.mxu0 0.0
    %6345 = vmatpush1.msra.mxu0 %v6227
    %6346 = vmatprep.subr.mxu0 0.0
    %6347 = vmatpush1.msra.mxu0 %v6228
    %6348 = vmatprep.subr.mxu0 0.0
    %6349 = vmatpush1.msra.mxu0 %v6229
    %6350 = vmatprep.subr.mxu0 0.0
    %6351 = vmatpush1.msra.mxu0 %v6230
    %6352 = vmatprep.subr.mxu0 0.0
    %6353 = vmatpush1.msra.mxu0 0.0
    %6354 = vmatprep.subr.mxu0 0.0
    %6355 = vmatpush1.msra.mxu0 0.0
    %6356 = vmatprep.subr.mxu0 0.0
    %6357 = vmatpush1.msra.mxu0 0.0
    %6358 = vmatprep.subr.mxu0 0.0
    %6359 = vmatpush1.msra.mxu0 0.0
    %6360 = vmatprep.subr.mxu0 0.0
    %6361 = vmatpush1.msra.mxu0 0.0
    %6362 = vmatprep.subr.mxu0 0.0
    %6363 = vmatpush1.msra.mxu0 0.0
    %6364 = vmatprep.subr.mxu0 0.0
    %6365 = vmatpush1.msra.mxu0 0.0
    %6366 = vmatprep.subr.mxu0 0.0
    %6367 = vmatpush1.msra.mxu0 0.0
    %6368 = vmatprep.subr.mxu0 0.0
    %6369 = vmatpush1.msra.mxu0 0.0
    %6370 = vmatprep.subr.mxu0 0.0
    %6371 = vmatpush1.msra.mxu0 0.0
    %6372 = vmatprep.subr.mxu0 0.0
    %6373 = vmatpush1.msra.mxu0 0.0
    %6374 = vmatprep.subr.mxu0 0.0
    %6375 = vmatpush1.msra.mxu0 0.0
    %6376 = vmatprep.subr.mxu0 0.0
    %6377 = vmatpush1.msra.mxu0 0.0
    %6378 = vmatprep.subr.mxu0 0.0
    %6379 = vmatpush1.msra.mxu0 0.0
    %6380 = vmatprep.subr.mxu0 0.0
    %6381 = vmatpush1.msra.mxu0 0.0
    %6382 = vmatprep.subr.mxu0 0.0
    %6383 = vmatpush1.msra.mxu0 0.0
    %6384 = vmatprep.subr.mxu0 0.0
    %6385 = vmatpush1.msra.mxu0 0.0
    %6386 = vmatprep.subr.mxu0 0.0
    %6387 = vmatpush1.msra.mxu0 0.0
    %6388 = vmatprep.subr.mxu0 0.0
    %6389 = vmatpush1.msra.mxu0 0.0
    %6390 = vmatprep.subr.mxu0 0.0
    %6391 = vmatpush1.msra.mxu0 0.0
    %6392 = vmatprep.subr.mxu0 0.0
    %6393 = vmatpush1.msra.mxu0 0.0
    %6394 = vmatprep.subr.mxu0 0.0
    %6395 = vmatpush1.msra.mxu0 0.0
    %6396 = vmatprep.subr.mxu0 0.0
    %6397 = vmatpush1.msra.mxu0 0.0
    %6398 = vmatprep.subr.mxu0 0.0
    %6399 = vmatpush1.msra.mxu0 0.0
    %6400 = vmatprep.mubr.f32.mxu0 0.0
    %6401 = vmatmul.mubr.f32.gmra.mrb[0].mxu0 %v6325
    %v6402 = vpop.f32.mrb[0].mxu0
    %v6403 = vadd.f32 %v6306, %v6402
    %v6404 = vpop.f32.mrb[0].mxu0
    %6405 = vmatprep.mubr.f32.mxu0 0.0
    %6406 = vmatmul.mubr.f32.gmra.mrb[0].mxu0 %v6328
    %v6407 = vpop.f32.mrb[0].mxu0
    %v6408 = vadd.f32 %v6311, %v6407
    %v6409 = vpop.f32.mrb[0].mxu0
    %6410 = vmatprep.mubr.f32.mxu0 0.0
    %6411 = vmatmul.mubr.f32.gmra.mrb[0].mxu0 %v6331
    %v6412 = vpop.f32.mrb[0].mxu0
    %v6413 = vadd.f32 %v6316, %v6412
    %v6414 = vpop.f32.mrb[0].mxu0
    %6415 = vmatprep.mubr.f32.mxu0 0.0
    %6416 = vmatmul.mubr.f32.gmra.mrb[0].mxu0 %v6334
    %v6417 = vpop.f32.mrb[0].mxu0
    %v6418 = vadd.f32 %v6321, %v6417
    %v6419 = vpop.f32.mrb[0].mxu0
    %6420 = vdwg.mxu0
    %v6421 = vlaneseq
    %v6422 = vshrl.u32 %v6421, 7
    %v6423 = vsub.s32 5, %v6422
    %v6424 = vrot.slane %v39, %v6423
    %v6425 = vadd.f32 %v6403, %v6424
    %v6426 = vadd.f32 %v6408, %v6424
    %v6427 = vadd.f32 %v6413, %v6424
    %v6428 = vadd.f32 %v6418, %v6424
    %v6429 = vmul.f32 %v6425, 0.5
    %v6430 = vmul.f32 %v6426, 0.5
    %v6431 = vmul.f32 %v6425, 0.70710677
    %v6432 = vmul.f32 %v6426, 0.70710677
    %vm6433 = vcmp.lt.f32.partialorder %v6431, 0.0
    %vm6434 = vcmp.lt.f32.partialorder %v6432, 0.0
    %v6435 = vsel %vm6433, -1.0, 1.0
    %v6436 = vsel %vm6434, -1.0, 1.0
    %v6437 = vand.u32 2147483647, %v6431
    %v6438 = vand.u32 2147483647, %v6432
    %v6439 = vmul.f32 %v6437, 0.3275911
    %v6440 = vmul.f32 %v6438, 0.3275911
    %v6441 = vadd.f32 %v6439, 1.0
    %v6442 = vadd.f32 %v6440, 1.0
    %v6443 = vrcp.pop %v6441
    %v6444 = vmul.f32 1.0, %v6443
    %v6445 = vrcp.pop %v6442
    %v6446 = vmul.f32 1.0, %v6445
    %v6447 = vmul.f32 %v6444, 1.0614054
    %v6448 = vmul.f32 %v6446, 1.0614054
    %v6449 = vadd.f32 %v6447, -1.4531521
    %v6450 = vadd.f32 %v6448, -1.4531521
    %v6451 = vmul.f32 %v6444, %v6449
    %v6452 = vmul.f32 %v6446, %v6450
    %v6453 = vadd.f32 %v6451, 1.4214138
    %v6454 = vadd.f32 %v6452, 1.4214138
    %v6455 = vmul.f32 %v6444, %v6453
    %v6456 = vmul.f32 %v6446, %v6454
    %v6457 = vadd.f32 %v6455, -0.28449672
    %v6458 = vadd.f32 %v6456, -0.28449672
    %v6459 = vmul.f32 %v6444, %v6457
    %v6460 = vmul.f32 %v6446, %v6458
    %v6461 = vadd.f32 %v6459, 0.2548296
    %v6462 = vadd.f32 %v6460, 0.2548296
    %v6463 = vmul.f32 %v6444, %v6461
    %v6464 = vmul.f32 %v6446, %v6462
    %v6465 = vmul.f32 %v6437, %v6437
    %v6466 = vmul.f32 %v6438, %v6438
    %v6467 = vsub.f32 0.0, %v6465
    %v6468 = vsub.f32 0.0, %v6466
    %v6469 = vmul.f32 %v6467, 1.442695
    %v6470 = vpow.pop %v6469
    %v6471 = vmul.f32 %v6468, 1.442695
    %v6472 = vpow.pop %v6471
    %v6473 = vmul.f32 %v6463, %v6470
    %v6474 = vmul.f32 %v6464, %v6472
    %v6475 = vsub.f32 1.0, %v6473
    %v6476 = vsub.f32 1.0, %v6474
    %v6477 = vmul.f32 %v6435, %v6475
    %v6478 = vmul.f32 %v6436, %v6476
    %v6479 = vadd.f32 %v6477, 1.0
    %v6480 = vadd.f32 %v6478, 1.0
    %v6481 = vmul.f32 %v6429, %v6479
    %v6482 = vmul.f32 %v6430, %v6480
    %v6483 = vmul.f32 %v6427, 0.5
    %v6484 = vmul.f32 %v6428, 0.5
    %v6485 = vmul.f32 %v6427, 0.70710677
    %v6486 = vmul.f32 %v6428, 0.70710677
    %vm6487 = vcmp.lt.f32.partialorder %v6485, 0.0
    %vm6488 = vcmp.lt.f32.partialorder %v6486, 0.0
    %v6489 = vsel %vm6487, -1.0, 1.0
    %v6490 = vsel %vm6488, -1.0, 1.0
    %v6491 = vand.u32 2147483647, %v6485
    %v6492 = vand.u32 2147483647, %v6486
    %v6493 = vmul.f32 %v6491, 0.3275911
    %v6494 = vmul.f32 %v6492, 0.3275911
    %v6495 = vadd.f32 %v6493, 1.0
    %v6496 = vadd.f32 %v6494, 1.0
    %v6497 = vrcp.pop %v6495
    %v6498 = vmul.f32 1.0, %v6497
    %v6499 = vrcp.pop %v6496
    %v6500 = vmul.f32 1.0, %v6499
    %v6501 = vmul.f32 %v6498, 1.0614054
    %v6502 = vmul.f32 %v6500, 1.0614054
    %v6503 = vadd.f32 %v6501, -1.4531521
    %v6504 = vadd.f32 %v6502, -1.4531521
    %v6505 = vmul.f32 %v6498, %v6503
    %v6506 = vmul.f32 %v6500, %v6504
    %v6507 = vadd.f32 %v6505, 1.4214138
    %v6508 = vadd.f32 %v6506, 1.4214138
    %v6509 = vmul.f32 %v6498, %v6507
    %v6510 = vmul.f32 %v6500, %v6508
    %v6511 = vadd.f32 %v6509, -0.28449672
    %v6512 = vadd.f32 %v6510, -0.28449672
    %v6513 = vmul.f32 %v6498, %v6511
    %v6514 = vmul.f32 %v6500, %v6512
    %v6515 = vadd.f32 %v6513, 0.2548296
    %v6516 = vadd.f32 %v6514, 0.2548296
    %v6517 = vmul.f32 %v6498, %v6515
    %v6518 = vmul.f32 %v6500, %v6516
    %v6519 = vmul.f32 %v6491, %v6491
    %v6520 = vmul.f32 %v6492, %v6492
    %v6521 = vsub.f32 0.0, %v6519
    %v6522 = vsub.f32 0.0, %v6520
    %v6523 = vmul.f32 %v6521, 1.442695
    %v6524 = vpow.pop %v6523
    %v6525 = vmul.f32 %v6522, 1.442695
    %v6526 = vpow.pop %v6525
    %v6527 = vmul.f32 %v6517, %v6524
    %v6528 = vmul.f32 %v6518, %v6526
    %v6529 = vsub.f32 1.0, %v6527
    %v6530 = vsub.f32 1.0, %v6528
    %v6531 = vmul.f32 %v6489, %v6529
    %v6532 = vmul.f32 %v6490, %v6530
    %v6533 = vadd.f32 %v6531, 1.0
    %v6534 = vadd.f32 %v6532, 1.0
    %v6535 = vmul.f32 %v6483, %v6533
    %v6536 = vmul.f32 %v6484, %v6534
    %v6538 = vrot.slane %v6481, 7
    %v6539 = vsel %vm2806, %v6538, 0
    %v6542 = vsel %vm2806, %v6535, 0
    %6544 = vmatprep.subr.mxu0 0.0
    %6545 = vmatpush1.xpose.msra.mxu0 %v6542
    %6546 = vmatprep.subr.mxu0 0.0
    %6547 = vmatpush1.xpose.msra.mxu0 0.0
    %6548 = vmatprep.subr.mxu0 0.0
    %6549 = vmatpush1.xpose.msra.mxu0 0.0
    %6550 = vmatprep.subr.mxu0 0.0
    %6551 = vmatpush1.xpose.msra.mxu0 0.0
    %6552 = vmatprep.subr.mxu0 0.0
    %6553 = vmatpush1.xpose.msra.mxu0 0.0
    %6554 = vmatprep.subr.mxu0 0.0
    %6555 = vmatpush1.xpose.msra.mxu0 0.0
    %6556 = vmatprep.subr.mxu0 0.0
    %6557 = vmatpush1.xpose.msra.mxu0 0.0
    %6558 = vmatprep.subr.mxu0 0.0
    %6559 = vmatpush1.xpose.msra.mxu0 0.0
    %6560 = vmatprep.subr.mxu0 0.0
    %6561 = vmatpush1.xpose.msra.mxu0 0.0
    %6562 = vmatprep.subr.mxu0 0.0
    %6563 = vmatpush1.xpose.msra.mxu0 0.0
    %6564 = vmatprep.subr.mxu0 0.0
    %6565 = vmatpush1.xpose.msra.mxu0 0.0
    %6566 = vmatprep.subr.mxu0 0.0
    %6567 = vmatpush1.xpose.msra.mxu0 0.0
    %6568 = vmatprep.subr.mxu0 0.0
    %6569 = vmatpush1.xpose.msra.mxu0 0.0
    %6570 = vmatprep.subr.mxu0 0.0
    %6571 = vmatpush1.xpose.msra.mxu0 0.0
    %6572 = vmatprep.subr.mxu0 0.0
    %6573 = vmatpush1.xpose.msra.mxu0 0.0
    %6574 = vmatprep.subr.mxu0 0.0
    %6575 = vmatpush1.xpose.msra.mxu0 0.0
    %6576 = vmatprep.subr.mxu0 0.0
    %6577 = vmatpush1.xpose.msra.mxu0 0.0
    %6578 = vmatprep.subr.mxu0 0.0
    %6579 = vmatpush1.xpose.msra.mxu0 0.0
    %6580 = vmatprep.subr.mxu0 0.0
    %6581 = vmatpush1.xpose.msra.mxu0 0.0
    %6582 = vmatprep.subr.mxu0 0.0
    %6583 = vmatpush1.xpose.msra.mxu0 0.0
    %6584 = vmatprep.subr.mxu0 0.0
    %6585 = vmatpush1.xpose.msra.mxu0 0.0
    %6586 = vmatprep.subr.mxu0 0.0
    %6587 = vmatpush1.xpose.msra.mxu0 0.0
    %6588 = vmatprep.subr.mxu0 0.0
    %6589 = vmatpush1.xpose.msra.mxu0 0.0
    %6590 = vmatprep.subr.mxu0 0.0
    %6591 = vmatpush1.xpose.msra.mxu0 0.0
    %6592 = vmatprep.subr.mxu0 0.0
    %6593 = vmatpush1.xpose.msra.mxu0 0.0
    %6594 = vmatprep.subr.mxu0 0.0
    %6595 = vmatpush1.xpose.msra.mxu0 0.0
    %6596 = vmatprep.subr.mxu0 0.0
    %6597 = vmatpush1.xpose.msra.mxu0 0.0
    %6598 = vmatprep.subr.mxu0 0.0
    %6599 = vmatpush1.xpose.msra.mxu0 0.0
    %6600 = vmatprep.subr.mxu0 0.0
    %6601 = vmatpush1.xpose.msra.mxu0 0.0
    %6602 = vmatprep.subr.mxu0 0.0
    %6603 = vmatpush1.xpose.msra.mxu0 0.0
    %6604 = vmatprep.subr.mxu0 0.0
    %6605 = vmatpush1.xpose.msra.mxu0 0.0
    %6606 = vmatprep.subr.mxu0 0.0
    %6607 = vmatpush1.xpose.msra.mxu0 0.0
    %6608 = vmatprep.mubr.f32.mxu0 0.0
    %6609 = vmatmul.mubr.f32.gmra.mrb[0].mxu0 %v6539
    %v6610 = vpop.f32.mrb[0].mxu0
    %v6611 = vadd.f32 0.0, %v6610
    %v6612 = vpop.f32.mrb[0].mxu0
    %6613 = vdwg.mxu0
    %v6615 = vrot.slane %v6482, 7
    %v6616 = vsel %vm2806, %v6615, 0
    %v6619 = vsel %vm2806, %v6536, 0
    %6621 = vmatprep.subr.mxu0 0.0
    %6622 = vmatpush1.xpose.msra.mxu0 %v6619
    %6623 = vmatprep.subr.mxu0 0.0
    %6624 = vmatpush1.xpose.msra.mxu0 0.0
    %6625 = vmatprep.subr.mxu0 0.0
    %6626 = vmatpush1.xpose.msra.mxu0 0.0
    %6627 = vmatprep.subr.mxu0 0.0
    %6628 = vmatpush1.xpose.msra.mxu0 0.0
    %6629 = vmatprep.subr.mxu0 0.0
    %6630 = vmatpush1.xpose.msra.mxu0 0.0
    %6631 = vmatprep.subr.mxu0 0.0
    %6632 = vmatpush1.xpose.msra.mxu0 0.0
    %6633 = vmatprep.subr.mxu0 0.0
    %6634 = vmatpush1.xpose.msra.mxu0 0.0
    %6635 = vmatprep.subr.mxu0 0.0
    %6636 = vmatpush1.xpose.msra.mxu0 0.0
    %6637 = vmatprep.subr.mxu0 0.0
    %6638 = vmatpush1.xpose.msra.mxu0 0.0
    %6639 = vmatprep.subr.mxu0 0.0
    %6640 = vmatpush1.xpose.msra.mxu0 0.0
    %6641 = vmatprep.subr.mxu0 0.0
    %6642 = vmatpush1.xpose.msra.mxu0 0.0
    %6643 = vmatprep.subr.mxu0 0.0
    %6644 = vmatpush1.xpose.msra.mxu0 0.0
    %6645 = vmatprep.subr.mxu0 0.0
    %6646 = vmatpush1.xpose.msra.mxu0 0.0
    %6647 = vmatprep.subr.mxu0 0.0
    %6648 = vmatpush1.xpose.msra.mxu0 0.0
    %6649 = vmatprep.subr.mxu0 0.0
    %6650 = vmatpush1.xpose.msra.mxu0 0.0
    %6651 = vmatprep.subr.mxu0 0.0
    %6652 = vmatpush1.xpose.msra.mxu0 0.0
    %6653 = vmatprep.subr.mxu0 0.0
    %6654 = vmatpush1.xpose.msra.mxu0 0.0
    %6655 = vmatprep.subr.mxu0 0.0
    %6656 = vmatpush1.xpose.msra.mxu0 0.0
    %6657 = vmatprep.subr.mxu0 0.0
    %6658 = vmatpush1.xpose.msra.mxu0 0.0
    %6659 = vmatprep.subr.mxu0 0.0
    %6660 = vmatpush1.xpose.msra.mxu0 0.0
    %6661 = vmatprep.subr.mxu0 0.0
    %6662 = vmatpush1.xpose.msra.mxu0 0.0
    %6663 = vmatprep.subr.mxu0 0.0
    %6664 = vmatpush1.xpose.msra.mxu0 0.0
    %6665 = vmatprep.subr.mxu0 0.0
    %6666 = vmatpush1.xpose.msra.mxu0 0.0
    %6667 = vmatprep.subr.mxu0 0.0
    %6668 = vmatpush1.xpose.msra.mxu0 0.0
    %6669 = vmatprep.subr.mxu0 0.0
    %6670 = vmatpush1.xpose.msra.mxu0 0.0
    %6671 = vmatprep.subr.mxu0 0.0
    %6672 = vmatpush1.xpose.msra.mxu0 0.0
    %6673 = vmatprep.subr.mxu0 0.0
    %6674 = vmatpush1.xpose.msra.mxu0 0.0
    %6675 = vmatprep.subr.mxu0 0.0
    %6676 = vmatpush1.xpose.msra.mxu0 0.0
    %6677 = vmatprep.subr.mxu0 0.0
    %6678 = vmatpush1.xpose.msra.mxu0 0.0
    %6679 = vmatprep.subr.mxu0 0.0
    %6680 = vmatpush1.xpose.msra.mxu0 0.0
    %6681 = vmatprep.subr.mxu0 0.0
    %6682 = vmatpush1.xpose.msra.mxu0 0.0
    %6683 = vmatprep.subr.mxu0 0.0
    %6684 = vmatpush1.xpose.msra.mxu0 0.0
    %6685 = vmatprep.mubr.f32.mxu0 0.0
    %6686 = vmatmul.mubr.f32.gmra.mrb[0].mxu0 %v6616
    %v6687 = vpop.f32.mrb[0].mxu0
    %v6688 = vadd.f32 0.0, %v6687
    %v6689 = vpop.f32.mrb[0].mxu0
    %6690 = vdwg.mxu0
    %vm6691 = vcmask 57344
    %v6692 = vsel %vm6691, %v6611, -inf
    %6693 = vmax.xlane.f32.xlu0 %v6692
    %v6694 = vpop.xlane.xlu0 %6693
    %v6695 = vsel %vm6691, %v6688, -inf
    %6696 = vmax.xlane.f32.xlu0 %v6695
    %v6697 = vpop.xlane.xlu0 %6696
    %v6698 = vsub.f32 %v6611, %v6694
    %v6699 = vsub.f32 %v6688, %v6697
    %v6700 = vmul.f32 %v6698, 1.442695
    %v6701 = vpow.pop %v6700
    %v6702 = vmul.f32 %v6699, 1.442695
    %v6703 = vpow.pop %v6702
    %v6704 = vsel %vm6691, %v6701, 0.0
    %6705 = vadd.xlane.f32.xlu0 %v6704
    %v6706 = vpop.xlane.xlu0 %6705
    %v6707 = vsel %vm6691, %v6703, 0.0
    %6708 = vadd.xlane.f32.xlu0 %v6707
    %v6709 = vpop.xlane.xlu0 %6708
    %v6710 = vrcp.pop %v6706
    %v6711 = vrcp.pop %v6709
    %v6712 = vmul.f32 %v6701, %v6710
    %v6713 = vmul.f32 %v6703, %v6711
    %v6715 = vsel %vm2023, %v6712, 0
    %6717 = vmatprep.subr.mxu0 0.0
    %6718 = vmatpush1.msra.mxu0 %v6427
    %6719 = vmatprep.subr.mxu0 0.0
    %6720 = vmatpush1.msra.mxu0 0.0
    %6721 = vmatprep.subr.mxu0 0.0
    %6722 = vmatpush1.msra.mxu0 0.0
    %6723 = vmatprep.subr.mxu0 0.0
    %6724 = vmatpush1.msra.mxu0 0.0
    %6725 = vmatprep.subr.mxu0 0.0
    %6726 = vmatpush1.msra.mxu0 0.0
    %6727 = vmatprep.subr.mxu0 0.0
    %6728 = vmatpush1.msra.mxu0 0.0
    %6729 = vmatprep.subr.mxu0 0.0
    %6730 = vmatpush1.msra.mxu0 0.0
    %6731 = vmatprep.subr.mxu0 0.0
    %6732 = vmatpush1.msra.mxu0 0.0
    %6733 = vmatprep.subr.mxu0 0.0
    %6734 = vmatpush1.msra.mxu0 0.0
    %6735 = vmatprep.subr.mxu0 0.0
    %6736 = vmatpush1.msra.mxu0 0.0
    %6737 = vmatprep.subr.mxu0 0.0
    %6738 = vmatpush1.msra.mxu0 0.0
    %6739 = vmatprep.subr.mxu0 0.0
    %6740 = vmatpush1.msra.mxu0 0.0
    %6741 = vmatprep.subr.mxu0 0.0
    %6742 = vmatpush1.msra.mxu0 0.0
    %6743 = vmatprep.subr.mxu0 0.0
    %6744 = vmatpush1.msra.mxu0 0.0
    %6745 = vmatprep.subr.mxu0 0.0
    %6746 = vmatpush1.msra.mxu0 0.0
    %6747 = vmatprep.subr.mxu0 0.0
    %6748 = vmatpush1.msra.mxu0 0.0
    %6749 = vmatprep.subr.mxu0 0.0
    %6750 = vmatpush1.msra.mxu0 0.0
    %6751 = vmatprep.subr.mxu0 0.0
    %6752 = vmatpush1.msra.mxu0 0.0
    %6753 = vmatprep.subr.mxu0 0.0
    %6754 = vmatpush1.msra.mxu0 0.0
    %6755 = vmatprep.subr.mxu0 0.0
    %6756 = vmatpush1.msra.mxu0 0.0
    %6757 = vmatprep.subr.mxu0 0.0
    %6758 = vmatpush1.msra.mxu0 0.0
    %6759 = vmatprep.subr.mxu0 0.0
    %6760 = vmatpush1.msra.mxu0 0.0
    %6761 = vmatprep.subr.mxu0 0.0
    %6762 = vmatpush1.msra.mxu0 0.0
    %6763 = vmatprep.subr.mxu0 0.0
    %6764 = vmatpush1.msra.mxu0 0.0
    %6765 = vmatprep.subr.mxu0 0.0
    %6766 = vmatpush1.msra.mxu0 0.0
    %6767 = vmatprep.subr.mxu0 0.0
    %6768 = vmatpush1.msra.mxu0 0.0
    %6769 = vmatprep.subr.mxu0 0.0
    %6770 = vmatpush1.msra.mxu0 0.0
    %6771 = vmatprep.subr.mxu0 0.0
    %6772 = vmatpush1.msra.mxu0 0.0
    %6773 = vmatprep.subr.mxu0 0.0
    %6774 = vmatpush1.msra.mxu0 0.0
    %6775 = vmatprep.subr.mxu0 0.0
    %6776 = vmatpush1.msra.mxu0 0.0
    %6777 = vmatprep.subr.mxu0 0.0
    %6778 = vmatpush1.msra.mxu0 0.0
    %6779 = vmatprep.subr.mxu0 0.0
    %6780 = vmatpush1.msra.mxu0 0.0
    %6781 = vmatprep.mubr.f32.mxu0 0.0
    %6782 = vmatmul.mubr.f32.gmra.mrb[0].mxu0 %v6715
    %v6783 = vpop.f32.mrb[0].mxu0
    %v6784 = vadd.f32 0.0, %v6783
    %v6785 = vpop.f32.mrb[0].mxu0
    %6786 = vdwg.mxu0
    %v6788 = vsel %vm2023, %v6713, 0
    %6790 = vmatprep.subr.mxu0 0.0
    %6791 = vmatpush1.msra.mxu0 %v6428
    %6792 = vmatprep.subr.mxu0 0.0
    %6793 = vmatpush1.msra.mxu0 0.0
    %6794 = vmatprep.subr.mxu0 0.0
    %6795 = vmatpush1.msra.mxu0 0.0
    %6796 = vmatprep.subr.mxu0 0.0
    %6797 = vmatpush1.msra.mxu0 0.0
    %6798 = vmatprep.subr.mxu0 0.0
    %6799 = vmatpush1.msra.mxu0 0.0
    %6800 = vmatprep.subr.mxu0 0.0
    %6801 = vmatpush1.msra.mxu0 0.0
    %6802 = vmatprep.subr.mxu0 0.0
    %6803 = vmatpush1.msra.mxu0 0.0
    %6804 = vmatprep.subr.mxu0 0.0
    %6805 = vmatpush1.msra.mxu0 0.0
    %6806 = vmatprep.subr.mxu0 0.0
    %6807 = vmatpush1.msra.mxu0 0.0
    %6808 = vmatprep.subr.mxu0 0.0
    %6809 = vmatpush1.msra.mxu0 0.0
    %6810 = vmatprep.subr.mxu0 0.0
    %6811 = vmatpush1.msra.mxu0 0.0
    %6812 = vmatprep.subr.mxu0 0.0
    %6813 = vmatpush1.msra.mxu0 0.0
    %6814 = vmatprep.subr.mxu0 0.0
    %6815 = vmatpush1.msra.mxu0 0.0
    %6816 = vmatprep.subr.mxu0 0.0
    %6817 = vmatpush1.msra.mxu0 0.0
    %6818 = vmatprep.subr.mxu0 0.0
    %6819 = vmatpush1.msra.mxu0 0.0
    %6820 = vmatprep.subr.mxu0 0.0
    %6821 = vmatpush1.msra.mxu0 0.0
    %6822 = vmatprep.subr.mxu0 0.0
    %6823 = vmatpush1.msra.mxu0 0.0
    %6824 = vmatprep.subr.mxu0 0.0
    %6825 = vmatpush1.msra.mxu0 0.0
    %6826 = vmatprep.subr.mxu0 0.0
    %6827 = vmatpush1.msra.mxu0 0.0
    %6828 = vmatprep.subr.mxu0 0.0
    %6829 = vmatpush1.msra.mxu0 0.0
    %6830 = vmatprep.subr.mxu0 0.0
    %6831 = vmatpush1.msra.mxu0 0.0
    %6832 = vmatprep.subr.mxu0 0.0
    %6833 = vmatpush1.msra.mxu0 0.0
    %6834 = vmatprep.subr.mxu0 0.0
    %6835 = vmatpush1.msra.mxu0 0.0
    %6836 = vmatprep.subr.mxu0 0.0
    %6837 = vmatpush1.msra.mxu0 0.0
    %6838 = vmatprep.subr.mxu0 0.0
    %6839 = vmatpush1.msra.mxu0 0.0
    %6840 = vmatprep.subr.mxu0 0.0
    %6841 = vmatpush1.msra.mxu0 0.0
    %6842 = vmatprep.subr.mxu0 0.0
    %6843 = vmatpush1.msra.mxu0 0.0
    %6844 = vmatprep.subr.mxu0 0.0
    %6845 = vmatpush1.msra.mxu0 0.0
    %6846 = vmatprep.subr.mxu0 0.0
    %6847 = vmatpush1.msra.mxu0 0.0
    %6848 = vmatprep.subr.mxu0 0.0
    %6849 = vmatpush1.msra.mxu0 0.0
    %6850 = vmatprep.subr.mxu0 0.0
    %6851 = vmatpush1.msra.mxu0 0.0
    %6852 = vmatprep.subr.mxu0 0.0
    %6853 = vmatpush1.msra.mxu0 0.0
    %6854 = vmatprep.mubr.f32.mxu0 0.0
    %6855 = vmatmul.mubr.f32.gmra.mrb[0].mxu0 %v6788
    %v6856 = vpop.f32.mrb[0].mxu0
    %v6857 = vadd.f32 0.0, %v6856
    %v6858 = vpop.f32.mrb[0].mxu0
    %6859 = vdwg.mxu0
    %v6860 = vrot.slane %v6535, 7
    %v6861 = vsel %vm2806, %v6860, 0
    %v6863 = vsel %vm2806, %v6481, 0
    %6865 = vmatprep.subr.mxu0 0.0
    %6866 = vmatpush1.xpose.msra.mxu0 %v6863
    %6867 = vmatprep.subr.mxu0 0.0
    %6868 = vmatpush1.xpose.msra.mxu0 0.0
    %6869 = vmatprep.subr.mxu0 0.0
    %6870 = vmatpush1.xpose.msra.mxu0 0.0
    %6871 = vmatprep.subr.mxu0 0.0
    %6872 = vmatpush1.xpose.msra.mxu0 0.0
    %6873 = vmatprep.subr.mxu0 0.0
    %6874 = vmatpush1.xpose.msra.mxu0 0.0
    %6875 = vmatprep.subr.mxu0 0.0
    %6876 = vmatpush1.xpose.msra.mxu0 0.0
    %6877 = vmatprep.subr.mxu0 0.0
    %6878 = vmatpush1.xpose.msra.mxu0 0.0
    %6879 = vmatprep.subr.mxu0 0.0
    %6880 = vmatpush1.xpose.msra.mxu0 0.0
    %6881 = vmatprep.subr.mxu0 0.0
    %6882 = vmatpush1.xpose.msra.mxu0 0.0
    %6883 = vmatprep.subr.mxu0 0.0
    %6884 = vmatpush1.xpose.msra.mxu0 0.0
    %6885 = vmatprep.subr.mxu0 0.0
    %6886 = vmatpush1.xpose.msra.mxu0 0.0
    %6887 = vmatprep.subr.mxu0 0.0
    %6888 = vmatpush1.xpose.msra.mxu0 0.0
    %6889 = vmatprep.subr.mxu0 0.0
    %6890 = vmatpush1.xpose.msra.mxu0 0.0
    %6891 = vmatprep.subr.mxu0 0.0
    %6892 = vmatpush1.xpose.msra.mxu0 0.0
    %6893 = vmatprep.subr.mxu0 0.0
    %6894 = vmatpush1.xpose.msra.mxu0 0.0
    %6895 = vmatprep.subr.mxu0 0.0
    %6896 = vmatpush1.xpose.msra.mxu0 0.0
    %6897 = vmatprep.subr.mxu0 0.0
    %6898 = vmatpush1.xpose.msra.mxu0 0.0
    %6899 = vmatprep.subr.mxu0 0.0
    %6900 = vmatpush1.xpose.msra.mxu0 0.0
    %6901 = vmatprep.subr.mxu0 0.0
    %6902 = vmatpush1.xpose.msra.mxu0 0.0
    %6903 = vmatprep.subr.mxu0 0.0
    %6904 = vmatpush1.xpose.msra.mxu0 0.0
    %6905 = vmatprep.subr.mxu0 0.0
    %6906 = vmatpush1.xpose.msra.mxu0 0.0
    %6907 = vmatprep.subr.mxu0 0.0
    %6908 = vmatpush1.xpose.msra.mxu0 0.0
    %6909 = vmatprep.subr.mxu0 0.0
    %6910 = vmatpush1.xpose.msra.mxu0 0.0
    %6911 = vmatprep.subr.mxu0 0.0
    %6912 = vmatpush1.xpose.msra.mxu0 0.0
    %6913 = vmatprep.subr.mxu0 0.0
    %6914 = vmatpush1.xpose.msra.mxu0 0.0
    %6915 = vmatprep.subr.mxu0 0.0
    %6916 = vmatpush1.xpose.msra.mxu0 0.0
    %6917 = vmatprep.subr.mxu0 0.0
    %6918 = vmatpush1.xpose.msra.mxu0 0.0
    %6919 = vmatprep.subr.mxu0 0.0
    %6920 = vmatpush1.xpose.msra.mxu0 0.0
    %6921 = vmatprep.subr.mxu0 0.0
    %6922 = vmatpush1.xpose.msra.mxu0 0.0
    %6923 = vmatprep.subr.mxu0 0.0
    %6924 = vmatpush1.xpose.msra.mxu0 0.0
    %6925 = vmatprep.subr.mxu0 0.0
    %6926 = vmatpush1.xpose.msra.mxu0 0.0
    %6927 = vmatprep.subr.mxu0 0.0
    %6928 = vmatpush1.xpose.msra.mxu0 0.0
    %6929 = vmatprep.mubr.f32.mxu0 0.0
    %6930 = vmatmul.mubr.f32.gmra.mrb[0].mxu0 %v6861
    %v6931 = vpop.f32.mrb[0].mxu0
    %v6932 = vadd.f32 0.0, %v6931
    %v6933 = vpop.f32.mrb[0].mxu0
    %6934 = vdwg.mxu0
    %v6935 = vrot.slane %v6536, 7
    %v6936 = vsel %vm2806, %v6935, 0
    %v6938 = vsel %vm2806, %v6482, 0
    %6940 = vmatprep.subr.mxu0 0.0
    %6941 = vmatpush1.xpose.msra.mxu0 %v6938
    %6942 = vmatprep.subr.mxu0 0.0
    %6943 = vmatpush1.xpose.msra.mxu0 0.0
    %6944 = vmatprep.subr.mxu0 0.0
    %6945 = vmatpush1.xpose.msra.mxu0 0.0
    %6946 = vmatprep.subr.mxu0 0.0
    %6947 = vmatpush1.xpose.msra.mxu0 0.0
    %6948 = vmatprep.subr.mxu0 0.0
    %6949 = vmatpush1.xpose.msra.mxu0 0.0
    %6950 = vmatprep.subr.mxu0 0.0
    %6951 = vmatpush1.xpose.msra.mxu0 0.0
    %6952 = vmatprep.subr.mxu0 0.0
    %6953 = vmatpush1.xpose.msra.mxu0 0.0
    %6954 = vmatprep.subr.mxu0 0.0
    %6955 = vmatpush1.xpose.msra.mxu0 0.0
    %6956 = vmatprep.subr.mxu0 0.0
    %6957 = vmatpush1.xpose.msra.mxu0 0.0
    %6958 = vmatprep.subr.mxu0 0.0
    %6959 = vmatpush1.xpose.msra.mxu0 0.0
    %6960 = vmatprep.subr.mxu0 0.0
    %6961 = vmatpush1.xpose.msra.mxu0 0.0
    %6962 = vmatprep.subr.mxu0 0.0
    %6963 = vmatpush1.xpose.msra.mxu0 0.0
    %6964 = vmatprep.subr.mxu0 0.0
    %6965 = vmatpush1.xpose.msra.mxu0 0.0
    %6966 = vmatprep.subr.mxu0 0.0
    %6967 = vmatpush1.xpose.msra.mxu0 0.0
    %6968 = vmatprep.subr.mxu0 0.0
    %6969 = vmatpush1.xpose.msra.mxu0 0.0
    %6970 = vmatprep.subr.mxu0 0.0
    %6971 = vmatpush1.xpose.msra.mxu0 0.0
    %6972 = vmatprep.subr.mxu0 0.0
    %6973 = vmatpush1.xpose.msra.mxu0 0.0
    %6974 = vmatprep.subr.mxu0 0.0
    %6975 = vmatpush1.xpose.msra.mxu0 0.0
    %6976 = vmatprep.subr.mxu0 0.0
    %6977 = vmatpush1.xpose.msra.mxu0 0.0
    %6978 = vmatprep.subr.mxu0 0.0
    %6979 = vmatpush1.xpose.msra.mxu0 0.0
    %6980 = vmatprep.subr.mxu0 0.0
    %6981 = vmatpush1.xpose.msra.mxu0 0.0
    %6982 = vmatprep.subr.mxu0 0.0
    %6983 = vmatpush1.xpose.msra.mxu0 0.0
    %6984 = vmatprep.subr.mxu0 0.0
    %6985 = vmatpush1.xpose.msra.mxu0 0.0
    %6986 = vmatprep.subr.mxu0 0.0
    %6987 = vmatpush1.xpose.msra.mxu0 0.0
    %6988 = vmatprep.subr.mxu0 0.0
    %6989 = vmatpush1.xpose.msra.mxu0 0.0
    %6990 = vmatprep.subr.mxu0 0.0
    %6991 = vmatpush1.xpose.msra.mxu0 0.0
    %6992 = vmatprep.subr.mxu0 0.0
    %6993 = vmatpush1.xpose.msra.mxu0 0.0
    %6994 = vmatprep.subr.mxu0 0.0
    %6995 = vmatpush1.xpose.msra.mxu0 0.0
    %6996 = vmatprep.subr.mxu0 0.0
    %6997 = vmatpush1.xpose.msra.mxu0 0.0
    %6998 = vmatprep.subr.mxu0 0.0
    %6999 = vmatpush1.xpose.msra.mxu0 0.0
    %7000 = vmatprep.subr.mxu0 0.0
    %7001 = vmatpush1.xpose.msra.mxu0 0.0
    %7002 = vmatprep.subr.mxu0 0.0
    %7003 = vmatpush1.xpose.msra.mxu0 0.0
    %7004 = vmatprep.mubr.f32.mxu0 0.0
    %7005 = vmatmul.mubr.f32.gmra.mrb[0].mxu0 %v6936
    %v7006 = vpop.f32.mrb[0].mxu0
    %v7007 = vadd.f32 0.0, %v7006
    %v7008 = vpop.f32.mrb[0].mxu0
    %7009 = vdwg.mxu0
    %v7010 = vsel %vm6691, %v6932, -inf
    %7011 = vmax.xlane.f32.xlu0 %v7010
    %v7012 = vpop.xlane.xlu0 %7011
    %v7013 = vsel %vm6691, %v7007, -inf
    %7014 = vmax.xlane.f32.xlu0 %v7013
    %v7015 = vpop.xlane.xlu0 %7014
    %v7016 = vsub.f32 %v6932, %v7012
    %v7017 = vsub.f32 %v7007, %v7015
    %v7018 = vmul.f32 %v7016, 1.442695
    %v7019 = vpow.pop %v7018
    %v7020 = vmul.f32 %v7017, 1.442695
    %v7021 = vpow.pop %v7020
    %v7022 = vsel %vm6691, %v7019, 0.0
    %7023 = vadd.xlane.f32.xlu0 %v7022
    %v7024 = vpop.xlane.xlu0 %7023
    %v7025 = vsel %vm6691, %v7021, 0.0
    %7026 = vadd.xlane.f32.xlu0 %v7025
    %v7027 = vpop.xlane.xlu0 %7026
    %v7028 = vrcp.pop %v7024
    %v7029 = vrcp.pop %v7027
    %v7030 = vmul.f32 %v7019, %v7028
    %v7031 = vmul.f32 %v7021, %v7029
    %v7033 = vsel %vm2023, %v7030, 0
    %7035 = vmatprep.subr.mxu0 0.0
    %7036 = vmatpush1.msra.mxu0 %v6425
    %7037 = vmatprep.subr.mxu0 0.0
    %7038 = vmatpush1.msra.mxu0 0.0
    %7039 = vmatprep.subr.mxu0 0.0
    %7040 = vmatpush1.msra.mxu0 0.0
    %7041 = vmatprep.subr.mxu0 0.0
    %7042 = vmatpush1.msra.mxu0 0.0
    %7043 = vmatprep.subr.mxu0 0.0
    %7044 = vmatpush1.msra.mxu0 0.0
    %7045 = vmatprep.subr.mxu0 0.0
    %7046 = vmatpush1.msra.mxu0 0.0
    %7047 = vmatprep.subr.mxu0 0.0
    %7048 = vmatpush1.msra.mxu0 0.0
    %7049 = vmatprep.subr.mxu0 0.0
    %7050 = vmatpush1.msra.mxu0 0.0
    %7051 = vmatprep.subr.mxu0 0.0
    %7052 = vmatpush1.msra.mxu0 0.0
    %7053 = vmatprep.subr.mxu0 0.0
    %7054 = vmatpush1.msra.mxu0 0.0
    %7055 = vmatprep.subr.mxu0 0.0
    %7056 = vmatpush1.msra.mxu0 0.0
    %7057 = vmatprep.subr.mxu0 0.0
    %7058 = vmatpush1.msra.mxu0 0.0
    %7059 = vmatprep.subr.mxu0 0.0
    %7060 = vmatpush1.msra.mxu0 0.0
    %7061 = vmatprep.subr.mxu0 0.0
    %7062 = vmatpush1.msra.mxu0 0.0
    %7063 = vmatprep.subr.mxu0 0.0
    %7064 = vmatpush1.msra.mxu0 0.0
    %7065 = vmatprep.subr.mxu0 0.0
    %7066 = vmatpush1.msra.mxu0 0.0
    %7067 = vmatprep.subr.mxu0 0.0
    %7068 = vmatpush1.msra.mxu0 0.0
    %7069 = vmatprep.subr.mxu0 0.0
    %7070 = vmatpush1.msra.mxu0 0.0
    %7071 = vmatprep.subr.mxu0 0.0
    %7072 = vmatpush1.msra.mxu0 0.0
    %7073 = vmatprep.subr.mxu0 0.0
    %7074 = vmatpush1.msra.mxu0 0.0
    %7075 = vmatprep.subr.mxu0 0.0
    %7076 = vmatpush1.msra.mxu0 0.0
    %7077 = vmatprep.subr.mxu0 0.0
    %7078 = vmatpush1.msra.mxu0 0.0
    %7079 = vmatprep.subr.mxu0 0.0
    %7080 = vmatpush1.msra.mxu0 0.0
    %7081 = vmatprep.subr.mxu0 0.0
    %7082 = vmatpush1.msra.mxu0 0.0
    %7083 = vmatprep.subr.mxu0 0.0
    %7084 = vmatpush1.msra.mxu0 0.0
    %7085 = vmatprep.subr.mxu0 0.0
    %7086 = vmatpush1.msra.mxu0 0.0
    %7087 = vmatprep.subr.mxu0 0.0
    %7088 = vmatpush1.msra.mxu0 0.0
    %7089 = vmatprep.subr.mxu0 0.0
    %7090 = vmatpush1.msra.mxu0 0.0
    %7091 = vmatprep.subr.mxu0 0.0
    %7092 = vmatpush1.msra.mxu0 0.0
    %7093 = vmatprep.subr.mxu0 0.0
    %7094 = vmatpush1.msra.mxu0 0.0
    %7095 = vmatprep.subr.mxu0 0.0
    %7096 = vmatpush1.msra.mxu0 0.0
    %7097 = vmatprep.subr.mxu0 0.0
    %7098 = vmatpush1.msra.mxu0 0.0
    %7099 = vmatprep.mubr.f32.mxu0 0.0
    %7100 = vmatmul.mubr.f32.gmra.mrb[0].mxu0 %v7033
    %v7101 = vpop.f32.mrb[0].mxu0
    %v7102 = vadd.f32 0.0, %v7101
    %v7103 = vpop.f32.mrb[0].mxu0
    %7104 = vdwg.mxu0
    %v7106 = vsel %vm2023, %v7031, 0
    %7108 = vmatprep.subr.mxu0 0.0
    %7109 = vmatpush1.msra.mxu0 %v6426
    %7110 = vmatprep.subr.mxu0 0.0
    %7111 = vmatpush1.msra.mxu0 0.0
    %7112 = vmatprep.subr.mxu0 0.0
    %7113 = vmatpush1.msra.mxu0 0.0
    %7114 = vmatprep.subr.mxu0 0.0
    %7115 = vmatpush1.msra.mxu0 0.0
    %7116 = vmatprep.subr.mxu0 0.0
    %7117 = vmatpush1.msra.mxu0 0.0
    %7118 = vmatprep.subr.mxu0 0.0
    %7119 = vmatpush1.msra.mxu0 0.0
    %7120 = vmatprep.subr.mxu0 0.0
    %7121 = vmatpush1.msra.mxu0 0.0
    %7122 = vmatprep.subr.mxu0 0.0
    %7123 = vmatpush1.msra.mxu0 0.0
    %7124 = vmatprep.subr.mxu0 0.0
    %7125 = vmatpush1.msra.mxu0 0.0
    %7126 = vmatprep.subr.mxu0 0.0
    %7127 = vmatpush1.msra.mxu0 0.0
    %7128 = vmatprep.subr.mxu0 0.0
    %7129 = vmatpush1.msra.mxu0 0.0
    %7130 = vmatprep.subr.mxu0 0.0
    %7131 = vmatpush1.msra.mxu0 0.0
    %7132 = vmatprep.subr.mxu0 0.0
    %7133 = vmatpush1.msra.mxu0 0.0
    %7134 = vmatprep.subr.mxu0 0.0
    %7135 = vmatpush1.msra.mxu0 0.0
    %7136 = vmatprep.subr.mxu0 0.0
    %7137 = vmatpush1.msra.mxu0 0.0
    %7138 = vmatprep.subr.mxu0 0.0
    %7139 = vmatpush1.msra.mxu0 0.0
    %7140 = vmatprep.subr.mxu0 0.0
    %7141 = vmatpush1.msra.mxu0 0.0
    %7142 = vmatprep.subr.mxu0 0.0
    %7143 = vmatpush1.msra.mxu0 0.0
    %7144 = vmatprep.subr.mxu0 0.0
    %7145 = vmatpush1.msra.mxu0 0.0
    %7146 = vmatprep.subr.mxu0 0.0
    %7147 = vmatpush1.msra.mxu0 0.0
    %7148 = vmatprep.subr.mxu0 0.0
    %7149 = vmatpush1.msra.mxu0 0.0
    %7150 = vmatprep.subr.mxu0 0.0
    %7151 = vmatpush1.msra.mxu0 0.0
    %7152 = vmatprep.subr.mxu0 0.0
    %7153 = vmatpush1.msra.mxu0 0.0
    %7154 = vmatprep.subr.mxu0 0.0
    %7155 = vmatpush1.msra.mxu0 0.0
    %7156 = vmatprep.subr.mxu0 0.0
    %7157 = vmatpush1.msra.mxu0 0.0
    %7158 = vmatprep.subr.mxu0 0.0
    %7159 = vmatpush1.msra.mxu0 0.0
    %7160 = vmatprep.subr.mxu0 0.0
    %7161 = vmatpush1.msra.mxu0 0.0
    %7162 = vmatprep.subr.mxu0 0.0
    %7163 = vmatpush1.msra.mxu0 0.0
    %7164 = vmatprep.subr.mxu0 0.0
    %7165 = vmatpush1.msra.mxu0 0.0
    %7166 = vmatprep.subr.mxu0 0.0
    %7167 = vmatpush1.msra.mxu0 0.0
    %7168 = vmatprep.subr.mxu0 0.0
    %7169 = vmatpush1.msra.mxu0 0.0
    %7170 = vmatprep.subr.mxu0 0.0
    %7171 = vmatpush1.msra.mxu0 0.0
    %7172 = vmatprep.mubr.f32.mxu0 0.0
    %7173 = vmatmul.mubr.f32.gmra.mrb[0].mxu0 %v7106
    %v7174 = vpop.f32.mrb[0].mxu0
    %v7175 = vadd.f32 0.0, %v7174
    %v7176 = vpop.f32.mrb[0].mxu0
    %7177 = vdwg.mxu0
    %v7180 = vrot.slane %v6857, 7
    %v7181 = vsel %vm2781, %v7180, %v6784
    %v7185 = vrot.slane %v6220, 7
    %v7186 = vsel %vm2781, %v7185, %v6219
    %7187 = vrot.lane.b32.xlu0 %v7186, 32
    %v7188 = vpop.permute.xlu0 %7187
    %v7192 = vrot.slane %v7175, 7
    %v7193 = vsel %vm2781, %v7192, %v7102
    %7194 = vrot.lane.b32.xlu0 %v7193, 64
    %v7195 = vpop.permute.xlu0 %7194
    %v7199 = vrot.slane %v6222, 7
    %v7200 = vsel %vm2781, %v7199, %v6221
    %7201 = vrot.lane.b32.xlu0 %v7200, 96
    %v7202 = vpop.permute.xlu0 %7201
    %v7204 = vsel %vm2806, %v7181, %v7188
    %v7205 = vsel %vm1663, %v7204, %v7195
    %vm7206 = vcmask 785408
    %v7207 = vsel %vm7206, %v7205, %v7202
    %v7208 = vmul.f32 %v7207, 0.5
    %v7209 = vmul.f32 %v1710, 0.5
    %v7210 = vmul.f32 %v7207, 0.70710677
    %v7211 = vmul.f32 %v1710, 0.70710677
    %vm7212 = vcmp.lt.f32.partialorder %v7210, 0.0
    %vm7213 = vcmp.lt.f32.partialorder %v7211, 0.0
    %v7214 = vsel %vm7212, -1.0, 1.0
    %v7215 = vsel %vm7213, -1.0, 1.0
    %v7216 = vand.u32 2147483647, %v7210
    %v7217 = vand.u32 2147483647, %v7211
    %v7218 = vmul.f32 %v7216, 0.3275911
    %v7219 = vmul.f32 %v7217, 0.3275911
    %v7220 = vadd.f32 %v7218, 1.0
    %v7221 = vadd.f32 %v7219, 1.0
    %v7222 = vrcp.pop %v7220
    %v7223 = vmul.f32 1.0, %v7222
    %v7224 = vrcp.pop %v7221
    %v7225 = vmul.f32 1.0, %v7224
    %v7226 = vmul.f32 %v7223, 1.0614054
    %v7227 = vmul.f32 %v7225, 1.0614054
    %v7228 = vadd.f32 %v7226, -1.4531521
    %v7229 = vadd.f32 %v7227, -1.4531521
    %v7230 = vmul.f32 %v7223, %v7228
    %v7231 = vmul.f32 %v7225, %v7229
    %v7232 = vadd.f32 %v7230, 1.4214138
    %v7233 = vadd.f32 %v7231, 1.4214138
    %v7234 = vmul.f32 %v7223, %v7232
    %v7235 = vmul.f32 %v7225, %v7233
    %v7236 = vadd.f32 %v7234, -0.28449672
    %v7237 = vadd.f32 %v7235, -0.28449672
    %v7238 = vmul.f32 %v7223, %v7236
    %v7239 = vmul.f32 %v7225, %v7237
    %v7240 = vadd.f32 %v7238, 0.2548296
    %v7241 = vadd.f32 %v7239, 0.2548296
    %v7242 = vmul.f32 %v7223, %v7240
    %v7243 = vmul.f32 %v7225, %v7241
    %v7244 = vmul.f32 %v7216, %v7216
    %v7245 = vmul.f32 %v7217, %v7217
    %v7246 = vsub.f32 0.0, %v7244
    %v7247 = vsub.f32 0.0, %v7245
    %v7248 = vmul.f32 %v7246, 1.442695
    %v7249 = vpow.pop %v7248
    %v7250 = vmul.f32 %v7247, 1.442695
    %v7251 = vpow.pop %v7250
    %v7252 = vmul.f32 %v7242, %v7249
    %v7253 = vmul.f32 %v7243, %v7251
    %v7254 = vsub.f32 1.0, %v7252
    %v7255 = vsub.f32 1.0, %v7253
    %v7256 = vmul.f32 %v7214, %v7254
    %v7257 = vmul.f32 %v7215, %v7255
    %v7258 = vadd.f32 %v7256, 1.0
    %v7259 = vadd.f32 %v7257, 1.0
    %v7260 = vmul.f32 %v7208, %v7258
    %v7261 = vmul.f32 %v7209, %v7259
    %v7262 = vld [vmem:[%s7] sm:$0xff]
    %v7263 = vld [vmem:[%s7 + $0x8] sm:$0xff]
    %v7264 = vld [vmem:[%s7 + $0x10] sm:$0xff]
    %v7265 = vld [vmem:[%s7 + $0x18] sm:$0xff]
    %v7266 = vld [vmem:[%s7 + $0x20] sm:$0xff]
    %v7267 = vld [vmem:[%s7 + $0x28] sm:$0xff]
    %v7268 = vld [vmem:[%s7 + $0x30] sm:$0xff]
    %v7269 = vld [vmem:[%s7 + $0x38] sm:$0xff]
    %v7270 = vld [vmem:[%s7 + $0x40] sm:$0xff]
    %v7271 = vld [vmem:[%s7 + $0x48] sm:$0xff]
    %v7272 = vld [vmem:[%s7 + $0x50] sm:$0xff]
    %v7273 = vld [vmem:[%s7 + $0x58] sm:$0xff]
    %v7274 = vld [vmem:[%s7 + $0x60] sm:$0xff]
    %v7275 = vld [vmem:[%s7 + $0x68] sm:$0xff]
    %v7276 = vld [vmem:[%s7 + $0x70] sm:$0xff]
    %v7277 = vld [vmem:[%s7 + $0x78] sm:$0xff]
    %v7278 = vld [vmem:[%s7 + $0x80] sm:$0xff]
    %v7279 = vld [vmem:[%s7 + $0x88] sm:$0xff]
    %v7280 = vld [vmem:[%s7 + $0x90] sm:$0xff]
    %v7281 = vld [vmem:[%s7 + $0x98] sm:$0xff]
    %v7282 = vlaneseq
    %v7283 = vshrl.u32 %v7282, 7
    %v7284 = vsub.s32 6, %v7283
    %v7285 = vrot.slane %v38, %v7284
    %v7287 = vsel %vm2806, %v7261, 0
    %7289 = vmatprep.subr.mxu0 0.0
    %7290 = vmatpush1.msra.mxu0 %v7262
    %7291 = vmatprep.subr.mxu0 0.0
    %7292 = vmatpush1.msra.mxu0 %v7263
    %7293 = vmatprep.subr.mxu0 0.0
    %7294 = vmatpush1.msra.mxu0 %v7264
    %7295 = vmatprep.subr.mxu0 0.0
    %7296 = vmatpush1.msra.mxu0 %v7265
    %7297 = vmatprep.subr.mxu0 0.0
    %7298 = vmatpush1.msra.mxu0 %v7266
    %7299 = vmatprep.subr.mxu0 0.0
    %7300 = vmatpush1.msra.mxu0 %v7267
    %7301 = vmatprep.subr.mxu0 0.0
    %7302 = vmatpush1.msra.mxu0 %v7268
    %7303 = vmatprep.subr.mxu0 0.0
    %7304 = vmatpush1.msra.mxu0 %v7269
    %7305 = vmatprep.subr.mxu0 0.0
    %7306 = vmatpush1.msra.mxu0 %v7270
    %7307 = vmatprep.subr.mxu0 0.0
    %7308 = vmatpush1.msra.mxu0 %v7271
    %7309 = vmatprep.subr.mxu0 0.0
    %7310 = vmatpush1.msra.mxu0 %v7272
    %7311 = vmatprep.subr.mxu0 0.0
    %7312 = vmatpush1.msra.mxu0 %v7273
    %7313 = vmatprep.subr.mxu0 0.0
    %7314 = vmatpush1.msra.mxu0 %v7274
    %7315 = vmatprep.subr.mxu0 0.0
    %7316 = vmatpush1.msra.mxu0 %v7275
    %7317 = vmatprep.subr.mxu0 0.0
    %7318 = vmatpush1.msra.mxu0 %v7276
    %7319 = vmatprep.subr.mxu0 0.0
    %7320 = vmatpush1.msra.mxu0 %v7277
    %7321 = vmatprep.subr.mxu0 0.0
    %7322 = vmatpush1.msra.mxu0 %v7278
    %7323 = vmatprep.subr.mxu0 0.0
    %7324 = vmatpush1.msra.mxu0 %v7279
    %7325 = vmatprep.subr.mxu0 0.0
    %7326 = vmatpush1.msra.mxu0 %v7280
    %7327 = vmatprep.subr.mxu0 0.0
    %7328 = vmatpush1.msra.mxu0 %v7281
    %7329 = vmatprep.subr.mxu0 0.0
    %7330 = vmatpush1.msra.mxu0 0.0
    %7331 = vmatprep.subr.mxu0 0.0
    %7332 = vmatpush1.msra.mxu0 0.0
    %7333 = vmatprep.subr.mxu0 0.0
    %7334 = vmatpush1.msra.mxu0 0.0
    %7335 = vmatprep.subr.mxu0 0.0
    %7336 = vmatpush1.msra.mxu0 0.0
    %7337 = vmatprep.subr.mxu0 0.0
    %7338 = vmatpush1.msra.mxu0 0.0
    %7339 = vmatprep.subr.mxu0 0.0
    %7340 = vmatpush1.msra.mxu0 0.0
    %7341 = vmatprep.subr.mxu0 0.0
    %7342 = vmatpush1.msra.mxu0 0.0
    %7343 = vmatprep.subr.mxu0 0.0
    %7344 = vmatpush1.msra.mxu0 0.0
    %7345 = vmatprep.subr.mxu0 0.0
    %7346 = vmatpush1.msra.mxu0 0.0
    %7347 = vmatprep.subr.mxu0 0.0
    %7348 = vmatpush1.msra.mxu0 0.0
    %7349 = vmatprep.subr.mxu0 0.0
    %7350 = vmatpush1.msra.mxu0 0.0
    %7351 = vmatprep.subr.mxu0 0.0
    %7352 = vmatpush1.msra.mxu0 0.0
    %7353 = vmatprep.mubr.f32.mxu0 %v7287
    %7354 = vmatmul.mubr.f32.gmra.mrb[0].mxu0 %v7260
    %v7355 = vpop.f32.mrb[0].mxu0
    %v7356 = vadd.f32 %v7285, %v7355
    %v7357 = vpop.f32.mrb[0].mxu0
    %7358 = vdwg.mxu0
    %v7359 = vmul.f32 %v7356, 0.5
    %v7360 = vmul.f32 %v7356, 0.70710677
    %vm7361 = vcmp.lt.f32.partialorder %v7360, 0.0
    %v7362 = vsel %vm7361, -1.0, 1.0
    %v7363 = vand.u32 2147483647, %v7360
    %v7364 = vmul.f32 %v7363, 0.3275911
    %v7365 = vadd.f32 %v7364, 1.0
    %v7366 = vrcp.pop %v7365
    %v7367 = vmul.f32 1.0, %v7366
    %v7368 = vmul.f32 %v7367, 1.0614054
    %v7369 = vadd.f32 %v7368, -1.4531521
    %v7370 = vmul.f32 %v7367, %v7369
    %v7371 = vadd.f32 %v7370, 1.4214138
    %v7372 = vmul.f32 %v7367, %v7371
    %v7373 = vadd.f32 %v7372, -0.28449672
    %v7374 = vmul.f32 %v7367, %v7373
    %v7375 = vadd.f32 %v7374, 0.2548296
    %v7376 = vmul.f32 %v7367, %v7375
    %v7377 = vmul.f32 %v7363, %v7363
    %v7378 = vsub.f32 0.0, %v7377
    %v7379 = vmul.f32 %v7378, 1.442695
    %v7380 = vpow.pop %v7379
    %v7381 = vmul.f32 %v7376, %v7380
    %v7382 = vsub.f32 1.0, %v7381
    %v7383 = vmul.f32 %v7362, %v7382
    %v7384 = vadd.f32 %v7383, 1.0
    %v7385 = vmul.f32 %v7359, %v7384
    %v7386 = vld [vmem:[%s8] sm:$0xff]
    %v7387 = vld [vmem:[%s8 + $0x8] sm:$0xff]
    %v7388 = vld [vmem:[%s8 + $0x10] sm:$0xff]
    %v7389 = vld [vmem:[%s8 + $0x18] sm:$0xff]
    %v7390 = vld [vmem:[%s8 + $0x20] sm:$0xff]
    %v7391 = vld [vmem:[%s8 + $0x28] sm:$0xff]
    %v7392 = vld [vmem:[%s8 + $0x30] sm:$0xff]
    %v7393 = vld [vmem:[%s8 + $0x38] sm:$0xff]
    %v7394 = vld [vmem:[%s8 + $0x40] sm:$0xff]
    %v7395 = vld [vmem:[%s8 + $0x48] sm:$0xff]
    %v7396 = vld [vmem:[%s8 + $0x50] sm:$0xff]
    %v7397 = vld [vmem:[%s8 + $0x58] sm:$0xff]
    %v7398 = vld [vmem:[%s8 + $0x60] sm:$0xff]
    %v7399 = vld [vmem:[%s8 + $0x68] sm:$0xff]
    %v7400 = vld [vmem:[%s8 + $0x70] sm:$0xff]
    %v7401 = vld [vmem:[%s8 + $0x78] sm:$0xff]
    %v7402 = vlaneseq
    %v7403 = vshrl.u32 %v7402, 7
    %v7404 = vsub.s32 7, %v7403
    %v7405 = vrot.slane %v38, %v7404
    %7406 = vmatprep.subr.mxu0 0.0
    %7407 = vmatpush1.msra.mxu0 %v7386
    %7408 = vmatprep.subr.mxu0 0.0
    %7409 = vmatpush1.msra.mxu0 %v7387
    %7410 = vmatprep.subr.mxu0 0.0
    %7411 = vmatpush1.msra.mxu0 %v7388
    %7412 = vmatprep.subr.mxu0 0.0
    %7413 = vmatpush1.msra.mxu0 %v7389
    %7414 = vmatprep.subr.mxu0 0.0
    %7415 = vmatpush1.msra.mxu0 %v7390
    %7416 = vmatprep.subr.mxu0 0.0
    %7417 = vmatpush1.msra.mxu0 %v7391
    %7418 = vmatprep.subr.mxu0 0.0
    %7419 = vmatpush1.msra.mxu0 %v7392
    %7420 = vmatprep.subr.mxu0 0.0
    %7421 = vmatpush1.msra.mxu0 %v7393
    %7422 = vmatprep.subr.mxu0 0.0
    %7423 = vmatpush1.msra.mxu0 %v7394
    %7424 = vmatprep.subr.mxu0 0.0
    %7425 = vmatpush1.msra.mxu0 %v7395
    %7426 = vmatprep.subr.mxu0 0.0
    %7427 = vmatpush1.msra.mxu0 %v7396
    %7428 = vmatprep.subr.mxu0 0.0
    %7429 = vmatpush1.msra.mxu0 %v7397
    %7430 = vmatprep.subr.mxu0 0.0
    %7431 = vmatpush1.msra.mxu0 %v7398
    %7432 = vmatprep.subr.mxu0 0.0
    %7433 = vmatpush1.msra.mxu0 %v7399
    %7434 = vmatprep.subr.mxu0 0.0
    %7435 = vmatpush1.msra.mxu0 %v7400
    %7436 = vmatprep.subr.mxu0 0.0
    %7437 = vmatpush1.msra.mxu0 %v7401
    %7438 = vmatprep.subr.mxu0 0.0
    %7439 = vmatpush1.msra.mxu0 0.0
    %7440 = vmatprep.subr.mxu0 0.0
    %7441 = vmatpush1.msra.mxu0 0.0
    %7442 = vmatprep.subr.mxu0 0.0
    %7443 = vmatpush1.msra.mxu0 0.0
    %7444 = vmatprep.subr.mxu0 0.0
    %7445 = vmatpush1.msra.mxu0 0.0
    %7446 = vmatprep.subr.mxu0 0.0
    %7447 = vmatpush1.msra.mxu0 0.0
    %7448 = vmatprep.subr.mxu0 0.0
    %7449 = vmatpush1.msra.mxu0 0.0
    %7450 = vmatprep.subr.mxu0 0.0
    %7451 = vmatpush1.msra.mxu0 0.0
    %7452 = vmatprep.subr.mxu0 0.0
    %7453 = vmatpush1.msra.mxu0 0.0
    %7454 = vmatprep.subr.mxu0 0.0
    %7455 = vmatpush1.msra.mxu0 0.0
    %7456 = vmatprep.subr.mxu0 0.0
    %7457 = vmatpush1.msra.mxu0 0.0
    %7458 = vmatprep.subr.mxu0 0.0
    %7459 = vmatpush1.msra.mxu0 0.0
    %7460 = vmatprep.subr.mxu0 0.0
    %7461 = vmatpush1.msra.mxu0 0.0
    %7462 = vmatprep.subr.mxu0 0.0
    %7463 = vmatpush1.msra.mxu0 0.0
    %7464 = vmatprep.subr.mxu0 0.0
    %7465 = vmatpush1.msra.mxu0 0.0
    %7466 = vmatprep.subr.mxu0 0.0
    %7467 = vmatpush1.msra.mxu0 0.0
    %7468 = vmatprep.subr.mxu0 0.0
    %7469 = vmatpush1.msra.mxu0 0.0
    %7470 = vmatprep.mubr.f32.mxu0 0.0
    %7471 = vmatmul.mubr.f32.gmra.mrb[0].mxu0 %v7385
    %v7472 = vpop.f32.mrb[0].mxu0
    %v7473 = vadd.f32 %v7405, %v7472
    %v7474 = vpop.f32.mrb[0].mxu0
    %7475 = vdwg.mxu0
    %7476 = vst [vmem:[#allocation2] sm:$0x3] %v7473
    // Predicated region
    $region42: #{model_forward.1} parent=1 // pred_check
      _
    $region43: #{model_forward.1} parent=1 // pred_check_branch
      %7478 = sbr.rel (0) target = $region45
    $region44: #{model_forward.1} parent=1 // pred_region
      %s7480 = ssub.s32 32, 32
      %7481 = vsyncadd [#allocation3], %s7480
      %s7483 = sshll.u32 [#allocation2], 4
      %s7484 = int_to_ptr.vmem [resolvable:$true] %s7483
      %7486 = dma.vmem_to_hbm [thread:$0]  %s7484, 32, %s10, [#allocation3]
    $region45: #{model_forward.1} parent=1 // pred_fallthru
      _
    // Predicated region
    $region46: #{model_forward.1} parent=1 // pred_check
      _
    $region47: #{model_forward.1} parent=1 // pred_check_branch
      %7488 = sbr.rel (0) target = $region49
    $region48: #{model_forward.1} parent=1 // pred_region
      _
    $region49: #{model_forward.1} parent=1 // pred_fallthru
      _
    // Predicated region
    $region50: #{model_forward.1} parent=1 // pred_check
      _
    $region51: #{model_forward.1} parent=1 // pred_check_branch
      %7490 = sbr.rel (0) target = $region53
    $region52: #{model_forward.1} parent=1 // pred_region
      %7491 = dma.done [#allocation3], 32
    $region53: #{model_forward.1} parent=1 // pred_fallthru
      _
    // Predicated region
    $region54: #{model_forward.1} parent=1 // pred_check
      _
    $region55: #{model_forward.1} parent=1 // pred_check_branch
      %7493 = sbr.rel (0) target = $region57
    $region56: #{model_forward.1} parent=1 // pred_region
      _
    $region57: #{model_forward.1} parent=1 // pred_fallthru
      _
    %7494 = vsyncpa [#allocation3], 1

</llo_original>
